<compile_context>
chip_gen: v6e
topology: v6e:2x2x1
jax: 0.10.0
libtpu: 0.0.40
codegen_flags: <defaults>
</compile_context>

<pallas_src>
import functools

import jax
import jax.numpy as jnp
from jax.experimental import pallas as pl
from jax.experimental.pallas import tpu as pltpu

COLOUR_CHANNELS = 3
NUM_CHANNELS = [64, 128, 256, 512]     # original module widths (demo uses a scaled-down list)
KSIZE = 4
BN_EPS = 1e-5

VMEM_LIMIT = 48 * 1024 * 1024          # <= v7x physical 64 MiB, raises v5e's 16 MiB default
MM_TILE_CAP = 512                      # matmul M-tile cap
EW_TILE_CAP = 1024                     # elementwise (BN+ReLU) M-tile cap


# ----------------------------------------------------------------------------
# Pallas kernels
# ----------------------------------------------------------------------------
def _convmm_bn_kernel(a_ref, w_ref, y_ref, sum_ref, ssq_ref):
    """One M-tile of the conv matmul (bf16 x bf16 -> f32 accum) plus per-tile
    partial per-column sum / sum-of-squares for the BatchNorm batch stats.

    Partials go to row 0 of a private (8, N) block per tile, so the grid axis
    stays fully "parallel" (v7x megacore); the tiny reduction over tiles /
    phase blocks happens in the JAX wrapper."""
    y = jnp.dot(a_ref[...], w_ref[...], preferred_element_type=jnp.float32)
    y_ref[...] = y.astype(y_ref.dtype)

    n = y.shape[1]
    ps = jnp.sum(y, axis=0, keepdims=True)           # (1, N) f32
    pss = jnp.sum(y * y, axis=0, keepdims=True)      # (1, N) f32
    row = jax.lax.broadcasted_iota(jnp.int32, (8, n), 0)
    sum_ref[...] = jnp.where(row == 0, jnp.broadcast_to(ps, (8, n)), 0.0)
    ssq_ref[...] = jnp.where(row == 0, jnp.broadcast_to(pss, (8, n)), 0.0)


def _convmm_act_kernel(a_ref, w_ref, o_ref, *, act):
    """Conv matmul with the output nonlinearity fused (no-BN last layer)."""
    y = jnp.dot(a_ref[...], w_ref[...], preferred_element_type=jnp.float32)
    if act == "tanh":
        y = jnp.tanh(y)
    elif act == "sigmoid":
        y = jax.nn.sigmoid(y)
    o_ref[...] = y.astype(o_ref.dtype)


def _bn_relu_kernel(x_ref, scale_ref, shift_ref, o_ref):
    """Fused per-column affine (folded BatchNorm) + ReLU; f32 math, bf16 in/out."""
    y = x_ref[...].astype(jnp.float32) * scale_ref[...] + shift_ref[...]
    o_ref[...] = jnp.maximum(y, 0.0).astype(o_ref.dtype)


# ----------------------------------------------------------------------------
# pallas_call wrappers
# ----------------------------------------------------------------------------
def _round_up(x, m):
    return ((x + m - 1) // m) * m


def _pick_tile(m, cap):
    """Largest M-tile <= cap that divides m and is a multiple of 8 (else full m)."""
    if m <= cap:
        return m
    t = (cap // 8) * 8
    while t >= 8:
        if m % t == 0:
            return t
        t -= 8
    return m


def conv_matmul_bn(a, w):
    """(M, K)bf16 @ (K, N)bf16 -> (M, N)bf16 plus per-column sum / sumsq (f32)."""
    M, K = a.shape
    _, N = w.shape
    tm = _pick_tile(M, MM_TILE_CAP)
    nt = M // tm
    # TODO(synk): at production widths (K up to ~4.6K, N up to 2K) add a K grid
    # axis ("arbitrary", last) with a (tm, N) f32 accumulator scratch, and/or
    # gather the 3x3 window inside the kernel to avoid materializing im2col.
    # TODO(synk): mark the weight BlockSpec pipeline_mode=pl.Buffered(1) (its
    # index_map is constant) once single-buffering is confirmed in this JAX.
    y, ps, pss = pl.pallas_call(
        _convmm_bn_kernel,
        out_shape=(jax.ShapeDtypeStruct((M, N), jnp.bfloat16),
                   jax.ShapeDtypeStruct((8 * nt, N), jnp.float32),
                   jax.ShapeDtypeStruct((8 * nt, N), jnp.float32)),
        grid_spec=pltpu.PrefetchScalarGridSpec(
            num_scalar_prefetch=0,
            grid=(nt,),
            in_specs=[pl.BlockSpec((tm, K), lambda i: (i, 0)),
                      pl.BlockSpec((K, N), lambda i: (0, 0))],
            out_specs=(pl.BlockSpec((tm, N), lambda i: (i, 0)),
                       pl.BlockSpec((8, N), lambda i: (i, 0)),
                       pl.BlockSpec((8, N), lambda i: (i, 0)))),
        compiler_params=pltpu.CompilerParams(
            dimension_semantics=("parallel",),
            vmem_limit_bytes=VMEM_LIMIT),
    )(a, w)
    return y, jnp.sum(ps, axis=0), jnp.sum(pss, axis=0)


def conv_matmul_act(a, w, act):
    """(M, K)bf16 @ (K, N)bf16 with fused tanh/sigmoid; f32 output (last layer)."""
    M, K = a.shape
    _, N = w.shape
    tm = _pick_tile(M, MM_TILE_CAP)
    return pl.pallas_call(
        functools.partial(_convmm_act_kernel, act=act),
        out_shape=jax.ShapeDtypeStruct((M, N), jnp.float32),
        grid_spec=pltpu.PrefetchScalarGridSpec(
            num_scalar_prefetch=0,
            grid=(M // tm,),
            in_specs=[pl.BlockSpec((tm, K), lambda i: (i, 0)),
                      pl.BlockSpec((K, N), lambda i: (0, 0))],
            out_specs=pl.BlockSpec((tm, N), lambda i: (i, 0))),
        compiler_params=pltpu.CompilerParams(
            dimension_semantics=("parallel",),
            vmem_limit_bytes=VMEM_LIMIT),
    )(a, w)


def scale_shift_relu(x, scale, shift):
    """(M, N) elementwise x*scale[col] + shift[col] then ReLU; bf16 in/out."""
    M, N = x.shape
    tm = _pick_tile(M, EW_TILE_CAP)
    return pl.pallas_call(
        _bn_relu_kernel,
        out_shape=jax.ShapeDtypeStruct((M, N), jnp.bfloat16),
        grid_spec=pltpu.PrefetchScalarGridSpec(
            num_scalar_prefetch=0,
            grid=(M // tm,),
            in_specs=[pl.BlockSpec((tm, N), lambda i: (i, 0)),
                      pl.BlockSpec((1, N), lambda i: (0, 0)),
                      pl.BlockSpec((1, N), lambda i: (0, 0))],
            out_specs=pl.BlockSpec((tm, N), lambda i: (i, 0))),
        compiler_params=pltpu.CompilerParams(
            dimension_semantics=("parallel",),
            vmem_limit_bytes=VMEM_LIMIT),
    )(x, scale.reshape(1, N), shift.reshape(1, N))


# ----------------------------------------------------------------------------
# ConvTranspose2d -> single-matmul formulation (sub-pixel / phase decomposition)
# ----------------------------------------------------------------------------
def _first_layer_weight(wt, cout_pad):
    """ConvT(k4, s1, p0) on a 1x1 input: weight (Cin, Cout, 4, 4) ->
    (Cin, 16*cout_pad); column layout (kh, kw, co), zero-padded channels."""
    cin, cout, K, _ = wt.shape
    wm = jnp.zeros((cin, K, K, cout_pad), jnp.float32)
    wm = wm.at[:, :, :, :cout].set(jnp.transpose(wt, (0, 2, 3, 1)))
    return wm.reshape(cin, K * K * cout_pad)


def _s2_layer_weight(wt, cin_pad, cout_pad):
    """ConvT(k4, s2, p1) weight (Cin, Cout, 4, 4) -> (9*cin_pad, 4*cout_pad).

    All four sub-pixel output phases (ph, pw) read the same 3x3 window of the
    1-padded input; phase (ph, pw) at window offset (dh, dw) uses kernel tap
    kh = ph + 3 - 2*dh, kw = pw + 3 - 2*dw when in [0, 4), else 0.
    Rows are laid out (dh, dw, ci); columns (ph, pw, co)."""
    cin, cout, K, _ = wt.shape
    wm = jnp.zeros((3, 3, cin_pad, 2, 2, cout_pad), jnp.float32)
    for dh in range(3):
        for dw in range(3):
            for ph in range(2):
                for pw in range(2):
                    kh = ph + 3 - 2 * dh
                    kw = pw + 3 - 2 * dw
                    if 0 <= kh < K and 0 <= kw < K:
                        wm = wm.at[dh, dw, :cin, ph, pw, :cout].set(wt[:, :, kh, kw])
    return wm.reshape(9 * cin_pad, 4 * cout_pad)


def _im2col_3x3(x):
    """x: (B, H, W, C) -> (B*H*W, 9*C): 3x3 windows of the 1-padded input."""
    B, H, W, C = x.shape
    xp = jnp.pad(x, ((0, 0), (1, 1), (1, 1), (0, 0)))
    cols = jnp.stack([xp[:, dh:dh + H, dw:dw + W, :]
                      for dh in range(3) for dw in range(3)], axis=3)
    return cols.reshape(B * H * W, 9 * C)


def _depth_to_space2(y, B, H, W, C):
    """(B*H*W, 4*C) with column layout (ph, pw, co) -> (B, 2H, 2W, C)."""
    y = y.reshape(B, H, W, 2, 2, C)
    y = jnp.transpose(y, (0, 1, 3, 2, 4, 5))
    return y.reshape(B, 2 * H, 2 * W, C)


def _bn_affine(s, ss, gamma, beta, c_pad, rows, positions):
    """Fold training-mode BatchNorm2d (biased batch stats) into per-column
    scale/shift vectors matching the (positions, c_pad) column layout."""
    c = gamma.shape[0]
    g = jnp.zeros((c_pad,), jnp.float32).at[:c].set(gamma)
    b = jnp.zeros((c_pad,), jnp.float32).at[:c].set(beta)
    cnt = float(rows * positions)
    s_c = s.reshape(positions, c_pad).sum(axis=0)
    ss_c = ss.reshape(positions, c_pad).sum(axis=0)
    mean = s_c / cnt
    var = jnp.maximum(ss_c / cnt - mean * mean, 0.0)
    scale_c = g * jax.lax.rsqrt(var + BN_EPS)
    shift_c = b - mean * scale_c
    return jnp.tile(scale_c, positions), jnp.tile(shift_c, positions)


# ----------------------------------------------------------------------------
# Generator forward (mirrors Networks/DCGAN_64.py::Generator.forward)
# ----------------------------------------------------------------------------
def generator_forward(in_noise, params, tanh=True):
    B, hidden = in_noise.shape

    # first_layer: ConvT(hidden -> C0, k4, s1, p0) + BN + ReLU.
    # On a 1x1 input this is a single matmul producing all 16 spatial taps.
    w0 = params["w0"]
    c0 = w0.shape[1]
    c0p = _round_up(c0, 8)                                    # 16*c0p lane-dense
    wm0 = _first_layer_weight(w0, c0p).astype(jnp.bfloat16)
    y, s, ss = conv_matmul_bn(in_noise.astype(jnp.bfloat16), wm0)   # (B, 16*c0p)
    scale, shift = _bn_affine(s, ss, params["g0"], params["b0"], c0p,
                              rows=B, positions=16)
    y = scale_shift_relu(y, scale, shift)
    x = y.reshape(B, KSIZE, KSIZE, c0p)                       # NHWC, pad chans are 0
    H = W = KSIZE
    cin_p = c0p

    # dconvs: three ConvT(k4, s2, p1) + BN + ReLU blocks.
    for i in (1, 2, 3):
        wt = params[f"w{i}"]
        cout = wt.shape[1]
        cout_p = _round_up(cout, 32)                          # 4*cout_p lane-dense
        wm = _s2_layer_weight(wt, cin_p, cout_p).astype(jnp.bfloat16)
        a = _im2col_3x3(x)                                    # (B*H*W, 9*cin_p) bf16
        y, s, ss = conv_matmul_bn(a, wm)                      # (B*H*W, 4*cout_p) bf16
        scale, shift = _bn_affine(s, ss, params[f"g{i}"], params[f"b{i}"], cout_p,
                                  rows=B * H * W, positions=4)
        y = scale_shift_relu(y, scale, shift)
        x = _depth_to_space2(y, B, H, W, cout_p)
        H, W = 2 * H, 2 * W
        cin_p = cout_p

    # last_layer: ConvT(C3 -> 3, k4, s2, p1) with Tanh / Sigmoid fused (no BN).
    wt = params["w4"]
    cout = wt.shape[1]
    cout_p = _round_up(cout, 32)
    wm = _s2_layer_weight(wt, cin_p, cout_p).astype(jnp.bfloat16)
    a = _im2col_3x3(x)
    y = conv_matmul_act(a, wm, "tanh" if tanh else "sigmoid")         # f32
    out = _depth_to_space2(y, B, H, W, cout_p)[:, :, :, :cout]        # drop pad chans
    return jnp.transpose(out, (0, 3, 1, 2))                           # NCHW


def init_params(key, hidden_dim, num_channels_fwd):
    """Deterministic synthetic parameters (same shapes as the PyTorch module)."""
    num_channels = list(reversed(num_channels_fwd))           # e.g. [512, 256, 128, 64]
    cins = [hidden_dim] + num_channels
    couts = num_channels + [COLOUR_CHANNELS]
    params = {}
    keys = jax.random.split(key, 3 * len(cins))
    for i, (ci, co) in enumerate(zip(cins, couts)):
        kw, kg, kb = keys[3 * i], keys[3 * i + 1], keys[3 * i + 2]
        params[f"w{i}"] = 0.05 * jax.random.normal(kw, (ci, co, KSIZE, KSIZE), jnp.float32)
        if i < len(cins) - 1:                                 # last layer has no BN
            params[f"g{i}"] = 1.0 + 0.1 * jax.random.normal(kg, (co,), jnp.float32)
            params[f"b{i}"] = 0.1 * jax.random.normal(kb, (co,), jnp.float32)
    return params


if __name__ == "__main__":
    key = jax.random.PRNGKey(0)
    k_param, k_noise = jax.random.split(key)

    # Small demo configuration (same architecture, scaled-down widths).
    B, hidden_dim = 2, 32
    demo_channels = [8, 16, 32, 64]     # stands in for NUM_CHANNELS = [64, 128, 256, 512]

    params = init_params(k_param, hidden_dim, demo_channels)
    noise = jax.random.normal(k_noise, (B, hidden_dim), jnp.float32)

    fwd = jax.jit(lambda n, p: generator_forward(n, p, tanh=True))
    out = fwd(noise, params)
    jax.block_until_ready(out)

    assert out.shape == (B, COLOUR_CHANNELS, 64, 64), out.shape
    assert bool(jnp.all(jnp.isfinite(out)))
    assert bool(jnp.all(jnp.abs(out) <= 1.0 + 1e-6))          # Tanh range
    print("KERNEL_OK")
</pallas_src>

<mosaic_0001>
module attributes {stable_mosaic.version = 11 : i64} {
  func.func @_convmm_bn_kernel(%arg0: i32, %arg1: memref<2x32xbf16, #tpu.memory_space<vmem>>, %arg2: memref<32x1024xbf16, #tpu.memory_space<vmem>>, %arg3: memref<2x1024xbf16, #tpu.memory_space<vmem>>, %arg4: memref<8x1024xf32, #tpu.memory_space<vmem>>, %arg5: memref<8x1024xf32, #tpu.memory_space<vmem>>) attributes {dimension_semantics = [#tpu.dimension_semantics<parallel>], iteration_bounds = array<i64: 1>, scalar_prefetch = 0 : i64, scratch_operands = 0 : i64, tpu.core_type = #tpu.core_type<tc>, window_params = [{transform_indices = @transform_0, window_bounds = array<i64: 2, 32>}, {pipeline_mode = #tpu.pipeline_mode<synchronous>, transform_indices = @transform_1, window_bounds = array<i64: 32, 1024>}, {transform_indices = @transform_2, window_bounds = array<i64: 2, 1024>}, {transform_indices = @transform_3, window_bounds = array<i64: 8, 1024>}, {transform_indices = @transform_4, window_bounds = array<i64: 8, 1024>}]} {
    %c0 = arith.constant 0 : index
    %c0_0 = arith.constant 0 : index
    %0 = vector.load %arg1[%c0, %c0_0] : memref<2x32xbf16, #tpu.memory_space<vmem>>, vector<2x32xbf16>
    %c0_1 = arith.constant 0 : index
    %c0_2 = arith.constant 0 : index
    %1 = vector.load %arg2[%c0_1, %c0_2] : memref<32x1024xbf16, #tpu.memory_space<vmem>>, vector<32x1024xbf16>
    %cst = arith.constant dense<0.000000e+00> : vector<2x1024xf32>
    %2 = tpu.matmul %0, %1, %cst {dimension_numbers = #tpu.dot_dimension_numbers<[1], [0], [0], [1], [0, 0, 1, 1], [], []>} : vector<2x32xbf16>, vector<32x1024xbf16>, vector<2x1024xf32> -> vector<2x1024xf32>
    %3 = arith.truncf %2 : vector<2x1024xf32> to vector<2x1024xbf16>
    %c0_3 = arith.constant 0 : index
    %c0_4 = arith.constant 0 : index
    %4 = vector.load %arg3[%c0_3, %c0_4] : memref<2x1024xbf16, #tpu.memory_space<vmem>>, vector<2x1024xbf16>
    tpu.vector_store %arg3[%c0_3, %c0_4], %3 {strides = array<i32>} : memref<2x1024xbf16, #tpu.memory_space<vmem>>, vector<2x1024xbf16>,
    %cst_5 = arith.constant dense<0.000000e+00> : vector<1024xf32>
    %5 = vector.multi_reduction <add>, %2, %cst_5 [0] : vector<2x1024xf32> to vector<1024xf32>
    %6 = vector.shape_cast %5 : vector<1024xf32> to vector<1x1024xf32>
    %7 = arith.mulf %2, %2 : vector<2x1024xf32>
    %cst_6 = arith.constant dense<0.000000e+00> : vector<1024xf32>
    %8 = vector.multi_reduction <add>, %7, %cst_6 [0] : vector<2x1024xf32> to vector<1024xf32>
    %9 = vector.shape_cast %8 : vector<1024xf32> to vector<1x1024xf32>
    %10 = tpu.iota {dimensions = array<i32: 0>} : vector<8x1024xi32>
    %c0_i32 = arith.constant 0 : i32
    %11 = vector.broadcast %c0_i32 : i32 to vector<8x1024xi32>
    %12 = arith.cmpi eq, %10, %11 : vector<8x1024xi32>
    %13 = vector.shape_cast %6 : vector<1x1024xf32> to vector<1x1024xf32>
    %14 = vector.broadcast %13 : vector<1x1024xf32> to vector<8x1024xf32>
    %cst_7 = arith.constant 0.000000e+00 : f32
    %15 = vector.broadcast %cst_7 : f32 to vector<8x1024xf32>
    %16 = arith.select %12, %14, %15 : vector<8x1024xi1>, vector<8x1024xf32>
    %c0_8 = arith.constant 0 : index
    %c0_9 = arith.constant 0 : index
    %17 = vector.load %arg4[%c0_8, %c0_9] : memref<8x1024xf32, #tpu.memory_space<vmem>>, vector<8x1024xf32>
    tpu.vector_store %arg4[%c0_8, %c0_9], %16 {strides = array<i32>} : memref<8x1024xf32, #tpu.memory_space<vmem>>, vector<8x1024xf32>,
    %c0_i32_10 = arith.constant 0 : i32
    %18 = vector.broadcast %c0_i32_10 : i32 to vector<8x1024xi32>
    %19 = arith.cmpi eq, %10, %18 : vector<8x1024xi32>
    %20 = vector.shape_cast %9 : vector<1x1024xf32> to vector<1x1024xf32>
    %21 = vector.broadcast %20 : vector<1x1024xf32> to vector<8x1024xf32>
    %cst_11 = arith.constant 0.000000e+00 : f32
    %22 = vector.broadcast %cst_11 : f32 to vector<8x1024xf32>
    %23 = arith.select %19, %21, %22 : vector<8x1024xi1>, vector<8x1024xf32>
    %c0_12 = arith.constant 0 : index
    %c0_13 = arith.constant 0 : index
    %24 = vector.load %arg5[%c0_12, %c0_13] : memref<8x1024xf32, #tpu.memory_space<vmem>>, vector<8x1024xf32>
    tpu.vector_store %arg5[%c0_12, %c0_13], %23 {strides = array<i32>} : memref<8x1024xf32, #tpu.memory_space<vmem>>, vector<8x1024xf32>,
    return
  }
  func.func @transform_0(%arg0: i32) -> (i32, i32) {
    %c0_i32 = arith.constant 0 : i32
    %c0_i32_0 = arith.constant 0 : i32
    return %arg0, %c0_i32 : i32, i32
  }
  func.func @transform_1(%arg0: i32) -> (i32, i32) {
    %c0_i32 = arith.constant 0 : i32
    %c0_i32_0 = arith.constant 0 : i32
    %c0_i32_1 = arith.constant 0 : i32
    return %c0_i32, %c0_i32_0 : i32, i32
  }
  func.func @transform_2(%arg0: i32) -> (i32, i32) {
    %c0_i32 = arith.constant 0 : i32
    %c0_i32_0 = arith.constant 0 : i32
    return %arg0, %c0_i32 : i32, i32
  }
  func.func @transform_3(%arg0: i32) -> (i32, i32) {
    %c0_i32 = arith.constant 0 : i32
    %c0_i32_0 = arith.constant 0 : i32
    return %arg0, %c0_i32 : i32, i32
  }
  func.func @transform_4(%arg0: i32) -> (i32, i32) {
    %c0_i32 = arith.constant 0 : i32
    %c0_i32_0 = arith.constant 0 : i32
    return %arg0, %c0_i32 : i32, i32
  }
}

module attributes {stable_mosaic.version = 11 : i64} {
  func.func @_bn_relu_kernel(%arg0: i32, %arg1: memref<2x1024xbf16, #tpu.memory_space<vmem>>, %arg2: memref<1x1024xf32, #tpu.memory_space<vmem>>, %arg3: memref<1x1024xf32, #tpu.memory_space<vmem>>, %arg4: memref<2x1024xbf16, #tpu.memory_space<vmem>>) attributes {dimension_semantics = [#tpu.dimension_semantics<parallel>], iteration_bounds = array<i64: 1>, scalar_prefetch = 0 : i64, scratch_operands = 0 : i64, tpu.core_type = #tpu.core_type<tc>, window_params = [{transform_indices = @transform_0, window_bounds = array<i64: 2, 1024>}, {pipeline_mode = #tpu.pipeline_mode<synchronous>, transform_indices = @transform_1, window_bounds = array<i64: 1, 1024>}, {pipeline_mode = #tpu.pipeline_mode<synchronous>, transform_indices = @transform_2, window_bounds = array<i64: 1, 1024>}, {transform_indices = @transform_3, window_bounds = array<i64: 2, 1024>}]} {
    %c0 = arith.constant 0 : index
    %c0_0 = arith.constant 0 : index
    %0 = vector.load %arg1[%c0, %c0_0] : memref<2x1024xbf16, #tpu.memory_space<vmem>>, vector<2x1024xbf16>
    %1 = arith.extf %0 : vector<2x1024xbf16> to vector<2x1024xf32>
    %c0_1 = arith.constant 0 : index
    %c0_2 = arith.constant 0 : index
    %2 = vector.load %arg2[%c0_1, %c0_2] : memref<1x1024xf32, #tpu.memory_space<vmem>>, vector<1x1024xf32>
    %3 = vector.broadcast %2 : vector<1x1024xf32> to vector<2x1024xf32>
    %4 = arith.mulf %1, %3 : vector<2x1024xf32>
    %c0_3 = arith.constant 0 : index
    %c0_4 = arith.constant 0 : index
    %5 = vector.load %arg3[%c0_3, %c0_4] : memref<1x1024xf32, #tpu.memory_space<vmem>>, vector<1x1024xf32>
    %6 = vector.broadcast %5 : vector<1x1024xf32> to vector<2x1024xf32>
    %7 = arith.addf %4, %6 : vector<2x1024xf32>
    %cst = arith.constant 0.000000e+00 : f32
    %8 = vector.broadcast %cst : f32 to vector<2x1024xf32>
    %9 = arith.maximumf %7, %8 : vector<2x1024xf32>
    %10 = arith.truncf %9 : vector<2x1024xf32> to vector<2x1024xbf16>
    %c0_5 = arith.constant 0 : index
    %c0_6 = arith.constant 0 : index
    %11 = vector.load %arg4[%c0_5, %c0_6] : memref<2x1024xbf16, #tpu.memory_space<vmem>>, vector<2x1024xbf16>
    tpu.vector_store %arg4[%c0_5, %c0_6], %10 {strides = array<i32>} : memref<2x1024xbf16, #tpu.memory_space<vmem>>, vector<2x1024xbf16>,
    return
  }
  func.func @transform_0(%arg0: i32) -> (i32, i32) {
    %c0_i32 = arith.constant 0 : i32
    %c0_i32_0 = arith.constant 0 : i32
    return %arg0, %c0_i32 : i32, i32
  }
  func.func @transform_1(%arg0: i32) -> (i32, i32) {
    %c0_i32 = arith.constant 0 : i32
    %c0_i32_0 = arith.constant 0 : i32
    %c0_i32_1 = arith.constant 0 : i32
    return %c0_i32, %c0_i32_0 : i32, i32
  }
  func.func @transform_2(%arg0: i32) -> (i32, i32) {
    %c0_i32 = arith.constant 0 : i32
    %c0_i32_0 = arith.constant 0 : i32
    %c0_i32_1 = arith.constant 0 : i32
    return %c0_i32, %c0_i32_0 : i32, i32
  }
  func.func @transform_3(%arg0: i32) -> (i32, i32) {
    %c0_i32 = arith.constant 0 : i32
    %c0_i32_0 = arith.constant 0 : i32
    return %arg0, %c0_i32 : i32, i32
  }
}

module attributes {stable_mosaic.version = 11 : i64} {
  func.func @_convmm_bn_kernel(%arg0: i32, %arg1: memref<32x576xbf16, #tpu.memory_space<vmem>>, %arg2: memref<576x128xbf16, #tpu.memory_space<vmem>>, %arg3: memref<32x128xbf16, #tpu.memory_space<vmem>>, %arg4: memref<8x128xf32, #tpu.memory_space<vmem>>, %arg5: memref<8x128xf32, #tpu.memory_space<vmem>>) attributes {dimension_semantics = [#tpu.dimension_semantics<parallel>], iteration_bounds = array<i64: 1>, scalar_prefetch = 0 : i64, scratch_operands = 0 : i64, tpu.core_type = #tpu.core_type<tc>, window_params = [{transform_indices = @transform_0, window_bounds = array<i64: 32, 576>}, {pipeline_mode = #tpu.pipeline_mode<synchronous>, transform_indices = @transform_1, window_bounds = array<i64: 576, 128>}, {transform_indices = @transform_2, window_bounds = array<i64: 32, 128>}, {transform_indices = @transform_3, window_bounds = array<i64: 8, 128>}, {transform_indices = @transform_4, window_bounds = array<i64: 8, 128>}]} {
    %c0 = arith.constant 0 : index
    %c0_0 = arith.constant 0 : index
    %0 = vector.load %arg1[%c0, %c0_0] : memref<32x576xbf16, #tpu.memory_space<vmem>>, vector<32x576xbf16>
    %c0_1 = arith.constant 0 : index
    %c0_2 = arith.constant 0 : index
    %1 = vector.load %arg2[%c0_1, %c0_2] : memref<576x128xbf16, #tpu.memory_space<vmem>>, vector<576x128xbf16>
    %cst = arith.constant dense<0.000000e+00> : vector<32x128xf32>
    %2 = tpu.matmul %0, %1, %cst {dimension_numbers = #tpu.dot_dimension_numbers<[1], [0], [0], [1], [0, 0, 1, 1], [], []>} : vector<32x576xbf16>, vector<576x128xbf16>, vector<32x128xf32> -> vector<32x128xf32>
    %3 = arith.truncf %2 : vector<32x128xf32> to vector<32x128xbf16>
    %c0_3 = arith.constant 0 : index
    %c0_4 = arith.constant 0 : index
    %4 = vector.load %arg3[%c0_3, %c0_4] : memref<32x128xbf16, #tpu.memory_space<vmem>>, vector<32x128xbf16>
    tpu.vector_store %arg3[%c0_3, %c0_4], %3 {strides = array<i32>} : memref<32x128xbf16, #tpu.memory_space<vmem>>, vector<32x128xbf16>,
    %cst_5 = arith.constant dense<0.000000e+00> : vector<128xf32>
    %5 = vector.multi_reduction <add>, %2, %cst_5 [0] : vector<32x128xf32> to vector<128xf32>
    %6 = vector.shape_cast %5 : vector<128xf32> to vector<1x128xf32>
    %7 = arith.mulf %2, %2 : vector<32x128xf32>
    %cst_6 = arith.constant dense<0.000000e+00> : vector<128xf32>
    %8 = vector.multi_reduction <add>, %7, %cst_6 [0] : vector<32x128xf32> to vector<128xf32>
    %9 = vector.shape_cast %8 : vector<128xf32> to vector<1x128xf32>
    %10 = tpu.iota {dimensions = array<i32: 0>} : vector<8x128xi32>
    %c0_i32 = arith.constant 0 : i32
    %11 = vector.broadcast %c0_i32 : i32 to vector<8x128xi32>
    %12 = arith.cmpi eq, %10, %11 : vector<8x128xi32>
    %13 = vector.shape_cast %6 : vector<1x128xf32> to vector<1x128xf32>
    %14 = vector.broadcast %13 : vector<1x128xf32> to vector<8x128xf32>
    %cst_7 = arith.constant 0.000000e+00 : f32
    %15 = vector.broadcast %cst_7 : f32 to vector<8x128xf32>
    %16 = arith.select %12, %14, %15 : vector<8x128xi1>, vector<8x128xf32>
    %c0_8 = arith.constant 0 : index
    %c0_9 = arith.constant 0 : index
    %17 = vector.load %arg4[%c0_8, %c0_9] : memref<8x128xf32, #tpu.memory_space<vmem>>, vector<8x128xf32>
    tpu.vector_store %arg4[%c0_8, %c0_9], %16 {strides = array<i32>} : memref<8x128xf32, #tpu.memory_space<vmem>>, vector<8x128xf32>,
    %c0_i32_10 = arith.constant 0 : i32
    %18 = vector.broadcast %c0_i32_10 : i32 to vector<8x128xi32>
    %19 = arith.cmpi eq, %10, %18 : vector<8x128xi32>
    %20 = vector.shape_cast %9 : vector<1x128xf32> to vector<1x128xf32>
    %21 = vector.broadcast %20 : vector<1x128xf32> to vector<8x128xf32>
    %cst_11 = arith.constant 0.000000e+00 : f32
    %22 = vector.broadcast %cst_11 : f32 to vector<8x128xf32>
    %23 = arith.select %19, %21, %22 : vector<8x128xi1>, vector<8x128xf32>
    %c0_12 = arith.constant 0 : index
    %c0_13 = arith.constant 0 : index
    %24 = vector.load %arg5[%c0_12, %c0_13] : memref<8x128xf32, #tpu.memory_space<vmem>>, vector<8x128xf32>
    tpu.vector_store %arg5[%c0_12, %c0_13], %23 {strides = array<i32>} : memref<8x128xf32, #tpu.memory_space<vmem>>, vector<8x128xf32>,
    return
  }
  func.func @transform_0(%arg0: i32) -> (i32, i32) {
    %c0_i32 = arith.constant 0 : i32
    %c0_i32_0 = arith.constant 0 : i32
    return %arg0, %c0_i32 : i32, i32
  }
  func.func @transform_1(%arg0: i32) -> (i32, i32) {
    %c0_i32 = arith.constant 0 : i32
    %c0_i32_0 = arith.constant 0 : i32
    %c0_i32_1 = arith.constant 0 : i32
    return %c0_i32, %c0_i32_0 : i32, i32
  }
  func.func @transform_2(%arg0: i32) -> (i32, i32) {
    %c0_i32 = arith.constant 0 : i32
    %c0_i32_0 = arith.constant 0 : i32
    return %arg0, %c0_i32 : i32, i32
  }
  func.func @transform_3(%arg0: i32) -> (i32, i32) {
    %c0_i32 = arith.constant 0 : i32
    %c0_i32_0 = arith.constant 0 : i32
    return %arg0, %c0_i32 : i32, i32
  }
  func.func @transform_4(%arg0: i32) -> (i32, i32) {
    %c0_i32 = arith.constant 0 : i32
    %c0_i32_0 = arith.constant 0 : i32
    return %arg0, %c0_i32 : i32, i32
  }
}

module attributes {stable_mosaic.version = 11 : i64} {
  func.func @_bn_relu_kernel(%arg0: i32, %arg1: memref<32x128xbf16, #tpu.memory_space<vmem>>, %arg2: memref<1x128xf32, #tpu.memory_space<vmem>>, %arg3: memref<1x128xf32, #tpu.memory_space<vmem>>, %arg4: memref<32x128xbf16, #tpu.memory_space<vmem>>) attributes {dimension_semantics = [#tpu.dimension_semantics<parallel>], iteration_bounds = array<i64: 1>, scalar_prefetch = 0 : i64, scratch_operands = 0 : i64, tpu.core_type = #tpu.core_type<tc>, window_params = [{transform_indices = @transform_0, window_bounds = array<i64: 32, 128>}, {pipeline_mode = #tpu.pipeline_mode<synchronous>, transform_indices = @transform_1, window_bounds = array<i64: 1, 128>}, {pipeline_mode = #tpu.pipeline_mode<synchronous>, transform_indices = @transform_2, window_bounds = array<i64: 1, 128>}, {transform_indices = @transform_3, window_bounds = array<i64: 32, 128>}]} {
    %c0 = arith.constant 0 : index
    %c0_0 = arith.constant 0 : index
    %0 = vector.load %arg1[%c0, %c0_0] : memref<32x128xbf16, #tpu.memory_space<vmem>>, vector<32x128xbf16>
    %1 = arith.extf %0 : vector<32x128xbf16> to vector<32x128xf32>
    %c0_1 = arith.constant 0 : index
    %c0_2 = arith.constant 0 : index
    %2 = vector.load %arg2[%c0_1, %c0_2] : memref<1x128xf32, #tpu.memory_space<vmem>>, vector<1x128xf32>
    %3 = vector.broadcast %2 : vector<1x128xf32> to vector<32x128xf32>
    %4 = arith.mulf %1, %3 : vector<32x128xf32>
    %c0_3 = arith.constant 0 : index
    %c0_4 = arith.constant 0 : index
    %5 = vector.load %arg3[%c0_3, %c0_4] : memref<1x128xf32, #tpu.memory_space<vmem>>, vector<1x128xf32>
    %6 = vector.broadcast %5 : vector<1x128xf32> to vector<32x128xf32>
    %7 = arith.addf %4, %6 : vector<32x128xf32>
    %cst = arith.constant 0.000000e+00 : f32
    %8 = vector.broadcast %cst : f32 to vector<32x128xf32>
    %9 = arith.maximumf %7, %8 : vector<32x128xf32>
    %10 = arith.truncf %9 : vector<32x128xf32> to vector<32x128xbf16>
    %c0_5 = arith.constant 0 : index
    %c0_6 = arith.constant 0 : index
    %11 = vector.load %arg4[%c0_5, %c0_6] : memref<32x128xbf16, #tpu.memory_space<vmem>>, vector<32x128xbf16>
    tpu.vector_store %arg4[%c0_5, %c0_6], %10 {strides = array<i32>} : memref<32x128xbf16, #tpu.memory_space<vmem>>, vector<32x128xbf16>,
    return
  }
  func.func @transform_0(%arg0: i32) -> (i32, i32) {
    %c0_i32 = arith.constant 0 : i32
    %c0_i32_0 = arith.constant 0 : i32
    return %arg0, %c0_i32 : i32, i32
  }
  func.func @transform_1(%arg0: i32) -> (i32, i32) {
    %c0_i32 = arith.constant 0 : i32
    %c0_i32_0 = arith.constant 0 : i32
    %c0_i32_1 = arith.constant 0 : i32
    return %c0_i32, %c0_i32_0 : i32, i32
  }
  func.func @transform_2(%arg0: i32) -> (i32, i32) {
    %c0_i32 = arith.constant 0 : i32
    %c0_i32_0 = arith.constant 0 : i32
    %c0_i32_1 = arith.constant 0 : i32
    return %c0_i32, %c0_i32_0 : i32, i32
  }
  func.func @transform_3(%arg0: i32) -> (i32, i32) {
    %c0_i32 = arith.constant 0 : i32
    %c0_i32_0 = arith.constant 0 : i32
    return %arg0, %c0_i32 : i32, i32
  }
}

module attributes {stable_mosaic.version = 11 : i64} {
  func.func @_convmm_bn_kernel(%arg0: i32, %arg1: memref<128x288xbf16, #tpu.memory_space<vmem>>, %arg2: memref<288x128xbf16, #tpu.memory_space<vmem>>, %arg3: memref<128x128xbf16, #tpu.memory_space<vmem>>, %arg4: memref<8x128xf32, #tpu.memory_space<vmem>>, %arg5: memref<8x128xf32, #tpu.memory_space<vmem>>) attributes {dimension_semantics = [#tpu.dimension_semantics<parallel>], iteration_bounds = array<i64: 1>, scalar_prefetch = 0 : i64, scratch_operands = 0 : i64, tpu.core_type = #tpu.core_type<tc>, window_params = [{transform_indices = @transform_0, window_bounds = array<i64: 128, 288>}, {pipeline_mode = #tpu.pipeline_mode<synchronous>, transform_indices = @transform_1, window_bounds = array<i64: 288, 128>}, {transform_indices = @transform_2, window_bounds = array<i64: 128, 128>}, {transform_indices = @transform_3, window_bounds = array<i64: 8, 128>}, {transform_indices = @transform_4, window_bounds = array<i64: 8, 128>}]} {
    %c0 = arith.constant 0 : index
    %c0_0 = arith.constant 0 : index
    %0 = vector.load %arg1[%c0, %c0_0] : memref<128x288xbf16, #tpu.memory_space<vmem>>, vector<128x288xbf16>
    %c0_1 = arith.constant 0 : index
    %c0_2 = arith.constant 0 : index
    %1 = vector.load %arg2[%c0_1, %c0_2] : memref<288x128xbf16, #tpu.memory_space<vmem>>, vector<288x128xbf16>
    %cst = arith.constant dense<0.000000e+00> : vector<128x128xf32>
    %2 = tpu.matmul %0, %1, %cst {dimension_numbers = #tpu.dot_dimension_numbers<[1], [0], [0], [1], [0, 0, 1, 1], [], []>} : vector<128x288xbf16>, vector<288x128xbf16>, vector<128x128xf32> -> vector<128x128xf32>
    %3 = arith.truncf %2 : vector<128x128xf32> to vector<128x128xbf16>
    %c0_3 = arith.constant 0 : index
    %c0_4 = arith.constant 0 : index
    %4 = vector.load %arg3[%c0_3, %c0_4] : memref<128x128xbf16, #tpu.memory_space<vmem>>, vector<128x128xbf16>
    tpu.vector_store %arg3[%c0_3, %c0_4], %3 {strides = array<i32>} : memref<128x128xbf16, #tpu.memory_space<vmem>>, vector<128x128xbf16>,
    %cst_5 = arith.constant dense<0.000000e+00> : vector<128xf32>
    %5 = vector.multi_reduction <add>, %2, %cst_5 [0] : vector<128x128xf32> to vector<128xf32>
    %6 = vector.shape_cast %5 : vector<128xf32> to vector<1x128xf32>
    %7 = arith.mulf %2, %2 : vector<128x128xf32>
    %cst_6 = arith.constant dense<0.000000e+00> : vector<128xf32>
    %8 = vector.multi_reduction <add>, %7, %cst_6 [0] : vector<128x128xf32> to vector<128xf32>
    %9 = vector.shape_cast %8 : vector<128xf32> to vector<1x128xf32>
    %10 = tpu.iota {dimensions = array<i32: 0>} : vector<8x128xi32>
    %c0_i32 = arith.constant 0 : i32
    %11 = vector.broadcast %c0_i32 : i32 to vector<8x128xi32>
    %12 = arith.cmpi eq, %10, %11 : vector<8x128xi32>
    %13 = vector.shape_cast %6 : vector<1x128xf32> to vector<1x128xf32>
    %14 = vector.broadcast %13 : vector<1x128xf32> to vector<8x128xf32>
    %cst_7 = arith.constant 0.000000e+00 : f32
    %15 = vector.broadcast %cst_7 : f32 to vector<8x128xf32>
    %16 = arith.select %12, %14, %15 : vector<8x128xi1>, vector<8x128xf32>
    %c0_8 = arith.constant 0 : index
    %c0_9 = arith.constant 0 : index
    %17 = vector.load %arg4[%c0_8, %c0_9] : memref<8x128xf32, #tpu.memory_space<vmem>>, vector<8x128xf32>
    tpu.vector_store %arg4[%c0_8, %c0_9], %16 {strides = array<i32>} : memref<8x128xf32, #tpu.memory_space<vmem>>, vector<8x128xf32>,
    %c0_i32_10 = arith.constant 0 : i32
    %18 = vector.broadcast %c0_i32_10 : i32 to vector<8x128xi32>
    %19 = arith.cmpi eq, %10, %18 : vector<8x128xi32>
    %20 = vector.shape_cast %9 : vector<1x128xf32> to vector<1x128xf32>
    %21 = vector.broadcast %20 : vector<1x128xf32> to vector<8x128xf32>
    %cst_11 = arith.constant 0.000000e+00 : f32
    %22 = vector.broadcast %cst_11 : f32 to vector<8x128xf32>
    %23 = arith.select %19, %21, %22 : vector<8x128xi1>, vector<8x128xf32>
    %c0_12 = arith.constant 0 : index
    %c0_13 = arith.constant 0 : index
    %24 = vector.load %arg5[%c0_12, %c0_13] : memref<8x128xf32, #tpu.memory_space<vmem>>, vector<8x128xf32>
    tpu.vector_store %arg5[%c0_12, %c0_13], %23 {strides = array<i32>} : memref<8x128xf32, #tpu.memory_space<vmem>>, vector<8x128xf32>,
    return
  }
  func.func @transform_0(%arg0: i32) -> (i32, i32) {
    %c0_i32 = arith.constant 0 : i32
    %c0_i32_0 = arith.constant 0 : i32
    return %arg0, %c0_i32 : i32, i32
  }
  func.func @transform_1(%arg0: i32) -> (i32, i32) {
    %c0_i32 = arith.constant 0 : i32
    %c0_i32_0 = arith.constant 0 : i32
    %c0_i32_1 = arith.constant 0 : i32
    return %c0_i32, %c0_i32_0 : i32, i32
  }
  func.func @transform_2(%arg0: i32) -> (i32, i32) {
    %c0_i32 = arith.constant 0 : i32
    %c0_i32_0 = arith.constant 0 : i32
    return %arg0, %c0_i32 : i32, i32
  }
  func.func @transform_3(%arg0: i32) -> (i32, i32) {
    %c0_i32 = arith.constant 0 : i32
    %c0_i32_0 = arith.constant 0 : i32
    return %arg0, %c0_i32 : i32, i32
  }
  func.func @transform_4(%arg0: i32) -> (i32, i32) {
    %c0_i32 = arith.constant 0 : i32
    %c0_i32_0 = arith.constant 0 : i32
    return %arg0, %c0_i32 : i32, i32
  }
}

module attributes {stable_mosaic.version = 11 : i64} {
  func.func @_bn_relu_kernel(%arg0: i32, %arg1: memref<128x128xbf16, #tpu.memory_space<vmem>>, %arg2: memref<1x128xf32, #tpu.memory_space<vmem>>, %arg3: memref<1x128xf32, #tpu.memory_space<vmem>>, %arg4: memref<128x128xbf16, #tpu.memory_space<vmem>>) attributes {dimension_semantics = [#tpu.dimension_semantics<parallel>], iteration_bounds = array<i64: 1>, scalar_prefetch = 0 : i64, scratch_operands = 0 : i64, tpu.core_type = #tpu.core_type<tc>, window_params = [{transform_indices = @transform_0, window_bounds = array<i64: 128, 128>}, {pipeline_mode = #tpu.pipeline_mode<synchronous>, transform_indices = @transform_1, window_bounds = array<i64: 1, 128>}, {pipeline_mode = #tpu.pipeline_mode<synchronous>, transform_indices = @transform_2, window_bounds = array<i64: 1, 128>}, {transform_indices = @transform_3, window_bounds = array<i64: 128, 128>}]} {
    %c0 = arith.constant 0 : index
    %c0_0 = arith.constant 0 : index
    %0 = vector.load %arg1[%c0, %c0_0] : memref<128x128xbf16, #tpu.memory_space<vmem>>, vector<128x128xbf16>
    %1 = arith.extf %0 : vector<128x128xbf16> to vector<128x128xf32>
    %c0_1 = arith.constant 0 : index
    %c0_2 = arith.constant 0 : index
    %2 = vector.load %arg2[%c0_1, %c0_2] : memref<1x128xf32, #tpu.memory_space<vmem>>, vector<1x128xf32>
    %3 = vector.broadcast %2 : vector<1x128xf32> to vector<128x128xf32>
    %4 = arith.mulf %1, %3 : vector<128x128xf32>
    %c0_3 = arith.constant 0 : index
    %c0_4 = arith.constant 0 : index
    %5 = vector.load %arg3[%c0_3, %c0_4] : memref<1x128xf32, #tpu.memory_space<vmem>>, vector<1x128xf32>
    %6 = vector.broadcast %5 : vector<1x128xf32> to vector<128x128xf32>
    %7 = arith.addf %4, %6 : vector<128x128xf32>
    %cst = arith.constant 0.000000e+00 : f32
    %8 = vector.broadcast %cst : f32 to vector<128x128xf32>
    %9 = arith.maximumf %7, %8 : vector<128x128xf32>
    %10 = arith.truncf %9 : vector<128x128xf32> to vector<128x128xbf16>
    %c0_5 = arith.constant 0 : index
    %c0_6 = arith.constant 0 : index
    %11 = vector.load %arg4[%c0_5, %c0_6] : memref<128x128xbf16, #tpu.memory_space<vmem>>, vector<128x128xbf16>
    tpu.vector_store %arg4[%c0_5, %c0_6], %10 {strides = array<i32>} : memref<128x128xbf16, #tpu.memory_space<vmem>>, vector<128x128xbf16>,
    return
  }
  func.func @transform_0(%arg0: i32) -> (i32, i32) {
    %c0_i32 = arith.constant 0 : i32
    %c0_i32_0 = arith.constant 0 : i32
    return %arg0, %c0_i32 : i32, i32
  }
  func.func @transform_1(%arg0: i32) -> (i32, i32) {
    %c0_i32 = arith.constant 0 : i32
    %c0_i32_0 = arith.constant 0 : i32
    %c0_i32_1 = arith.constant 0 : i32
    return %c0_i32, %c0_i32_0 : i32, i32
  }
  func.func @transform_2(%arg0: i32) -> (i32, i32) {
    %c0_i32 = arith.constant 0 : i32
    %c0_i32_0 = arith.constant 0 : i32
    %c0_i32_1 = arith.constant 0 : i32
    return %c0_i32, %c0_i32_0 : i32, i32
  }
  func.func @transform_3(%arg0: i32) -> (i32, i32) {
    %c0_i32 = arith.constant 0 : i32
    %c0_i32_0 = arith.constant 0 : i32
    return %arg0, %c0_i32 : i32, i32
  }
}

module attributes {stable_mosaic.version = 11 : i64} {
  func.func @_convmm_bn_kernel(%arg0: i32, %arg1: memref<512x288xbf16, #tpu.memory_space<vmem>>, %arg2: memref<288x128xbf16, #tpu.memory_space<vmem>>, %arg3: memref<512x128xbf16, #tpu.memory_space<vmem>>, %arg4: memref<8x128xf32, #tpu.memory_space<vmem>>, %arg5: memref<8x128xf32, #tpu.memory_space<vmem>>) attributes {dimension_semantics = [#tpu.dimension_semantics<parallel>], iteration_bounds = array<i64: 1>, scalar_prefetch = 0 : i64, scratch_operands = 0 : i64, tpu.core_type = #tpu.core_type<tc>, window_params = [{transform_indices = @transform_0, window_bounds = array<i64: 512, 288>}, {pipeline_mode = #tpu.pipeline_mode<synchronous>, transform_indices = @transform_1, window_bounds = array<i64: 288, 128>}, {transform_indices = @transform_2, window_bounds = array<i64: 512, 128>}, {transform_indices = @transform_3, window_bounds = array<i64: 8, 128>}, {transform_indices = @transform_4, window_bounds = array<i64: 8, 128>}]} {
    %c0 = arith.constant 0 : index
    %c0_0 = arith.constant 0 : index
    %0 = vector.load %arg1[%c0, %c0_0] : memref<512x288xbf16, #tpu.memory_space<vmem>>, vector<512x288xbf16>
    %c0_1 = arith.constant 0 : index
    %c0_2 = arith.constant 0 : index
    %1 = vector.load %arg2[%c0_1, %c0_2] : memref<288x128xbf16, #tpu.memory_space<vmem>>, vector<288x128xbf16>
    %cst = arith.constant dense<0.000000e+00> : vector<512x128xf32>
    %2 = tpu.matmul %0, %1, %cst {dimension_numbers = #tpu.dot_dimension_numbers<[1], [0], [0], [1], [0, 0, 1, 1], [], []>} : vector<512x288xbf16>, vector<288x128xbf16>, vector<512x128xf32> -> vector<512x128xf32>
    %3 = arith.truncf %2 : vector<512x128xf32> to vector<512x128xbf16>
    %c0_3 = arith.constant 0 : index
    %c0_4 = arith.constant 0 : index
    %4 = vector.load %arg3[%c0_3, %c0_4] : memref<512x128xbf16, #tpu.memory_space<vmem>>, vector<512x128xbf16>
    tpu.vector_store %arg3[%c0_3, %c0_4], %3 {strides = array<i32>} : memref<512x128xbf16, #tpu.memory_space<vmem>>, vector<512x128xbf16>,
    %cst_5 = arith.constant dense<0.000000e+00> : vector<128xf32>
    %5 = vector.multi_reduction <add>, %2, %cst_5 [0] : vector<512x128xf32> to vector<128xf32>
    %6 = vector.shape_cast %5 : vector<128xf32> to vector<1x128xf32>
    %7 = arith.mulf %2, %2 : vector<512x128xf32>
    %cst_6 = arith.constant dense<0.000000e+00> : vector<128xf32>
    %8 = vector.multi_reduction <add>, %7, %cst_6 [0] : vector<512x128xf32> to vector<128xf32>
    %9 = vector.shape_cast %8 : vector<128xf32> to vector<1x128xf32>
    %10 = tpu.iota {dimensions = array<i32: 0>} : vector<8x128xi32>
    %c0_i32 = arith.constant 0 : i32
    %11 = vector.broadcast %c0_i32 : i32 to vector<8x128xi32>
    %12 = arith.cmpi eq, %10, %11 : vector<8x128xi32>
    %13 = vector.shape_cast %6 : vector<1x128xf32> to vector<1x128xf32>
    %14 = vector.broadcast %13 : vector<1x128xf32> to vector<8x128xf32>
    %cst_7 = arith.constant 0.000000e+00 : f32
    %15 = vector.broadcast %cst_7 : f32 to vector<8x128xf32>
    %16 = arith.select %12, %14, %15 : vector<8x128xi1>, vector<8x128xf32>
    %c0_8 = arith.constant 0 : index
    %c0_9 = arith.constant 0 : index
    %17 = vector.load %arg4[%c0_8, %c0_9] : memref<8x128xf32, #tpu.memory_space<vmem>>, vector<8x128xf32>
    tpu.vector_store %arg4[%c0_8, %c0_9], %16 {strides = array<i32>} : memref<8x128xf32, #tpu.memory_space<vmem>>, vector<8x128xf32>,
    %c0_i32_10 = arith.constant 0 : i32
    %18 = vector.broadcast %c0_i32_10 : i32 to vector<8x128xi32>
    %19 = arith.cmpi eq, %10, %18 : vector<8x128xi32>
    %20 = vector.shape_cast %9 : vector<1x128xf32> to vector<1x128xf32>
    %21 = vector.broadcast %20 : vector<1x128xf32> to vector<8x128xf32>
    %cst_11 = arith.constant 0.000000e+00 : f32
    %22 = vector.broadcast %cst_11 : f32 to vector<8x128xf32>
    %23 = arith.select %19, %21, %22 : vector<8x128xi1>, vector<8x128xf32>
    %c0_12 = arith.constant 0 : index
    %c0_13 = arith.constant 0 : index
    %24 = vector.load %arg5[%c0_12, %c0_13] : memref<8x128xf32, #tpu.memory_space<vmem>>, vector<8x128xf32>
    tpu.vector_store %arg5[%c0_12, %c0_13], %23 {strides = array<i32>} : memref<8x128xf32, #tpu.memory_space<vmem>>, vector<8x128xf32>,
    return
  }
  func.func @transform_0(%arg0: i32) -> (i32, i32) {
    %c0_i32 = arith.constant 0 : i32
    %c0_i32_0 = arith.constant 0 : i32
    return %arg0, %c0_i32 : i32, i32
  }
  func.func @transform_1(%arg0: i32) -> (i32, i32) {
    %c0_i32 = arith.constant 0 : i32
    %c0_i32_0 = arith.constant 0 : i32
    %c0_i32_1 = arith.constant 0 : i32
    return %c0_i32, %c0_i32_0 : i32, i32
  }
  func.func @transform_2(%arg0: i32) -> (i32, i32) {
    %c0_i32 = arith.constant 0 : i32
    %c0_i32_0 = arith.constant 0 : i32
    return %arg0, %c0_i32 : i32, i32
  }
  func.func @transform_3(%arg0: i32) -> (i32, i32) {
    %c0_i32 = arith.constant 0 : i32
    %c0_i32_0 = arith.constant 0 : i32
    return %arg0, %c0_i32 : i32, i32
  }
  func.func @transform_4(%arg0: i32) -> (i32, i32) {
    %c0_i32 = arith.constant 0 : i32
    %c0_i32_0 = arith.constant 0 : i32
    return %arg0, %c0_i32 : i32, i32
  }
}

module attributes {stable_mosaic.version = 11 : i64} {
  func.func @_bn_relu_kernel(%arg0: i32, %arg1: memref<512x128xbf16, #tpu.memory_space<vmem>>, %arg2: memref<1x128xf32, #tpu.memory_space<vmem>>, %arg3: memref<1x128xf32, #tpu.memory_space<vmem>>, %arg4: memref<512x128xbf16, #tpu.memory_space<vmem>>) attributes {dimension_semantics = [#tpu.dimension_semantics<parallel>], iteration_bounds = array<i64: 1>, scalar_prefetch = 0 : i64, scratch_operands = 0 : i64, tpu.core_type = #tpu.core_type<tc>, window_params = [{transform_indices = @transform_0, window_bounds = array<i64: 512, 128>}, {pipeline_mode = #tpu.pipeline_mode<synchronous>, transform_indices = @transform_1, window_bounds = array<i64: 1, 128>}, {pipeline_mode = #tpu.pipeline_mode<synchronous>, transform_indices = @transform_2, window_bounds = array<i64: 1, 128>}, {transform_indices = @transform_3, window_bounds = array<i64: 512, 128>}]} {
    %c0 = arith.constant 0 : index
    %c0_0 = arith.constant 0 : index
    %0 = vector.load %arg1[%c0, %c0_0] : memref<512x128xbf16, #tpu.memory_space<vmem>>, vector<512x128xbf16>
    %1 = arith.extf %0 : vector<512x128xbf16> to vector<512x128xf32>
    %c0_1 = arith.constant 0 : index
    %c0_2 = arith.constant 0 : index
    %2 = vector.load %arg2[%c0_1, %c0_2] : memref<1x128xf32, #tpu.memory_space<vmem>>, vector<1x128xf32>
    %3 = vector.broadcast %2 : vector<1x128xf32> to vector<512x128xf32>
    %4 = arith.mulf %1, %3 : vector<512x128xf32>
    %c0_3 = arith.constant 0 : index
    %c0_4 = arith.constant 0 : index
    %5 = vector.load %arg3[%c0_3, %c0_4] : memref<1x128xf32, #tpu.memory_space<vmem>>, vector<1x128xf32>
    %6 = vector.broadcast %5 : vector<1x128xf32> to vector<512x128xf32>
    %7 = arith.addf %4, %6 : vector<512x128xf32>
    %cst = arith.constant 0.000000e+00 : f32
    %8 = vector.broadcast %cst : f32 to vector<512x128xf32>
    %9 = arith.maximumf %7, %8 : vector<512x128xf32>
    %10 = arith.truncf %9 : vector<512x128xf32> to vector<512x128xbf16>
    %c0_5 = arith.constant 0 : index
    %c0_6 = arith.constant 0 : index
    %11 = vector.load %arg4[%c0_5, %c0_6] : memref<512x128xbf16, #tpu.memory_space<vmem>>, vector<512x128xbf16>
    tpu.vector_store %arg4[%c0_5, %c0_6], %10 {strides = array<i32>} : memref<512x128xbf16, #tpu.memory_space<vmem>>, vector<512x128xbf16>,
    return
  }
  func.func @transform_0(%arg0: i32) -> (i32, i32) {
    %c0_i32 = arith.constant 0 : i32
    %c0_i32_0 = arith.constant 0 : i32
    return %arg0, %c0_i32 : i32, i32
  }
  func.func @transform_1(%arg0: i32) -> (i32, i32) {
    %c0_i32 = arith.constant 0 : i32
    %c0_i32_0 = arith.constant 0 : i32
    %c0_i32_1 = arith.constant 0 : i32
    return %c0_i32, %c0_i32_0 : i32, i32
  }
  func.func @transform_2(%arg0: i32) -> (i32, i32) {
    %c0_i32 = arith.constant 0 : i32
    %c0_i32_0 = arith.constant 0 : i32
    %c0_i32_1 = arith.constant 0 : i32
    return %c0_i32, %c0_i32_0 : i32, i32
  }
  func.func @transform_3(%arg0: i32) -> (i32, i32) {
    %c0_i32 = arith.constant 0 : i32
    %c0_i32_0 = arith.constant 0 : i32
    return %arg0, %c0_i32 : i32, i32
  }
}

module attributes {stable_mosaic.version = 11 : i64} {
  func.func @_convmm_act_kernel(%arg0: i32, %arg1: memref<512x288xbf16, #tpu.memory_space<vmem>>, %arg2: memref<288x128xbf16, #tpu.memory_space<vmem>>, %arg3: memref<512x128xf32, #tpu.memory_space<vmem>>) attributes {dimension_semantics = [#tpu.dimension_semantics<parallel>], iteration_bounds = array<i64: 4>, scalar_prefetch = 0 : i64, scratch_operands = 0 : i64, tpu.core_type = #tpu.core_type<tc>, window_params = [{transform_indices = @transform_0, window_bounds = array<i64: 512, 288>}, {pipeline_mode = #tpu.pipeline_mode<synchronous>, transform_indices = @transform_1, window_bounds = array<i64: 288, 128>}, {transform_indices = @transform_2, window_bounds = array<i64: 512, 128>}]} {
    %c0 = arith.constant 0 : index
    %c0_0 = arith.constant 0 : index
    %0 = vector.load %arg1[%c0, %c0_0] : memref<512x288xbf16, #tpu.memory_space<vmem>>, vector<512x288xbf16>
    %c0_1 = arith.constant 0 : index
    %c0_2 = arith.constant 0 : index
    %1 = vector.load %arg2[%c0_1, %c0_2] : memref<288x128xbf16, #tpu.memory_space<vmem>>, vector<288x128xbf16>
    %cst = arith.constant dense<0.000000e+00> : vector<512x128xf32>
    %2 = tpu.matmul %0, %1, %cst {dimension_numbers = #tpu.dot_dimension_numbers<[1], [0], [0], [1], [0, 0, 1, 1], [], []>} : vector<512x288xbf16>, vector<288x128xbf16>, vector<512x128xf32> -> vector<512x128xf32>
    %3 = math.tanh %2 : vector<512x128xf32>
    %c0_3 = arith.constant 0 : index
    %c0_4 = arith.constant 0 : index
    %4 = vector.load %arg3[%c0_3, %c0_4] : memref<512x128xf32, #tpu.memory_space<vmem>>, vector<512x128xf32>
    tpu.vector_store %arg3[%c0_3, %c0_4], %3 {strides = array<i32>} : memref<512x128xf32, #tpu.memory_space<vmem>>, vector<512x128xf32>,
    return
  }
  func.func @transform_0(%arg0: i32) -> (i32, i32) {
    %c0_i32 = arith.constant 0 : i32
    %c0_i32_0 = arith.constant 0 : i32
    return %arg0, %c0_i32 : i32, i32
  }
  func.func @transform_1(%arg0: i32) -> (i32, i32) {
    %c0_i32 = arith.constant 0 : i32
    %c0_i32_0 = arith.constant 0 : i32
    %c0_i32_1 = arith.constant 0 : i32
    return %c0_i32, %c0_i32_0 : i32, i32
  }
  func.func @transform_2(%arg0: i32) -> (i32, i32) {
    %c0_i32 = arith.constant 0 : i32
    %c0_i32_0 = arith.constant 0 : i32
    return %arg0, %c0_i32 : i32, i32
  }
}

</mosaic_0001>

<llo_original>
// kernel: _lambda_.9
$region0: #{_lambda_.9}
  #allocation0 [shape = 'u32[]', space=smem, size = 0x4, offset = 0x4, fixed_abs, tag = 'smem constant byte address 0x4 - core index']
  #allocation1 [shape = 'u32[144,128]{1,0:T(1,128)}', space=vmem, size = 0x12000, scoped, tag = 'internal scratch']
  %s0 = inlined_call_operand.vmem [shape: bf16[2,32], index: 0, kind: input, shape index: {}]
  %s1 = inlined_call_operand.vmem [shape: bf16[32,1024], index: 1, kind: input, shape index: {}]
  %s2 = inlined_call_operand.vmem [shape: bf16[2,1024], index: 2, kind: output, shape index: {0}]
  %s3 = inlined_call_operand.vmem [shape: f32[8,1024], index: 3, kind: output, shape index: {1}]
  %s4 = inlined_call_operand.vmem [shape: f32[8,1024], index: 4, kind: output, shape index: {2}]
  %5 = xla_tuple %s2, %s3, %s4
  %s6 = sld [smem:[#allocation0]]
  $region34: #{_lambda_.9} parent=0
    _
  %s8 = ssub.s32 1, %s6
  %s9 = scalar_select 0, %s8, %s6
  // Predicated region
  $region2: #{_lambda_.9} parent=0 // pred_check
    _
  $region3: #{_lambda_.9} parent=0 // pred_check_branch
    %11 = sbr.rel (0) target = $region5
  $region4: #{_lambda_.9} parent=0 // pred_region
    _
  $region5: #{_lambda_.9} parent=0 // pred_fallthru
    _
  // Predicated region
  $region6: #{_lambda_.9} parent=0 // pred_check
    _
  $region7: #{_lambda_.9} parent=0 // pred_check_branch
    %13 = sbr.rel (0) target = $region9
  $region8: #{_lambda_.9} parent=0 // pred_region
    _
  $region9: #{_lambda_.9} parent=0 // pred_fallthru
    _
  %v15 = vld [vmem:[%s0] sm:$0x1]
  %v16 = vld [vmem:[%s1] sm:$0xff]
  %v17 = vld [vmem:[%s1 + $0x8] sm:$0xff]
  %v18 = vld [vmem:[%s1 + $0x10] sm:$0xff]
  %v19 = vld [vmem:[%s1 + $0x18] sm:$0xff]
  %v20 = vld [vmem:[%s1 + $0x20] sm:$0xff]
  %v21 = vld [vmem:[%s1 + $0x28] sm:$0xff]
  %v22 = vld [vmem:[%s1 + $0x30] sm:$0xff]
  %v23 = vld [vmem:[%s1 + $0x38] sm:$0xff]
  %v24 = vld [vmem:[%s1 + $0x40] sm:$0xff]
  %v25 = vld [vmem:[%s1 + $0x48] sm:$0xff]
  %v26 = vld [vmem:[%s1 + $0x50] sm:$0xff]
  %v27 = vld [vmem:[%s1 + $0x58] sm:$0xff]
  %v28 = vld [vmem:[%s1 + $0x60] sm:$0xff]
  %v29 = vld [vmem:[%s1 + $0x68] sm:$0xff]
  %v30 = vld [vmem:[%s1 + $0x70] sm:$0xff]
  %v31 = vld [vmem:[%s1 + $0x78] sm:$0xff]
  %v48 = vunpack.c.l.b16 %v16
  %v49 = vunpack.c.h.b16 %v16
  %v50 = vunpack.c.l.b16 %v17
  %v51 = vunpack.c.h.b16 %v17
  %v52 = vunpack.c.l.b16 %v18
  %v53 = vunpack.c.h.b16 %v18
  %v54 = vunpack.c.l.b16 %v19
  %v55 = vunpack.c.h.b16 %v19
  %v56 = vunpack.c.l.b16 %v20
  %v57 = vunpack.c.h.b16 %v20
  %v58 = vunpack.c.l.b16 %v21
  %v59 = vunpack.c.h.b16 %v21
  %v60 = vunpack.c.l.b16 %v22
  %v61 = vunpack.c.h.b16 %v22
  %v62 = vunpack.c.l.b16 %v23
  %v63 = vunpack.c.h.b16 %v23
  %v64 = vunpack.c.l.b16 %v24
  %v65 = vunpack.c.h.b16 %v24
  %v66 = vunpack.c.l.b16 %v25
  %v67 = vunpack.c.h.b16 %v25
  %v68 = vunpack.c.l.b16 %v26
  %v69 = vunpack.c.h.b16 %v26
  %v70 = vunpack.c.l.b16 %v27
  %v71 = vunpack.c.h.b16 %v27
  %v72 = vunpack.c.l.b16 %v28
  %v73 = vunpack.c.h.b16 %v28
  %v74 = vunpack.c.l.b16 %v29
  %v75 = vunpack.c.h.b16 %v29
  %v76 = vunpack.c.l.b16 %v30
  %v77 = vunpack.c.h.b16 %v30
  %v78 = vunpack.c.l.b16 %v31
  %v79 = vunpack.c.h.b16 %v31
  %v80 = vpack.c.b16 %v56, %v48
  %v81 = vpack.c.b16 %v57, %v49
  %v82 = vpack.c.b16 %v58, %v50
  %v83 = vpack.c.b16 %v59, %v51
  %v84 = vpack.c.b16 %v60, %v52
  %v85 = vpack.c.b16 %v61, %v53
  %v86 = vpack.c.b16 %v62, %v54
  %v87 = vpack.c.b16 %v63, %v55
  %v88 = vpack.c.b16 %v72, %v64
  %v89 = vpack.c.b16 %v73, %v65
  %v90 = vpack.c.b16 %v74, %v66
  %v91 = vpack.c.b16 %v75, %v67
  %v92 = vpack.c.b16 %v76, %v68
  %v93 = vpack.c.b16 %v77, %v69
  %v94 = vpack.c.b16 %v78, %v70
  %v95 = vpack.c.b16 %v79, %v71
  %vm112 = vcmask 261120
  %v114 = vsel %vm112, %v15, 0
  %116 = vmatprep.subr.bf16.mxu0 0
  %117 = vmatpush1.bf16.msra.mxu0 0
  %118 = vmatprep.subr.bf16.mxu0 0
  %119 = vmatpush1.bf16.msra.mxu0 0
  %120 = vmatprep.subr.bf16.mxu0 0
  %121 = vmatpush1.bf16.msra.mxu0 0
  %122 = vmatprep.subr.bf16.mxu0 0
  %123 = vmatpush1.bf16.msra.mxu0 0
  %124 = vmatprep.subr.bf16.mxu0 0
  %125 = vmatpush1.bf16.msra.mxu0 0
  %126 = vmatprep.subr.bf16.mxu0 0
  %127 = vmatpush1.bf16.msra.mxu0 0
  %128 = vmatprep.subr.bf16.mxu0 %v89
  %129 = vmatpush1.bf16.msra.mxu0 %v88
  %130 = vmatprep.subr.bf16.mxu0 %v81
  %131 = vmatpush1.bf16.msra.mxu0 %v80
  %132 = vmatprep.subr.bf16.mxu0 0
  %133 = vmatpush2.bf16.msra.mxu0 0
  %134 = vmatprep.subr.bf16.mxu0 0
  %135 = vmatpush2.bf16.msra.mxu0 0
  %136 = vmatprep.subr.bf16.mxu0 0
  %137 = vmatpush2.bf16.msra.mxu0 0
  %138 = vmatprep.subr.bf16.mxu0 0
  %139 = vmatpush2.bf16.msra.mxu0 0
  %140 = vmatprep.subr.bf16.mxu0 0
  %141 = vmatpush2.bf16.msra.mxu0 0
  %142 = vmatprep.subr.bf16.mxu0 0
  %143 = vmatpush2.bf16.msra.mxu0 0
  %144 = vmatprep.subr.bf16.mxu0 0
  %145 = vmatpush2.bf16.msra.mxu0 0
  %146 = vmatprep.subr.bf16.mxu0 0
  %147 = vmatpush2.bf16.msra.mxu0 0
  %148 = vmatprep.mubr.bf16.mxu0 0
  %149 = vmatmul.mubr.bf16.gmra.mxu0 %v114
  %v150 = vpop.f32.mrf.mxu0
  %v151 = vadd.f32 0.0, %v150
  %v152 = vpop.f32.mrf.mxu0
  %v153 = vadd.f32 0.0, %v152
  %v154 = vpop.f32.mrf.mxu0
  %v155 = vpop.f32.mrf.mxu0
  %156 = vdwg.mxu0
  %157 = vmatprep.subr.bf16.mxu0 0
  %158 = vmatpush1.bf16.msra.mxu0 0
  %159 = vmatprep.subr.bf16.mxu0 0
  %160 = vmatpush1.bf16.msra.mxu0 0
  %161 = vmatprep.subr.bf16.mxu0 0
  %162 = vmatpush1.bf16.msra.mxu0 0
  %163 = vmatprep.subr.bf16.mxu0 0
  %164 = vmatpush1.bf16.msra.mxu0 0
  %165 = vmatprep.subr.bf16.mxu0 0
  %166 = vmatpush1.bf16.msra.mxu0 0
  %167 = vmatprep.subr.bf16.mxu0 0
  %168 = vmatpush1.bf16.msra.mxu0 0
  %169 = vmatprep.subr.bf16.mxu0 %v91
  %170 = vmatpush1.bf16.msra.mxu0 %v90
  %171 = vmatprep.subr.bf16.mxu0 %v83
  %172 = vmatpush1.bf16.msra.mxu0 %v82
  %173 = vmatprep.subr.bf16.mxu0 0
  %174 = vmatpush2.bf16.msra.mxu0 0
  %175 = vmatprep.subr.bf16.mxu0 0
  %176 = vmatpush2.bf16.msra.mxu0 0
  %177 = vmatprep.subr.bf16.mxu0 0
  %178 = vmatpush2.bf16.msra.mxu0 0
  %179 = vmatprep.subr.bf16.mxu0 0
  %180 = vmatpush2.bf16.msra.mxu0 0
  %181 = vmatprep.subr.bf16.mxu0 0
  %182 = vmatpush2.bf16.msra.mxu0 0
  %183 = vmatprep.subr.bf16.mxu0 0
  %184 = vmatpush2.bf16.msra.mxu0 0
  %185 = vmatprep.subr.bf16.mxu0 0
  %186 = vmatpush2.bf16.msra.mxu0 0
  %187 = vmatprep.subr.bf16.mxu0 0
  %188 = vmatpush2.bf16.msra.mxu0 0
  %189 = vmatprep.mubr.bf16.mxu0 0
  %190 = vmatmul.mubr.bf16.gmra.mxu0 %v114
  %v191 = vpop.f32.mrf.mxu0
  %v192 = vadd.f32 0.0, %v191
  %v193 = vpop.f32.mrf.mxu0
  %v194 = vadd.f32 0.0, %v193
  %v195 = vpop.f32.mrf.mxu0
  %v196 = vpop.f32.mrf.mxu0
  %197 = vdwg.mxu0
  %198 = vmatprep.subr.bf16.mxu0 0
  %199 = vmatpush1.bf16.msra.mxu0 0
  %200 = vmatprep.subr.bf16.mxu0 0
  %201 = vmatpush1.bf16.msra.mxu0 0
  %202 = vmatprep.subr.bf16.mxu0 0
  %203 = vmatpush1.bf16.msra.mxu0 0
  %204 = vmatprep.subr.bf16.mxu0 0
  %205 = vmatpush1.bf16.msra.mxu0 0
  %206 = vmatprep.subr.bf16.mxu0 0
  %207 = vmatpush1.bf16.msra.mxu0 0
  %208 = vmatprep.subr.bf16.mxu0 0
  %209 = vmatpush1.bf16.msra.mxu0 0
  %210 = vmatprep.subr.bf16.mxu0 %v93
  %211 = vmatpush1.bf16.msra.mxu0 %v92
  %212 = vmatprep.subr.bf16.mxu0 %v85
  %213 = vmatpush1.bf16.msra.mxu0 %v84
  %214 = vmatprep.subr.bf16.mxu0 0
  %215 = vmatpush2.bf16.msra.mxu0 0
  %216 = vmatprep.subr.bf16.mxu0 0
  %217 = vmatpush2.bf16.msra.mxu0 0
  %218 = vmatprep.subr.bf16.mxu0 0
  %219 = vmatpush2.bf16.msra.mxu0 0
  %220 = vmatprep.subr.bf16.mxu0 0
  %221 = vmatpush2.bf16.msra.mxu0 0
  %222 = vmatprep.subr.bf16.mxu0 0
  %223 = vmatpush2.bf16.msra.mxu0 0
  %224 = vmatprep.subr.bf16.mxu0 0
  %225 = vmatpush2.bf16.msra.mxu0 0
  %226 = vmatprep.subr.bf16.mxu0 0
  %227 = vmatpush2.bf16.msra.mxu0 0
  %228 = vmatprep.subr.bf16.mxu0 0
  %229 = vmatpush2.bf16.msra.mxu0 0
  %230 = vmatprep.mubr.bf16.mxu0 0
  %231 = vmatmul.mubr.bf16.gmra.mxu0 %v114
  %v232 = vpop.f32.mrf.mxu0
  %v233 = vadd.f32 0.0, %v232
  %v234 = vpop.f32.mrf.mxu0
  %v235 = vadd.f32 0.0, %v234
  %v236 = vpop.f32.mrf.mxu0
  %v237 = vpop.f32.mrf.mxu0
  %238 = vdwg.mxu0
  %239 = vmatprep.subr.bf16.mxu0 0
  %240 = vmatpush1.bf16.msra.mxu0 0
  %241 = vmatprep.subr.bf16.mxu0 0
  %242 = vmatpush1.bf16.msra.mxu0 0
  %243 = vmatprep.subr.bf16.mxu0 0
  %244 = vmatpush1.bf16.msra.mxu0 0
  %245 = vmatprep.subr.bf16.mxu0 0
  %246 = vmatpush1.bf16.msra.mxu0 0
  %247 = vmatprep.subr.bf16.mxu0 0
  %248 = vmatpush1.bf16.msra.mxu0 0
  %249 = vmatprep.subr.bf16.mxu0 0
  %250 = vmatpush1.bf16.msra.mxu0 0
  %251 = vmatprep.subr.bf16.mxu0 %v95
  %252 = vmatpush1.bf16.msra.mxu0 %v94
  %253 = vmatprep.subr.bf16.mxu0 %v87
  %254 = vmatpush1.bf16.msra.mxu0 %v86
  %255 = vmatprep.subr.bf16.mxu0 0
  %256 = vmatpush2.bf16.msra.mxu0 0
  %257 = vmatprep.subr.bf16.mxu0 0
  %258 = vmatpush2.bf16.msra.mxu0 0
  %259 = vmatprep.subr.bf16.mxu0 0
  %260 = vmatpush2.bf16.msra.mxu0 0
  %261 = vmatprep.subr.bf16.mxu0 0
  %262 = vmatpush2.bf16.msra.mxu0 0
  %263 = vmatprep.subr.bf16.mxu0 0
  %264 = vmatpush2.bf16.msra.mxu0 0
  %265 = vmatprep.subr.bf16.mxu0 0
  %266 = vmatpush2.bf16.msra.mxu0 0
  %267 = vmatprep.subr.bf16.mxu0 0
  %268 = vmatpush2.bf16.msra.mxu0 0
  %269 = vmatprep.subr.bf16.mxu0 0
  %270 = vmatpush2.bf16.msra.mxu0 0
  %271 = vmatprep.mubr.bf16.mxu0 0
  %272 = vmatmul.mubr.bf16.gmra.mxu0 %v114
  %v273 = vpop.f32.mrf.mxu0
  %v274 = vadd.f32 0.0, %v273
  %v275 = vpop.f32.mrf.mxu0
  %v276 = vadd.f32 0.0, %v275
  %v277 = vpop.f32.mrf.mxu0
  %v278 = vpop.f32.mrf.mxu0
  %279 = vdwg.mxu0
  %v280 = vpack.c.bf16 %v151, %v151
  %v281 = vpack.c.bf16 %v153, %v153
  %v282 = vpack.c.bf16 %v192, %v192
  %v283 = vpack.c.bf16 %v194, %v194
  %v284 = vpack.c.bf16 %v233, %v233
  %v285 = vpack.c.bf16 %v235, %v235
  %v286 = vpack.c.bf16 %v274, %v274
  %v287 = vpack.c.bf16 %v276, %v276
  %v296 = vcombine.low %v280, %v281
  %v297 = vcombine.low %v282, %v283
  %v298 = vcombine.low %v284, %v285
  %v299 = vcombine.low %v286, %v287
  %v301 = vunpack.c.l.s4 1966171168
  %v302 = vunpack.c.0.s8 %v301
  %v303 = vlaneseq
  %v304 = vshrl.u32 %v303, 7
  %v305 = vsub.s32 %v302, %v304
  %v306 = vrot.slane %v296, %v305
  %v308 = vunpack.c.l.s4 1966171168
  %v309 = vunpack.c.0.s8 %v308
  %v310 = vlaneseq
  %v311 = vshrl.u32 %v310, 7
  %v312 = vsub.s32 %v309, %v311
  %v313 = vrot.slane %v297, %v312
  %v315 = vunpack.c.l.s4 1966171168
  %v316 = vunpack.c.0.s8 %v315
  %v317 = vlaneseq
  %v318 = vshrl.u32 %v317, 7
  %v319 = vsub.s32 %v316, %v318
  %v320 = vrot.slane %v298, %v319
  %v322 = vunpack.c.l.s4 1966171168
  %v323 = vunpack.c.0.s8 %v322
  %v324 = vlaneseq
  %v325 = vshrl.u32 %v324, 7
  %v326 = vsub.s32 %v323, %v325
  %v327 = vrot.slane %v299, %v326
  %v328 = vcombine.low %v306, %v313
  %v329 = vcombine.low %v320, %v327
  %v331 = vunpack.c.l.s4 1966171168
  %v332 = vunpack.c.0.s8 %v331
  %v333 = vlaneseq
  %v334 = vshrl.u32 %v333, 7
  %v335 = vsub.s32 %v332, %v334
  %v336 = vrot.slane %v328, %v335
  %v338 = vunpack.c.l.s4 1966171168
  %v339 = vunpack.c.0.s8 %v338
  %v340 = vlaneseq
  %v341 = vshrl.u32 %v340, 7
  %v342 = vsub.s32 %v339, %v341
  %v343 = vrot.slane %v329, %v342
  %v344 = vcombine.low %v336, %v343
  %346 = vst [vmem:[%s2] sm:$0xff] %v344
  %vm347 = vcmask 1041408
  %v348 = vsel %vm347, %v151, 0.0
  %v349 = vrot.slane %v348, 4
  %v350 = vadd.f32 %v348, %v349
  %v351 = vrot.slane %v350, 2
  %v352 = vadd.f32 %v350, %v351
  %v353 = vrot.slane %v352, 1
  %v354 = vadd.f32 %v352, %v353
  %v355 = vsel %vm347, %v153, 0.0
  %v356 = vrot.slane %v355, 4
  %v357 = vadd.f32 %v355, %v356
  %v358 = vrot.slane %v357, 2
  %v359 = vadd.f32 %v357, %v358
  %v360 = vrot.slane %v359, 1
  %v361 = vadd.f32 %v359, %v360
  %v362 = vsel %vm347, %v192, 0.0
  %v363 = vrot.slane %v362, 4
  %v364 = vadd.f32 %v362, %v363
  %v365 = vrot.slane %v364, 2
  %v366 = vadd.f32 %v364, %v365
  %v367 = vrot.slane %v366, 1
  %v368 = vadd.f32 %v366, %v367
  %v369 = vsel %vm347, %v194, 0.0
  %v370 = vrot.slane %v369, 4
  %v371 = vadd.f32 %v369, %v370
  %v372 = vrot.slane %v371, 2
  %v373 = vadd.f32 %v371, %v372
  %v374 = vrot.slane %v373, 1
  %v375 = vadd.f32 %v373, %v374
  %v376 = vsel %vm347, %v233, 0.0
  %v377 = vrot.slane %v376, 4
  %v378 = vadd.f32 %v376, %v377
  %v379 = vrot.slane %v378, 2
  %v380 = vadd.f32 %v378, %v379
  %v381 = vrot.slane %v380, 1
  %v382 = vadd.f32 %v380, %v381
  %v383 = vsel %vm347, %v235, 0.0
  %v384 = vrot.slane %v383, 4
  %v385 = vadd.f32 %v383, %v384
  %v386 = vrot.slane %v385, 2
  %v387 = vadd.f32 %v385, %v386
  %v388 = vrot.slane %v387, 1
  %v389 = vadd.f32 %v387, %v388
  %v390 = vsel %vm347, %v274, 0.0
  %v391 = vrot.slane %v390, 4
  %v392 = vadd.f32 %v390, %v391
  %v393 = vrot.slane %v392, 2
  %v394 = vadd.f32 %v392, %v393
  %v395 = vrot.slane %v394, 1
  %v396 = vadd.f32 %v394, %v395
  %v397 = vsel %vm347, %v276, 0.0
  %v398 = vrot.slane %v397, 4
  %v399 = vadd.f32 %v397, %v398
  %v400 = vrot.slane %v399, 2
  %v401 = vadd.f32 %v399, %v400
  %v402 = vrot.slane %v401, 1
  %v403 = vadd.f32 %v401, %v402
  %v404 = vmul.f32 %v151, %v151
  %v405 = vmul.f32 %v153, %v153
  %v406 = vmul.f32 %v192, %v192
  %v407 = vmul.f32 %v194, %v194
  %v408 = vmul.f32 %v233, %v233
  %v409 = vmul.f32 %v235, %v235
  %v410 = vmul.f32 %v274, %v274
  %v411 = vmul.f32 %v276, %v276
  %v412 = vsel %vm347, %v404, 0.0
  %v413 = vrot.slane %v412, 4
  %v414 = vadd.f32 %v412, %v413
  %v415 = vrot.slane %v414, 2
  %v416 = vadd.f32 %v414, %v415
  %v417 = vrot.slane %v416, 1
  %v418 = vadd.f32 %v416, %v417
  %v419 = vsel %vm347, %v405, 0.0
  %v420 = vrot.slane %v419, 4
  %v421 = vadd.f32 %v419, %v420
  %v422 = vrot.slane %v421, 2
  %v423 = vadd.f32 %v421, %v422
  %v424 = vrot.slane %v423, 1
  %v425 = vadd.f32 %v423, %v424
  %v426 = vsel %vm347, %v406, 0.0
  %v427 = vrot.slane %v426, 4
  %v428 = vadd.f32 %v426, %v427
  %v429 = vrot.slane %v428, 2
  %v430 = vadd.f32 %v428, %v429
  %v431 = vrot.slane %v430, 1
  %v432 = vadd.f32 %v430, %v431
  %v433 = vsel %vm347, %v407, 0.0
  %v434 = vrot.slane %v433, 4
  %v435 = vadd.f32 %v433, %v434
  %v436 = vrot.slane %v435, 2
  %v437 = vadd.f32 %v435, %v436
  %v438 = vrot.slane %v437, 1
  %v439 = vadd.f32 %v437, %v438
  %v440 = vsel %vm347, %v408, 0.0
  %v441 = vrot.slane %v440, 4
  %v442 = vadd.f32 %v440, %v441
  %v443 = vrot.slane %v442, 2
  %v444 = vadd.f32 %v442, %v443
  %v445 = vrot.slane %v444, 1
  %v446 = vadd.f32 %v444, %v445
  %v447 = vsel %vm347, %v409, 0.0
  %v448 = vrot.slane %v447, 4
  %v449 = vadd.f32 %v447, %v448
  %v450 = vrot.slane %v449, 2
  %v451 = vadd.f32 %v449, %v450
  %v452 = vrot.slane %v451, 1
  %v453 = vadd.f32 %v451, %v452
  %v454 = vsel %vm347, %v410, 0.0
  %v455 = vrot.slane %v454, 4
  %v456 = vadd.f32 %v454, %v455
  %v457 = vrot.slane %v456, 2
  %v458 = vadd.f32 %v456, %v457
  %v459 = vrot.slane %v458, 1
  %v460 = vadd.f32 %v458, %v459
  %v461 = vsel %vm347, %v411, 0.0
  %v462 = vrot.slane %v461, 4
  %v463 = vadd.f32 %v461, %v462
  %v464 = vrot.slane %v463, 2
  %v465 = vadd.f32 %v463, %v464
  %v466 = vrot.slane %v465, 1
  %v467 = vadd.f32 %v465, %v466
  %v468 = vlaneseq
  %v469 = vshrl.u32 %v468, 7
  %vm470 = vcmp.eq.s32.totalorder %v469, 0
  %v471 = vsel %vm470, %v354, 0.0
  %v472 = vsel %vm470, %v361, 0.0
  %v473 = vsel %vm470, %v368, 0.0
  %v474 = vsel %vm470, %v375, 0.0
  %v475 = vsel %vm470, %v382, 0.0
  %v476 = vsel %vm470, %v389, 0.0
  %v477 = vsel %vm470, %v396, 0.0
  %v478 = vsel %vm470, %v403, 0.0
  %479 = vst [vmem:[%s3] sm:$0xff] %v471
  %480 = vst [vmem:[%s3 + $0x8] sm:$0xff] %v472
  %481 = vst [vmem:[%s3 + $0x10] sm:$0xff] %v473
  %482 = vst [vmem:[%s3 + $0x18] sm:$0xff] %v474
  %483 = vst [vmem:[%s3 + $0x20] sm:$0xff] %v475
  %484 = vst [vmem:[%s3 + $0x28] sm:$0xff] %v476
  %485 = vst [vmem:[%s3 + $0x30] sm:$0xff] %v477
  %486 = vst [vmem:[%s3 + $0x38] sm:$0xff] %v478
  %v487 = vsel %vm470, %v418, 0.0
  %v488 = vsel %vm470, %v425, 0.0
  %v489 = vsel %vm470, %v432, 0.0
  %v490 = vsel %vm470, %v439, 0.0
  %v491 = vsel %vm470, %v446, 0.0
  %v492 = vsel %vm470, %v453, 0.0
  %v493 = vsel %vm470, %v460, 0.0
  %v494 = vsel %vm470, %v467, 0.0
  %495 = vst [vmem:[%s4] sm:$0xff] %v487
  %496 = vst [vmem:[%s4 + $0x8] sm:$0xff] %v488
  %497 = vst [vmem:[%s4 + $0x10] sm:$0xff] %v489
  %498 = vst [vmem:[%s4 + $0x18] sm:$0xff] %v490
  %499 = vst [vmem:[%s4 + $0x20] sm:$0xff] %v491
  %500 = vst [vmem:[%s4 + $0x28] sm:$0xff] %v492
  %501 = vst [vmem:[%s4 + $0x30] sm:$0xff] %v493
  %502 = vst [vmem:[%s4 + $0x38] sm:$0xff] %v494
  // Predicated region
  $region10: #{_lambda_.9} parent=0 // pred_check
    _
  $region11: #{_lambda_.9} parent=0 // pred_check_branch
    %504 = sbr.rel (0) target = $region13
  $region12: #{_lambda_.9} parent=0 // pred_region
    _
  $region13: #{_lambda_.9} parent=0 // pred_fallthru
    _
  // Predicated region
  $region14: #{_lambda_.9} parent=0 // pred_check
    _
  $region15: #{_lambda_.9} parent=0 // pred_check_branch
    %506 = sbr.rel (0) target = $region17
  $region16: #{_lambda_.9} parent=0 // pred_region
    _
  $region17: #{_lambda_.9} parent=0 // pred_fallthru
    _
  // Predicated region
  $region18: #{_lambda_.9} parent=0 // pred_check
    _
  $region19: #{_lambda_.9} parent=0 // pred_check_branch
    %508 = sbr.rel (0) target = $region21
  $region20: #{_lambda_.9} parent=0 // pred_region
    _
  $region21: #{_lambda_.9} parent=0 // pred_fallthru
    _
  // Predicated region
  $region22: #{_lambda_.9} parent=0 // pred_check
    _
  $region23: #{_lambda_.9} parent=0 // pred_check_branch
    %510 = sbr.rel (0) target = $region25
  $region24: #{_lambda_.9} parent=0 // pred_region
    _
  $region25: #{_lambda_.9} parent=0 // pred_fallthru
    _
  // Predicated region
  $region26: #{_lambda_.9} parent=0 // pred_check
    _
  $region27: #{_lambda_.9} parent=0 // pred_check_branch
    %512 = sbr.rel (0) target = $region29
  $region28: #{_lambda_.9} parent=0 // pred_region
    _
  $region29: #{_lambda_.9} parent=0 // pred_fallthru
    _
  // Predicated region
  $region30: #{_lambda_.9} parent=0 // pred_check
    _
  $region31: #{_lambda_.9} parent=0 // pred_check_branch
    %514 = sbr.rel (0) target = $region33
  $region32: #{_lambda_.9} parent=0 // pred_region
    _
  $region33: #{_lambda_.9} parent=0 // pred_fallthru
    _

// kernel: tile.43
$region0: #{tile.43}
  #allocation0 [shape = 's32[1]{0}', space=sflag, size = 0x4, scoped, tag = 'scoped memory for tile.43']
  %s0 = inlined_call_operand.vmem [shape: f32[64], index: 0, kind: input, shape index: {}]
  %s1 = inlined_call_operand.vmem [shape: f32[16,64], index: 1, kind: output, shape index: {}]
  // Predicated region
  $region2: #{tile.43} parent=0 // pred_check
    _
  $region3: #{tile.43} parent=0 // pred_check_branch
    %3 = sbr.rel (0) target = $region5
  $region4: #{tile.43} parent=0 // pred_region
    _
  $region5: #{tile.43} parent=0 // pred_fallthru
    _
  %v4 = vld [vmem:[%s0] ss:$0 sm:$0xff]
  %5 = vst [vmem:[%s1] sm:$0xff] %v4
  %s6 = scalar_lea.vmem %s1, 8
  %7 = vst [vmem:[%s6] sm:$0xff] %v4

// kernel: tile.48
$region0: #{tile.48}
  %s0 = inlined_call_operand.vmem [shape: f32[16,64], index: 0, kind: input, shape index: {}]
  %s1 = inlined_call_operand.vmem [shape: f32[1,1024], index: 1, kind: output, shape index: {}]
  $region1: #{tile.48} parent=0
    #allocation0 [shape = 'u8[32768]{0}', space=vmem, size = 0x8000, scoped, tag = 'scoped mem for output reshape']
    %v2 = vld [vmem:[%s0] ss:$2 sm:$0xff]
    %vm3 = vcmask 523264
    %4 = vst.msk [vmem:[#allocation0] ss:$8 sm:$0xf] %vm3, %v2
    %5 = vst.msk [vmem:[#allocation0] ss:$8 sm:$0xf0] %vm3, %v2
    %s6 = scalar_lea.vmem %s0, 1
    %v7 = vld [vmem:[%s6] ss:$2 sm:$0xff]
    %8 = vrot.lane.b32.xlu0 %v7, 64
    %v9 = vpop.permute.xlu0 %8
    %vm10 = vcmask 1048064
    %11 = vst.msk [vmem:[#allocation0] ss:$8 sm:$0xf] %vm10, %v9
    %12 = vst.msk [vmem:[#allocation0] ss:$8 sm:$0xf0] %vm10, %v9
    %s14 = sshll.u32 1, 1
    %s15 = ssub.s32 %s14, 1
    %v17 = vld [vmem:[#allocation0] sm:%s15]
    %s18 = sshll.u32 1, 1
    %s19 = ssub.s32 %s18, 1
    %20 = vst [vmem:[%s1] sm:%s19] %v17
    %s21 = scalar_lea.vmem [#allocation0], 8
    %v22 = vld [vmem:[%s21] sm:%s15]
    %s23 = sshll.u32 1, 1
    %s24 = ssub.s32 %s23, 1
    %s25 = scalar_lea.vmem %s1, 1
    %26 = vst [vmem:[%s25] sm:%s24] %v22
    %s27 = scalar_lea.vmem [#allocation0], 16
    %v28 = vld [vmem:[%s27] sm:%s15]
    %s29 = sshll.u32 1, 1
    %s30 = ssub.s32 %s29, 1
    %s31 = smul.addr 1, 2
    %s32 = scalar_lea.vmem %s1, %s31
    %33 = vst [vmem:[%s32] sm:%s30] %v28
    %s34 = scalar_lea.vmem [#allocation0], 24
    %v35 = vld [vmem:[%s34] sm:%s15]
    %s36 = sshll.u32 1, 1
    %s37 = ssub.s32 %s36, 1
    %s38 = smul.addr 1, 3
    %s39 = scalar_lea.vmem %s1, %s38
    %40 = vst [vmem:[%s39] sm:%s37] %v35
    %s41 = scalar_lea.vmem [#allocation0], 32
    %v42 = vld [vmem:[%s41] sm:%s15]
    %s43 = sshll.u32 1, 1
    %s44 = ssub.s32 %s43, 1
    %s45 = smul.addr 1, 4
    %s46 = scalar_lea.vmem %s1, %s45
    %47 = vst [vmem:[%s46] sm:%s44] %v42
    %s48 = scalar_lea.vmem [#allocation0], 40
    %v49 = vld [vmem:[%s48] sm:%s15]
    %s50 = sshll.u32 1, 1
    %s51 = ssub.s32 %s50, 1
    %s52 = smul.addr 1, 5
    %s53 = scalar_lea.vmem %s1, %s52
    %54 = vst [vmem:[%s53] sm:%s51] %v49
    %s55 = scalar_lea.vmem [#allocation0], 48
    %v56 = vld [vmem:[%s55] sm:%s15]
    %s57 = sshll.u32 1, 1
    %s58 = ssub.s32 %s57, 1
    %s59 = smul.addr 1, 6
    %s60 = scalar_lea.vmem %s1, %s59
    %61 = vst [vmem:[%s60] sm:%s58] %v56
    %s62 = scalar_lea.vmem [#allocation0], 56
    %v63 = vld [vmem:[%s62] sm:%s15]
    %s64 = sshll.u32 1, 1
    %s65 = ssub.s32 %s64, 1
    %s66 = smul.addr 1, 7
    %s67 = scalar_lea.vmem %s1, %s66
    %68 = vst [vmem:[%s67] sm:%s65] %v63

// kernel: _lambda_.10
$region0: #{_lambda_.10}
  #allocation0 [shape = 'u32[]', space=smem, size = 0x4, offset = 0x4, fixed_abs, tag = 'smem constant byte address 0x4 - core index']
  #allocation1 [shape = 'u32[144,128]{1,0:T(1,128)}', space=vmem, size = 0x12000, scoped, tag = 'internal scratch']
  %s0 = inlined_call_operand.vmem [shape: bf16[2,1024], index: 0, kind: input, shape index: {}]
  %s1 = inlined_call_operand.vmem [shape: f32[1,1024], index: 1, kind: input, shape index: {}]
  %s2 = inlined_call_operand.vmem [shape: f32[1,1024], index: 2, kind: input, shape index: {}]
  %s3 = inlined_call_operand.vmem [shape: bf16[2,1024], index: 3, kind: output, shape index: {}]
  %s4 = sld [smem:[#allocation0]]
  $region22: #{_lambda_.10} parent=0
    _
  %s6 = ssub.s32 1, %s4
  %s7 = scalar_select 0, %s6, %s4
  // Predicated region
  $region2: #{_lambda_.10} parent=0 // pred_check
    _
  $region3: #{_lambda_.10} parent=0 // pred_check_branch
    %9 = sbr.rel (0) target = $region5
  $region4: #{_lambda_.10} parent=0 // pred_region
    _
  $region5: #{_lambda_.10} parent=0 // pred_fallthru
    _
  // Predicated region
  $region6: #{_lambda_.10} parent=0 // pred_check
    _
  $region7: #{_lambda_.10} parent=0 // pred_check_branch
    %11 = sbr.rel (0) target = $region9
  $region8: #{_lambda_.10} parent=0 // pred_region
    _
  $region9: #{_lambda_.10} parent=0 // pred_fallthru
    _
  // Predicated region
  $region10: #{_lambda_.10} parent=0 // pred_check
    _
  $region11: #{_lambda_.10} parent=0 // pred_check_branch
    %13 = sbr.rel (0) target = $region13
  $region12: #{_lambda_.10} parent=0 // pred_region
    _
  $region13: #{_lambda_.10} parent=0 // pred_fallthru
    _
  %v14 = vld [vmem:[%s0] sm:$0xff]
  %v15 = vunpack.c.l.bf16 %v14
  %v16 = vunpack.c.h.bf16 %v14
  %v17 = vld [vmem:[%s1] sm:$0xff]
  %v19 = vlaneseq
  %v20 = vshrl.u32 %v19, 7
  %v21 = vsub.s32 0, %v20
  %v22 = vrot.slane %v17, %v21
  %v23 = vlaneseq
  %v24 = vshrl.u32 %v23, 7
  %v25 = vsub.s32 1, %v24
  %v26 = vrot.slane %v17, %v25
  %v27 = vlaneseq
  %v28 = vshrl.u32 %v27, 7
  %v29 = vsub.s32 2, %v28
  %v30 = vrot.slane %v17, %v29
  %v31 = vlaneseq
  %v32 = vshrl.u32 %v31, 7
  %v33 = vsub.s32 3, %v32
  %v34 = vrot.slane %v17, %v33
  %v35 = vlaneseq
  %v36 = vshrl.u32 %v35, 7
  %v37 = vsub.s32 4, %v36
  %v38 = vrot.slane %v17, %v37
  %v39 = vlaneseq
  %v40 = vshrl.u32 %v39, 7
  %v41 = vsub.s32 5, %v40
  %v42 = vrot.slane %v17, %v41
  %v43 = vlaneseq
  %v44 = vshrl.u32 %v43, 7
  %v45 = vsub.s32 6, %v44
  %v46 = vrot.slane %v17, %v45
  %v47 = vlaneseq
  %v48 = vshrl.u32 %v47, 7
  %v49 = vsub.s32 7, %v48
  %v50 = vrot.slane %v17, %v49
  %v51 = vcombine.low %v22, %v26
  %v52 = vcombine.low %v30, %v34
  %v54 = vunpack.c.l.s4 1983009808
  %v55 = vunpack.c.0.s8 %v54
  %v56 = vlaneseq
  %v57 = vshrl.u32 %v56, 7
  %v58 = vsub.s32 %v55, %v57
  %v59 = vrot.slane %v51, %v58
  %v61 = vunpack.c.l.s4 1983009808
  %v62 = vunpack.c.0.s8 %v61
  %v63 = vlaneseq
  %v64 = vshrl.u32 %v63, 7
  %v65 = vsub.s32 %v62, %v64
  %v66 = vrot.slane %v52, %v65
  %v67 = vcombine.low %v59, %v66
  %v68 = vcombine.low %v38, %v42
  %v69 = vcombine.low %v46, %v50
  %v71 = vunpack.c.l.s4 1983009808
  %v72 = vunpack.c.0.s8 %v71
  %v73 = vlaneseq
  %v74 = vshrl.u32 %v73, 7
  %v75 = vsub.s32 %v72, %v74
  %v76 = vrot.slane %v68, %v75
  %v78 = vunpack.c.l.s4 1983009808
  %v79 = vunpack.c.0.s8 %v78
  %v80 = vlaneseq
  %v81 = vshrl.u32 %v80, 7
  %v82 = vsub.s32 %v79, %v81
  %v83 = vrot.slane %v69, %v82
  %v84 = vcombine.low %v76, %v83
  %v87 = vmul.f32 %v15, %v67
  %v88 = vmul.f32 %v16, %v84
  %v89 = vld [vmem:[%s2] sm:$0xff]
  %v91 = vlaneseq
  %v92 = vshrl.u32 %v91, 7
  %v93 = vsub.s32 0, %v92
  %v94 = vrot.slane %v89, %v93
  %v95 = vlaneseq
  %v96 = vshrl.u32 %v95, 7
  %v97 = vsub.s32 1, %v96
  %v98 = vrot.slane %v89, %v97
  %v99 = vlaneseq
  %v100 = vshrl.u32 %v99, 7
  %v101 = vsub.s32 2, %v100
  %v102 = vrot.slane %v89, %v101
  %v103 = vlaneseq
  %v104 = vshrl.u32 %v103, 7
  %v105 = vsub.s32 3, %v104
  %v106 = vrot.slane %v89, %v105
  %v107 = vlaneseq
  %v108 = vshrl.u32 %v107, 7
  %v109 = vsub.s32 4, %v108
  %v110 = vrot.slane %v89, %v109
  %v111 = vlaneseq
  %v112 = vshrl.u32 %v111, 7
  %v113 = vsub.s32 5, %v112
  %v114 = vrot.slane %v89, %v113
  %v115 = vlaneseq
  %v116 = vshrl.u32 %v115, 7
  %v117 = vsub.s32 6, %v116
  %v118 = vrot.slane %v89, %v117
  %v119 = vlaneseq
  %v120 = vshrl.u32 %v119, 7
  %v121 = vsub.s32 7, %v120
  %v122 = vrot.slane %v89, %v121
  %v123 = vcombine.low %v94, %v98
  %v124 = vcombine.low %v102, %v106
  %v126 = vunpack.c.l.s4 1983009808
  %v127 = vunpack.c.0.s8 %v126
  %v128 = vlaneseq
  %v129 = vshrl.u32 %v128, 7
  %v130 = vsub.s32 %v127, %v129
  %v131 = vrot.slane %v123, %v130
  %v133 = vunpack.c.l.s4 1983009808
  %v134 = vunpack.c.0.s8 %v133
  %v135 = vlaneseq
  %v136 = vshrl.u32 %v135, 7
  %v137 = vsub.s32 %v134, %v136
  %v138 = vrot.slane %v124, %v137
  %v139 = vcombine.low %v131, %v138
  %v140 = vcombine.low %v110, %v114
  %v141 = vcombine.low %v118, %v122
  %v143 = vunpack.c.l.s4 1983009808
  %v144 = vunpack.c.0.s8 %v143
  %v145 = vlaneseq
  %v146 = vshrl.u32 %v145, 7
  %v147 = vsub.s32 %v144, %v146
  %v148 = vrot.slane %v140, %v147
  %v150 = vunpack.c.l.s4 1983009808
  %v151 = vunpack.c.0.s8 %v150
  %v152 = vlaneseq
  %v153 = vshrl.u32 %v152, 7
  %v154 = vsub.s32 %v151, %v153
  %v155 = vrot.slane %v141, %v154
  %v156 = vcombine.low %v148, %v155
  %v159 = vadd.f32 %v87, %v139
  %v160 = vadd.f32 %v88, %v156
  %v161 = vmax.f32 %v159, 0.0
  %v162 = vmax.f32 %v160, 0.0
  %v165 = vcombine.high %v161, %v161
  %v167 = vunpack.c.l.s4 1983009808
  %v168 = vunpack.c.0.s8 %v167
  %v169 = vlaneseq
  %v170 = vshrl.u32 %v169, 7
  %v171 = vsub.s32 %v168, %v170
  %v172 = vrot.slane %v161, %v171
  %v174 = vunpack.c.l.s4 1983009808
  %v175 = vunpack.c.0.s8 %v174
  %v176 = vlaneseq
  %v177 = vshrl.u32 %v176, 7
  %v178 = vsub.s32 %v175, %v177
  %v179 = vrot.slane %v165, %v178
  %v180 = vcombine.high %v172, %v172
  %v181 = vcombine.high %v179, %v179
  %v182 = vcombine.high %v162, %v162
  %v184 = vunpack.c.l.s4 1983009808
  %v185 = vunpack.c.0.s8 %v184
  %v186 = vlaneseq
  %v187 = vshrl.u32 %v186, 7
  %v188 = vsub.s32 %v185, %v187
  %v189 = vrot.slane %v162, %v188
  %v191 = vunpack.c.l.s4 1983009808
  %v192 = vunpack.c.0.s8 %v191
  %v193 = vlaneseq
  %v194 = vshrl.u32 %v193, 7
  %v195 = vsub.s32 %v192, %v194
  %v196 = vrot.slane %v182, %v195
  %v197 = vcombine.high %v189, %v189
  %v198 = vcombine.high %v196, %v196
  %v207 = vpack.c.bf16 %v172, %v172
  %v208 = vpack.c.bf16 %v180, %v180
  %v209 = vpack.c.bf16 %v179, %v179
  %v210 = vpack.c.bf16 %v181, %v181
  %v211 = vpack.c.bf16 %v189, %v189
  %v212 = vpack.c.bf16 %v197, %v197
  %v213 = vpack.c.bf16 %v196, %v196
  %v214 = vpack.c.bf16 %v198, %v198
  %v223 = vcombine.low %v207, %v208
  %v224 = vcombine.low %v209, %v210
  %v225 = vcombine.low %v211, %v212
  %v226 = vcombine.low %v213, %v214
  %v228 = vunpack.c.l.s4 1966171168
  %v229 = vunpack.c.0.s8 %v228
  %v230 = vlaneseq
  %v231 = vshrl.u32 %v230, 7
  %v232 = vsub.s32 %v229, %v231
  %v233 = vrot.slane %v223, %v232
  %v235 = vunpack.c.l.s4 1966171168
  %v236 = vunpack.c.0.s8 %v235
  %v237 = vlaneseq
  %v238 = vshrl.u32 %v237, 7
  %v239 = vsub.s32 %v236, %v238
  %v240 = vrot.slane %v224, %v239
  %v242 = vunpack.c.l.s4 1966171168
  %v243 = vunpack.c.0.s8 %v242
  %v244 = vlaneseq
  %v245 = vshrl.u32 %v244, 7
  %v246 = vsub.s32 %v243, %v245
  %v247 = vrot.slane %v225, %v246
  %v249 = vunpack.c.l.s4 1966171168
  %v250 = vunpack.c.0.s8 %v249
  %v251 = vlaneseq
  %v252 = vshrl.u32 %v251, 7
  %v253 = vsub.s32 %v250, %v252
  %v254 = vrot.slane %v226, %v253
  %v255 = vcombine.low %v233, %v240
  %v256 = vcombine.low %v247, %v254
  %v258 = vunpack.c.l.s4 1966171168
  %v259 = vunpack.c.0.s8 %v258
  %v260 = vlaneseq
  %v261 = vshrl.u32 %v260, 7
  %v262 = vsub.s32 %v259, %v261
  %v263 = vrot.slane %v255, %v262
  %v265 = vunpack.c.l.s4 1966171168
  %v266 = vunpack.c.0.s8 %v265
  %v267 = vlaneseq
  %v268 = vshrl.u32 %v267, 7
  %v269 = vsub.s32 %v266, %v268
  %v270 = vrot.slane %v256, %v269
  %v271 = vcombine.low %v263, %v270
  %273 = vst [vmem:[%s3] sm:$0xff] %v271
  // Predicated region
  $region14: #{_lambda_.10} parent=0 // pred_check
    _
  $region15: #{_lambda_.10} parent=0 // pred_check_branch
    %275 = sbr.rel (0) target = $region17
  $region16: #{_lambda_.10} parent=0 // pred_region
    _
  $region17: #{_lambda_.10} parent=0 // pred_fallthru
    _
  // Predicated region
  $region18: #{_lambda_.10} parent=0 // pred_check
    _
  $region19: #{_lambda_.10} parent=0 // pred_check_branch
    %277 = sbr.rel (0) target = $region21
  $region20: #{_lambda_.10} parent=0 // pred_region
    _
  $region21: #{_lambda_.10} parent=0 // pred_fallthru
    _

// kernel: tile.53
$region0: #{tile.53}
  #allocation0 [shape = 's32[1]{0}', space=sflag, size = 0x4, scoped, tag = 'scoped memory for tile.53']
  %s0 = inlined_call_operand.vmem [shape: f32[32], index: 0, kind: input, shape index: {}]
  %s1 = inlined_call_operand.vmem [shape: f32[4,32], index: 1, kind: output, shape index: {}]
  // Predicated region
  $region2: #{tile.53} parent=0 // pred_check
    _
  $region3: #{tile.53} parent=0 // pred_check_branch
    %3 = sbr.rel (0) target = $region5
  $region4: #{tile.53} parent=0 // pred_region
    _
  $region5: #{tile.53} parent=0 // pred_fallthru
    _
  %v4 = vld [vmem:[%s0] ss:$0 sm:$0xff]
  %5 = vst [vmem:[%s1] sm:$0xf] %v4

// kernel: tile.58
$region0: #{tile.58}
  %s0 = inlined_call_operand.vmem [shape: f32[4,32], index: 0, kind: input, shape index: {}]
  %s1 = inlined_call_operand.vmem [shape: f32[1,128], index: 1, kind: output, shape index: {}]
  $region1: #{tile.58} parent=0
    #allocation0 [shape = 'u8[4096]{0}', space=vmem, size = 0x1000, scoped, tag = 'scoped mem for output reshape']
    #allocation1 [shape = 'u8[4096]{0}', space=vmem, size = 0x1000, scoped, tag = 'scoped mem for input reshape']
    %s3 = sshll.u32 1, 4
    %s4 = ssub.s32 %s3, 1
    %v5 = vld [vmem:[%s0] sm:%s4]
    %6 = vst [vmem:[#allocation1] sm:%s4] %v5
    %v7 = vld [vmem:[#allocation1] sm:$0x1]
    %vm8 = vcmask 261120
    %9 = vst.msk [vmem:[#allocation0] sm:$0x1] %vm8, %v7
    %s10 = scalar_lea.vmem [#allocation1], 3
    %v11 = vld [vmem:[%s10] sm:$0x1]
    %12 = vrot.lane.b32.xlu0 %v11, 96
    %v13 = vpop.permute.xlu0 %12
    %vm14 = vcmask 1048320
    %15 = vst.msk [vmem:[#allocation0] sm:$0x1] %vm14, %v13
    %s16 = scalar_lea.vmem [#allocation1], 2
    %v17 = vld [vmem:[%s16] sm:$0x1]
    %18 = vrot.lane.b32.xlu0 %v17, 64
    %v19 = vpop.permute.xlu0 %18
    %vm20 = vcmask 785920
    %21 = vst.msk [vmem:[#allocation0] sm:$0x1] %vm20, %v19
    %s22 = scalar_lea.vmem [#allocation1], 1
    %v23 = vld [vmem:[%s22] sm:$0x1]
    %24 = vrot.lane.b32.xlu0 %v23, 32
    %v25 = vpop.permute.xlu0 %24
    %vm26 = vcmask 523520
    %27 = vst.msk [vmem:[#allocation0] sm:$0x1] %vm26, %v25
    %s29 = sshll.u32 1, 1
    %s30 = ssub.s32 %s29, 1
    %v32 = vld [vmem:[#allocation0] sm:%s30]
    %s33 = sshll.u32 1, 1
    %s34 = ssub.s32 %s33, 1
    %35 = vst [vmem:[%s1] sm:%s34] %v32

// kernel: _lambda_.11
$region0: #{_lambda_.11}
  #allocation0 [shape = 'u32[]', space=smem, size = 0x4, offset = 0x4, fixed_abs, tag = 'smem constant byte address 0x4 - core index']
  #allocation1 [shape = 'u32[144,128]{1,0:T(1,128)}', space=vmem, size = 0x12000, scoped, tag = 'internal scratch']
  %s0 = inlined_call_operand.vmem [shape: bf16[32,576], index: 0, kind: input, shape index: {}]
  %s1 = inlined_call_operand.vmem [shape: bf16[576,128], index: 1, kind: input, shape index: {}]
  %s2 = inlined_call_operand.vmem [shape: bf16[32,128], index: 2, kind: output, shape index: {0}]
  %s3 = inlined_call_operand.vmem [shape: f32[8,128], index: 3, kind: output, shape index: {1}]
  %s4 = inlined_call_operand.vmem [shape: f32[8,128], index: 4, kind: output, shape index: {2}]
  %5 = xla_tuple %s2, %s3, %s4
  %s6 = sld [smem:[#allocation0]]
  $region34: #{_lambda_.11} parent=0
    _
  %s8 = ssub.s32 1, %s6
  %s9 = scalar_select 0, %s8, %s6
  // Predicated region
  $region2: #{_lambda_.11} parent=0 // pred_check
    _
  $region3: #{_lambda_.11} parent=0 // pred_check_branch
    %11 = sbr.rel (0) target = $region5
  $region4: #{_lambda_.11} parent=0 // pred_region
    _
  $region5: #{_lambda_.11} parent=0 // pred_fallthru
    _
  // Predicated region
  $region6: #{_lambda_.11} parent=0 // pred_check
    _
  $region7: #{_lambda_.11} parent=0 // pred_check_branch
    %13 = sbr.rel (0) target = $region9
  $region8: #{_lambda_.11} parent=0 // pred_region
    _
  $region9: #{_lambda_.11} parent=0 // pred_fallthru
    _
  %v15 = vld [vmem:[%s0] sm:$0xff]
  %v16 = vld [vmem:[%s0 + $0x8] sm:$0xff]
  %v17 = vld [vmem:[%s0 + $0x10] sm:$0xf]
  %v18 = vld [vmem:[%s0 + $0x14] sm:$0xff]
  %v19 = vld [vmem:[%s0 + $0x1c] sm:$0xff]
  %v20 = vld [vmem:[%s0 + $0x24] sm:$0xf]
  %v21 = vld [vmem:[%s0 + $0x28] sm:$0xff]
  %v22 = vld [vmem:[%s0 + $0x30] sm:$0xff]
  %v23 = vld [vmem:[%s0 + $0x38] sm:$0xf]
  %v24 = vld [vmem:[%s0 + $0x3c] sm:$0xff]
  %v25 = vld [vmem:[%s0 + $0x44] sm:$0xff]
  %v26 = vld [vmem:[%s0 + $0x4c] sm:$0xf]
  %v27 = vld [vmem:[%s1] sm:$0xf]
  %v28 = vld [vmem:[%s1 + $0x4] sm:$0xf]
  %v29 = vld [vmem:[%s1 + $0x8] sm:$0xf]
  %v30 = vld [vmem:[%s1 + $0xc] sm:$0xf]
  %v31 = vld [vmem:[%s1 + $0x10] sm:$0xf]
  %v32 = vld [vmem:[%s1 + $0x14] sm:$0xf]
  %v33 = vld [vmem:[%s1 + $0x18] sm:$0xf]
  %v34 = vld [vmem:[%s1 + $0x1c] sm:$0xf]
  %v35 = vld [vmem:[%s1 + $0x20] sm:$0xf]
  %v36 = vld [vmem:[%s1 + $0x24] sm:$0xf]
  %v37 = vld [vmem:[%s1 + $0x28] sm:$0xf]
  %v38 = vld [vmem:[%s1 + $0x2c] sm:$0xf]
  %v39 = vld [vmem:[%s1 + $0x30] sm:$0xf]
  %v40 = vld [vmem:[%s1 + $0x34] sm:$0xf]
  %v41 = vld [vmem:[%s1 + $0x38] sm:$0xf]
  %v42 = vld [vmem:[%s1 + $0x3c] sm:$0xf]
  %v43 = vld [vmem:[%s1 + $0x40] sm:$0xf]
  %v44 = vld [vmem:[%s1 + $0x44] sm:$0xf]
  %v45 = vld [vmem:[%s1 + $0x48] sm:$0xf]
  %v46 = vld [vmem:[%s1 + $0x4c] sm:$0xf]
  %v47 = vld [vmem:[%s1 + $0x50] sm:$0xf]
  %v48 = vld [vmem:[%s1 + $0x54] sm:$0xf]
  %v49 = vld [vmem:[%s1 + $0x58] sm:$0xf]
  %v50 = vld [vmem:[%s1 + $0x5c] sm:$0xf]
  %v51 = vld [vmem:[%s1 + $0x60] sm:$0xf]
  %v52 = vld [vmem:[%s1 + $0x64] sm:$0xf]
  %v53 = vld [vmem:[%s1 + $0x68] sm:$0xf]
  %v54 = vld [vmem:[%s1 + $0x6c] sm:$0xf]
  %v55 = vld [vmem:[%s1 + $0x70] sm:$0xf]
  %v56 = vld [vmem:[%s1 + $0x74] sm:$0xf]
  %v57 = vld [vmem:[%s1 + $0x78] sm:$0xf]
  %v58 = vld [vmem:[%s1 + $0x7c] sm:$0xf]
  %v59 = vld [vmem:[%s1 + $0x80] sm:$0xf]
  %v60 = vld [vmem:[%s1 + $0x84] sm:$0xf]
  %v61 = vld [vmem:[%s1 + $0x88] sm:$0xf]
  %v62 = vld [vmem:[%s1 + $0x8c] sm:$0xf]
  %v63 = vld [vmem:[%s1 + $0x90] sm:$0xf]
  %v64 = vld [vmem:[%s1 + $0x94] sm:$0xf]
  %v65 = vld [vmem:[%s1 + $0x98] sm:$0xf]
  %v66 = vld [vmem:[%s1 + $0x9c] sm:$0xf]
  %v67 = vld [vmem:[%s1 + $0xa0] sm:$0xf]
  %v68 = vld [vmem:[%s1 + $0xa4] sm:$0xf]
  %v69 = vld [vmem:[%s1 + $0xa8] sm:$0xf]
  %v70 = vld [vmem:[%s1 + $0xac] sm:$0xf]
  %v71 = vld [vmem:[%s1 + $0xb0] sm:$0xf]
  %v72 = vld [vmem:[%s1 + $0xb4] sm:$0xf]
  %v73 = vld [vmem:[%s1 + $0xb8] sm:$0xf]
  %v74 = vld [vmem:[%s1 + $0xbc] sm:$0xf]
  %v75 = vld [vmem:[%s1 + $0xc0] sm:$0xf]
  %v76 = vld [vmem:[%s1 + $0xc4] sm:$0xf]
  %v77 = vld [vmem:[%s1 + $0xc8] sm:$0xf]
  %v78 = vld [vmem:[%s1 + $0xcc] sm:$0xf]
  %v79 = vld [vmem:[%s1 + $0xd0] sm:$0xf]
  %v80 = vld [vmem:[%s1 + $0xd4] sm:$0xf]
  %v81 = vld [vmem:[%s1 + $0xd8] sm:$0xf]
  %v82 = vld [vmem:[%s1 + $0xdc] sm:$0xf]
  %v83 = vld [vmem:[%s1 + $0xe0] sm:$0xf]
  %v84 = vld [vmem:[%s1 + $0xe4] sm:$0xf]
  %v85 = vld [vmem:[%s1 + $0xe8] sm:$0xf]
  %v86 = vld [vmem:[%s1 + $0xec] sm:$0xf]
  %v87 = vld [vmem:[%s1 + $0xf0] sm:$0xf]
  %v88 = vld [vmem:[%s1 + $0xf4] sm:$0xf]
  %v89 = vld [vmem:[%s1 + $0xf8] sm:$0xf]
  %v90 = vld [vmem:[%s1 + $0xfc] sm:$0xf]
  %v91 = vld [vmem:[%s1 + $0x100] sm:$0xf]
  %v92 = vld [vmem:[%s1 + $0x104] sm:$0xf]
  %v93 = vld [vmem:[%s1 + $0x108] sm:$0xf]
  %v94 = vld [vmem:[%s1 + $0x10c] sm:$0xf]
  %v95 = vld [vmem:[%s1 + $0x110] sm:$0xf]
  %v96 = vld [vmem:[%s1 + $0x114] sm:$0xf]
  %v97 = vld [vmem:[%s1 + $0x118] sm:$0xf]
  %v98 = vld [vmem:[%s1 + $0x11c] sm:$0xf]
  %v111 = vunpack.c.l.b16 %v15
  %v112 = vunpack.c.h.b16 %v15
  %v113 = vunpack.c.l.b16 %v16
  %v114 = vunpack.c.h.b16 %v16
  %v115 = vunpack.c.l.b16 %v17
  %v116 = vunpack.c.l.b16 %v18
  %v117 = vunpack.c.h.b16 %v18
  %v118 = vunpack.c.l.b16 %v19
  %v119 = vunpack.c.h.b16 %v19
  %v120 = vunpack.c.l.b16 %v20
  %v121 = vunpack.c.l.b16 %v21
  %v122 = vunpack.c.h.b16 %v21
  %v123 = vunpack.c.l.b16 %v22
  %v124 = vunpack.c.h.b16 %v22
  %v125 = vunpack.c.l.b16 %v23
  %v126 = vunpack.c.l.b16 %v24
  %v127 = vunpack.c.h.b16 %v24
  %v128 = vunpack.c.l.b16 %v25
  %v129 = vunpack.c.h.b16 %v25
  %v130 = vunpack.c.l.b16 %v26
  %v131 = vpack.c.b16 %v116, %v111
  %v132 = vpack.c.b16 %v117, %v112
  %v133 = vpack.c.b16 %v118, %v113
  %v134 = vpack.c.b16 %v119, %v114
  %v135 = vpack.c.b16 %v120, %v115
  %v136 = vpack.c.b16 %v126, %v121
  %v137 = vpack.c.b16 %v127, %v122
  %v138 = vpack.c.b16 %v128, %v123
  %v139 = vpack.c.b16 %v129, %v124
  %v140 = vpack.c.b16 %v130, %v125
  %v221 = vunpack.c.l.b16 %v27
  %v222 = vunpack.c.l.b16 %v28
  %v223 = vunpack.c.l.b16 %v29
  %v224 = vunpack.c.l.b16 %v30
  %v225 = vunpack.c.l.b16 %v31
  %v226 = vunpack.c.l.b16 %v32
  %v227 = vunpack.c.l.b16 %v33
  %v228 = vunpack.c.l.b16 %v34
  %v229 = vunpack.c.l.b16 %v35
  %v230 = vunpack.c.l.b16 %v36
  %v231 = vunpack.c.l.b16 %v37
  %v232 = vunpack.c.l.b16 %v38
  %v233 = vunpack.c.l.b16 %v39
  %v234 = vunpack.c.l.b16 %v40
  %v235 = vunpack.c.l.b16 %v41
  %v236 = vunpack.c.l.b16 %v42
  %v237 = vunpack.c.l.b16 %v43
  %v238 = vunpack.c.l.b16 %v44
  %v239 = vunpack.c.l.b16 %v45
  %v240 = vunpack.c.l.b16 %v46
  %v241 = vunpack.c.l.b16 %v47
  %v242 = vunpack.c.l.b16 %v48
  %v243 = vunpack.c.l.b16 %v49
  %v244 = vunpack.c.l.b16 %v50
  %v245 = vunpack.c.l.b16 %v51
  %v246 = vunpack.c.l.b16 %v52
  %v247 = vunpack.c.l.b16 %v53
  %v248 = vunpack.c.l.b16 %v54
  %v249 = vunpack.c.l.b16 %v55
  %v250 = vunpack.c.l.b16 %v56
  %v251 = vunpack.c.l.b16 %v57
  %v252 = vunpack.c.l.b16 %v58
  %v253 = vunpack.c.l.b16 %v59
  %v254 = vunpack.c.l.b16 %v60
  %v255 = vunpack.c.l.b16 %v61
  %v256 = vunpack.c.l.b16 %v62
  %v257 = vunpack.c.l.b16 %v63
  %v258 = vunpack.c.l.b16 %v64
  %v259 = vunpack.c.l.b16 %v65
  %v260 = vunpack.c.l.b16 %v66
  %v261 = vunpack.c.l.b16 %v67
  %v262 = vunpack.c.l.b16 %v68
  %v263 = vunpack.c.l.b16 %v69
  %v264 = vunpack.c.l.b16 %v70
  %v265 = vunpack.c.l.b16 %v71
  %v266 = vunpack.c.l.b16 %v72
  %v267 = vunpack.c.l.b16 %v73
  %v268 = vunpack.c.l.b16 %v74
  %v269 = vunpack.c.l.b16 %v75
  %v270 = vunpack.c.l.b16 %v76
  %v271 = vunpack.c.l.b16 %v77
  %v272 = vunpack.c.l.b16 %v78
  %v273 = vunpack.c.l.b16 %v79
  %v274 = vunpack.c.l.b16 %v80
  %v275 = vunpack.c.l.b16 %v81
  %v276 = vunpack.c.l.b16 %v82
  %v277 = vunpack.c.l.b16 %v83
  %v278 = vunpack.c.l.b16 %v84
  %v279 = vunpack.c.l.b16 %v85
  %v280 = vunpack.c.l.b16 %v86
  %v281 = vunpack.c.l.b16 %v87
  %v282 = vunpack.c.l.b16 %v88
  %v283 = vunpack.c.l.b16 %v89
  %v284 = vunpack.c.l.b16 %v90
  %v285 = vunpack.c.l.b16 %v91
  %v286 = vunpack.c.l.b16 %v92
  %v287 = vunpack.c.l.b16 %v93
  %v288 = vunpack.c.l.b16 %v94
  %v289 = vunpack.c.l.b16 %v95
  %v290 = vunpack.c.l.b16 %v96
  %v291 = vunpack.c.l.b16 %v97
  %v292 = vunpack.c.l.b16 %v98
  %v293 = vpack.c.b16 %v222, %v221
  %v294 = vpack.c.b16 %v224, %v223
  %v295 = vpack.c.b16 %v226, %v225
  %v296 = vpack.c.b16 %v228, %v227
  %v297 = vpack.c.b16 %v230, %v229
  %v298 = vpack.c.b16 %v232, %v231
  %v299 = vpack.c.b16 %v234, %v233
  %v300 = vpack.c.b16 %v236, %v235
  %v301 = vpack.c.b16 %v238, %v237
  %v302 = vpack.c.b16 %v240, %v239
  %v303 = vpack.c.b16 %v242, %v241
  %v304 = vpack.c.b16 %v244, %v243
  %v305 = vpack.c.b16 %v246, %v245
  %v306 = vpack.c.b16 %v248, %v247
  %v307 = vpack.c.b16 %v250, %v249
  %v308 = vpack.c.b16 %v252, %v251
  %v309 = vpack.c.b16 %v254, %v253
  %v310 = vpack.c.b16 %v256, %v255
  %v311 = vpack.c.b16 %v258, %v257
  %v312 = vpack.c.b16 %v260, %v259
  %v313 = vpack.c.b16 %v262, %v261
  %v314 = vpack.c.b16 %v264, %v263
  %v315 = vpack.c.b16 %v266, %v265
  %v316 = vpack.c.b16 %v268, %v267
  %v317 = vpack.c.b16 %v270, %v269
  %v318 = vpack.c.b16 %v272, %v271
  %v319 = vpack.c.b16 %v274, %v273
  %v320 = vpack.c.b16 %v276, %v275
  %v321 = vpack.c.b16 %v278, %v277
  %v322 = vpack.c.b16 %v280, %v279
  %v323 = vpack.c.b16 %v282, %v281
  %v324 = vpack.c.b16 %v284, %v283
  %v325 = vpack.c.b16 %v286, %v285
  %v326 = vpack.c.b16 %v288, %v287
  %v327 = vpack.c.b16 %v290, %v289
  %v328 = vpack.c.b16 %v292, %v291
  %vm365 = vcmask 523264
  %v367 = vsel %vm365, %v135, 0
  %v370 = vsel %vm365, %v140, 0
  %372 = vmatprep.subr.bf16.mxu0 0
  %373 = vmatpush1.bf16.msra.mxu0 %v300
  %374 = vmatprep.subr.bf16.mxu0 0
  %375 = vmatpush1.bf16.msra.mxu0 %v299
  %376 = vmatprep.subr.bf16.mxu0 0
  %377 = vmatpush1.bf16.msra.mxu0 %v298
  %378 = vmatprep.subr.bf16.mxu0 0
  %379 = vmatpush1.bf16.msra.mxu0 %v297
  %380 = vmatprep.subr.bf16.mxu0 0
  %381 = vmatpush1.bf16.msra.mxu0 %v296
  %382 = vmatprep.subr.bf16.mxu0 0
  %383 = vmatpush1.bf16.msra.mxu0 %v295
  %384 = vmatprep.subr.bf16.mxu0 0
  %385 = vmatpush1.bf16.msra.mxu0 %v294
  %386 = vmatprep.subr.bf16.mxu0 0
  %387 = vmatpush1.bf16.msra.mxu0 %v293
  %388 = vmatprep.subr.bf16.mxu0 0
  %389 = vmatpush2.bf16.msra.mxu0 %v308
  %390 = vmatprep.subr.bf16.mxu0 0
  %391 = vmatpush2.bf16.msra.mxu0 %v307
  %392 = vmatprep.subr.bf16.mxu0 0
  %393 = vmatpush2.bf16.msra.mxu0 %v306
  %394 = vmatprep.subr.bf16.mxu0 0
  %395 = vmatpush2.bf16.msra.mxu0 %v305
  %396 = vmatprep.subr.bf16.mxu0 0
  %397 = vmatpush2.bf16.msra.mxu0 %v304
  %398 = vmatprep.subr.bf16.mxu0 0
  %399 = vmatpush2.bf16.msra.mxu0 %v303
  %400 = vmatprep.subr.bf16.mxu0 0
  %401 = vmatpush2.bf16.msra.mxu0 %v302
  %402 = vmatprep.subr.bf16.mxu0 0
  %403 = vmatpush2.bf16.msra.mxu0 %v301
  %404 = vmatprep.mubr.bf16.mxu0 %v132
  %405 = vmatmul.mubr.bf16.gmra.mxu0 %v131
  %v406 = vpop.f32.mrf.mxu0
  %v407 = vadd.f32 0.0, %v406
  %v408 = vpop.f32.mrf.mxu0
  %v409 = vpop.f32.mrf.mxu0
  %v410 = vadd.f32 0.0, %v409
  %v411 = vpop.f32.mrf.mxu0
  %412 = vmatprep.mubr.bf16.mxu0 %v137
  %413 = vmatmul.mubr.bf16.gmra.mxu0 %v136
  %v414 = vpop.f32.mrf.mxu0
  %v415 = vadd.f32 0.0, %v414
  %v416 = vpop.f32.mrf.mxu0
  %v417 = vpop.f32.mrf.mxu0
  %v418 = vadd.f32 0.0, %v417
  %v419 = vpop.f32.mrf.mxu0
  %420 = vdwg.mxu0
  %421 = vmatprep.subr.bf16.mxu0 0
  %422 = vmatpush1.bf16.msra.mxu0 %v316
  %423 = vmatprep.subr.bf16.mxu0 0
  %424 = vmatpush1.bf16.msra.mxu0 %v315
  %425 = vmatprep.subr.bf16.mxu0 0
  %426 = vmatpush1.bf16.msra.mxu0 %v314
  %427 = vmatprep.subr.bf16.mxu0 0
  %428 = vmatpush1.bf16.msra.mxu0 %v313
  %429 = vmatprep.subr.bf16.mxu0 0
  %430 = vmatpush1.bf16.msra.mxu0 %v312
  %431 = vmatprep.subr.bf16.mxu0 0
  %432 = vmatpush1.bf16.msra.mxu0 %v311
  %433 = vmatprep.subr.bf16.mxu0 0
  %434 = vmatpush1.bf16.msra.mxu0 %v310
  %435 = vmatprep.subr.bf16.mxu0 0
  %436 = vmatpush1.bf16.msra.mxu0 %v309
  %437 = vmatprep.subr.bf16.mxu0 0
  %438 = vmatpush2.bf16.msra.mxu0 %v324
  %439 = vmatprep.subr.bf16.mxu0 0
  %440 = vmatpush2.bf16.msra.mxu0 %v323
  %441 = vmatprep.subr.bf16.mxu0 0
  %442 = vmatpush2.bf16.msra.mxu0 %v322
  %443 = vmatprep.subr.bf16.mxu0 0
  %444 = vmatpush2.bf16.msra.mxu0 %v321
  %445 = vmatprep.subr.bf16.mxu0 0
  %446 = vmatpush2.bf16.msra.mxu0 %v320
  %447 = vmatprep.subr.bf16.mxu0 0
  %448 = vmatpush2.bf16.msra.mxu0 %v319
  %449 = vmatprep.subr.bf16.mxu0 0
  %450 = vmatpush2.bf16.msra.mxu0 %v318
  %451 = vmatprep.subr.bf16.mxu0 0
  %452 = vmatpush2.bf16.msra.mxu0 %v317
  %453 = vmatprep.mubr.bf16.mxu0 %v134
  %454 = vmatmul.mubr.bf16.gmra.mxu0 %v133
  %v455 = vpop.f32.mrf.mxu0
  %v456 = vadd.f32 %v407, %v455
  %v457 = vpop.f32.mrf.mxu0
  %v458 = vpop.f32.mrf.mxu0
  %v459 = vadd.f32 %v410, %v458
  %v460 = vpop.f32.mrf.mxu0
  %461 = vmatprep.mubr.bf16.mxu0 %v139
  %462 = vmatmul.mubr.bf16.gmra.mxu0 %v138
  %v463 = vpop.f32.mrf.mxu0
  %v464 = vadd.f32 %v415, %v463
  %v465 = vpop.f32.mrf.mxu0
  %v466 = vpop.f32.mrf.mxu0
  %v467 = vadd.f32 %v418, %v466
  %v468 = vpop.f32.mrf.mxu0
  %469 = vdwg.mxu0
  %470 = vmatprep.subr.bf16.mxu0 0
  %471 = vmatpush1.bf16.msra.mxu0 0
  %472 = vmatprep.subr.bf16.mxu0 0
  %473 = vmatpush1.bf16.msra.mxu0 0
  %474 = vmatprep.subr.bf16.mxu0 0
  %475 = vmatpush1.bf16.msra.mxu0 0
  %476 = vmatprep.subr.bf16.mxu0 0
  %477 = vmatpush1.bf16.msra.mxu0 0
  %478 = vmatprep.subr.bf16.mxu0 0
  %479 = vmatpush1.bf16.msra.mxu0 %v328
  %480 = vmatprep.subr.bf16.mxu0 0
  %481 = vmatpush1.bf16.msra.mxu0 %v327
  %482 = vmatprep.subr.bf16.mxu0 0
  %483 = vmatpush1.bf16.msra.mxu0 %v326
  %484 = vmatprep.subr.bf16.mxu0 0
  %485 = vmatpush1.bf16.msra.mxu0 %v325
  %486 = vmatprep.subr.bf16.mxu0 0
  %487 = vmatpush2.bf16.msra.mxu0 0
  %488 = vmatprep.subr.bf16.mxu0 0
  %489 = vmatpush2.bf16.msra.mxu0 0
  %490 = vmatprep.subr.bf16.mxu0 0
  %491 = vmatpush2.bf16.msra.mxu0 0
  %492 = vmatprep.subr.bf16.mxu0 0
  %493 = vmatpush2.bf16.msra.mxu0 0
  %494 = vmatprep.subr.bf16.mxu0 0
  %495 = vmatpush2.bf16.msra.mxu0 0
  %496 = vmatprep.subr.bf16.mxu0 0
  %497 = vmatpush2.bf16.msra.mxu0 0
  %498 = vmatprep.subr.bf16.mxu0 0
  %499 = vmatpush2.bf16.msra.mxu0 0
  %500 = vmatprep.subr.bf16.mxu0 0
  %501 = vmatpush2.bf16.msra.mxu0 0
  %502 = vmatprep.mubr.bf16.mxu0 0
  %503 = vmatmul.mubr.bf16.gmra.mxu0 %v367
  %v504 = vpop.f32.mrf.mxu0
  %v505 = vadd.f32 %v456, %v504
  %v506 = vpop.f32.mrf.mxu0
  %v507 = vpop.f32.mrf.mxu0
  %v508 = vadd.f32 %v459, %v507
  %v509 = vpop.f32.mrf.mxu0
  %510 = vmatprep.mubr.bf16.mxu0 0
  %511 = vmatmul.mubr.bf16.gmra.mxu0 %v370
  %v512 = vpop.f32.mrf.mxu0
  %v513 = vadd.f32 %v464, %v512
  %v514 = vpop.f32.mrf.mxu0
  %v515 = vpop.f32.mrf.mxu0
  %v516 = vadd.f32 %v467, %v515
  %v517 = vpop.f32.mrf.mxu0
  %518 = vdwg.mxu0
  %v519 = vpack.c.bf16 %v508, %v505
  %v520 = vpack.c.bf16 %v516, %v513
  %v523 = vunpack.c.l.b16 %v519
  %v524 = vunpack.c.h.b16 %v519
  %v525 = vunpack.c.l.b16 %v520
  %v526 = vunpack.c.h.b16 %v520
  %v527 = vpack.c.b16 %v523, %v523
  %v528 = vpack.c.b16 %v524, %v524
  %v529 = vpack.c.b16 %v525, %v525
  %v530 = vpack.c.b16 %v526, %v526
  %535 = vst [vmem:[%s2] sm:$0xf] %v527
  %536 = vst [vmem:[%s2 + $0x4] sm:$0xf] %v528
  %537 = vst [vmem:[%s2 + $0x8] sm:$0xf] %v529
  %538 = vst [vmem:[%s2 + $0xc] sm:$0xf] %v530
  %v539 = vadd.f32 %v505, %v508
  %v540 = vadd.f32 %v539, %v513
  %v541 = vadd.f32 %v540, %v516
  %v542 = vrot.slane %v541, 4
  %v543 = vadd.f32 %v541, %v542
  %v544 = vrot.slane %v543, 2
  %v545 = vadd.f32 %v543, %v544
  %v546 = vrot.slane %v545, 1
  %v547 = vadd.f32 %v545, %v546
  %v548 = vmul.f32 %v505, %v505
  %v549 = vmul.f32 %v508, %v508
  %v550 = vmul.f32 %v513, %v513
  %v551 = vmul.f32 %v516, %v516
  %v552 = vadd.f32 %v548, %v549
  %v553 = vadd.f32 %v552, %v550
  %v554 = vadd.f32 %v553, %v551
  %v555 = vrot.slane %v554, 4
  %v556 = vadd.f32 %v554, %v555
  %v557 = vrot.slane %v556, 2
  %v558 = vadd.f32 %v556, %v557
  %v559 = vrot.slane %v558, 1
  %v560 = vadd.f32 %v558, %v559
  %v561 = vlaneseq
  %v562 = vshrl.u32 %v561, 7
  %vm563 = vcmp.eq.s32.totalorder %v562, 0
  %v564 = vsel %vm563, %v547, 0.0
  %565 = vst [vmem:[%s3] sm:$0xff] %v564
  %v566 = vsel %vm563, %v560, 0.0
  %567 = vst [vmem:[%s4] sm:$0xff] %v566
  // Predicated region
  $region10: #{_lambda_.11} parent=0 // pred_check
    _
  $region11: #{_lambda_.11} parent=0 // pred_check_branch
    %569 = sbr.rel (0) target = $region13
  $region12: #{_lambda_.11} parent=0 // pred_region
    _
  $region13: #{_lambda_.11} parent=0 // pred_fallthru
    _
  // Predicated region
  $region14: #{_lambda_.11} parent=0 // pred_check
    _
  $region15: #{_lambda_.11} parent=0 // pred_check_branch
    %571 = sbr.rel (0) target = $region17
  $region16: #{_lambda_.11} parent=0 // pred_region
    _
  $region17: #{_lambda_.11} parent=0 // pred_fallthru
    _
  // Predicated region
  $region18: #{_lambda_.11} parent=0 // pred_check
    _
  $region19: #{_lambda_.11} parent=0 // pred_check_branch
    %573 = sbr.rel (0) target = $region21
  $region20: #{_lambda_.11} parent=0 // pred_region
    _
  $region21: #{_lambda_.11} parent=0 // pred_fallthru
    _
  // Predicated region
  $region22: #{_lambda_.11} parent=0 // pred_check
    _
  $region23: #{_lambda_.11} parent=0 // pred_check_branch
    %575 = sbr.rel (0) target = $region25
  $region24: #{_lambda_.11} parent=0 // pred_region
    _
  $region25: #{_lambda_.11} parent=0 // pred_fallthru
    _
  // Predicated region
  $region26: #{_lambda_.11} parent=0 // pred_check
    _
  $region27: #{_lambda_.11} parent=0 // pred_check_branch
    %577 = sbr.rel (0) target = $region29
  $region28: #{_lambda_.11} parent=0 // pred_region
    _
  $region29: #{_lambda_.11} parent=0 // pred_fallthru
    _
  // Predicated region
  $region30: #{_lambda_.11} parent=0 // pred_check
    _
  $region31: #{_lambda_.11} parent=0 // pred_check_branch
    %579 = sbr.rel (0) target = $region33
  $region32: #{_lambda_.11} parent=0 // pred_region
    _
  $region33: #{_lambda_.11} parent=0 // pred_fallthru
    _

// kernel: _lambda_.12
$region0: #{_lambda_.12}
  #allocation0 [shape = 'u32[]', space=smem, size = 0x4, offset = 0x4, fixed_abs, tag = 'smem constant byte address 0x4 - core index']
  #allocation1 [shape = 'u32[144,128]{1,0:T(1,128)}', space=vmem, size = 0x12000, scoped, tag = 'internal scratch']
  %s0 = inlined_call_operand.vmem [shape: bf16[32,128], index: 0, kind: input, shape index: {}]
  %s1 = inlined_call_operand.vmem [shape: f32[1,128], index: 1, kind: input, shape index: {}]
  %s2 = inlined_call_operand.vmem [shape: f32[1,128], index: 2, kind: input, shape index: {}]
  %s3 = inlined_call_operand.vmem [shape: bf16[32,128], index: 3, kind: output, shape index: {}]
  %s4 = sld [smem:[#allocation0]]
  $region22: #{_lambda_.12} parent=0
    _
  %s6 = ssub.s32 1, %s4
  %s7 = scalar_select 0, %s6, %s4
  // Predicated region
  $region2: #{_lambda_.12} parent=0 // pred_check
    _
  $region3: #{_lambda_.12} parent=0 // pred_check_branch
    %9 = sbr.rel (0) target = $region5
  $region4: #{_lambda_.12} parent=0 // pred_region
    _
  $region5: #{_lambda_.12} parent=0 // pred_fallthru
    _
  // Predicated region
  $region6: #{_lambda_.12} parent=0 // pred_check
    _
  $region7: #{_lambda_.12} parent=0 // pred_check_branch
    %11 = sbr.rel (0) target = $region9
  $region8: #{_lambda_.12} parent=0 // pred_region
    _
  $region9: #{_lambda_.12} parent=0 // pred_fallthru
    _
  // Predicated region
  $region10: #{_lambda_.12} parent=0 // pred_check
    _
  $region11: #{_lambda_.12} parent=0 // pred_check_branch
    %13 = sbr.rel (0) target = $region13
  $region12: #{_lambda_.12} parent=0 // pred_region
    _
  $region13: #{_lambda_.12} parent=0 // pred_fallthru
    _
  %v14 = vld [vmem:[%s0] sm:$0xf]
  %v15 = vld [vmem:[%s0 + $0x4] sm:$0xf]
  %v16 = vld [vmem:[%s0 + $0x8] sm:$0xf]
  %v17 = vld [vmem:[%s0 + $0xc] sm:$0xf]
  %v18 = vunpack.c.l.bf16 %v14
  %v19 = vunpack.c.l.bf16 %v15
  %v20 = vunpack.c.l.bf16 %v16
  %v21 = vunpack.c.l.bf16 %v17
  %v22 = vld [vmem:[%s1] sm:$0x1]
  %v24 = vlaneseq
  %v25 = vshrl.u32 %v24, 7
  %v26 = vsub.s32 0, %v25
  %v27 = vrot.slane %v22, %v26
  %v29 = vmul.f32 %v18, %v27
  %v30 = vmul.f32 %v19, %v27
  %v31 = vmul.f32 %v20, %v27
  %v32 = vmul.f32 %v21, %v27
  %v33 = vld [vmem:[%s2] sm:$0x1]
  %v35 = vlaneseq
  %v36 = vshrl.u32 %v35, 7
  %v37 = vsub.s32 0, %v36
  %v38 = vrot.slane %v33, %v37
  %v40 = vadd.f32 %v29, %v38
  %v41 = vadd.f32 %v30, %v38
  %v42 = vadd.f32 %v31, %v38
  %v43 = vadd.f32 %v32, %v38
  %v44 = vmax.f32 %v40, 0.0
  %v45 = vmax.f32 %v41, 0.0
  %v46 = vmax.f32 %v42, 0.0
  %v47 = vmax.f32 %v43, 0.0
  %v48 = vpack.c.bf16 %v45, %v44
  %v49 = vpack.c.bf16 %v47, %v46
  %v52 = vunpack.c.l.b16 %v48
  %v53 = vunpack.c.h.b16 %v48
  %v54 = vunpack.c.l.b16 %v49
  %v55 = vunpack.c.h.b16 %v49
  %v56 = vpack.c.b16 %v52, %v52
  %v57 = vpack.c.b16 %v53, %v53
  %v58 = vpack.c.b16 %v54, %v54
  %v59 = vpack.c.b16 %v55, %v55
  %64 = vst [vmem:[%s3] sm:$0xf] %v56
  %65 = vst [vmem:[%s3 + $0x4] sm:$0xf] %v57
  %66 = vst [vmem:[%s3 + $0x8] sm:$0xf] %v58
  %67 = vst [vmem:[%s3 + $0xc] sm:$0xf] %v59
  // Predicated region
  $region14: #{_lambda_.12} parent=0 // pred_check
    _
  $region15: #{_lambda_.12} parent=0 // pred_check_branch
    %69 = sbr.rel (0) target = $region17
  $region16: #{_lambda_.12} parent=0 // pred_region
    _
  $region17: #{_lambda_.12} parent=0 // pred_fallthru
    _
  // Predicated region
  $region18: #{_lambda_.12} parent=0 // pred_check
    _
  $region19: #{_lambda_.12} parent=0 // pred_check_branch
    %71 = sbr.rel (0) target = $region21
  $region20: #{_lambda_.12} parent=0 // pred_region
    _
  $region21: #{_lambda_.12} parent=0 // pred_fallthru
    _

// kernel: _lambda_.13
$region0: #{_lambda_.13}
  #allocation0 [shape = 'u32[]', space=smem, size = 0x4, offset = 0x4, fixed_abs, tag = 'smem constant byte address 0x4 - core index']
  #allocation1 [shape = 'u32[144,128]{1,0:T(1,128)}', space=vmem, size = 0x12000, scoped, tag = 'internal scratch']
  %s0 = inlined_call_operand.vmem [shape: bf16[128,288], index: 0, kind: input, shape index: {}]
  %s1 = inlined_call_operand.vmem [shape: bf16[288,128], index: 1, kind: input, shape index: {}]
  %s2 = inlined_call_operand.vmem [shape: bf16[128,128], index: 2, kind: output, shape index: {0}]
  %s3 = inlined_call_operand.vmem [shape: f32[8,128], index: 3, kind: output, shape index: {1}]
  %s4 = inlined_call_operand.vmem [shape: f32[8,128], index: 4, kind: output, shape index: {2}]
  %5 = xla_tuple %s2, %s3, %s4
  %s6 = sld [smem:[#allocation0]]
  $region34: #{_lambda_.13} parent=0
    _
  %s8 = ssub.s32 1, %s6
  %s9 = scalar_select 0, %s8, %s6
  // Predicated region
  $region2: #{_lambda_.13} parent=0 // pred_check
    _
  $region3: #{_lambda_.13} parent=0 // pred_check_branch
    %11 = sbr.rel (0) target = $region5
  $region4: #{_lambda_.13} parent=0 // pred_region
    _
  $region5: #{_lambda_.13} parent=0 // pred_fallthru
    _
  // Predicated region
  $region6: #{_lambda_.13} parent=0 // pred_check
    _
  $region7: #{_lambda_.13} parent=0 // pred_check_branch
    %13 = sbr.rel (0) target = $region9
  $region8: #{_lambda_.13} parent=0 // pred_region
    _
  $region9: #{_lambda_.13} parent=0 // pred_fallthru
    _
  %v15 = vld [vmem:[%s0] sm:$0xff]
  %v16 = vld [vmem:[%s0 + $0x8] sm:$0xf]
  %v17 = vld [vmem:[%s0 + $0xc] sm:$0xff]
  %v18 = vld [vmem:[%s0 + $0x14] sm:$0xf]
  %v19 = vld [vmem:[%s0 + $0x18] sm:$0xff]
  %v20 = vld [vmem:[%s0 + $0x20] sm:$0xf]
  %v21 = vld [vmem:[%s0 + $0x24] sm:$0xff]
  %v22 = vld [vmem:[%s0 + $0x2c] sm:$0xf]
  %v23 = vld [vmem:[%s0 + $0x30] sm:$0xff]
  %v24 = vld [vmem:[%s0 + $0x38] sm:$0xf]
  %v25 = vld [vmem:[%s0 + $0x3c] sm:$0xff]
  %v26 = vld [vmem:[%s0 + $0x44] sm:$0xf]
  %v27 = vld [vmem:[%s0 + $0x48] sm:$0xff]
  %v28 = vld [vmem:[%s0 + $0x50] sm:$0xf]
  %v29 = vld [vmem:[%s0 + $0x54] sm:$0xff]
  %v30 = vld [vmem:[%s0 + $0x5c] sm:$0xf]
  %v31 = vld [vmem:[%s0 + $0x60] sm:$0xff]
  %v32 = vld [vmem:[%s0 + $0x68] sm:$0xf]
  %v33 = vld [vmem:[%s0 + $0x6c] sm:$0xff]
  %v34 = vld [vmem:[%s0 + $0x74] sm:$0xf]
  %v35 = vld [vmem:[%s0 + $0x78] sm:$0xff]
  %v36 = vld [vmem:[%s0 + $0x80] sm:$0xf]
  %v37 = vld [vmem:[%s0 + $0x84] sm:$0xff]
  %v38 = vld [vmem:[%s0 + $0x8c] sm:$0xf]
  %v39 = vld [vmem:[%s0 + $0x90] sm:$0xff]
  %v40 = vld [vmem:[%s0 + $0x98] sm:$0xf]
  %v41 = vld [vmem:[%s0 + $0x9c] sm:$0xff]
  %v42 = vld [vmem:[%s0 + $0xa4] sm:$0xf]
  %v43 = vld [vmem:[%s0 + $0xa8] sm:$0xff]
  %v44 = vld [vmem:[%s0 + $0xb0] sm:$0xf]
  %v45 = vld [vmem:[%s0 + $0xb4] sm:$0xff]
  %v46 = vld [vmem:[%s0 + $0xbc] sm:$0xf]
  %v47 = vld [vmem:[%s1] sm:$0xf]
  %v48 = vld [vmem:[%s1 + $0x4] sm:$0xf]
  %v49 = vld [vmem:[%s1 + $0x8] sm:$0xf]
  %v50 = vld [vmem:[%s1 + $0xc] sm:$0xf]
  %v51 = vld [vmem:[%s1 + $0x10] sm:$0xf]
  %v52 = vld [vmem:[%s1 + $0x14] sm:$0xf]
  %v53 = vld [vmem:[%s1 + $0x18] sm:$0xf]
  %v54 = vld [vmem:[%s1 + $0x1c] sm:$0xf]
  %v55 = vld [vmem:[%s1 + $0x20] sm:$0xf]
  %v56 = vld [vmem:[%s1 + $0x24] sm:$0xf]
  %v57 = vld [vmem:[%s1 + $0x28] sm:$0xf]
  %v58 = vld [vmem:[%s1 + $0x2c] sm:$0xf]
  %v59 = vld [vmem:[%s1 + $0x30] sm:$0xf]
  %v60 = vld [vmem:[%s1 + $0x34] sm:$0xf]
  %v61 = vld [vmem:[%s1 + $0x38] sm:$0xf]
  %v62 = vld [vmem:[%s1 + $0x3c] sm:$0xf]
  %v63 = vld [vmem:[%s1 + $0x40] sm:$0xf]
  %v64 = vld [vmem:[%s1 + $0x44] sm:$0xf]
  %v65 = vld [vmem:[%s1 + $0x48] sm:$0xf]
  %v66 = vld [vmem:[%s1 + $0x4c] sm:$0xf]
  %v67 = vld [vmem:[%s1 + $0x50] sm:$0xf]
  %v68 = vld [vmem:[%s1 + $0x54] sm:$0xf]
  %v69 = vld [vmem:[%s1 + $0x58] sm:$0xf]
  %v70 = vld [vmem:[%s1 + $0x5c] sm:$0xf]
  %v71 = vld [vmem:[%s1 + $0x60] sm:$0xf]
  %v72 = vld [vmem:[%s1 + $0x64] sm:$0xf]
  %v73 = vld [vmem:[%s1 + $0x68] sm:$0xf]
  %v74 = vld [vmem:[%s1 + $0x6c] sm:$0xf]
  %v75 = vld [vmem:[%s1 + $0x70] sm:$0xf]
  %v76 = vld [vmem:[%s1 + $0x74] sm:$0xf]
  %v77 = vld [vmem:[%s1 + $0x78] sm:$0xf]
  %v78 = vld [vmem:[%s1 + $0x7c] sm:$0xf]
  %v79 = vld [vmem:[%s1 + $0x80] sm:$0xf]
  %v80 = vld [vmem:[%s1 + $0x84] sm:$0xf]
  %v81 = vld [vmem:[%s1 + $0x88] sm:$0xf]
  %v82 = vld [vmem:[%s1 + $0x8c] sm:$0xf]
  %v115 = vunpack.c.l.b16 %v15
  %v116 = vunpack.c.h.b16 %v15
  %v117 = vunpack.c.l.b16 %v16
  %v118 = vunpack.c.l.b16 %v17
  %v119 = vunpack.c.h.b16 %v17
  %v120 = vunpack.c.l.b16 %v18
  %v121 = vunpack.c.l.b16 %v19
  %v122 = vunpack.c.h.b16 %v19
  %v123 = vunpack.c.l.b16 %v20
  %v124 = vunpack.c.l.b16 %v21
  %v125 = vunpack.c.h.b16 %v21
  %v126 = vunpack.c.l.b16 %v22
  %v127 = vunpack.c.l.b16 %v23
  %v128 = vunpack.c.h.b16 %v23
  %v129 = vunpack.c.l.b16 %v24
  %v130 = vunpack.c.l.b16 %v25
  %v131 = vunpack.c.h.b16 %v25
  %v132 = vunpack.c.l.b16 %v26
  %v133 = vunpack.c.l.b16 %v27
  %v134 = vunpack.c.h.b16 %v27
  %v135 = vunpack.c.l.b16 %v28
  %v136 = vunpack.c.l.b16 %v29
  %v137 = vunpack.c.h.b16 %v29
  %v138 = vunpack.c.l.b16 %v30
  %v139 = vunpack.c.l.b16 %v31
  %v140 = vunpack.c.h.b16 %v31
  %v141 = vunpack.c.l.b16 %v32
  %v142 = vunpack.c.l.b16 %v33
  %v143 = vunpack.c.h.b16 %v33
  %v144 = vunpack.c.l.b16 %v34
  %v145 = vunpack.c.l.b16 %v35
  %v146 = vunpack.c.h.b16 %v35
  %v147 = vunpack.c.l.b16 %v36
  %v148 = vunpack.c.l.b16 %v37
  %v149 = vunpack.c.h.b16 %v37
  %v150 = vunpack.c.l.b16 %v38
  %v151 = vunpack.c.l.b16 %v39
  %v152 = vunpack.c.h.b16 %v39
  %v153 = vunpack.c.l.b16 %v40
  %v154 = vunpack.c.l.b16 %v41
  %v155 = vunpack.c.h.b16 %v41
  %v156 = vunpack.c.l.b16 %v42
  %v157 = vunpack.c.l.b16 %v43
  %v158 = vunpack.c.h.b16 %v43
  %v159 = vunpack.c.l.b16 %v44
  %v160 = vunpack.c.l.b16 %v45
  %v161 = vunpack.c.h.b16 %v45
  %v162 = vunpack.c.l.b16 %v46
  %v163 = vpack.c.b16 %v118, %v115
  %v164 = vpack.c.b16 %v119, %v116
  %v165 = vpack.c.b16 %v120, %v117
  %v166 = vpack.c.b16 %v124, %v121
  %v167 = vpack.c.b16 %v125, %v122
  %v168 = vpack.c.b16 %v126, %v123
  %v169 = vpack.c.b16 %v130, %v127
  %v170 = vpack.c.b16 %v131, %v128
  %v171 = vpack.c.b16 %v132, %v129
  %v172 = vpack.c.b16 %v136, %v133
  %v173 = vpack.c.b16 %v137, %v134
  %v174 = vpack.c.b16 %v138, %v135
  %v175 = vpack.c.b16 %v142, %v139
  %v176 = vpack.c.b16 %v143, %v140
  %v177 = vpack.c.b16 %v144, %v141
  %v178 = vpack.c.b16 %v148, %v145
  %v179 = vpack.c.b16 %v149, %v146
  %v180 = vpack.c.b16 %v150, %v147
  %v181 = vpack.c.b16 %v154, %v151
  %v182 = vpack.c.b16 %v155, %v152
  %v183 = vpack.c.b16 %v156, %v153
  %v184 = vpack.c.b16 %v160, %v157
  %v185 = vpack.c.b16 %v161, %v158
  %v186 = vpack.c.b16 %v162, %v159
  %v239 = vunpack.c.l.b16 %v47
  %v240 = vunpack.c.l.b16 %v48
  %v241 = vunpack.c.l.b16 %v49
  %v242 = vunpack.c.l.b16 %v50
  %v243 = vunpack.c.l.b16 %v51
  %v244 = vunpack.c.l.b16 %v52
  %v245 = vunpack.c.l.b16 %v53
  %v246 = vunpack.c.l.b16 %v54
  %v247 = vunpack.c.l.b16 %v55
  %v248 = vunpack.c.l.b16 %v56
  %v249 = vunpack.c.l.b16 %v57
  %v250 = vunpack.c.l.b16 %v58
  %v251 = vunpack.c.l.b16 %v59
  %v252 = vunpack.c.l.b16 %v60
  %v253 = vunpack.c.l.b16 %v61
  %v254 = vunpack.c.l.b16 %v62
  %v255 = vunpack.c.l.b16 %v63
  %v256 = vunpack.c.l.b16 %v64
  %v257 = vunpack.c.l.b16 %v65
  %v258 = vunpack.c.l.b16 %v66
  %v259 = vunpack.c.l.b16 %v67
  %v260 = vunpack.c.l.b16 %v68
  %v261 = vunpack.c.l.b16 %v69
  %v262 = vunpack.c.l.b16 %v70
  %v263 = vunpack.c.l.b16 %v71
  %v264 = vunpack.c.l.b16 %v72
  %v265 = vunpack.c.l.b16 %v73
  %v266 = vunpack.c.l.b16 %v74
  %v267 = vunpack.c.l.b16 %v75
  %v268 = vunpack.c.l.b16 %v76
  %v269 = vunpack.c.l.b16 %v77
  %v270 = vunpack.c.l.b16 %v78
  %v271 = vunpack.c.l.b16 %v79
  %v272 = vunpack.c.l.b16 %v80
  %v273 = vunpack.c.l.b16 %v81
  %v274 = vunpack.c.l.b16 %v82
  %v275 = vpack.c.b16 %v240, %v239
  %v276 = vpack.c.b16 %v242, %v241
  %v277 = vpack.c.b16 %v244, %v243
  %v278 = vpack.c.b16 %v246, %v245
  %v279 = vpack.c.b16 %v248, %v247
  %v280 = vpack.c.b16 %v250, %v249
  %v281 = vpack.c.b16 %v252, %v251
  %v282 = vpack.c.b16 %v254, %v253
  %v283 = vpack.c.b16 %v256, %v255
  %v284 = vpack.c.b16 %v258, %v257
  %v285 = vpack.c.b16 %v260, %v259
  %v286 = vpack.c.b16 %v262, %v261
  %v287 = vpack.c.b16 %v264, %v263
  %v288 = vpack.c.b16 %v266, %v265
  %v289 = vpack.c.b16 %v268, %v267
  %v290 = vpack.c.b16 %v270, %v269
  %v291 = vpack.c.b16 %v272, %v271
  %v292 = vpack.c.b16 %v274, %v273
  %vm311 = vcmask 261120
  %v313 = vsel %vm311, %v165, 0
  %v316 = vsel %vm311, %v168, 0
  %v319 = vsel %vm311, %v171, 0
  %v322 = vsel %vm311, %v174, 0
  %v325 = vsel %vm311, %v177, 0
  %v328 = vsel %vm311, %v180, 0
  %v331 = vsel %vm311, %v183, 0
  %v334 = vsel %vm311, %v186, 0
  %336 = vmatprep.subr.bf16.mxu0 0
  %337 = vmatpush1.bf16.msra.mxu0 %v282
  %338 = vmatprep.subr.bf16.mxu0 0
  %339 = vmatpush1.bf16.msra.mxu0 %v281
  %340 = vmatprep.subr.bf16.mxu0 0
  %341 = vmatpush1.bf16.msra.mxu0 %v280
  %342 = vmatprep.subr.bf16.mxu0 0
  %343 = vmatpush1.bf16.msra.mxu0 %v279
  %344 = vmatprep.subr.bf16.mxu0 0
  %345 = vmatpush1.bf16.msra.mxu0 %v278
  %346 = vmatprep.subr.bf16.mxu0 0
  %347 = vmatpush1.bf16.msra.mxu0 %v277
  %348 = vmatprep.subr.bf16.mxu0 0
  %349 = vmatpush1.bf16.msra.mxu0 %v276
  %350 = vmatprep.subr.bf16.mxu0 0
  %351 = vmatpush1.bf16.msra.mxu0 %v275
  %352 = vmatprep.subr.bf16.mxu0 0
  %353 = vmatpush2.bf16.msra.mxu0 %v290
  %354 = vmatprep.subr.bf16.mxu0 0
  %355 = vmatpush2.bf16.msra.mxu0 %v289
  %356 = vmatprep.subr.bf16.mxu0 0
  %357 = vmatpush2.bf16.msra.mxu0 %v288
  %358 = vmatprep.subr.bf16.mxu0 0
  %359 = vmatpush2.bf16.msra.mxu0 %v287
  %360 = vmatprep.subr.bf16.mxu0 0
  %361 = vmatpush2.bf16.msra.mxu0 %v286
  %362 = vmatprep.subr.bf16.mxu0 0
  %363 = vmatpush2.bf16.msra.mxu0 %v285
  %364 = vmatprep.subr.bf16.mxu0 0
  %365 = vmatpush2.bf16.msra.mxu0 %v284
  %366 = vmatprep.subr.bf16.mxu0 0
  %367 = vmatpush2.bf16.msra.mxu0 %v283
  %368 = vmatprep.mubr.bf16.mxu0 %v164
  %369 = vmatmul.mubr.bf16.gmra.mxu0 %v163
  %v370 = vpop.f32.mrf.mxu0
  %v371 = vadd.f32 0.0, %v370
  %v372 = vpop.f32.mrf.mxu0
  %v373 = vpop.f32.mrf.mxu0
  %v374 = vadd.f32 0.0, %v373
  %v375 = vpop.f32.mrf.mxu0
  %376 = vmatprep.mubr.bf16.mxu0 %v167
  %377 = vmatmul.mubr.bf16.gmra.mxu0 %v166
  %v378 = vpop.f32.mrf.mxu0
  %v379 = vadd.f32 0.0, %v378
  %v380 = vpop.f32.mrf.mxu0
  %v381 = vpop.f32.mrf.mxu0
  %v382 = vadd.f32 0.0, %v381
  %v383 = vpop.f32.mrf.mxu0
  %384 = vmatprep.mubr.bf16.mxu0 %v170
  %385 = vmatmul.mubr.bf16.gmra.mxu0 %v169
  %v386 = vpop.f32.mrf.mxu0
  %v387 = vadd.f32 0.0, %v386
  %v388 = vpop.f32.mrf.mxu0
  %v389 = vpop.f32.mrf.mxu0
  %v390 = vadd.f32 0.0, %v389
  %v391 = vpop.f32.mrf.mxu0
  %392 = vmatprep.mubr.bf16.mxu0 %v173
  %393 = vmatmul.mubr.bf16.gmra.mxu0 %v172
  %v394 = vpop.f32.mrf.mxu0
  %v395 = vadd.f32 0.0, %v394
  %v396 = vpop.f32.mrf.mxu0
  %v397 = vpop.f32.mrf.mxu0
  %v398 = vadd.f32 0.0, %v397
  %v399 = vpop.f32.mrf.mxu0
  %400 = vmatprep.mubr.bf16.mxu0 %v176
  %401 = vmatmul.mubr.bf16.gmra.mxu0 %v175
  %v402 = vpop.f32.mrf.mxu0
  %v403 = vadd.f32 0.0, %v402
  %v404 = vpop.f32.mrf.mxu0
  %v405 = vpop.f32.mrf.mxu0
  %v406 = vadd.f32 0.0, %v405
  %v407 = vpop.f32.mrf.mxu0
  %408 = vmatprep.mubr.bf16.mxu0 %v179
  %409 = vmatmul.mubr.bf16.gmra.mxu0 %v178
  %v410 = vpop.f32.mrf.mxu0
  %v411 = vadd.f32 0.0, %v410
  %v412 = vpop.f32.mrf.mxu0
  %v413 = vpop.f32.mrf.mxu0
  %v414 = vadd.f32 0.0, %v413
  %v415 = vpop.f32.mrf.mxu0
  %416 = vmatprep.mubr.bf16.mxu0 %v182
  %417 = vmatmul.mubr.bf16.gmra.mxu0 %v181
  %v418 = vpop.f32.mrf.mxu0
  %v419 = vadd.f32 0.0, %v418
  %v420 = vpop.f32.mrf.mxu0
  %v421 = vpop.f32.mrf.mxu0
  %v422 = vadd.f32 0.0, %v421
  %v423 = vpop.f32.mrf.mxu0
  %424 = vmatprep.mubr.bf16.mxu0 %v185
  %425 = vmatmul.mubr.bf16.gmra.mxu0 %v184
  %v426 = vpop.f32.mrf.mxu0
  %v427 = vadd.f32 0.0, %v426
  %v428 = vpop.f32.mrf.mxu0
  %v429 = vpop.f32.mrf.mxu0
  %v430 = vadd.f32 0.0, %v429
  %v431 = vpop.f32.mrf.mxu0
  %432 = vdwg.mxu0
  %433 = vmatprep.subr.bf16.mxu0 0
  %434 = vmatpush1.bf16.msra.mxu0 0
  %435 = vmatprep.subr.bf16.mxu0 0
  %436 = vmatpush1.bf16.msra.mxu0 0
  %437 = vmatprep.subr.bf16.mxu0 0
  %438 = vmatpush1.bf16.msra.mxu0 0
  %439 = vmatprep.subr.bf16.mxu0 0
  %440 = vmatpush1.bf16.msra.mxu0 0
  %441 = vmatprep.subr.bf16.mxu0 0
  %442 = vmatpush1.bf16.msra.mxu0 0
  %443 = vmatprep.subr.bf16.mxu0 0
  %444 = vmatpush1.bf16.msra.mxu0 0
  %445 = vmatprep.subr.bf16.mxu0 0
  %446 = vmatpush1.bf16.msra.mxu0 %v292
  %447 = vmatprep.subr.bf16.mxu0 0
  %448 = vmatpush1.bf16.msra.mxu0 %v291
  %449 = vmatprep.subr.bf16.mxu0 0
  %450 = vmatpush2.bf16.msra.mxu0 0
  %451 = vmatprep.subr.bf16.mxu0 0
  %452 = vmatpush2.bf16.msra.mxu0 0
  %453 = vmatprep.subr.bf16.mxu0 0
  %454 = vmatpush2.bf16.msra.mxu0 0
  %455 = vmatprep.subr.bf16.mxu0 0
  %456 = vmatpush2.bf16.msra.mxu0 0
  %457 = vmatprep.subr.bf16.mxu0 0
  %458 = vmatpush2.bf16.msra.mxu0 0
  %459 = vmatprep.subr.bf16.mxu0 0
  %460 = vmatpush2.bf16.msra.mxu0 0
  %461 = vmatprep.subr.bf16.mxu0 0
  %462 = vmatpush2.bf16.msra.mxu0 0
  %463 = vmatprep.subr.bf16.mxu0 0
  %464 = vmatpush2.bf16.msra.mxu0 0
  %465 = vmatprep.mubr.bf16.mxu0 0
  %466 = vmatmul.mubr.bf16.gmra.mxu0 %v313
  %v467 = vpop.f32.mrf.mxu0
  %v468 = vadd.f32 %v371, %v467
  %v469 = vpop.f32.mrf.mxu0
  %v470 = vpop.f32.mrf.mxu0
  %v471 = vadd.f32 %v374, %v470
  %v472 = vpop.f32.mrf.mxu0
  %473 = vmatprep.mubr.bf16.mxu0 0
  %474 = vmatmul.mubr.bf16.gmra.mxu0 %v316
  %v475 = vpop.f32.mrf.mxu0
  %v476 = vadd.f32 %v379, %v475
  %v477 = vpop.f32.mrf.mxu0
  %v478 = vpop.f32.mrf.mxu0
  %v479 = vadd.f32 %v382, %v478
  %v480 = vpop.f32.mrf.mxu0
  %481 = vmatprep.mubr.bf16.mxu0 0
  %482 = vmatmul.mubr.bf16.gmra.mxu0 %v319
  %v483 = vpop.f32.mrf.mxu0
  %v484 = vadd.f32 %v387, %v483
  %v485 = vpop.f32.mrf.mxu0
  %v486 = vpop.f32.mrf.mxu0
  %v487 = vadd.f32 %v390, %v486
  %v488 = vpop.f32.mrf.mxu0
  %489 = vmatprep.mubr.bf16.mxu0 0
  %490 = vmatmul.mubr.bf16.gmra.mxu0 %v322
  %v491 = vpop.f32.mrf.mxu0
  %v492 = vadd.f32 %v395, %v491
  %v493 = vpop.f32.mrf.mxu0
  %v494 = vpop.f32.mrf.mxu0
  %v495 = vadd.f32 %v398, %v494
  %v496 = vpop.f32.mrf.mxu0
  %497 = vmatprep.mubr.bf16.mxu0 0
  %498 = vmatmul.mubr.bf16.gmra.mxu0 %v325
  %v499 = vpop.f32.mrf.mxu0
  %v500 = vadd.f32 %v403, %v499
  %v501 = vpop.f32.mrf.mxu0
  %v502 = vpop.f32.mrf.mxu0
  %v503 = vadd.f32 %v406, %v502
  %v504 = vpop.f32.mrf.mxu0
  %505 = vmatprep.mubr.bf16.mxu0 0
  %506 = vmatmul.mubr.bf16.gmra.mxu0 %v328
  %v507 = vpop.f32.mrf.mxu0
  %v508 = vadd.f32 %v411, %v507
  %v509 = vpop.f32.mrf.mxu0
  %v510 = vpop.f32.mrf.mxu0
  %v511 = vadd.f32 %v414, %v510
  %v512 = vpop.f32.mrf.mxu0
  %513 = vmatprep.mubr.bf16.mxu0 0
  %514 = vmatmul.mubr.bf16.gmra.mxu0 %v331
  %v515 = vpop.f32.mrf.mxu0
  %v516 = vadd.f32 %v419, %v515
  %v517 = vpop.f32.mrf.mxu0
  %v518 = vpop.f32.mrf.mxu0
  %v519 = vadd.f32 %v422, %v518
  %v520 = vpop.f32.mrf.mxu0
  %521 = vmatprep.mubr.bf16.mxu0 0
  %522 = vmatmul.mubr.bf16.gmra.mxu0 %v334
  %v523 = vpop.f32.mrf.mxu0
  %v524 = vadd.f32 %v427, %v523
  %v525 = vpop.f32.mrf.mxu0
  %v526 = vpop.f32.mrf.mxu0
  %v527 = vadd.f32 %v430, %v526
  %v528 = vpop.f32.mrf.mxu0
  %529 = vdwg.mxu0
  %v530 = vpack.c.bf16 %v471, %v468
  %v531 = vpack.c.bf16 %v479, %v476
  %v532 = vpack.c.bf16 %v487, %v484
  %v533 = vpack.c.bf16 %v495, %v492
  %v534 = vpack.c.bf16 %v503, %v500
  %v535 = vpack.c.bf16 %v511, %v508
  %v536 = vpack.c.bf16 %v519, %v516
  %v537 = vpack.c.bf16 %v527, %v524
  %v546 = vunpack.c.l.b16 %v530
  %v547 = vunpack.c.h.b16 %v530
  %v548 = vunpack.c.l.b16 %v531
  %v549 = vunpack.c.h.b16 %v531
  %v550 = vunpack.c.l.b16 %v532
  %v551 = vunpack.c.h.b16 %v532
  %v552 = vunpack.c.l.b16 %v533
  %v553 = vunpack.c.h.b16 %v533
  %v554 = vunpack.c.l.b16 %v534
  %v555 = vunpack.c.h.b16 %v534
  %v556 = vunpack.c.l.b16 %v535
  %v557 = vunpack.c.h.b16 %v535
  %v558 = vunpack.c.l.b16 %v536
  %v559 = vunpack.c.h.b16 %v536
  %v560 = vunpack.c.l.b16 %v537
  %v561 = vunpack.c.h.b16 %v537
  %v562 = vpack.c.b16 %v546, %v546
  %v563 = vpack.c.b16 %v547, %v547
  %v564 = vpack.c.b16 %v548, %v548
  %v565 = vpack.c.b16 %v549, %v549
  %v566 = vpack.c.b16 %v550, %v550
  %v567 = vpack.c.b16 %v551, %v551
  %v568 = vpack.c.b16 %v552, %v552
  %v569 = vpack.c.b16 %v553, %v553
  %v570 = vpack.c.b16 %v554, %v554
  %v571 = vpack.c.b16 %v555, %v555
  %v572 = vpack.c.b16 %v556, %v556
  %v573 = vpack.c.b16 %v557, %v557
  %v574 = vpack.c.b16 %v558, %v558
  %v575 = vpack.c.b16 %v559, %v559
  %v576 = vpack.c.b16 %v560, %v560
  %v577 = vpack.c.b16 %v561, %v561
  %594 = vst [vmem:[%s2] sm:$0xf] %v562
  %595 = vst [vmem:[%s2 + $0x4] sm:$0xf] %v563
  %596 = vst [vmem:[%s2 + $0x8] sm:$0xf] %v564
  %597 = vst [vmem:[%s2 + $0xc] sm:$0xf] %v565
  %598 = vst [vmem:[%s2 + $0x10] sm:$0xf] %v566
  %599 = vst [vmem:[%s2 + $0x14] sm:$0xf] %v567
  %600 = vst [vmem:[%s2 + $0x18] sm:$0xf] %v568
  %601 = vst [vmem:[%s2 + $0x1c] sm:$0xf] %v569
  %602 = vst [vmem:[%s2 + $0x20] sm:$0xf] %v570
  %603 = vst [vmem:[%s2 + $0x24] sm:$0xf] %v571
  %604 = vst [vmem:[%s2 + $0x28] sm:$0xf] %v572
  %605 = vst [vmem:[%s2 + $0x2c] sm:$0xf] %v573
  %606 = vst [vmem:[%s2 + $0x30] sm:$0xf] %v574
  %607 = vst [vmem:[%s2 + $0x34] sm:$0xf] %v575
  %608 = vst [vmem:[%s2 + $0x38] sm:$0xf] %v576
  %609 = vst [vmem:[%s2 + $0x3c] sm:$0xf] %v577
  %v610 = vadd.f32 %v468, %v471
  %v611 = vadd.f32 %v610, %v476
  %v612 = vadd.f32 %v611, %v479
  %v613 = vadd.f32 %v612, %v484
  %v614 = vadd.f32 %v613, %v487
  %v615 = vadd.f32 %v614, %v492
  %v616 = vadd.f32 %v615, %v495
  %v617 = vadd.f32 %v616, %v500
  %v618 = vadd.f32 %v617, %v503
  %v619 = vadd.f32 %v618, %v508
  %v620 = vadd.f32 %v619, %v511
  %v621 = vadd.f32 %v620, %v516
  %v622 = vadd.f32 %v621, %v519
  %v623 = vadd.f32 %v622, %v524
  %v624 = vadd.f32 %v623, %v527
  %v625 = vrot.slane %v624, 4
  %v626 = vadd.f32 %v624, %v625
  %v627 = vrot.slane %v626, 2
  %v628 = vadd.f32 %v626, %v627
  %v629 = vrot.slane %v628, 1
  %v630 = vadd.f32 %v628, %v629
  %v631 = vmul.f32 %v468, %v468
  %v632 = vmul.f32 %v471, %v471
  %v633 = vmul.f32 %v476, %v476
  %v634 = vmul.f32 %v479, %v479
  %v635 = vmul.f32 %v484, %v484
  %v636 = vmul.f32 %v487, %v487
  %v637 = vmul.f32 %v492, %v492
  %v638 = vmul.f32 %v495, %v495
  %v639 = vmul.f32 %v500, %v500
  %v640 = vmul.f32 %v503, %v503
  %v641 = vmul.f32 %v508, %v508
  %v642 = vmul.f32 %v511, %v511
  %v643 = vmul.f32 %v516, %v516
  %v644 = vmul.f32 %v519, %v519
  %v645 = vmul.f32 %v524, %v524
  %v646 = vmul.f32 %v527, %v527
  %v647 = vadd.f32 %v631, %v632
  %v648 = vadd.f32 %v647, %v633
  %v649 = vadd.f32 %v648, %v634
  %v650 = vadd.f32 %v649, %v635
  %v651 = vadd.f32 %v650, %v636
  %v652 = vadd.f32 %v651, %v637
  %v653 = vadd.f32 %v652, %v638
  %v654 = vadd.f32 %v653, %v639
  %v655 = vadd.f32 %v654, %v640
  %v656 = vadd.f32 %v655, %v641
  %v657 = vadd.f32 %v656, %v642
  %v658 = vadd.f32 %v657, %v643
  %v659 = vadd.f32 %v658, %v644
  %v660 = vadd.f32 %v659, %v645
  %v661 = vadd.f32 %v660, %v646
  %v662 = vrot.slane %v661, 4
  %v663 = vadd.f32 %v661, %v662
  %v664 = vrot.slane %v663, 2
  %v665 = vadd.f32 %v663, %v664
  %v666 = vrot.slane %v665, 1
  %v667 = vadd.f32 %v665, %v666
  %v668 = vlaneseq
  %v669 = vshrl.u32 %v668, 7
  %vm670 = vcmp.eq.s32.totalorder %v669, 0
  %v671 = vsel %vm670, %v630, 0.0
  %672 = vst [vmem:[%s3] sm:$0xff] %v671
  %v673 = vsel %vm670, %v667, 0.0
  %674 = vst [vmem:[%s4] sm:$0xff] %v673
  // Predicated region
  $region10: #{_lambda_.13} parent=0 // pred_check
    _
  $region11: #{_lambda_.13} parent=0 // pred_check_branch
    %676 = sbr.rel (0) target = $region13
  $region12: #{_lambda_.13} parent=0 // pred_region
    _
  $region13: #{_lambda_.13} parent=0 // pred_fallthru
    _
  // Predicated region
  $region14: #{_lambda_.13} parent=0 // pred_check
    _
  $region15: #{_lambda_.13} parent=0 // pred_check_branch
    %678 = sbr.rel (0) target = $region17
  $region16: #{_lambda_.13} parent=0 // pred_region
    _
  $region17: #{_lambda_.13} parent=0 // pred_fallthru
    _
  // Predicated region
  $region18: #{_lambda_.13} parent=0 // pred_check
    _
  $region19: #{_lambda_.13} parent=0 // pred_check_branch
    %680 = sbr.rel (0) target = $region21
  $region20: #{_lambda_.13} parent=0 // pred_region
    _
  $region21: #{_lambda_.13} parent=0 // pred_fallthru
    _
  // Predicated region
  $region22: #{_lambda_.13} parent=0 // pred_check
    _
  $region23: #{_lambda_.13} parent=0 // pred_check_branch
    %682 = sbr.rel (0) target = $region25
  $region24: #{_lambda_.13} parent=0 // pred_region
    _
  $region25: #{_lambda_.13} parent=0 // pred_fallthru
    _
  // Predicated region
  $region26: #{_lambda_.13} parent=0 // pred_check
    _
  $region27: #{_lambda_.13} parent=0 // pred_check_branch
    %684 = sbr.rel (0) target = $region29
  $region28: #{_lambda_.13} parent=0 // pred_region
    _
  $region29: #{_lambda_.13} parent=0 // pred_fallthru
    _
  // Predicated region
  $region30: #{_lambda_.13} parent=0 // pred_check
    _
  $region31: #{_lambda_.13} parent=0 // pred_check_branch
    %686 = sbr.rel (0) target = $region33
  $region32: #{_lambda_.13} parent=0 // pred_region
    _
  $region33: #{_lambda_.13} parent=0 // pred_fallthru
    _

// kernel: _lambda_.14
$region0: #{_lambda_.14}
  #allocation0 [shape = 'u32[]', space=smem, size = 0x4, offset = 0x4, fixed_abs, tag = 'smem constant byte address 0x4 - core index']
  #allocation1 [shape = 'u32[144,128]{1,0:T(1,128)}', space=vmem, size = 0x12000, scoped, tag = 'internal scratch']
  %s0 = inlined_call_operand.vmem [shape: bf16[128,128], index: 0, kind: input, shape index: {}]
  %s1 = inlined_call_operand.vmem [shape: f32[1,128], index: 1, kind: input, shape index: {}]
  %s2 = inlined_call_operand.vmem [shape: f32[1,128], index: 2, kind: input, shape index: {}]
  %s3 = inlined_call_operand.vmem [shape: bf16[128,128], index: 3, kind: output, shape index: {}]
  %s4 = sld [smem:[#allocation0]]
  $region22: #{_lambda_.14} parent=0
    _
  %s6 = ssub.s32 1, %s4
  %s7 = scalar_select 0, %s6, %s4
  // Predicated region
  $region2: #{_lambda_.14} parent=0 // pred_check
    _
  $region3: #{_lambda_.14} parent=0 // pred_check_branch
    %9 = sbr.rel (0) target = $region5
  $region4: #{_lambda_.14} parent=0 // pred_region
    _
  $region5: #{_lambda_.14} parent=0 // pred_fallthru
    _
  // Predicated region
  $region6: #{_lambda_.14} parent=0 // pred_check
    _
  $region7: #{_lambda_.14} parent=0 // pred_check_branch
    %11 = sbr.rel (0) target = $region9
  $region8: #{_lambda_.14} parent=0 // pred_region
    _
  $region9: #{_lambda_.14} parent=0 // pred_fallthru
    _
  // Predicated region
  $region10: #{_lambda_.14} parent=0 // pred_check
    _
  $region11: #{_lambda_.14} parent=0 // pred_check_branch
    %13 = sbr.rel (0) target = $region13
  $region12: #{_lambda_.14} parent=0 // pred_region
    _
  $region13: #{_lambda_.14} parent=0 // pred_fallthru
    _
  %v14 = vld [vmem:[%s0] sm:$0xf]
  %v15 = vld [vmem:[%s0 + $0x4] sm:$0xf]
  %v16 = vld [vmem:[%s0 + $0x8] sm:$0xf]
  %v17 = vld [vmem:[%s0 + $0xc] sm:$0xf]
  %v18 = vld [vmem:[%s0 + $0x10] sm:$0xf]
  %v19 = vld [vmem:[%s0 + $0x14] sm:$0xf]
  %v20 = vld [vmem:[%s0 + $0x18] sm:$0xf]
  %v21 = vld [vmem:[%s0 + $0x1c] sm:$0xf]
  %v22 = vld [vmem:[%s0 + $0x20] sm:$0xf]
  %v23 = vld [vmem:[%s0 + $0x24] sm:$0xf]
  %v24 = vld [vmem:[%s0 + $0x28] sm:$0xf]
  %v25 = vld [vmem:[%s0 + $0x2c] sm:$0xf]
  %v26 = vld [vmem:[%s0 + $0x30] sm:$0xf]
  %v27 = vld [vmem:[%s0 + $0x34] sm:$0xf]
  %v28 = vld [vmem:[%s0 + $0x38] sm:$0xf]
  %v29 = vld [vmem:[%s0 + $0x3c] sm:$0xf]
  %v30 = vunpack.c.l.bf16 %v14
  %v31 = vunpack.c.l.bf16 %v15
  %v32 = vunpack.c.l.bf16 %v16
  %v33 = vunpack.c.l.bf16 %v17
  %v34 = vunpack.c.l.bf16 %v18
  %v35 = vunpack.c.l.bf16 %v19
  %v36 = vunpack.c.l.bf16 %v20
  %v37 = vunpack.c.l.bf16 %v21
  %v38 = vunpack.c.l.bf16 %v22
  %v39 = vunpack.c.l.bf16 %v23
  %v40 = vunpack.c.l.bf16 %v24
  %v41 = vunpack.c.l.bf16 %v25
  %v42 = vunpack.c.l.bf16 %v26
  %v43 = vunpack.c.l.bf16 %v27
  %v44 = vunpack.c.l.bf16 %v28
  %v45 = vunpack.c.l.bf16 %v29
  %v46 = vld [vmem:[%s1] sm:$0x1]
  %v48 = vlaneseq
  %v49 = vshrl.u32 %v48, 7
  %v50 = vsub.s32 0, %v49
  %v51 = vrot.slane %v46, %v50
  %v53 = vmul.f32 %v30, %v51
  %v54 = vmul.f32 %v31, %v51
  %v55 = vmul.f32 %v32, %v51
  %v56 = vmul.f32 %v33, %v51
  %v57 = vmul.f32 %v34, %v51
  %v58 = vmul.f32 %v35, %v51
  %v59 = vmul.f32 %v36, %v51
  %v60 = vmul.f32 %v37, %v51
  %v61 = vmul.f32 %v38, %v51
  %v62 = vmul.f32 %v39, %v51
  %v63 = vmul.f32 %v40, %v51
  %v64 = vmul.f32 %v41, %v51
  %v65 = vmul.f32 %v42, %v51
  %v66 = vmul.f32 %v43, %v51
  %v67 = vmul.f32 %v44, %v51
  %v68 = vmul.f32 %v45, %v51
  %v69 = vld [vmem:[%s2] sm:$0x1]
  %v71 = vlaneseq
  %v72 = vshrl.u32 %v71, 7
  %v73 = vsub.s32 0, %v72
  %v74 = vrot.slane %v69, %v73
  %v76 = vadd.f32 %v53, %v74
  %v77 = vadd.f32 %v54, %v74
  %v78 = vadd.f32 %v55, %v74
  %v79 = vadd.f32 %v56, %v74
  %v80 = vadd.f32 %v57, %v74
  %v81 = vadd.f32 %v58, %v74
  %v82 = vadd.f32 %v59, %v74
  %v83 = vadd.f32 %v60, %v74
  %v84 = vadd.f32 %v61, %v74
  %v85 = vadd.f32 %v62, %v74
  %v86 = vadd.f32 %v63, %v74
  %v87 = vadd.f32 %v64, %v74
  %v88 = vadd.f32 %v65, %v74
  %v89 = vadd.f32 %v66, %v74
  %v90 = vadd.f32 %v67, %v74
  %v91 = vadd.f32 %v68, %v74
  %v92 = vmax.f32 %v76, 0.0
  %v93 = vmax.f32 %v77, 0.0
  %v94 = vmax.f32 %v78, 0.0
  %v95 = vmax.f32 %v79, 0.0
  %v96 = vmax.f32 %v80, 0.0
  %v97 = vmax.f32 %v81, 0.0
  %v98 = vmax.f32 %v82, 0.0
  %v99 = vmax.f32 %v83, 0.0
  %v100 = vmax.f32 %v84, 0.0
  %v101 = vmax.f32 %v85, 0.0
  %v102 = vmax.f32 %v86, 0.0
  %v103 = vmax.f32 %v87, 0.0
  %v104 = vmax.f32 %v88, 0.0
  %v105 = vmax.f32 %v89, 0.0
  %v106 = vmax.f32 %v90, 0.0
  %v107 = vmax.f32 %v91, 0.0
  %v108 = vpack.c.bf16 %v93, %v92
  %v109 = vpack.c.bf16 %v95, %v94
  %v110 = vpack.c.bf16 %v97, %v96
  %v111 = vpack.c.bf16 %v99, %v98
  %v112 = vpack.c.bf16 %v101, %v100
  %v113 = vpack.c.bf16 %v103, %v102
  %v114 = vpack.c.bf16 %v105, %v104
  %v115 = vpack.c.bf16 %v107, %v106
  %v124 = vunpack.c.l.b16 %v108
  %v125 = vunpack.c.h.b16 %v108
  %v126 = vunpack.c.l.b16 %v109
  %v127 = vunpack.c.h.b16 %v109
  %v128 = vunpack.c.l.b16 %v110
  %v129 = vunpack.c.h.b16 %v110
  %v130 = vunpack.c.l.b16 %v111
  %v131 = vunpack.c.h.b16 %v111
  %v132 = vunpack.c.l.b16 %v112
  %v133 = vunpack.c.h.b16 %v112
  %v134 = vunpack.c.l.b16 %v113
  %v135 = vunpack.c.h.b16 %v113
  %v136 = vunpack.c.l.b16 %v114
  %v137 = vunpack.c.h.b16 %v114
  %v138 = vunpack.c.l.b16 %v115
  %v139 = vunpack.c.h.b16 %v115
  %v140 = vpack.c.b16 %v124, %v124
  %v141 = vpack.c.b16 %v125, %v125
  %v142 = vpack.c.b16 %v126, %v126
  %v143 = vpack.c.b16 %v127, %v127
  %v144 = vpack.c.b16 %v128, %v128
  %v145 = vpack.c.b16 %v129, %v129
  %v146 = vpack.c.b16 %v130, %v130
  %v147 = vpack.c.b16 %v131, %v131
  %v148 = vpack.c.b16 %v132, %v132
  %v149 = vpack.c.b16 %v133, %v133
  %v150 = vpack.c.b16 %v134, %v134
  %v151 = vpack.c.b16 %v135, %v135
  %v152 = vpack.c.b16 %v136, %v136
  %v153 = vpack.c.b16 %v137, %v137
  %v154 = vpack.c.b16 %v138, %v138
  %v155 = vpack.c.b16 %v139, %v139
  %172 = vst [vmem:[%s3] sm:$0xf] %v140
  %173 = vst [vmem:[%s3 + $0x4] sm:$0xf] %v141
  %174 = vst [vmem:[%s3 + $0x8] sm:$0xf] %v142
  %175 = vst [vmem:[%s3 + $0xc] sm:$0xf] %v143
  %176 = vst [vmem:[%s3 + $0x10] sm:$0xf] %v144
  %177 = vst [vmem:[%s3 + $0x14] sm:$0xf] %v145
  %178 = vst [vmem:[%s3 + $0x18] sm:$0xf] %v146
  %179 = vst [vmem:[%s3 + $0x1c] sm:$0xf] %v147
  %180 = vst [vmem:[%s3 + $0x20] sm:$0xf] %v148
  %181 = vst [vmem:[%s3 + $0x24] sm:$0xf] %v149
  %182 = vst [vmem:[%s3 + $0x28] sm:$0xf] %v150
  %183 = vst [vmem:[%s3 + $0x2c] sm:$0xf] %v151
  %184 = vst [vmem:[%s3 + $0x30] sm:$0xf] %v152
  %185 = vst [vmem:[%s3 + $0x34] sm:$0xf] %v153
  %186 = vst [vmem:[%s3 + $0x38] sm:$0xf] %v154
  %187 = vst [vmem:[%s3 + $0x3c] sm:$0xf] %v155
  // Predicated region
  $region14: #{_lambda_.14} parent=0 // pred_check
    _
  $region15: #{_lambda_.14} parent=0 // pred_check_branch
    %189 = sbr.rel (0) target = $region17
  $region16: #{_lambda_.14} parent=0 // pred_region
    _
  $region17: #{_lambda_.14} parent=0 // pred_fallthru
    _
  // Predicated region
  $region18: #{_lambda_.14} parent=0 // pred_check
    _
  $region19: #{_lambda_.14} parent=0 // pred_check_branch
    %191 = sbr.rel (0) target = $region21
  $region20: #{_lambda_.14} parent=0 // pred_region
    _
  $region21: #{_lambda_.14} parent=0 // pred_fallthru
    _

// kernel: _lambda_.16
$region0: #{_lambda_.16}
  #allocation0 [shape = 'u32[]', space=smem, size = 0x4, offset = 0x4, fixed_abs, tag = 'smem constant byte address 0x4 - core index']
  #allocation1 [shape = 'u32[144,128]{1,0:T(1,128)}', space=vmem, size = 0x12000, scoped, tag = 'internal scratch']
  %s0 = inlined_call_operand.vmem [shape: bf16[512,128], index: 0, kind: input, shape index: {}]
  %s1 = inlined_call_operand.vmem [shape: f32[1,128], index: 1, kind: input, shape index: {}]
  %s2 = inlined_call_operand.vmem [shape: f32[1,128], index: 2, kind: input, shape index: {}]
  %s3 = inlined_call_operand.vmem [shape: bf16[512,128], index: 3, kind: output, shape index: {}]
  %s4 = sld [smem:[#allocation0]]
  $region22: #{_lambda_.16} parent=0
    _
  %s6 = ssub.s32 1, %s4
  %s7 = scalar_select 0, %s6, %s4
  // Predicated region
  $region2: #{_lambda_.16} parent=0 // pred_check
    _
  $region3: #{_lambda_.16} parent=0 // pred_check_branch
    %9 = sbr.rel (0) target = $region5
  $region4: #{_lambda_.16} parent=0 // pred_region
    _
  $region5: #{_lambda_.16} parent=0 // pred_fallthru
    _
  // Predicated region
  $region6: #{_lambda_.16} parent=0 // pred_check
    _
  $region7: #{_lambda_.16} parent=0 // pred_check_branch
    %11 = sbr.rel (0) target = $region9
  $region8: #{_lambda_.16} parent=0 // pred_region
    _
  $region9: #{_lambda_.16} parent=0 // pred_fallthru
    _
  // Predicated region
  $region10: #{_lambda_.16} parent=0 // pred_check
    _
  $region11: #{_lambda_.16} parent=0 // pred_check_branch
    %13 = sbr.rel (0) target = $region13
  $region12: #{_lambda_.16} parent=0 // pred_region
    _
  $region13: #{_lambda_.16} parent=0 // pred_fallthru
    _
  %v14 = vld [vmem:[%s0] sm:$0xf]
  %v15 = vld [vmem:[%s0 + $0x4] sm:$0xf]
  %v16 = vld [vmem:[%s0 + $0x8] sm:$0xf]
  %v17 = vld [vmem:[%s0 + $0xc] sm:$0xf]
  %v18 = vld [vmem:[%s0 + $0x10] sm:$0xf]
  %v19 = vld [vmem:[%s0 + $0x14] sm:$0xf]
  %v20 = vld [vmem:[%s0 + $0x18] sm:$0xf]
  %v21 = vld [vmem:[%s0 + $0x1c] sm:$0xf]
  %v22 = vld [vmem:[%s0 + $0x20] sm:$0xf]
  %v23 = vld [vmem:[%s0 + $0x24] sm:$0xf]
  %v24 = vld [vmem:[%s0 + $0x28] sm:$0xf]
  %v25 = vld [vmem:[%s0 + $0x2c] sm:$0xf]
  %v26 = vld [vmem:[%s0 + $0x30] sm:$0xf]
  %v27 = vld [vmem:[%s0 + $0x34] sm:$0xf]
  %v28 = vld [vmem:[%s0 + $0x38] sm:$0xf]
  %v29 = vld [vmem:[%s0 + $0x3c] sm:$0xf]
  %v30 = vld [vmem:[%s0 + $0x40] sm:$0xf]
  %v31 = vld [vmem:[%s0 + $0x44] sm:$0xf]
  %v32 = vld [vmem:[%s0 + $0x48] sm:$0xf]
  %v33 = vld [vmem:[%s0 + $0x4c] sm:$0xf]
  %v34 = vld [vmem:[%s0 + $0x50] sm:$0xf]
  %v35 = vld [vmem:[%s0 + $0x54] sm:$0xf]
  %v36 = vld [vmem:[%s0 + $0x58] sm:$0xf]
  %v37 = vld [vmem:[%s0 + $0x5c] sm:$0xf]
  %v38 = vld [vmem:[%s0 + $0x60] sm:$0xf]
  %v39 = vld [vmem:[%s0 + $0x64] sm:$0xf]
  %v40 = vld [vmem:[%s0 + $0x68] sm:$0xf]
  %v41 = vld [vmem:[%s0 + $0x6c] sm:$0xf]
  %v42 = vld [vmem:[%s0 + $0x70] sm:$0xf]
  %v43 = vld [vmem:[%s0 + $0x74] sm:$0xf]
  %v44 = vld [vmem:[%s0 + $0x78] sm:$0xf]
  %v45 = vld [vmem:[%s0 + $0x7c] sm:$0xf]
  %v46 = vld [vmem:[%s0 + $0x80] sm:$0xf]
  %v47 = vld [vmem:[%s0 + $0x84] sm:$0xf]
  %v48 = vld [vmem:[%s0 + $0x88] sm:$0xf]
  %v49 = vld [vmem:[%s0 + $0x8c] sm:$0xf]
  %v50 = vld [vmem:[%s0 + $0x90] sm:$0xf]
  %v51 = vld [vmem:[%s0 + $0x94] sm:$0xf]
  %v52 = vld [vmem:[%s0 + $0x98] sm:$0xf]
  %v53 = vld [vmem:[%s0 + $0x9c] sm:$0xf]
  %v54 = vld [vmem:[%s0 + $0xa0] sm:$0xf]
  %v55 = vld [vmem:[%s0 + $0xa4] sm:$0xf]
  %v56 = vld [vmem:[%s0 + $0xa8] sm:$0xf]
  %v57 = vld [vmem:[%s0 + $0xac] sm:$0xf]
  %v58 = vld [vmem:[%s0 + $0xb0] sm:$0xf]
  %v59 = vld [vmem:[%s0 + $0xb4] sm:$0xf]
  %v60 = vld [vmem:[%s0 + $0xb8] sm:$0xf]
  %v61 = vld [vmem:[%s0 + $0xbc] sm:$0xf]
  %v62 = vld [vmem:[%s0 + $0xc0] sm:$0xf]
  %v63 = vld [vmem:[%s0 + $0xc4] sm:$0xf]
  %v64 = vld [vmem:[%s0 + $0xc8] sm:$0xf]
  %v65 = vld [vmem:[%s0 + $0xcc] sm:$0xf]
  %v66 = vld [vmem:[%s0 + $0xd0] sm:$0xf]
  %v67 = vld [vmem:[%s0 + $0xd4] sm:$0xf]
  %v68 = vld [vmem:[%s0 + $0xd8] sm:$0xf]
  %v69 = vld [vmem:[%s0 + $0xdc] sm:$0xf]
  %v70 = vld [vmem:[%s0 + $0xe0] sm:$0xf]
  %v71 = vld [vmem:[%s0 + $0xe4] sm:$0xf]
  %v72 = vld [vmem:[%s0 + $0xe8] sm:$0xf]
  %v73 = vld [vmem:[%s0 + $0xec] sm:$0xf]
  %v74 = vld [vmem:[%s0 + $0xf0] sm:$0xf]
  %v75 = vld [vmem:[%s0 + $0xf4] sm:$0xf]
  %v76 = vld [vmem:[%s0 + $0xf8] sm:$0xf]
  %v77 = vld [vmem:[%s0 + $0xfc] sm:$0xf]
  %v78 = vunpack.c.l.bf16 %v14
  %v79 = vunpack.c.l.bf16 %v15
  %v80 = vunpack.c.l.bf16 %v16
  %v81 = vunpack.c.l.bf16 %v17
  %v82 = vunpack.c.l.bf16 %v18
  %v83 = vunpack.c.l.bf16 %v19
  %v84 = vunpack.c.l.bf16 %v20
  %v85 = vunpack.c.l.bf16 %v21
  %v86 = vunpack.c.l.bf16 %v22
  %v87 = vunpack.c.l.bf16 %v23
  %v88 = vunpack.c.l.bf16 %v24
  %v89 = vunpack.c.l.bf16 %v25
  %v90 = vunpack.c.l.bf16 %v26
  %v91 = vunpack.c.l.bf16 %v27
  %v92 = vunpack.c.l.bf16 %v28
  %v93 = vunpack.c.l.bf16 %v29
  %v94 = vunpack.c.l.bf16 %v30
  %v95 = vunpack.c.l.bf16 %v31
  %v96 = vunpack.c.l.bf16 %v32
  %v97 = vunpack.c.l.bf16 %v33
  %v98 = vunpack.c.l.bf16 %v34
  %v99 = vunpack.c.l.bf16 %v35
  %v100 = vunpack.c.l.bf16 %v36
  %v101 = vunpack.c.l.bf16 %v37
  %v102 = vunpack.c.l.bf16 %v38
  %v103 = vunpack.c.l.bf16 %v39
  %v104 = vunpack.c.l.bf16 %v40
  %v105 = vunpack.c.l.bf16 %v41
  %v106 = vunpack.c.l.bf16 %v42
  %v107 = vunpack.c.l.bf16 %v43
  %v108 = vunpack.c.l.bf16 %v44
  %v109 = vunpack.c.l.bf16 %v45
  %v110 = vunpack.c.l.bf16 %v46
  %v111 = vunpack.c.l.bf16 %v47
  %v112 = vunpack.c.l.bf16 %v48
  %v113 = vunpack.c.l.bf16 %v49
  %v114 = vunpack.c.l.bf16 %v50
  %v115 = vunpack.c.l.bf16 %v51
  %v116 = vunpack.c.l.bf16 %v52
  %v117 = vunpack.c.l.bf16 %v53
  %v118 = vunpack.c.l.bf16 %v54
  %v119 = vunpack.c.l.bf16 %v55
  %v120 = vunpack.c.l.bf16 %v56
  %v121 = vunpack.c.l.bf16 %v57
  %v122 = vunpack.c.l.bf16 %v58
  %v123 = vunpack.c.l.bf16 %v59
  %v124 = vunpack.c.l.bf16 %v60
  %v125 = vunpack.c.l.bf16 %v61
  %v126 = vunpack.c.l.bf16 %v62
  %v127 = vunpack.c.l.bf16 %v63
  %v128 = vunpack.c.l.bf16 %v64
  %v129 = vunpack.c.l.bf16 %v65
  %v130 = vunpack.c.l.bf16 %v66
  %v131 = vunpack.c.l.bf16 %v67
  %v132 = vunpack.c.l.bf16 %v68
  %v133 = vunpack.c.l.bf16 %v69
  %v134 = vunpack.c.l.bf16 %v70
  %v135 = vunpack.c.l.bf16 %v71
  %v136 = vunpack.c.l.bf16 %v72
  %v137 = vunpack.c.l.bf16 %v73
  %v138 = vunpack.c.l.bf16 %v74
  %v139 = vunpack.c.l.bf16 %v75
  %v140 = vunpack.c.l.bf16 %v76
  %v141 = vunpack.c.l.bf16 %v77
  %v142 = vld [vmem:[%s1] sm:$0x1]
  %v144 = vlaneseq
  %v145 = vshrl.u32 %v144, 7
  %v146 = vsub.s32 0, %v145
  %v147 = vrot.slane %v142, %v146
  %v149 = vmul.f32 %v78, %v147
  %v150 = vmul.f32 %v79, %v147
  %v151 = vmul.f32 %v80, %v147
  %v152 = vmul.f32 %v81, %v147
  %v153 = vmul.f32 %v82, %v147
  %v154 = vmul.f32 %v83, %v147
  %v155 = vmul.f32 %v84, %v147
  %v156 = vmul.f32 %v85, %v147
  %v157 = vmul.f32 %v86, %v147
  %v158 = vmul.f32 %v87, %v147
  %v159 = vmul.f32 %v88, %v147
  %v160 = vmul.f32 %v89, %v147
  %v161 = vmul.f32 %v90, %v147
  %v162 = vmul.f32 %v91, %v147
  %v163 = vmul.f32 %v92, %v147
  %v164 = vmul.f32 %v93, %v147
  %v165 = vmul.f32 %v94, %v147
  %v166 = vmul.f32 %v95, %v147
  %v167 = vmul.f32 %v96, %v147
  %v168 = vmul.f32 %v97, %v147
  %v169 = vmul.f32 %v98, %v147
  %v170 = vmul.f32 %v99, %v147
  %v171 = vmul.f32 %v100, %v147
  %v172 = vmul.f32 %v101, %v147
  %v173 = vmul.f32 %v102, %v147
  %v174 = vmul.f32 %v103, %v147
  %v175 = vmul.f32 %v104, %v147
  %v176 = vmul.f32 %v105, %v147
  %v177 = vmul.f32 %v106, %v147
  %v178 = vmul.f32 %v107, %v147
  %v179 = vmul.f32 %v108, %v147
  %v180 = vmul.f32 %v109, %v147
  %v181 = vmul.f32 %v110, %v147
  %v182 = vmul.f32 %v111, %v147
  %v183 = vmul.f32 %v112, %v147
  %v184 = vmul.f32 %v113, %v147
  %v185 = vmul.f32 %v114, %v147
  %v186 = vmul.f32 %v115, %v147
  %v187 = vmul.f32 %v116, %v147
  %v188 = vmul.f32 %v117, %v147
  %v189 = vmul.f32 %v118, %v147
  %v190 = vmul.f32 %v119, %v147
  %v191 = vmul.f32 %v120, %v147
  %v192 = vmul.f32 %v121, %v147
  %v193 = vmul.f32 %v122, %v147
  %v194 = vmul.f32 %v123, %v147
  %v195 = vmul.f32 %v124, %v147
  %v196 = vmul.f32 %v125, %v147
  %v197 = vmul.f32 %v126, %v147
  %v198 = vmul.f32 %v127, %v147
  %v199 = vmul.f32 %v128, %v147
  %v200 = vmul.f32 %v129, %v147
  %v201 = vmul.f32 %v130, %v147
  %v202 = vmul.f32 %v131, %v147
  %v203 = vmul.f32 %v132, %v147
  %v204 = vmul.f32 %v133, %v147
  %v205 = vmul.f32 %v134, %v147
  %v206 = vmul.f32 %v135, %v147
  %v207 = vmul.f32 %v136, %v147
  %v208 = vmul.f32 %v137, %v147
  %v209 = vmul.f32 %v138, %v147
  %v210 = vmul.f32 %v139, %v147
  %v211 = vmul.f32 %v140, %v147
  %v212 = vmul.f32 %v141, %v147
  %v213 = vld [vmem:[%s2] sm:$0x1]
  %v215 = vlaneseq
  %v216 = vshrl.u32 %v215, 7
  %v217 = vsub.s32 0, %v216
  %v218 = vrot.slane %v213, %v217
  %v220 = vadd.f32 %v149, %v218
  %v221 = vadd.f32 %v150, %v218
  %v222 = vadd.f32 %v151, %v218
  %v223 = vadd.f32 %v152, %v218
  %v224 = vadd.f32 %v153, %v218
  %v225 = vadd.f32 %v154, %v218
  %v226 = vadd.f32 %v155, %v218
  %v227 = vadd.f32 %v156, %v218
  %v228 = vadd.f32 %v157, %v218
  %v229 = vadd.f32 %v158, %v218
  %v230 = vadd.f32 %v159, %v218
  %v231 = vadd.f32 %v160, %v218
  %v232 = vadd.f32 %v161, %v218
  %v233 = vadd.f32 %v162, %v218
  %v234 = vadd.f32 %v163, %v218
  %v235 = vadd.f32 %v164, %v218
  %v236 = vadd.f32 %v165, %v218
  %v237 = vadd.f32 %v166, %v218
  %v238 = vadd.f32 %v167, %v218
  %v239 = vadd.f32 %v168, %v218
  %v240 = vadd.f32 %v169, %v218
  %v241 = vadd.f32 %v170, %v218
  %v242 = vadd.f32 %v171, %v218
  %v243 = vadd.f32 %v172, %v218
  %v244 = vadd.f32 %v173, %v218
  %v245 = vadd.f32 %v174, %v218
  %v246 = vadd.f32 %v175, %v218
  %v247 = vadd.f32 %v176, %v218
  %v248 = vadd.f32 %v177, %v218
  %v249 = vadd.f32 %v178, %v218
  %v250 = vadd.f32 %v179, %v218
  %v251 = vadd.f32 %v180, %v218
  %v252 = vadd.f32 %v181, %v218
  %v253 = vadd.f32 %v182, %v218
  %v254 = vadd.f32 %v183, %v218
  %v255 = vadd.f32 %v184, %v218
  %v256 = vadd.f32 %v185, %v218
  %v257 = vadd.f32 %v186, %v218
  %v258 = vadd.f32 %v187, %v218
  %v259 = vadd.f32 %v188, %v218
  %v260 = vadd.f32 %v189, %v218
  %v261 = vadd.f32 %v190, %v218
  %v262 = vadd.f32 %v191, %v218
  %v263 = vadd.f32 %v192, %v218
  %v264 = vadd.f32 %v193, %v218
  %v265 = vadd.f32 %v194, %v218
  %v266 = vadd.f32 %v195, %v218
  %v267 = vadd.f32 %v196, %v218
  %v268 = vadd.f32 %v197, %v218
  %v269 = vadd.f32 %v198, %v218
  %v270 = vadd.f32 %v199, %v218
  %v271 = vadd.f32 %v200, %v218
  %v272 = vadd.f32 %v201, %v218
  %v273 = vadd.f32 %v202, %v218
  %v274 = vadd.f32 %v203, %v218
  %v275 = vadd.f32 %v204, %v218
  %v276 = vadd.f32 %v205, %v218
  %v277 = vadd.f32 %v206, %v218
  %v278 = vadd.f32 %v207, %v218
  %v279 = vadd.f32 %v208, %v218
  %v280 = vadd.f32 %v209, %v218
  %v281 = vadd.f32 %v210, %v218
  %v282 = vadd.f32 %v211, %v218
  %v283 = vadd.f32 %v212, %v218
  %v284 = vmax.f32 %v220, 0.0
  %v285 = vmax.f32 %v221, 0.0
  %v286 = vmax.f32 %v222, 0.0
  %v287 = vmax.f32 %v223, 0.0
  %v288 = vmax.f32 %v224, 0.0
  %v289 = vmax.f32 %v225, 0.0
  %v290 = vmax.f32 %v226, 0.0
  %v291 = vmax.f32 %v227, 0.0
  %v292 = vmax.f32 %v228, 0.0
  %v293 = vmax.f32 %v229, 0.0
  %v294 = vmax.f32 %v230, 0.0
  %v295 = vmax.f32 %v231, 0.0
  %v296 = vmax.f32 %v232, 0.0
  %v297 = vmax.f32 %v233, 0.0
  %v298 = vmax.f32 %v234, 0.0
  %v299 = vmax.f32 %v235, 0.0
  %v300 = vmax.f32 %v236, 0.0
  %v301 = vmax.f32 %v237, 0.0
  %v302 = vmax.f32 %v238, 0.0
  %v303 = vmax.f32 %v239, 0.0
  %v304 = vmax.f32 %v240, 0.0
  %v305 = vmax.f32 %v241, 0.0
  %v306 = vmax.f32 %v242, 0.0
  %v307 = vmax.f32 %v243, 0.0
  %v308 = vmax.f32 %v244, 0.0
  %v309 = vmax.f32 %v245, 0.0
  %v310 = vmax.f32 %v246, 0.0
  %v311 = vmax.f32 %v247, 0.0
  %v312 = vmax.f32 %v248, 0.0
  %v313 = vmax.f32 %v249, 0.0
  %v314 = vmax.f32 %v250, 0.0
  %v315 = vmax.f32 %v251, 0.0
  %v316 = vmax.f32 %v252, 0.0
  %v317 = vmax.f32 %v253, 0.0
  %v318 = vmax.f32 %v254, 0.0
  %v319 = vmax.f32 %v255, 0.0
  %v320 = vmax.f32 %v256, 0.0
  %v321 = vmax.f32 %v257, 0.0
  %v322 = vmax.f32 %v258, 0.0
  %v323 = vmax.f32 %v259, 0.0
  %v324 = vmax.f32 %v260, 0.0
  %v325 = vmax.f32 %v261, 0.0
  %v326 = vmax.f32 %v262, 0.0
  %v327 = vmax.f32 %v263, 0.0
  %v328 = vmax.f32 %v264, 0.0
  %v329 = vmax.f32 %v265, 0.0
  %v330 = vmax.f32 %v266, 0.0
  %v331 = vmax.f32 %v267, 0.0
  %v332 = vmax.f32 %v268, 0.0
  %v333 = vmax.f32 %v269, 0.0
  %v334 = vmax.f32 %v270, 0.0
  %v335 = vmax.f32 %v271, 0.0
  %v336 = vmax.f32 %v272, 0.0
  %v337 = vmax.f32 %v273, 0.0
  %v338 = vmax.f32 %v274, 0.0
  %v339 = vmax.f32 %v275, 0.0
  %v340 = vmax.f32 %v276, 0.0
  %v341 = vmax.f32 %v277, 0.0
  %v342 = vmax.f32 %v278, 0.0
  %v343 = vmax.f32 %v279, 0.0
  %v344 = vmax.f32 %v280, 0.0
  %v345 = vmax.f32 %v281, 0.0
  %v346 = vmax.f32 %v282, 0.0
  %v347 = vmax.f32 %v283, 0.0
  %v348 = vpack.c.bf16 %v285, %v284
  %v349 = vpack.c.bf16 %v287, %v286
  %v350 = vpack.c.bf16 %v289, %v288
  %v351 = vpack.c.bf16 %v291, %v290
  %v352 = vpack.c.bf16 %v293, %v292
  %v353 = vpack.c.bf16 %v295, %v294
  %v354 = vpack.c.bf16 %v297, %v296
  %v355 = vpack.c.bf16 %v299, %v298
  %v356 = vpack.c.bf16 %v301, %v300
  %v357 = vpack.c.bf16 %v303, %v302
  %v358 = vpack.c.bf16 %v305, %v304
  %v359 = vpack.c.bf16 %v307, %v306
  %v360 = vpack.c.bf16 %v309, %v308
  %v361 = vpack.c.bf16 %v311, %v310
  %v362 = vpack.c.bf16 %v313, %v312
  %v363 = vpack.c.bf16 %v315, %v314
  %v364 = vpack.c.bf16 %v317, %v316
  %v365 = vpack.c.bf16 %v319, %v318
  %v366 = vpack.c.bf16 %v321, %v320
  %v367 = vpack.c.bf16 %v323, %v322
  %v368 = vpack.c.bf16 %v325, %v324
  %v369 = vpack.c.bf16 %v327, %v326
  %v370 = vpack.c.bf16 %v329, %v328
  %v371 = vpack.c.bf16 %v331, %v330
  %v372 = vpack.c.bf16 %v333, %v332
  %v373 = vpack.c.bf16 %v335, %v334
  %v374 = vpack.c.bf16 %v337, %v336
  %v375 = vpack.c.bf16 %v339, %v338
  %v376 = vpack.c.bf16 %v341, %v340
  %v377 = vpack.c.bf16 %v343, %v342
  %v378 = vpack.c.bf16 %v345, %v344
  %v379 = vpack.c.bf16 %v347, %v346
  %v412 = vunpack.c.l.b16 %v348
  %v413 = vunpack.c.h.b16 %v348
  %v414 = vunpack.c.l.b16 %v349
  %v415 = vunpack.c.h.b16 %v349
  %v416 = vunpack.c.l.b16 %v350
  %v417 = vunpack.c.h.b16 %v350
  %v418 = vunpack.c.l.b16 %v351
  %v419 = vunpack.c.h.b16 %v351
  %v420 = vunpack.c.l.b16 %v352
  %v421 = vunpack.c.h.b16 %v352
  %v422 = vunpack.c.l.b16 %v353
  %v423 = vunpack.c.h.b16 %v353
  %v424 = vunpack.c.l.b16 %v354
  %v425 = vunpack.c.h.b16 %v354
  %v426 = vunpack.c.l.b16 %v355
  %v427 = vunpack.c.h.b16 %v355
  %v428 = vunpack.c.l.b16 %v356
  %v429 = vunpack.c.h.b16 %v356
  %v430 = vunpack.c.l.b16 %v357
  %v431 = vunpack.c.h.b16 %v357
  %v432 = vunpack.c.l.b16 %v358
  %v433 = vunpack.c.h.b16 %v358
  %v434 = vunpack.c.l.b16 %v359
  %v435 = vunpack.c.h.b16 %v359
  %v436 = vunpack.c.l.b16 %v360
  %v437 = vunpack.c.h.b16 %v360
  %v438 = vunpack.c.l.b16 %v361
  %v439 = vunpack.c.h.b16 %v361
  %v440 = vunpack.c.l.b16 %v362
  %v441 = vunpack.c.h.b16 %v362
  %v442 = vunpack.c.l.b16 %v363
  %v443 = vunpack.c.h.b16 %v363
  %v444 = vunpack.c.l.b16 %v364
  %v445 = vunpack.c.h.b16 %v364
  %v446 = vunpack.c.l.b16 %v365
  %v447 = vunpack.c.h.b16 %v365
  %v448 = vunpack.c.l.b16 %v366
  %v449 = vunpack.c.h.b16 %v366
  %v450 = vunpack.c.l.b16 %v367
  %v451 = vunpack.c.h.b16 %v367
  %v452 = vunpack.c.l.b16 %v368
  %v453 = vunpack.c.h.b16 %v368
  %v454 = vunpack.c.l.b16 %v369
  %v455 = vunpack.c.h.b16 %v369
  %v456 = vunpack.c.l.b16 %v370
  %v457 = vunpack.c.h.b16 %v370
  %v458 = vunpack.c.l.b16 %v371
  %v459 = vunpack.c.h.b16 %v371
  %v460 = vunpack.c.l.b16 %v372
  %v461 = vunpack.c.h.b16 %v372
  %v462 = vunpack.c.l.b16 %v373
  %v463 = vunpack.c.h.b16 %v373
  %v464 = vunpack.c.l.b16 %v374
  %v465 = vunpack.c.h.b16 %v374
  %v466 = vunpack.c.l.b16 %v375
  %v467 = vunpack.c.h.b16 %v375
  %v468 = vunpack.c.l.b16 %v376
  %v469 = vunpack.c.h.b16 %v376
  %v470 = vunpack.c.l.b16 %v377
  %v471 = vunpack.c.h.b16 %v377
  %v472 = vunpack.c.l.b16 %v378
  %v473 = vunpack.c.h.b16 %v378
  %v474 = vunpack.c.l.b16 %v379
  %v475 = vunpack.c.h.b16 %v379
  %v476 = vpack.c.b16 %v412, %v412
  %v477 = vpack.c.b16 %v413, %v413
  %v478 = vpack.c.b16 %v414, %v414
  %v479 = vpack.c.b16 %v415, %v415
  %v480 = vpack.c.b16 %v416, %v416
  %v481 = vpack.c.b16 %v417, %v417
  %v482 = vpack.c.b16 %v418, %v418
  %v483 = vpack.c.b16 %v419, %v419
  %v484 = vpack.c.b16 %v420, %v420
  %v485 = vpack.c.b16 %v421, %v421
  %v486 = vpack.c.b16 %v422, %v422
  %v487 = vpack.c.b16 %v423, %v423
  %v488 = vpack.c.b16 %v424, %v424
  %v489 = vpack.c.b16 %v425, %v425
  %v490 = vpack.c.b16 %v426, %v426
  %v491 = vpack.c.b16 %v427, %v427
  %v492 = vpack.c.b16 %v428, %v428
  %v493 = vpack.c.b16 %v429, %v429
  %v494 = vpack.c.b16 %v430, %v430
  %v495 = vpack.c.b16 %v431, %v431
  %v496 = vpack.c.b16 %v432, %v432
  %v497 = vpack.c.b16 %v433, %v433
  %v498 = vpack.c.b16 %v434, %v434
  %v499 = vpack.c.b16 %v435, %v435
  %v500 = vpack.c.b16 %v436, %v436
  %v501 = vpack.c.b16 %v437, %v437
  %v502 = vpack.c.b16 %v438, %v438
  %v503 = vpack.c.b16 %v439, %v439
  %v504 = vpack.c.b16 %v440, %v440
  %v505 = vpack.c.b16 %v441, %v441
  %v506 = vpack.c.b16 %v442, %v442
  %v507 = vpack.c.b16 %v443, %v443
  %v508 = vpack.c.b16 %v444, %v444
  %v509 = vpack.c.b16 %v445, %v445
  %v510 = vpack.c.b16 %v446, %v446
  %v511 = vpack.c.b16 %v447, %v447
  %v512 = vpack.c.b16 %v448, %v448
  %v513 = vpack.c.b16 %v449, %v449
  %v514 = vpack.c.b16 %v450, %v450
  %v515 = vpack.c.b16 %v451, %v451
  %v516 = vpack.c.b16 %v452, %v452
  %v517 = vpack.c.b16 %v453, %v453
  %v518 = vpack.c.b16 %v454, %v454
  %v519 = vpack.c.b16 %v455, %v455
  %v520 = vpack.c.b16 %v456, %v456
  %v521 = vpack.c.b16 %v457, %v457
  %v522 = vpack.c.b16 %v458, %v458
  %v523 = vpack.c.b16 %v459, %v459
  %v524 = vpack.c.b16 %v460, %v460
  %v525 = vpack.c.b16 %v461, %v461
  %v526 = vpack.c.b16 %v462, %v462
  %v527 = vpack.c.b16 %v463, %v463
  %v528 = vpack.c.b16 %v464, %v464
  %v529 = vpack.c.b16 %v465, %v465
  %v530 = vpack.c.b16 %v466, %v466
  %v531 = vpack.c.b16 %v467, %v467
  %v532 = vpack.c.b16 %v468, %v468
  %v533 = vpack.c.b16 %v469, %v469
  %v534 = vpack.c.b16 %v470, %v470
  %v535 = vpack.c.b16 %v471, %v471
  %v536 = vpack.c.b16 %v472, %v472
  %v537 = vpack.c.b16 %v473, %v473
  %v538 = vpack.c.b16 %v474, %v474
  %v539 = vpack.c.b16 %v475, %v475
  %604 = vst [vmem:[%s3] sm:$0xf] %v476
  %605 = vst [vmem:[%s3 + $0x4] sm:$0xf] %v477
  %606 = vst [vmem:[%s3 + $0x8] sm:$0xf] %v478
  %607 = vst [vmem:[%s3 + $0xc] sm:$0xf] %v479
  %608 = vst [vmem:[%s3 + $0x10] sm:$0xf] %v480
  %609 = vst [vmem:[%s3 + $0x14] sm:$0xf] %v481
  %610 = vst [vmem:[%s3 + $0x18] sm:$0xf] %v482
  %611 = vst [vmem:[%s3 + $0x1c] sm:$0xf] %v483
  %612 = vst [vmem:[%s3 + $0x20] sm:$0xf] %v484
  %613 = vst [vmem:[%s3 + $0x24] sm:$0xf] %v485
  %614 = vst [vmem:[%s3 + $0x28] sm:$0xf] %v486
  %615 = vst [vmem:[%s3 + $0x2c] sm:$0xf] %v487
  %616 = vst [vmem:[%s3 + $0x30] sm:$0xf] %v488
  %617 = vst [vmem:[%s3 + $0x34] sm:$0xf] %v489
  %618 = vst [vmem:[%s3 + $0x38] sm:$0xf] %v490
  %619 = vst [vmem:[%s3 + $0x3c] sm:$0xf] %v491
  %620 = vst [vmem:[%s3 + $0x40] sm:$0xf] %v492
  %621 = vst [vmem:[%s3 + $0x44] sm:$0xf] %v493
  %622 = vst [vmem:[%s3 + $0x48] sm:$0xf] %v494
  %623 = vst [vmem:[%s3 + $0x4c] sm:$0xf] %v495
  %624 = vst [vmem:[%s3 + $0x50] sm:$0xf] %v496
  %625 = vst [vmem:[%s3 + $0x54] sm:$0xf] %v497
  %626 = vst [vmem:[%s3 + $0x58] sm:$0xf] %v498
  %627 = vst [vmem:[%s3 + $0x5c] sm:$0xf] %v499
  %628 = vst [vmem:[%s3 + $0x60] sm:$0xf] %v500
  %629 = vst [vmem:[%s3 + $0x64] sm:$0xf] %v501
  %630 = vst [vmem:[%s3 + $0x68] sm:$0xf] %v502
  %631 = vst [vmem:[%s3 + $0x6c] sm:$0xf] %v503
  %632 = vst [vmem:[%s3 + $0x70] sm:$0xf] %v504
  %633 = vst [vmem:[%s3 + $0x74] sm:$0xf] %v505
  %634 = vst [vmem:[%s3 + $0x78] sm:$0xf] %v506
  %635 = vst [vmem:[%s3 + $0x7c] sm:$0xf] %v507
  %636 = vst [vmem:[%s3 + $0x80] sm:$0xf] %v508
  %637 = vst [vmem:[%s3 + $0x84] sm:$0xf] %v509
  %638 = vst [vmem:[%s3 + $0x88] sm:$0xf] %v510
  %639 = vst [vmem:[%s3 + $0x8c] sm:$0xf] %v511
  %640 = vst [vmem:[%s3 + $0x90] sm:$0xf] %v512
  %641 = vst [vmem:[%s3 + $0x94] sm:$0xf] %v513
  %642 = vst [vmem:[%s3 + $0x98] sm:$0xf] %v514
  %643 = vst [vmem:[%s3 + $0x9c] sm:$0xf] %v515
  %644 = vst [vmem:[%s3 + $0xa0] sm:$0xf] %v516
  %645 = vst [vmem:[%s3 + $0xa4] sm:$0xf] %v517
  %646 = vst [vmem:[%s3 + $0xa8] sm:$0xf] %v518
  %647 = vst [vmem:[%s3 + $0xac] sm:$0xf] %v519
  %648 = vst [vmem:[%s3 + $0xb0] sm:$0xf] %v520
  %649 = vst [vmem:[%s3 + $0xb4] sm:$0xf] %v521
  %650 = vst [vmem:[%s3 + $0xb8] sm:$0xf] %v522
  %651 = vst [vmem:[%s3 + $0xbc] sm:$0xf] %v523
  %652 = vst [vmem:[%s3 + $0xc0] sm:$0xf] %v524
  %653 = vst [vmem:[%s3 + $0xc4] sm:$0xf] %v525
  %654 = vst [vmem:[%s3 + $0xc8] sm:$0xf] %v526
  %655 = vst [vmem:[%s3 + $0xcc] sm:$0xf] %v527
  %656 = vst [vmem:[%s3 + $0xd0] sm:$0xf] %v528
  %657 = vst [vmem:[%s3 + $0xd4] sm:$0xf] %v529
  %658 = vst [vmem:[%s3 + $0xd8] sm:$0xf] %v530
  %659 = vst [vmem:[%s3 + $0xdc] sm:$0xf] %v531
  %660 = vst [vmem:[%s3 + $0xe0] sm:$0xf] %v532
  %661 = vst [vmem:[%s3 + $0xe4] sm:$0xf] %v533
  %662 = vst [vmem:[%s3 + $0xe8] sm:$0xf] %v534
  %663 = vst [vmem:[%s3 + $0xec] sm:$0xf] %v535
  %664 = vst [vmem:[%s3 + $0xf0] sm:$0xf] %v536
  %665 = vst [vmem:[%s3 + $0xf4] sm:$0xf] %v537
  %666 = vst [vmem:[%s3 + $0xf8] sm:$0xf] %v538
  %667 = vst [vmem:[%s3 + $0xfc] sm:$0xf] %v539
  // Predicated region
  $region14: #{_lambda_.16} parent=0 // pred_check
    _
  $region15: #{_lambda_.16} parent=0 // pred_check_branch
    %669 = sbr.rel (0) target = $region17
  $region16: #{_lambda_.16} parent=0 // pred_region
    _
  $region17: #{_lambda_.16} parent=0 // pred_fallthru
    _
  // Predicated region
  $region18: #{_lambda_.16} parent=0 // pred_check
    _
  $region19: #{_lambda_.16} parent=0 // pred_check_branch
    %671 = sbr.rel (0) target = $region21
  $region20: #{_lambda_.16} parent=0 // pred_region
    _
  $region21: #{_lambda_.16} parent=0 // pred_fallthru
    _

// kernel: _lambda_.15
$region0: #{_lambda_.15}
  #allocation0 [shape = 'u32[]', space=smem, size = 0x4, offset = 0x4, fixed_abs, tag = 'smem constant byte address 0x4 - core index']
  #allocation1 [shape = 'u32[144,128]{1,0:T(1,128)}', space=vmem, size = 0x12000, scoped, tag = 'internal scratch']
  %s0 = inlined_call_operand.vmem [shape: bf16[512,288], index: 0, kind: input, shape index: {}]
  %s1 = inlined_call_operand.vmem [shape: bf16[288,128], index: 1, kind: input, shape index: {}]
  %s2 = inlined_call_operand.vmem [shape: bf16[512,128], index: 2, kind: output, shape index: {0}]
  %s3 = inlined_call_operand.vmem [shape: f32[8,128], index: 3, kind: output, shape index: {1}]
  %s4 = inlined_call_operand.vmem [shape: f32[8,128], index: 4, kind: output, shape index: {2}]
  %5 = xla_tuple %s2, %s3, %s4
  %s6 = sld [smem:[#allocation0]]
  $region34: #{_lambda_.15} parent=0
    _
  %s8 = ssub.s32 1, %s6
  %s9 = scalar_select 0, %s8, %s6
  // Predicated region
  $region2: #{_lambda_.15} parent=0 // pred_check
    _
  $region3: #{_lambda_.15} parent=0 // pred_check_branch
    %11 = sbr.rel (0) target = $region5
  $region4: #{_lambda_.15} parent=0 // pred_region
    _
  $region5: #{_lambda_.15} parent=0 // pred_fallthru
    _
  // Predicated region
  $region6: #{_lambda_.15} parent=0 // pred_check
    _
  $region7: #{_lambda_.15} parent=0 // pred_check_branch
    %13 = sbr.rel (0) target = $region9
  $region8: #{_lambda_.15} parent=0 // pred_region
    _
  $region9: #{_lambda_.15} parent=0 // pred_fallthru
    _
  %v15 = vld [vmem:[%s0] sm:$0xff]
  %v16 = vld [vmem:[%s0 + $0x8] sm:$0xf]
  %v17 = vld [vmem:[%s0 + $0xc] sm:$0xff]
  %v18 = vld [vmem:[%s0 + $0x14] sm:$0xf]
  %v19 = vld [vmem:[%s0 + $0x18] sm:$0xff]
  %v20 = vld [vmem:[%s0 + $0x20] sm:$0xf]
  %v21 = vld [vmem:[%s0 + $0x24] sm:$0xff]
  %v22 = vld [vmem:[%s0 + $0x2c] sm:$0xf]
  %v23 = vld [vmem:[%s0 + $0x30] sm:$0xff]
  %v24 = vld [vmem:[%s0 + $0x38] sm:$0xf]
  %v25 = vld [vmem:[%s0 + $0x3c] sm:$0xff]
  %v26 = vld [vmem:[%s0 + $0x44] sm:$0xf]
  %v27 = vld [vmem:[%s0 + $0x48] sm:$0xff]
  %v28 = vld [vmem:[%s0 + $0x50] sm:$0xf]
  %v29 = vld [vmem:[%s0 + $0x54] sm:$0xff]
  %v30 = vld [vmem:[%s0 + $0x5c] sm:$0xf]
  %v31 = vld [vmem:[%s0 + $0x60] sm:$0xff]
  %v32 = vld [vmem:[%s0 + $0x68] sm:$0xf]
  %v33 = vld [vmem:[%s0 + $0x6c] sm:$0xff]
  %v34 = vld [vmem:[%s0 + $0x74] sm:$0xf]
  %v35 = vld [vmem:[%s0 + $0x78] sm:$0xff]
  %v36 = vld [vmem:[%s0 + $0x80] sm:$0xf]
  %v37 = vld [vmem:[%s0 + $0x84] sm:$0xff]
  %v38 = vld [vmem:[%s0 + $0x8c] sm:$0xf]
  %v39 = vld [vmem:[%s0 + $0x90] sm:$0xff]
  %v40 = vld [vmem:[%s0 + $0x98] sm:$0xf]
  %v41 = vld [vmem:[%s0 + $0x9c] sm:$0xff]
  %v42 = vld [vmem:[%s0 + $0xa4] sm:$0xf]
  %v43 = vld [vmem:[%s0 + $0xa8] sm:$0xff]
  %v44 = vld [vmem:[%s0 + $0xb0] sm:$0xf]
  %v45 = vld [vmem:[%s0 + $0xb4] sm:$0xff]
  %v46 = vld [vmem:[%s0 + $0xbc] sm:$0xf]
  %v47 = vld [vmem:[%s0 + $0xc0] sm:$0xff]
  %v48 = vld [vmem:[%s0 + $0xc8] sm:$0xf]
  %v49 = vld [vmem:[%s0 + $0xcc] sm:$0xff]
  %v50 = vld [vmem:[%s0 + $0xd4] sm:$0xf]
  %v51 = vld [vmem:[%s0 + $0xd8] sm:$0xff]
  %v52 = vld [vmem:[%s0 + $0xe0] sm:$0xf]
  %v53 = vld [vmem:[%s0 + $0xe4] sm:$0xff]
  %v54 = vld [vmem:[%s0 + $0xec] sm:$0xf]
  %v55 = vld [vmem:[%s0 + $0xf0] sm:$0xff]
  %v56 = vld [vmem:[%s0 + $0xf8] sm:$0xf]
  %v57 = vld [vmem:[%s0 + $0xfc] sm:$0xff]
  %v58 = vld [vmem:[%s0 + $0x104] sm:$0xf]
  %v59 = vld [vmem:[%s0 + $0x108] sm:$0xff]
  %v60 = vld [vmem:[%s0 + $0x110] sm:$0xf]
  %v61 = vld [vmem:[%s0 + $0x114] sm:$0xff]
  %v62 = vld [vmem:[%s0 + $0x11c] sm:$0xf]
  %v63 = vld [vmem:[%s0 + $0x120] sm:$0xff]
  %v64 = vld [vmem:[%s0 + $0x128] sm:$0xf]
  %v65 = vld [vmem:[%s0 + $0x12c] sm:$0xff]
  %v66 = vld [vmem:[%s0 + $0x134] sm:$0xf]
  %v67 = vld [vmem:[%s0 + $0x138] sm:$0xff]
  %v68 = vld [vmem:[%s0 + $0x140] sm:$0xf]
  %v69 = vld [vmem:[%s0 + $0x144] sm:$0xff]
  %v70 = vld [vmem:[%s0 + $0x14c] sm:$0xf]
  %v71 = vld [vmem:[%s0 + $0x150] sm:$0xff]
  %v72 = vld [vmem:[%s0 + $0x158] sm:$0xf]
  %v73 = vld [vmem:[%s0 + $0x15c] sm:$0xff]
  %v74 = vld [vmem:[%s0 + $0x164] sm:$0xf]
  %v75 = vld [vmem:[%s0 + $0x168] sm:$0xff]
  %v76 = vld [vmem:[%s0 + $0x170] sm:$0xf]
  %v77 = vld [vmem:[%s0 + $0x174] sm:$0xff]
  %v78 = vld [vmem:[%s0 + $0x17c] sm:$0xf]
  %v79 = vld [vmem:[%s0 + $0x180] sm:$0xff]
  %v80 = vld [vmem:[%s0 + $0x188] sm:$0xf]
  %v81 = vld [vmem:[%s0 + $0x18c] sm:$0xff]
  %v82 = vld [vmem:[%s0 + $0x194] sm:$0xf]
  %v83 = vld [vmem:[%s0 + $0x198] sm:$0xff]
  %v84 = vld [vmem:[%s0 + $0x1a0] sm:$0xf]
  %v85 = vld [vmem:[%s0 + $0x1a4] sm:$0xff]
  %v86 = vld [vmem:[%s0 + $0x1ac] sm:$0xf]
  %v87 = vld [vmem:[%s0 + $0x1b0] sm:$0xff]
  %v88 = vld [vmem:[%s0 + $0x1b8] sm:$0xf]
  %v89 = vld [vmem:[%s0 + $0x1bc] sm:$0xff]
  %v90 = vld [vmem:[%s0 + $0x1c4] sm:$0xf]
  %v91 = vld [vmem:[%s0 + $0x1c8] sm:$0xff]
  %v92 = vld [vmem:[%s0 + $0x1d0] sm:$0xf]
  %v93 = vld [vmem:[%s0 + $0x1d4] sm:$0xff]
  %v94 = vld [vmem:[%s0 + $0x1dc] sm:$0xf]
  %v95 = vld [vmem:[%s0 + $0x1e0] sm:$0xff]
  %v96 = vld [vmem:[%s0 + $0x1e8] sm:$0xf]
  %v97 = vld [vmem:[%s0 + $0x1ec] sm:$0xff]
  %v98 = vld [vmem:[%s0 + $0x1f4] sm:$0xf]
  %v99 = vld [vmem:[%s0 + $0x1f8] sm:$0xff]
  %v100 = vld [vmem:[%s0 + $0x200] sm:$0xf]
  %v101 = vld [vmem:[%s0 + $0x204] sm:$0xff]
  %v102 = vld [vmem:[%s0 + $0x20c] sm:$0xf]
  %v103 = vld [vmem:[%s0 + $0x210] sm:$0xff]
  %v104 = vld [vmem:[%s0 + $0x218] sm:$0xf]
  %v105 = vld [vmem:[%s0 + $0x21c] sm:$0xff]
  %v106 = vld [vmem:[%s0 + $0x224] sm:$0xf]
  %v107 = vld [vmem:[%s0 + $0x228] sm:$0xff]
  %v108 = vld [vmem:[%s0 + $0x230] sm:$0xf]
  %v109 = vld [vmem:[%s0 + $0x234] sm:$0xff]
  %v110 = vld [vmem:[%s0 + $0x23c] sm:$0xf]
  %v111 = vld [vmem:[%s0 + $0x240] sm:$0xff]
  %v112 = vld [vmem:[%s0 + $0x248] sm:$0xf]
  %v113 = vld [vmem:[%s0 + $0x24c] sm:$0xff]
  %v114 = vld [vmem:[%s0 + $0x254] sm:$0xf]
  %v115 = vld [vmem:[%s0 + $0x258] sm:$0xff]
  %v116 = vld [vmem:[%s0 + $0x260] sm:$0xf]
  %v117 = vld [vmem:[%s0 + $0x264] sm:$0xff]
  %v118 = vld [vmem:[%s0 + $0x26c] sm:$0xf]
  %v119 = vld [vmem:[%s0 + $0x270] sm:$0xff]
  %v120 = vld [vmem:[%s0 + $0x278] sm:$0xf]
  %v121 = vld [vmem:[%s0 + $0x27c] sm:$0xff]
  %v122 = vld [vmem:[%s0 + $0x284] sm:$0xf]
  %v123 = vld [vmem:[%s0 + $0x288] sm:$0xff]
  %v124 = vld [vmem:[%s0 + $0x290] sm:$0xf]
  %v125 = vld [vmem:[%s0 + $0x294] sm:$0xff]
  %v126 = vld [vmem:[%s0 + $0x29c] sm:$0xf]
  %v127 = vld [vmem:[%s0 + $0x2a0] sm:$0xff]
  %v128 = vld [vmem:[%s0 + $0x2a8] sm:$0xf]
  %v129 = vld [vmem:[%s0 + $0x2ac] sm:$0xff]
  %v130 = vld [vmem:[%s0 + $0x2b4] sm:$0xf]
  %v131 = vld [vmem:[%s0 + $0x2b8] sm:$0xff]
  %v132 = vld [vmem:[%s0 + $0x2c0] sm:$0xf]
  %v133 = vld [vmem:[%s0 + $0x2c4] sm:$0xff]
  %v134 = vld [vmem:[%s0 + $0x2cc] sm:$0xf]
  %v135 = vld [vmem:[%s0 + $0x2d0] sm:$0xff]
  %v136 = vld [vmem:[%s0 + $0x2d8] sm:$0xf]
  %v137 = vld [vmem:[%s0 + $0x2dc] sm:$0xff]
  %v138 = vld [vmem:[%s0 + $0x2e4] sm:$0xf]
  %v139 = vld [vmem:[%s0 + $0x2e8] sm:$0xff]
  %v140 = vld [vmem:[%s0 + $0x2f0] sm:$0xf]
  %v141 = vld [vmem:[%s0 + $0x2f4] sm:$0xff]
  %v142 = vld [vmem:[%s0 + $0x2fc] sm:$0xf]
  %v143 = vld [vmem:[%s1] sm:$0xf]
  %v144 = vld [vmem:[%s1 + $0x4] sm:$0xf]
  %v145 = vld [vmem:[%s1 + $0x8] sm:$0xf]
  %v146 = vld [vmem:[%s1 + $0xc] sm:$0xf]
  %v147 = vld [vmem:[%s1 + $0x10] sm:$0xf]
  %v148 = vld [vmem:[%s1 + $0x14] sm:$0xf]
  %v149 = vld [vmem:[%s1 + $0x18] sm:$0xf]
  %v150 = vld [vmem:[%s1 + $0x1c] sm:$0xf]
  %v151 = vld [vmem:[%s1 + $0x20] sm:$0xf]
  %v152 = vld [vmem:[%s1 + $0x24] sm:$0xf]
  %v153 = vld [vmem:[%s1 + $0x28] sm:$0xf]
  %v154 = vld [vmem:[%s1 + $0x2c] sm:$0xf]
  %v155 = vld [vmem:[%s1 + $0x30] sm:$0xf]
  %v156 = vld [vmem:[%s1 + $0x34] sm:$0xf]
  %v157 = vld [vmem:[%s1 + $0x38] sm:$0xf]
  %v158 = vld [vmem:[%s1 + $0x3c] sm:$0xf]
  %v159 = vld [vmem:[%s1 + $0x40] sm:$0xf]
  %v160 = vld [vmem:[%s1 + $0x44] sm:$0xf]
  %v161 = vld [vmem:[%s1 + $0x48] sm:$0xf]
  %v162 = vld [vmem:[%s1 + $0x4c] sm:$0xf]
  %v163 = vld [vmem:[%s1 + $0x50] sm:$0xf]
  %v164 = vld [vmem:[%s1 + $0x54] sm:$0xf]
  %v165 = vld [vmem:[%s1 + $0x58] sm:$0xf]
  %v166 = vld [vmem:[%s1 + $0x5c] sm:$0xf]
  %v167 = vld [vmem:[%s1 + $0x60] sm:$0xf]
  %v168 = vld [vmem:[%s1 + $0x64] sm:$0xf]
  %v169 = vld [vmem:[%s1 + $0x68] sm:$0xf]
  %v170 = vld [vmem:[%s1 + $0x6c] sm:$0xf]
  %v171 = vld [vmem:[%s1 + $0x70] sm:$0xf]
  %v172 = vld [vmem:[%s1 + $0x74] sm:$0xf]
  %v173 = vld [vmem:[%s1 + $0x78] sm:$0xf]
  %v174 = vld [vmem:[%s1 + $0x7c] sm:$0xf]
  %v175 = vld [vmem:[%s1 + $0x80] sm:$0xf]
  %v176 = vld [vmem:[%s1 + $0x84] sm:$0xf]
  %v177 = vld [vmem:[%s1 + $0x88] sm:$0xf]
  %v178 = vld [vmem:[%s1 + $0x8c] sm:$0xf]
  %v307 = vunpack.c.l.b16 %v15
  %v308 = vunpack.c.h.b16 %v15
  %v309 = vunpack.c.l.b16 %v16
  %v310 = vunpack.c.l.b16 %v17
  %v311 = vunpack.c.h.b16 %v17
  %v312 = vunpack.c.l.b16 %v18
  %v313 = vunpack.c.l.b16 %v19
  %v314 = vunpack.c.h.b16 %v19
  %v315 = vunpack.c.l.b16 %v20
  %v316 = vunpack.c.l.b16 %v21
  %v317 = vunpack.c.h.b16 %v21
  %v318 = vunpack.c.l.b16 %v22
  %v319 = vunpack.c.l.b16 %v23
  %v320 = vunpack.c.h.b16 %v23
  %v321 = vunpack.c.l.b16 %v24
  %v322 = vunpack.c.l.b16 %v25
  %v323 = vunpack.c.h.b16 %v25
  %v324 = vunpack.c.l.b16 %v26
  %v325 = vunpack.c.l.b16 %v27
  %v326 = vunpack.c.h.b16 %v27
  %v327 = vunpack.c.l.b16 %v28
  %v328 = vunpack.c.l.b16 %v29
  %v329 = vunpack.c.h.b16 %v29
  %v330 = vunpack.c.l.b16 %v30
  %v331 = vunpack.c.l.b16 %v31
  %v332 = vunpack.c.h.b16 %v31
  %v333 = vunpack.c.l.b16 %v32
  %v334 = vunpack.c.l.b16 %v33
  %v335 = vunpack.c.h.b16 %v33
  %v336 = vunpack.c.l.b16 %v34
  %v337 = vunpack.c.l.b16 %v35
  %v338 = vunpack.c.h.b16 %v35
  %v339 = vunpack.c.l.b16 %v36
  %v340 = vunpack.c.l.b16 %v37
  %v341 = vunpack.c.h.b16 %v37
  %v342 = vunpack.c.l.b16 %v38
  %v343 = vunpack.c.l.b16 %v39
  %v344 = vunpack.c.h.b16 %v39
  %v345 = vunpack.c.l.b16 %v40
  %v346 = vunpack.c.l.b16 %v41
  %v347 = vunpack.c.h.b16 %v41
  %v348 = vunpack.c.l.b16 %v42
  %v349 = vunpack.c.l.b16 %v43
  %v350 = vunpack.c.h.b16 %v43
  %v351 = vunpack.c.l.b16 %v44
  %v352 = vunpack.c.l.b16 %v45
  %v353 = vunpack.c.h.b16 %v45
  %v354 = vunpack.c.l.b16 %v46
  %v355 = vunpack.c.l.b16 %v47
  %v356 = vunpack.c.h.b16 %v47
  %v357 = vunpack.c.l.b16 %v48
  %v358 = vunpack.c.l.b16 %v49
  %v359 = vunpack.c.h.b16 %v49
  %v360 = vunpack.c.l.b16 %v50
  %v361 = vunpack.c.l.b16 %v51
  %v362 = vunpack.c.h.b16 %v51
  %v363 = vunpack.c.l.b16 %v52
  %v364 = vunpack.c.l.b16 %v53
  %v365 = vunpack.c.h.b16 %v53
  %v366 = vunpack.c.l.b16 %v54
  %v367 = vunpack.c.l.b16 %v55
  %v368 = vunpack.c.h.b16 %v55
  %v369 = vunpack.c.l.b16 %v56
  %v370 = vunpack.c.l.b16 %v57
  %v371 = vunpack.c.h.b16 %v57
  %v372 = vunpack.c.l.b16 %v58
  %v373 = vunpack.c.l.b16 %v59
  %v374 = vunpack.c.h.b16 %v59
  %v375 = vunpack.c.l.b16 %v60
  %v376 = vunpack.c.l.b16 %v61
  %v377 = vunpack.c.h.b16 %v61
  %v378 = vunpack.c.l.b16 %v62
  %v379 = vunpack.c.l.b16 %v63
  %v380 = vunpack.c.h.b16 %v63
  %v381 = vunpack.c.l.b16 %v64
  %v382 = vunpack.c.l.b16 %v65
  %v383 = vunpack.c.h.b16 %v65
  %v384 = vunpack.c.l.b16 %v66
  %v385 = vunpack.c.l.b16 %v67
  %v386 = vunpack.c.h.b16 %v67
  %v387 = vunpack.c.l.b16 %v68
  %v388 = vunpack.c.l.b16 %v69
  %v389 = vunpack.c.h.b16 %v69
  %v390 = vunpack.c.l.b16 %v70
  %v391 = vunpack.c.l.b16 %v71
  %v392 = vunpack.c.h.b16 %v71
  %v393 = vunpack.c.l.b16 %v72
  %v394 = vunpack.c.l.b16 %v73
  %v395 = vunpack.c.h.b16 %v73
  %v396 = vunpack.c.l.b16 %v74
  %v397 = vunpack.c.l.b16 %v75
  %v398 = vunpack.c.h.b16 %v75
  %v399 = vunpack.c.l.b16 %v76
  %v400 = vunpack.c.l.b16 %v77
  %v401 = vunpack.c.h.b16 %v77
  %v402 = vunpack.c.l.b16 %v78
  %v403 = vunpack.c.l.b16 %v79
  %v404 = vunpack.c.h.b16 %v79
  %v405 = vunpack.c.l.b16 %v80
  %v406 = vunpack.c.l.b16 %v81
  %v407 = vunpack.c.h.b16 %v81
  %v408 = vunpack.c.l.b16 %v82
  %v409 = vunpack.c.l.b16 %v83
  %v410 = vunpack.c.h.b16 %v83
  %v411 = vunpack.c.l.b16 %v84
  %v412 = vunpack.c.l.b16 %v85
  %v413 = vunpack.c.h.b16 %v85
  %v414 = vunpack.c.l.b16 %v86
  %v415 = vunpack.c.l.b16 %v87
  %v416 = vunpack.c.h.b16 %v87
  %v417 = vunpack.c.l.b16 %v88
  %v418 = vunpack.c.l.b16 %v89
  %v419 = vunpack.c.h.b16 %v89
  %v420 = vunpack.c.l.b16 %v90
  %v421 = vunpack.c.l.b16 %v91
  %v422 = vunpack.c.h.b16 %v91
  %v423 = vunpack.c.l.b16 %v92
  %v424 = vunpack.c.l.b16 %v93
  %v425 = vunpack.c.h.b16 %v93
  %v426 = vunpack.c.l.b16 %v94
  %v427 = vunpack.c.l.b16 %v95
  %v428 = vunpack.c.h.b16 %v95
  %v429 = vunpack.c.l.b16 %v96
  %v430 = vunpack.c.l.b16 %v97
  %v431 = vunpack.c.h.b16 %v97
  %v432 = vunpack.c.l.b16 %v98
  %v433 = vunpack.c.l.b16 %v99
  %v434 = vunpack.c.h.b16 %v99
  %v435 = vunpack.c.l.b16 %v100
  %v436 = vunpack.c.l.b16 %v101
  %v437 = vunpack.c.h.b16 %v101
  %v438 = vunpack.c.l.b16 %v102
  %v439 = vunpack.c.l.b16 %v103
  %v440 = vunpack.c.h.b16 %v103
  %v441 = vunpack.c.l.b16 %v104
  %v442 = vunpack.c.l.b16 %v105
  %v443 = vunpack.c.h.b16 %v105
  %v444 = vunpack.c.l.b16 %v106
  %v445 = vunpack.c.l.b16 %v107
  %v446 = vunpack.c.h.b16 %v107
  %v447 = vunpack.c.l.b16 %v108
  %v448 = vunpack.c.l.b16 %v109
  %v449 = vunpack.c.h.b16 %v109
  %v450 = vunpack.c.l.b16 %v110
  %v451 = vunpack.c.l.b16 %v111
  %v452 = vunpack.c.h.b16 %v111
  %v453 = vunpack.c.l.b16 %v112
  %v454 = vunpack.c.l.b16 %v113
  %v455 = vunpack.c.h.b16 %v113
  %v456 = vunpack.c.l.b16 %v114
  %v457 = vunpack.c.l.b16 %v115
  %v458 = vunpack.c.h.b16 %v115
  %v459 = vunpack.c.l.b16 %v116
  %v460 = vunpack.c.l.b16 %v117
  %v461 = vunpack.c.h.b16 %v117
  %v462 = vunpack.c.l.b16 %v118
  %v463 = vunpack.c.l.b16 %v119
  %v464 = vunpack.c.h.b16 %v119
  %v465 = vunpack.c.l.b16 %v120
  %v466 = vunpack.c.l.b16 %v121
  %v467 = vunpack.c.h.b16 %v121
  %v468 = vunpack.c.l.b16 %v122
  %v469 = vunpack.c.l.b16 %v123
  %v470 = vunpack.c.h.b16 %v123
  %v471 = vunpack.c.l.b16 %v124
  %v472 = vunpack.c.l.b16 %v125
  %v473 = vunpack.c.h.b16 %v125
  %v474 = vunpack.c.l.b16 %v126
  %v475 = vunpack.c.l.b16 %v127
  %v476 = vunpack.c.h.b16 %v127
  %v477 = vunpack.c.l.b16 %v128
  %v478 = vunpack.c.l.b16 %v129
  %v479 = vunpack.c.h.b16 %v129
  %v480 = vunpack.c.l.b16 %v130
  %v481 = vunpack.c.l.b16 %v131
  %v482 = vunpack.c.h.b16 %v131
  %v483 = vunpack.c.l.b16 %v132
  %v484 = vunpack.c.l.b16 %v133
  %v485 = vunpack.c.h.b16 %v133
  %v486 = vunpack.c.l.b16 %v134
  %v487 = vunpack.c.l.b16 %v135
  %v488 = vunpack.c.h.b16 %v135
  %v489 = vunpack.c.l.b16 %v136
  %v490 = vunpack.c.l.b16 %v137
  %v491 = vunpack.c.h.b16 %v137
  %v492 = vunpack.c.l.b16 %v138
  %v493 = vunpack.c.l.b16 %v139
  %v494 = vunpack.c.h.b16 %v139
  %v495 = vunpack.c.l.b16 %v140
  %v496 = vunpack.c.l.b16 %v141
  %v497 = vunpack.c.h.b16 %v141
  %v498 = vunpack.c.l.b16 %v142
  %v499 = vpack.c.b16 %v310, %v307
  %v500 = vpack.c.b16 %v311, %v308
  %v501 = vpack.c.b16 %v312, %v309
  %v502 = vpack.c.b16 %v316, %v313
  %v503 = vpack.c.b16 %v317, %v314
  %v504 = vpack.c.b16 %v318, %v315
  %v505 = vpack.c.b16 %v322, %v319
  %v506 = vpack.c.b16 %v323, %v320
  %v507 = vpack.c.b16 %v324, %v321
  %v508 = vpack.c.b16 %v328, %v325
  %v509 = vpack.c.b16 %v329, %v326
  %v510 = vpack.c.b16 %v330, %v327
  %v511 = vpack.c.b16 %v334, %v331
  %v512 = vpack.c.b16 %v335, %v332
  %v513 = vpack.c.b16 %v336, %v333
  %v514 = vpack.c.b16 %v340, %v337
  %v515 = vpack.c.b16 %v341, %v338
  %v516 = vpack.c.b16 %v342, %v339
  %v517 = vpack.c.b16 %v346, %v343
  %v518 = vpack.c.b16 %v347, %v344
  %v519 = vpack.c.b16 %v348, %v345
  %v520 = vpack.c.b16 %v352, %v349
  %v521 = vpack.c.b16 %v353, %v350
  %v522 = vpack.c.b16 %v354, %v351
  %v523 = vpack.c.b16 %v358, %v355
  %v524 = vpack.c.b16 %v359, %v356
  %v525 = vpack.c.b16 %v360, %v357
  %v526 = vpack.c.b16 %v364, %v361
  %v527 = vpack.c.b16 %v365, %v362
  %v528 = vpack.c.b16 %v366, %v363
  %v529 = vpack.c.b16 %v370, %v367
  %v530 = vpack.c.b16 %v371, %v368
  %v531 = vpack.c.b16 %v372, %v369
  %v532 = vpack.c.b16 %v376, %v373
  %v533 = vpack.c.b16 %v377, %v374
  %v534 = vpack.c.b16 %v378, %v375
  %v535 = vpack.c.b16 %v382, %v379
  %v536 = vpack.c.b16 %v383, %v380
  %v537 = vpack.c.b16 %v384, %v381
  %v538 = vpack.c.b16 %v388, %v385
  %v539 = vpack.c.b16 %v389, %v386
  %v540 = vpack.c.b16 %v390, %v387
  %v541 = vpack.c.b16 %v394, %v391
  %v542 = vpack.c.b16 %v395, %v392
  %v543 = vpack.c.b16 %v396, %v393
  %v544 = vpack.c.b16 %v400, %v397
  %v545 = vpack.c.b16 %v401, %v398
  %v546 = vpack.c.b16 %v402, %v399
  %v547 = vpack.c.b16 %v406, %v403
  %v548 = vpack.c.b16 %v407, %v404
  %v549 = vpack.c.b16 %v408, %v405
  %v550 = vpack.c.b16 %v412, %v409
  %v551 = vpack.c.b16 %v413, %v410
  %v552 = vpack.c.b16 %v414, %v411
  %v553 = vpack.c.b16 %v418, %v415
  %v554 = vpack.c.b16 %v419, %v416
  %v555 = vpack.c.b16 %v420, %v417
  %v556 = vpack.c.b16 %v424, %v421
  %v557 = vpack.c.b16 %v425, %v422
  %v558 = vpack.c.b16 %v426, %v423
  %v559 = vpack.c.b16 %v430, %v427
  %v560 = vpack.c.b16 %v431, %v428
  %v561 = vpack.c.b16 %v432, %v429
  %v562 = vpack.c.b16 %v436, %v433
  %v563 = vpack.c.b16 %v437, %v434
  %v564 = vpack.c.b16 %v438, %v435
  %v565 = vpack.c.b16 %v442, %v439
  %v566 = vpack.c.b16 %v443, %v440
  %v567 = vpack.c.b16 %v444, %v441
  %v568 = vpack.c.b16 %v448, %v445
  %v569 = vpack.c.b16 %v449, %v446
  %v570 = vpack.c.b16 %v450, %v447
  %v571 = vpack.c.b16 %v454, %v451
  %v572 = vpack.c.b16 %v455, %v452
  %v573 = vpack.c.b16 %v456, %v453
  %v574 = vpack.c.b16 %v460, %v457
  %v575 = vpack.c.b16 %v461, %v458
  %v576 = vpack.c.b16 %v462, %v459
  %v577 = vpack.c.b16 %v466, %v463
  %v578 = vpack.c.b16 %v467, %v464
  %v579 = vpack.c.b16 %v468, %v465
  %v580 = vpack.c.b16 %v472, %v469
  %v581 = vpack.c.b16 %v473, %v470
  %v582 = vpack.c.b16 %v474, %v471
  %v583 = vpack.c.b16 %v478, %v475
  %v584 = vpack.c.b16 %v479, %v476
  %v585 = vpack.c.b16 %v480, %v477
  %v586 = vpack.c.b16 %v484, %v481
  %v587 = vpack.c.b16 %v485, %v482
  %v588 = vpack.c.b16 %v486, %v483
  %v589 = vpack.c.b16 %v490, %v487
  %v590 = vpack.c.b16 %v491, %v488
  %v591 = vpack.c.b16 %v492, %v489
  %v592 = vpack.c.b16 %v496, %v493
  %v593 = vpack.c.b16 %v497, %v494
  %v594 = vpack.c.b16 %v498, %v495
  %v695 = vunpack.c.l.b16 %v143
  %v696 = vunpack.c.l.b16 %v144
  %v697 = vunpack.c.l.b16 %v145
  %v698 = vunpack.c.l.b16 %v146
  %v699 = vunpack.c.l.b16 %v147
  %v700 = vunpack.c.l.b16 %v148
  %v701 = vunpack.c.l.b16 %v149
  %v702 = vunpack.c.l.b16 %v150
  %v703 = vunpack.c.l.b16 %v151
  %v704 = vunpack.c.l.b16 %v152
  %v705 = vunpack.c.l.b16 %v153
  %v706 = vunpack.c.l.b16 %v154
  %v707 = vunpack.c.l.b16 %v155
  %v708 = vunpack.c.l.b16 %v156
  %v709 = vunpack.c.l.b16 %v157
  %v710 = vunpack.c.l.b16 %v158
  %v711 = vunpack.c.l.b16 %v159
  %v712 = vunpack.c.l.b16 %v160
  %v713 = vunpack.c.l.b16 %v161
  %v714 = vunpack.c.l.b16 %v162
  %v715 = vunpack.c.l.b16 %v163
  %v716 = vunpack.c.l.b16 %v164
  %v717 = vunpack.c.l.b16 %v165
  %v718 = vunpack.c.l.b16 %v166
  %v719 = vunpack.c.l.b16 %v167
  %v720 = vunpack.c.l.b16 %v168
  %v721 = vunpack.c.l.b16 %v169
  %v722 = vunpack.c.l.b16 %v170
  %v723 = vunpack.c.l.b16 %v171
  %v724 = vunpack.c.l.b16 %v172
  %v725 = vunpack.c.l.b16 %v173
  %v726 = vunpack.c.l.b16 %v174
  %v727 = vunpack.c.l.b16 %v175
  %v728 = vunpack.c.l.b16 %v176
  %v729 = vunpack.c.l.b16 %v177
  %v730 = vunpack.c.l.b16 %v178
  %v731 = vpack.c.b16 %v696, %v695
  %v732 = vpack.c.b16 %v698, %v697
  %v733 = vpack.c.b16 %v700, %v699
  %v734 = vpack.c.b16 %v702, %v701
  %v735 = vpack.c.b16 %v704, %v703
  %v736 = vpack.c.b16 %v706, %v705
  %v737 = vpack.c.b16 %v708, %v707
  %v738 = vpack.c.b16 %v710, %v709
  %v739 = vpack.c.b16 %v712, %v711
  %v740 = vpack.c.b16 %v714, %v713
  %v741 = vpack.c.b16 %v716, %v715
  %v742 = vpack.c.b16 %v718, %v717
  %v743 = vpack.c.b16 %v720, %v719
  %v744 = vpack.c.b16 %v722, %v721
  %v745 = vpack.c.b16 %v724, %v723
  %v746 = vpack.c.b16 %v726, %v725
  %v747 = vpack.c.b16 %v728, %v727
  %v748 = vpack.c.b16 %v730, %v729
  %vm767 = vcmask 261120
  %v769 = vsel %vm767, %v501, 0
  %v772 = vsel %vm767, %v504, 0
  %v775 = vsel %vm767, %v507, 0
  %v778 = vsel %vm767, %v510, 0
  %v781 = vsel %vm767, %v513, 0
  %v784 = vsel %vm767, %v516, 0
  %v787 = vsel %vm767, %v519, 0
  %v790 = vsel %vm767, %v522, 0
  %v793 = vsel %vm767, %v525, 0
  %v796 = vsel %vm767, %v528, 0
  %v799 = vsel %vm767, %v531, 0
  %v802 = vsel %vm767, %v534, 0
  %v805 = vsel %vm767, %v537, 0
  %v808 = vsel %vm767, %v540, 0
  %v811 = vsel %vm767, %v543, 0
  %v814 = vsel %vm767, %v546, 0
  %v817 = vsel %vm767, %v549, 0
  %v820 = vsel %vm767, %v552, 0
  %v823 = vsel %vm767, %v555, 0
  %v826 = vsel %vm767, %v558, 0
  %v829 = vsel %vm767, %v561, 0
  %v832 = vsel %vm767, %v564, 0
  %v835 = vsel %vm767, %v567, 0
  %v838 = vsel %vm767, %v570, 0
  %v841 = vsel %vm767, %v573, 0
  %v844 = vsel %vm767, %v576, 0
  %v847 = vsel %vm767, %v579, 0
  %v850 = vsel %vm767, %v582, 0
  %v853 = vsel %vm767, %v585, 0
  %v856 = vsel %vm767, %v588, 0
  %v859 = vsel %vm767, %v591, 0
  %v862 = vsel %vm767, %v594, 0
  %864 = vmatprep.subr.bf16.mxu0 0
  %865 = vmatpush1.bf16.msra.mxu0 %v738
  %866 = vmatprep.subr.bf16.mxu0 0
  %867 = vmatpush1.bf16.msra.mxu0 %v737
  %868 = vmatprep.subr.bf16.mxu0 0
  %869 = vmatpush1.bf16.msra.mxu0 %v736
  %870 = vmatprep.subr.bf16.mxu0 0
  %871 = vmatpush1.bf16.msra.mxu0 %v735
  %872 = vmatprep.subr.bf16.mxu0 0
  %873 = vmatpush1.bf16.msra.mxu0 %v734
  %874 = vmatprep.subr.bf16.mxu0 0
  %875 = vmatpush1.bf16.msra.mxu0 %v733
  %876 = vmatprep.subr.bf16.mxu0 0
  %877 = vmatpush1.bf16.msra.mxu0 %v732
  %878 = vmatprep.subr.bf16.mxu0 0
  %879 = vmatpush1.bf16.msra.mxu0 %v731
  %880 = vmatprep.subr.bf16.mxu0 0
  %881 = vmatpush2.bf16.msra.mxu0 %v746
  %882 = vmatprep.subr.bf16.mxu0 0
  %883 = vmatpush2.bf16.msra.mxu0 %v745
  %884 = vmatprep.subr.bf16.mxu0 0
  %885 = vmatpush2.bf16.msra.mxu0 %v744
  %886 = vmatprep.subr.bf16.mxu0 0
  %887 = vmatpush2.bf16.msra.mxu0 %v743
  %888 = vmatprep.subr.bf16.mxu0 0
  %889 = vmatpush2.bf16.msra.mxu0 %v742
  %890 = vmatprep.subr.bf16.mxu0 0
  %891 = vmatpush2.bf16.msra.mxu0 %v741
  %892 = vmatprep.subr.bf16.mxu0 0
  %893 = vmatpush2.bf16.msra.mxu0 %v740
  %894 = vmatprep.subr.bf16.mxu0 0
  %895 = vmatpush2.bf16.msra.mxu0 %v739
  %896 = vmatprep.mubr.bf16.mxu0 %v500
  %897 = vmatmul.mubr.bf16.gmra.mxu0 %v499
  %v898 = vpop.f32.mrf.mxu0
  %v899 = vadd.f32 0.0, %v898
  %v900 = vpop.f32.mrf.mxu0
  %v901 = vpop.f32.mrf.mxu0
  %v902 = vadd.f32 0.0, %v901
  %v903 = vpop.f32.mrf.mxu0
  %904 = vmatprep.mubr.bf16.mxu0 %v503
  %905 = vmatmul.mubr.bf16.gmra.mxu0 %v502
  %v906 = vpop.f32.mrf.mxu0
  %v907 = vadd.f32 0.0, %v906
  %v908 = vpop.f32.mrf.mxu0
  %v909 = vpop.f32.mrf.mxu0
  %v910 = vadd.f32 0.0, %v909
  %v911 = vpop.f32.mrf.mxu0
  %912 = vmatprep.mubr.bf16.mxu0 %v506
  %913 = vmatmul.mubr.bf16.gmra.mxu0 %v505
  %v914 = vpop.f32.mrf.mxu0
  %v915 = vadd.f32 0.0, %v914
  %v916 = vpop.f32.mrf.mxu0
  %v917 = vpop.f32.mrf.mxu0
  %v918 = vadd.f32 0.0, %v917
  %v919 = vpop.f32.mrf.mxu0
  %920 = vmatprep.mubr.bf16.mxu0 %v509
  %921 = vmatmul.mubr.bf16.gmra.mxu0 %v508
  %v922 = vpop.f32.mrf.mxu0
  %v923 = vadd.f32 0.0, %v922
  %v924 = vpop.f32.mrf.mxu0
  %v925 = vpop.f32.mrf.mxu0
  %v926 = vadd.f32 0.0, %v925
  %v927 = vpop.f32.mrf.mxu0
  %928 = vmatprep.mubr.bf16.mxu0 %v512
  %929 = vmatmul.mubr.bf16.gmra.mxu0 %v511
  %v930 = vpop.f32.mrf.mxu0
  %v931 = vadd.f32 0.0, %v930
  %v932 = vpop.f32.mrf.mxu0
  %v933 = vpop.f32.mrf.mxu0
  %v934 = vadd.f32 0.0, %v933
  %v935 = vpop.f32.mrf.mxu0
  %936 = vmatprep.mubr.bf16.mxu0 %v515
  %937 = vmatmul.mubr.bf16.gmra.mxu0 %v514
  %v938 = vpop.f32.mrf.mxu0
  %v939 = vadd.f32 0.0, %v938
  %v940 = vpop.f32.mrf.mxu0
  %v941 = vpop.f32.mrf.mxu0
  %v942 = vadd.f32 0.0, %v941
  %v943 = vpop.f32.mrf.mxu0
  %944 = vmatprep.mubr.bf16.mxu0 %v518
  %945 = vmatmul.mubr.bf16.gmra.mxu0 %v517
  %v946 = vpop.f32.mrf.mxu0
  %v947 = vadd.f32 0.0, %v946
  %v948 = vpop.f32.mrf.mxu0
  %v949 = vpop.f32.mrf.mxu0
  %v950 = vadd.f32 0.0, %v949
  %v951 = vpop.f32.mrf.mxu0
  %952 = vmatprep.mubr.bf16.mxu0 %v521
  %953 = vmatmul.mubr.bf16.gmra.mxu0 %v520
  %v954 = vpop.f32.mrf.mxu0
  %v955 = vadd.f32 0.0, %v954
  %v956 = vpop.f32.mrf.mxu0
  %v957 = vpop.f32.mrf.mxu0
  %v958 = vadd.f32 0.0, %v957
  %v959 = vpop.f32.mrf.mxu0
  %960 = vmatprep.mubr.bf16.mxu0 %v524
  %961 = vmatmul.mubr.bf16.gmra.mxu0 %v523
  %v962 = vpop.f32.mrf.mxu0
  %v963 = vadd.f32 0.0, %v962
  %v964 = vpop.f32.mrf.mxu0
  %v965 = vpop.f32.mrf.mxu0
  %v966 = vadd.f32 0.0, %v965
  %v967 = vpop.f32.mrf.mxu0
  %968 = vmatprep.mubr.bf16.mxu0 %v527
  %969 = vmatmul.mubr.bf16.gmra.mxu0 %v526
  %v970 = vpop.f32.mrf.mxu0
  %v971 = vadd.f32 0.0, %v970
  %v972 = vpop.f32.mrf.mxu0
  %v973 = vpop.f32.mrf.mxu0
  %v974 = vadd.f32 0.0, %v973
  %v975 = vpop.f32.mrf.mxu0
  %976 = vmatprep.mubr.bf16.mxu0 %v530
  %977 = vmatmul.mubr.bf16.gmra.mxu0 %v529
  %v978 = vpop.f32.mrf.mxu0
  %v979 = vadd.f32 0.0, %v978
  %v980 = vpop.f32.mrf.mxu0
  %v981 = vpop.f32.mrf.mxu0
  %v982 = vadd.f32 0.0, %v981
  %v983 = vpop.f32.mrf.mxu0
  %984 = vmatprep.mubr.bf16.mxu0 %v533
  %985 = vmatmul.mubr.bf16.gmra.mxu0 %v532
  %v986 = vpop.f32.mrf.mxu0
  %v987 = vadd.f32 0.0, %v986
  %v988 = vpop.f32.mrf.mxu0
  %v989 = vpop.f32.mrf.mxu0
  %v990 = vadd.f32 0.0, %v989
  %v991 = vpop.f32.mrf.mxu0
  %992 = vmatprep.mubr.bf16.mxu0 %v536
  %993 = vmatmul.mubr.bf16.gmra.mxu0 %v535
  %v994 = vpop.f32.mrf.mxu0
  %v995 = vadd.f32 0.0, %v994
  %v996 = vpop.f32.mrf.mxu0
  %v997 = vpop.f32.mrf.mxu0
  %v998 = vadd.f32 0.0, %v997
  %v999 = vpop.f32.mrf.mxu0
  %1000 = vmatprep.mubr.bf16.mxu0 %v539
  %1001 = vmatmul.mubr.bf16.gmra.mxu0 %v538
  %v1002 = vpop.f32.mrf.mxu0
  %v1003 = vadd.f32 0.0, %v1002
  %v1004 = vpop.f32.mrf.mxu0
  %v1005 = vpop.f32.mrf.mxu0
  %v1006 = vadd.f32 0.0, %v1005
  %v1007 = vpop.f32.mrf.mxu0
  %1008 = vmatprep.mubr.bf16.mxu0 %v542
  %1009 = vmatmul.mubr.bf16.gmra.mxu0 %v541
  %v1010 = vpop.f32.mrf.mxu0
  %v1011 = vadd.f32 0.0, %v1010
  %v1012 = vpop.f32.mrf.mxu0
  %v1013 = vpop.f32.mrf.mxu0
  %v1014 = vadd.f32 0.0, %v1013
  %v1015 = vpop.f32.mrf.mxu0
  %1016 = vmatprep.mubr.bf16.mxu0 %v545
  %1017 = vmatmul.mubr.bf16.gmra.mxu0 %v544
  %v1018 = vpop.f32.mrf.mxu0
  %v1019 = vadd.f32 0.0, %v1018
  %v1020 = vpop.f32.mrf.mxu0
  %v1021 = vpop.f32.mrf.mxu0
  %v1022 = vadd.f32 0.0, %v1021
  %v1023 = vpop.f32.mrf.mxu0
  %1024 = vmatprep.mubr.bf16.mxu0 %v548
  %1025 = vmatmul.mubr.bf16.gmra.mxu0 %v547
  %v1026 = vpop.f32.mrf.mxu0
  %v1027 = vadd.f32 0.0, %v1026
  %v1028 = vpop.f32.mrf.mxu0
  %v1029 = vpop.f32.mrf.mxu0
  %v1030 = vadd.f32 0.0, %v1029
  %v1031 = vpop.f32.mrf.mxu0
  %1032 = vmatprep.mubr.bf16.mxu0 %v551
  %1033 = vmatmul.mubr.bf16.gmra.mxu0 %v550
  %v1034 = vpop.f32.mrf.mxu0
  %v1035 = vadd.f32 0.0, %v1034
  %v1036 = vpop.f32.mrf.mxu0
  %v1037 = vpop.f32.mrf.mxu0
  %v1038 = vadd.f32 0.0, %v1037
  %v1039 = vpop.f32.mrf.mxu0
  %1040 = vmatprep.mubr.bf16.mxu0 %v554
  %1041 = vmatmul.mubr.bf16.gmra.mxu0 %v553
  %v1042 = vpop.f32.mrf.mxu0
  %v1043 = vadd.f32 0.0, %v1042
  %v1044 = vpop.f32.mrf.mxu0
  %v1045 = vpop.f32.mrf.mxu0
  %v1046 = vadd.f32 0.0, %v1045
  %v1047 = vpop.f32.mrf.mxu0
  %1048 = vmatprep.mubr.bf16.mxu0 %v557
  %1049 = vmatmul.mubr.bf16.gmra.mxu0 %v556
  %v1050 = vpop.f32.mrf.mxu0
  %v1051 = vadd.f32 0.0, %v1050
  %v1052 = vpop.f32.mrf.mxu0
  %v1053 = vpop.f32.mrf.mxu0
  %v1054 = vadd.f32 0.0, %v1053
  %v1055 = vpop.f32.mrf.mxu0
  %1056 = vmatprep.mubr.bf16.mxu0 %v560
  %1057 = vmatmul.mubr.bf16.gmra.mxu0 %v559
  %v1058 = vpop.f32.mrf.mxu0
  %v1059 = vadd.f32 0.0, %v1058
  %v1060 = vpop.f32.mrf.mxu0
  %v1061 = vpop.f32.mrf.mxu0
  %v1062 = vadd.f32 0.0, %v1061
  %v1063 = vpop.f32.mrf.mxu0
  %1064 = vmatprep.mubr.bf16.mxu0 %v563
  %1065 = vmatmul.mubr.bf16.gmra.mxu0 %v562
  %v1066 = vpop.f32.mrf.mxu0
  %v1067 = vadd.f32 0.0, %v1066
  %v1068 = vpop.f32.mrf.mxu0
  %v1069 = vpop.f32.mrf.mxu0
  %v1070 = vadd.f32 0.0, %v1069
  %v1071 = vpop.f32.mrf.mxu0
  %1072 = vmatprep.mubr.bf16.mxu0 %v566
  %1073 = vmatmul.mubr.bf16.gmra.mxu0 %v565
  %v1074 = vpop.f32.mrf.mxu0
  %v1075 = vadd.f32 0.0, %v1074
  %v1076 = vpop.f32.mrf.mxu0
  %v1077 = vpop.f32.mrf.mxu0
  %v1078 = vadd.f32 0.0, %v1077
  %v1079 = vpop.f32.mrf.mxu0
  %1080 = vmatprep.mubr.bf16.mxu0 %v569
  %1081 = vmatmul.mubr.bf16.gmra.mxu0 %v568
  %v1082 = vpop.f32.mrf.mxu0
  %v1083 = vadd.f32 0.0, %v1082
  %v1084 = vpop.f32.mrf.mxu0
  %v1085 = vpop.f32.mrf.mxu0
  %v1086 = vadd.f32 0.0, %v1085
  %v1087 = vpop.f32.mrf.mxu0
  %1088 = vmatprep.mubr.bf16.mxu0 %v572
  %1089 = vmatmul.mubr.bf16.gmra.mxu0 %v571
  %v1090 = vpop.f32.mrf.mxu0
  %v1091 = vadd.f32 0.0, %v1090
  %v1092 = vpop.f32.mrf.mxu0
  %v1093 = vpop.f32.mrf.mxu0
  %v1094 = vadd.f32 0.0, %v1093
  %v1095 = vpop.f32.mrf.mxu0
  %1096 = vmatprep.mubr.bf16.mxu0 %v575
  %1097 = vmatmul.mubr.bf16.gmra.mxu0 %v574
  %v1098 = vpop.f32.mrf.mxu0
  %v1099 = vadd.f32 0.0, %v1098
  %v1100 = vpop.f32.mrf.mxu0
  %v1101 = vpop.f32.mrf.mxu0
  %v1102 = vadd.f32 0.0, %v1101
  %v1103 = vpop.f32.mrf.mxu0
  %1104 = vmatprep.mubr.bf16.mxu0 %v578
  %1105 = vmatmul.mubr.bf16.gmra.mxu0 %v577
  %v1106 = vpop.f32.mrf.mxu0
  %v1107 = vadd.f32 0.0, %v1106
  %v1108 = vpop.f32.mrf.mxu0
  %v1109 = vpop.f32.mrf.mxu0
  %v1110 = vadd.f32 0.0, %v1109
  %v1111 = vpop.f32.mrf.mxu0
  %1112 = vmatprep.mubr.bf16.mxu0 %v581
  %1113 = vmatmul.mubr.bf16.gmra.mxu0 %v580
  %v1114 = vpop.f32.mrf.mxu0
  %v1115 = vadd.f32 0.0, %v1114
  %v1116 = vpop.f32.mrf.mxu0
  %v1117 = vpop.f32.mrf.mxu0
  %v1118 = vadd.f32 0.0, %v1117
  %v1119 = vpop.f32.mrf.mxu0
  %1120 = vmatprep.mubr.bf16.mxu0 %v584
  %1121 = vmatmul.mubr.bf16.gmra.mxu0 %v583
  %v1122 = vpop.f32.mrf.mxu0
  %v1123 = vadd.f32 0.0, %v1122
  %v1124 = vpop.f32.mrf.mxu0
  %v1125 = vpop.f32.mrf.mxu0
  %v1126 = vadd.f32 0.0, %v1125
  %v1127 = vpop.f32.mrf.mxu0
  %1128 = vmatprep.mubr.bf16.mxu0 %v587
  %1129 = vmatmul.mubr.bf16.gmra.mxu0 %v586
  %v1130 = vpop.f32.mrf.mxu0
  %v1131 = vadd.f32 0.0, %v1130
  %v1132 = vpop.f32.mrf.mxu0
  %v1133 = vpop.f32.mrf.mxu0
  %v1134 = vadd.f32 0.0, %v1133
  %v1135 = vpop.f32.mrf.mxu0
  %1136 = vmatprep.mubr.bf16.mxu0 %v590
  %1137 = vmatmul.mubr.bf16.gmra.mxu0 %v589
  %v1138 = vpop.f32.mrf.mxu0
  %v1139 = vadd.f32 0.0, %v1138
  %v1140 = vpop.f32.mrf.mxu0
  %v1141 = vpop.f32.mrf.mxu0
  %v1142 = vadd.f32 0.0, %v1141
  %v1143 = vpop.f32.mrf.mxu0
  %1144 = vmatprep.mubr.bf16.mxu0 %v593
  %1145 = vmatmul.mubr.bf16.gmra.mxu0 %v592
  %v1146 = vpop.f32.mrf.mxu0
  %v1147 = vadd.f32 0.0, %v1146
  %v1148 = vpop.f32.mrf.mxu0
  %v1149 = vpop.f32.mrf.mxu0
  %v1150 = vadd.f32 0.0, %v1149
  %v1151 = vpop.f32.mrf.mxu0
  %1152 = vdwg.mxu0
  %1153 = vmatprep.subr.bf16.mxu0 0
  %1154 = vmatpush1.bf16.msra.mxu0 0
  %1155 = vmatprep.subr.bf16.mxu0 0
  %1156 = vmatpush1.bf16.msra.mxu0 0
  %1157 = vmatprep.subr.bf16.mxu0 0
  %1158 = vmatpush1.bf16.msra.mxu0 0
  %1159 = vmatprep.subr.bf16.mxu0 0
  %1160 = vmatpush1.bf16.msra.mxu0 0
  %1161 = vmatprep.subr.bf16.mxu0 0
  %1162 = vmatpush1.bf16.msra.mxu0 0
  %1163 = vmatprep.subr.bf16.mxu0 0
  %1164 = vmatpush1.bf16.msra.mxu0 0
  %1165 = vmatprep.subr.bf16.mxu0 0
  %1166 = vmatpush1.bf16.msra.mxu0 %v748
  %1167 = vmatprep.subr.bf16.mxu0 0
  %1168 = vmatpush1.bf16.msra.mxu0 %v747
  %1169 = vmatprep.subr.bf16.mxu0 0
  %1170 = vmatpush2.bf16.msra.mxu0 0
  %1171 = vmatprep.subr.bf16.mxu0 0
  %1172 = vmatpush2.bf16.msra.mxu0 0
  %1173 = vmatprep.subr.bf16.mxu0 0
  %1174 = vmatpush2.bf16.msra.mxu0 0
  %1175 = vmatprep.subr.bf16.mxu0 0
  %1176 = vmatpush2.bf16.msra.mxu0 0
  %1177 = vmatprep.subr.bf16.mxu0 0
  %1178 = vmatpush2.bf16.msra.mxu0 0
  %1179 = vmatprep.subr.bf16.mxu0 0
  %1180 = vmatpush2.bf16.msra.mxu0 0
  %1181 = vmatprep.subr.bf16.mxu0 0
  %1182 = vmatpush2.bf16.msra.mxu0 0
  %1183 = vmatprep.subr.bf16.mxu0 0
  %1184 = vmatpush2.bf16.msra.mxu0 0
  %1185 = vmatprep.mubr.bf16.mxu0 0
  %1186 = vmatmul.mubr.bf16.gmra.mxu0 %v769
  %v1187 = vpop.f32.mrf.mxu0
  %v1188 = vadd.f32 %v899, %v1187
  %v1189 = vpop.f32.mrf.mxu0
  %v1190 = vpop.f32.mrf.mxu0
  %v1191 = vadd.f32 %v902, %v1190
  %v1192 = vpop.f32.mrf.mxu0
  %1193 = vmatprep.mubr.bf16.mxu0 0
  %1194 = vmatmul.mubr.bf16.gmra.mxu0 %v772
  %v1195 = vpop.f32.mrf.mxu0
  %v1196 = vadd.f32 %v907, %v1195
  %v1197 = vpop.f32.mrf.mxu0
  %v1198 = vpop.f32.mrf.mxu0
  %v1199 = vadd.f32 %v910, %v1198
  %v1200 = vpop.f32.mrf.mxu0
  %1201 = vmatprep.mubr.bf16.mxu0 0
  %1202 = vmatmul.mubr.bf16.gmra.mxu0 %v775
  %v1203 = vpop.f32.mrf.mxu0
  %v1204 = vadd.f32 %v915, %v1203
  %v1205 = vpop.f32.mrf.mxu0
  %v1206 = vpop.f32.mrf.mxu0
  %v1207 = vadd.f32 %v918, %v1206
  %v1208 = vpop.f32.mrf.mxu0
  %1209 = vmatprep.mubr.bf16.mxu0 0
  %1210 = vmatmul.mubr.bf16.gmra.mxu0 %v778
  %v1211 = vpop.f32.mrf.mxu0
  %v1212 = vadd.f32 %v923, %v1211
  %v1213 = vpop.f32.mrf.mxu0
  %v1214 = vpop.f32.mrf.mxu0
  %v1215 = vadd.f32 %v926, %v1214
  %v1216 = vpop.f32.mrf.mxu0
  %1217 = vmatprep.mubr.bf16.mxu0 0
  %1218 = vmatmul.mubr.bf16.gmra.mxu0 %v781
  %v1219 = vpop.f32.mrf.mxu0
  %v1220 = vadd.f32 %v931, %v1219
  %v1221 = vpop.f32.mrf.mxu0
  %v1222 = vpop.f32.mrf.mxu0
  %v1223 = vadd.f32 %v934, %v1222
  %v1224 = vpop.f32.mrf.mxu0
  %1225 = vmatprep.mubr.bf16.mxu0 0
  %1226 = vmatmul.mubr.bf16.gmra.mxu0 %v784
  %v1227 = vpop.f32.mrf.mxu0
  %v1228 = vadd.f32 %v939, %v1227
  %v1229 = vpop.f32.mrf.mxu0
  %v1230 = vpop.f32.mrf.mxu0
  %v1231 = vadd.f32 %v942, %v1230
  %v1232 = vpop.f32.mrf.mxu0
  %1233 = vmatprep.mubr.bf16.mxu0 0
  %1234 = vmatmul.mubr.bf16.gmra.mxu0 %v787
  %v1235 = vpop.f32.mrf.mxu0
  %v1236 = vadd.f32 %v947, %v1235
  %v1237 = vpop.f32.mrf.mxu0
  %v1238 = vpop.f32.mrf.mxu0
  %v1239 = vadd.f32 %v950, %v1238
  %v1240 = vpop.f32.mrf.mxu0
  %1241 = vmatprep.mubr.bf16.mxu0 0
  %1242 = vmatmul.mubr.bf16.gmra.mxu0 %v790
  %v1243 = vpop.f32.mrf.mxu0
  %v1244 = vadd.f32 %v955, %v1243
  %v1245 = vpop.f32.mrf.mxu0
  %v1246 = vpop.f32.mrf.mxu0
  %v1247 = vadd.f32 %v958, %v1246
  %v1248 = vpop.f32.mrf.mxu0
  %1249 = vmatprep.mubr.bf16.mxu0 0
  %1250 = vmatmul.mubr.bf16.gmra.mxu0 %v793
  %v1251 = vpop.f32.mrf.mxu0
  %v1252 = vadd.f32 %v963, %v1251
  %v1253 = vpop.f32.mrf.mxu0
  %v1254 = vpop.f32.mrf.mxu0
  %v1255 = vadd.f32 %v966, %v1254
  %v1256 = vpop.f32.mrf.mxu0
  %1257 = vmatprep.mubr.bf16.mxu0 0
  %1258 = vmatmul.mubr.bf16.gmra.mxu0 %v796
  %v1259 = vpop.f32.mrf.mxu0
  %v1260 = vadd.f32 %v971, %v1259
  %v1261 = vpop.f32.mrf.mxu0
  %v1262 = vpop.f32.mrf.mxu0
  %v1263 = vadd.f32 %v974, %v1262
  %v1264 = vpop.f32.mrf.mxu0
  %1265 = vmatprep.mubr.bf16.mxu0 0
  %1266 = vmatmul.mubr.bf16.gmra.mxu0 %v799
  %v1267 = vpop.f32.mrf.mxu0
  %v1268 = vadd.f32 %v979, %v1267
  %v1269 = vpop.f32.mrf.mxu0
  %v1270 = vpop.f32.mrf.mxu0
  %v1271 = vadd.f32 %v982, %v1270
  %v1272 = vpop.f32.mrf.mxu0
  %1273 = vmatprep.mubr.bf16.mxu0 0
  %1274 = vmatmul.mubr.bf16.gmra.mxu0 %v802
  %v1275 = vpop.f32.mrf.mxu0
  %v1276 = vadd.f32 %v987, %v1275
  %v1277 = vpop.f32.mrf.mxu0
  %v1278 = vpop.f32.mrf.mxu0
  %v1279 = vadd.f32 %v990, %v1278
  %v1280 = vpop.f32.mrf.mxu0
  %1281 = vmatprep.mubr.bf16.mxu0 0
  %1282 = vmatmul.mubr.bf16.gmra.mxu0 %v805
  %v1283 = vpop.f32.mrf.mxu0
  %v1284 = vadd.f32 %v995, %v1283
  %v1285 = vpop.f32.mrf.mxu0
  %v1286 = vpop.f32.mrf.mxu0
  %v1287 = vadd.f32 %v998, %v1286
  %v1288 = vpop.f32.mrf.mxu0
  %1289 = vmatprep.mubr.bf16.mxu0 0
  %1290 = vmatmul.mubr.bf16.gmra.mxu0 %v808
  %v1291 = vpop.f32.mrf.mxu0
  %v1292 = vadd.f32 %v1003, %v1291
  %v1293 = vpop.f32.mrf.mxu0
  %v1294 = vpop.f32.mrf.mxu0
  %v1295 = vadd.f32 %v1006, %v1294
  %v1296 = vpop.f32.mrf.mxu0
  %1297 = vmatprep.mubr.bf16.mxu0 0
  %1298 = vmatmul.mubr.bf16.gmra.mxu0 %v811
  %v1299 = vpop.f32.mrf.mxu0
  %v1300 = vadd.f32 %v1011, %v1299
  %v1301 = vpop.f32.mrf.mxu0
  %v1302 = vpop.f32.mrf.mxu0
  %v1303 = vadd.f32 %v1014, %v1302
  %v1304 = vpop.f32.mrf.mxu0
  %1305 = vmatprep.mubr.bf16.mxu0 0
  %1306 = vmatmul.mubr.bf16.gmra.mxu0 %v814
  %v1307 = vpop.f32.mrf.mxu0
  %v1308 = vadd.f32 %v1019, %v1307
  %v1309 = vpop.f32.mrf.mxu0
  %v1310 = vpop.f32.mrf.mxu0
  %v1311 = vadd.f32 %v1022, %v1310
  %v1312 = vpop.f32.mrf.mxu0
  %1313 = vmatprep.mubr.bf16.mxu0 0
  %1314 = vmatmul.mubr.bf16.gmra.mxu0 %v817
  %v1315 = vpop.f32.mrf.mxu0
  %v1316 = vadd.f32 %v1027, %v1315
  %v1317 = vpop.f32.mrf.mxu0
  %v1318 = vpop.f32.mrf.mxu0
  %v1319 = vadd.f32 %v1030, %v1318
  %v1320 = vpop.f32.mrf.mxu0
  %1321 = vmatprep.mubr.bf16.mxu0 0
  %1322 = vmatmul.mubr.bf16.gmra.mxu0 %v820
  %v1323 = vpop.f32.mrf.mxu0
  %v1324 = vadd.f32 %v1035, %v1323
  %v1325 = vpop.f32.mrf.mxu0
  %v1326 = vpop.f32.mrf.mxu0
  %v1327 = vadd.f32 %v1038, %v1326
  %v1328 = vpop.f32.mrf.mxu0
  %1329 = vmatprep.mubr.bf16.mxu0 0
  %1330 = vmatmul.mubr.bf16.gmra.mxu0 %v823
  %v1331 = vpop.f32.mrf.mxu0
  %v1332 = vadd.f32 %v1043, %v1331
  %v1333 = vpop.f32.mrf.mxu0
  %v1334 = vpop.f32.mrf.mxu0
  %v1335 = vadd.f32 %v1046, %v1334
  %v1336 = vpop.f32.mrf.mxu0
  %1337 = vmatprep.mubr.bf16.mxu0 0
  %1338 = vmatmul.mubr.bf16.gmra.mxu0 %v826
  %v1339 = vpop.f32.mrf.mxu0
  %v1340 = vadd.f32 %v1051, %v1339
  %v1341 = vpop.f32.mrf.mxu0
  %v1342 = vpop.f32.mrf.mxu0
  %v1343 = vadd.f32 %v1054, %v1342
  %v1344 = vpop.f32.mrf.mxu0
  %1345 = vmatprep.mubr.bf16.mxu0 0
  %1346 = vmatmul.mubr.bf16.gmra.mxu0 %v829
  %v1347 = vpop.f32.mrf.mxu0
  %v1348 = vadd.f32 %v1059, %v1347
  %v1349 = vpop.f32.mrf.mxu0
  %v1350 = vpop.f32.mrf.mxu0
  %v1351 = vadd.f32 %v1062, %v1350
  %v1352 = vpop.f32.mrf.mxu0
  %1353 = vmatprep.mubr.bf16.mxu0 0
  %1354 = vmatmul.mubr.bf16.gmra.mxu0 %v832
  %v1355 = vpop.f32.mrf.mxu0
  %v1356 = vadd.f32 %v1067, %v1355
  %v1357 = vpop.f32.mrf.mxu0
  %v1358 = vpop.f32.mrf.mxu0
  %v1359 = vadd.f32 %v1070, %v1358
  %v1360 = vpop.f32.mrf.mxu0
  %1361 = vmatprep.mubr.bf16.mxu0 0
  %1362 = vmatmul.mubr.bf16.gmra.mxu0 %v835
  %v1363 = vpop.f32.mrf.mxu0
  %v1364 = vadd.f32 %v1075, %v1363
  %v1365 = vpop.f32.mrf.mxu0
  %v1366 = vpop.f32.mrf.mxu0
  %v1367 = vadd.f32 %v1078, %v1366
  %v1368 = vpop.f32.mrf.mxu0
  %1369 = vmatprep.mubr.bf16.mxu0 0
  %1370 = vmatmul.mubr.bf16.gmra.mxu0 %v838
  %v1371 = vpop.f32.mrf.mxu0
  %v1372 = vadd.f32 %v1083, %v1371
  %v1373 = vpop.f32.mrf.mxu0
  %v1374 = vpop.f32.mrf.mxu0
  %v1375 = vadd.f32 %v1086, %v1374
  %v1376 = vpop.f32.mrf.mxu0
  %1377 = vmatprep.mubr.bf16.mxu0 0
  %1378 = vmatmul.mubr.bf16.gmra.mxu0 %v841
  %v1379 = vpop.f32.mrf.mxu0
  %v1380 = vadd.f32 %v1091, %v1379
  %v1381 = vpop.f32.mrf.mxu0
  %v1382 = vpop.f32.mrf.mxu0
  %v1383 = vadd.f32 %v1094, %v1382
  %v1384 = vpop.f32.mrf.mxu0
  %1385 = vmatprep.mubr.bf16.mxu0 0
  %1386 = vmatmul.mubr.bf16.gmra.mxu0 %v844
  %v1387 = vpop.f32.mrf.mxu0
  %v1388 = vadd.f32 %v1099, %v1387
  %v1389 = vpop.f32.mrf.mxu0
  %v1390 = vpop.f32.mrf.mxu0
  %v1391 = vadd.f32 %v1102, %v1390
  %v1392 = vpop.f32.mrf.mxu0
  %1393 = vmatprep.mubr.bf16.mxu0 0
  %1394 = vmatmul.mubr.bf16.gmra.mxu0 %v847
  %v1395 = vpop.f32.mrf.mxu0
  %v1396 = vadd.f32 %v1107, %v1395
  %v1397 = vpop.f32.mrf.mxu0
  %v1398 = vpop.f32.mrf.mxu0
  %v1399 = vadd.f32 %v1110, %v1398
  %v1400 = vpop.f32.mrf.mxu0
  %1401 = vmatprep.mubr.bf16.mxu0 0
  %1402 = vmatmul.mubr.bf16.gmra.mxu0 %v850
  %v1403 = vpop.f32.mrf.mxu0
  %v1404 = vadd.f32 %v1115, %v1403
  %v1405 = vpop.f32.mrf.mxu0
  %v1406 = vpop.f32.mrf.mxu0
  %v1407 = vadd.f32 %v1118, %v1406
  %v1408 = vpop.f32.mrf.mxu0
  %1409 = vmatprep.mubr.bf16.mxu0 0
  %1410 = vmatmul.mubr.bf16.gmra.mxu0 %v853
  %v1411 = vpop.f32.mrf.mxu0
  %v1412 = vadd.f32 %v1123, %v1411
  %v1413 = vpop.f32.mrf.mxu0
  %v1414 = vpop.f32.mrf.mxu0
  %v1415 = vadd.f32 %v1126, %v1414
  %v1416 = vpop.f32.mrf.mxu0
  %1417 = vmatprep.mubr.bf16.mxu0 0
  %1418 = vmatmul.mubr.bf16.gmra.mxu0 %v856
  %v1419 = vpop.f32.mrf.mxu0
  %v1420 = vadd.f32 %v1131, %v1419
  %v1421 = vpop.f32.mrf.mxu0
  %v1422 = vpop.f32.mrf.mxu0
  %v1423 = vadd.f32 %v1134, %v1422
  %v1424 = vpop.f32.mrf.mxu0
  %1425 = vmatprep.mubr.bf16.mxu0 0
  %1426 = vmatmul.mubr.bf16.gmra.mxu0 %v859
  %v1427 = vpop.f32.mrf.mxu0
  %v1428 = vadd.f32 %v1139, %v1427
  %v1429 = vpop.f32.mrf.mxu0
  %v1430 = vpop.f32.mrf.mxu0
  %v1431 = vadd.f32 %v1142, %v1430
  %v1432 = vpop.f32.mrf.mxu0
  %1433 = vmatprep.mubr.bf16.mxu0 0
  %1434 = vmatmul.mubr.bf16.gmra.mxu0 %v862
  %v1435 = vpop.f32.mrf.mxu0
  %v1436 = vadd.f32 %v1147, %v1435
  %v1437 = vpop.f32.mrf.mxu0
  %v1438 = vpop.f32.mrf.mxu0
  %v1439 = vadd.f32 %v1150, %v1438
  %v1440 = vpop.f32.mrf.mxu0
  %1441 = vdwg.mxu0
  %v1442 = vpack.c.bf16 %v1191, %v1188
  %v1443 = vpack.c.bf16 %v1199, %v1196
  %v1444 = vpack.c.bf16 %v1207, %v1204
  %v1445 = vpack.c.bf16 %v1215, %v1212
  %v1446 = vpack.c.bf16 %v1223, %v1220
  %v1447 = vpack.c.bf16 %v1231, %v1228
  %v1448 = vpack.c.bf16 %v1239, %v1236
  %v1449 = vpack.c.bf16 %v1247, %v1244
  %v1450 = vpack.c.bf16 %v1255, %v1252
  %v1451 = vpack.c.bf16 %v1263, %v1260
  %v1452 = vpack.c.bf16 %v1271, %v1268
  %v1453 = vpack.c.bf16 %v1279, %v1276
  %v1454 = vpack.c.bf16 %v1287, %v1284
  %v1455 = vpack.c.bf16 %v1295, %v1292
  %v1456 = vpack.c.bf16 %v1303, %v1300
  %v1457 = vpack.c.bf16 %v1311, %v1308
  %v1458 = vpack.c.bf16 %v1319, %v1316
  %v1459 = vpack.c.bf16 %v1327, %v1324
  %v1460 = vpack.c.bf16 %v1335, %v1332
  %v1461 = vpack.c.bf16 %v1343, %v1340
  %v1462 = vpack.c.bf16 %v1351, %v1348
  %v1463 = vpack.c.bf16 %v1359, %v1356
  %v1464 = vpack.c.bf16 %v1367, %v1364
  %v1465 = vpack.c.bf16 %v1375, %v1372
  %v1466 = vpack.c.bf16 %v1383, %v1380
  %v1467 = vpack.c.bf16 %v1391, %v1388
  %v1468 = vpack.c.bf16 %v1399, %v1396
  %v1469 = vpack.c.bf16 %v1407, %v1404
  %v1470 = vpack.c.bf16 %v1415, %v1412
  %v1471 = vpack.c.bf16 %v1423, %v1420
  %v1472 = vpack.c.bf16 %v1431, %v1428
  %v1473 = vpack.c.bf16 %v1439, %v1436
  %v1506 = vunpack.c.l.b16 %v1442
  %v1507 = vunpack.c.h.b16 %v1442
  %v1508 = vunpack.c.l.b16 %v1443
  %v1509 = vunpack.c.h.b16 %v1443
  %v1510 = vunpack.c.l.b16 %v1444
  %v1511 = vunpack.c.h.b16 %v1444
  %v1512 = vunpack.c.l.b16 %v1445
  %v1513 = vunpack.c.h.b16 %v1445
  %v1514 = vunpack.c.l.b16 %v1446
  %v1515 = vunpack.c.h.b16 %v1446
  %v1516 = vunpack.c.l.b16 %v1447
  %v1517 = vunpack.c.h.b16 %v1447
  %v1518 = vunpack.c.l.b16 %v1448
  %v1519 = vunpack.c.h.b16 %v1448
  %v1520 = vunpack.c.l.b16 %v1449
  %v1521 = vunpack.c.h.b16 %v1449
  %v1522 = vunpack.c.l.b16 %v1450
  %v1523 = vunpack.c.h.b16 %v1450
  %v1524 = vunpack.c.l.b16 %v1451
  %v1525 = vunpack.c.h.b16 %v1451
  %v1526 = vunpack.c.l.b16 %v1452
  %v1527 = vunpack.c.h.b16 %v1452
  %v1528 = vunpack.c.l.b16 %v1453
  %v1529 = vunpack.c.h.b16 %v1453
  %v1530 = vunpack.c.l.b16 %v1454
  %v1531 = vunpack.c.h.b16 %v1454
  %v1532 = vunpack.c.l.b16 %v1455
  %v1533 = vunpack.c.h.b16 %v1455
  %v1534 = vunpack.c.l.b16 %v1456
  %v1535 = vunpack.c.h.b16 %v1456
  %v1536 = vunpack.c.l.b16 %v1457
  %v1537 = vunpack.c.h.b16 %v1457
  %v1538 = vunpack.c.l.b16 %v1458
  %v1539 = vunpack.c.h.b16 %v1458
  %v1540 = vunpack.c.l.b16 %v1459
  %v1541 = vunpack.c.h.b16 %v1459
  %v1542 = vunpack.c.l.b16 %v1460
  %v1543 = vunpack.c.h.b16 %v1460
  %v1544 = vunpack.c.l.b16 %v1461
  %v1545 = vunpack.c.h.b16 %v1461
  %v1546 = vunpack.c.l.b16 %v1462
  %v1547 = vunpack.c.h.b16 %v1462
  %v1548 = vunpack.c.l.b16 %v1463
  %v1549 = vunpack.c.h.b16 %v1463
  %v1550 = vunpack.c.l.b16 %v1464
  %v1551 = vunpack.c.h.b16 %v1464
  %v1552 = vunpack.c.l.b16 %v1465
  %v1553 = vunpack.c.h.b16 %v1465
  %v1554 = vunpack.c.l.b16 %v1466
  %v1555 = vunpack.c.h.b16 %v1466
  %v1556 = vunpack.c.l.b16 %v1467
  %v1557 = vunpack.c.h.b16 %v1467
  %v1558 = vunpack.c.l.b16 %v1468
  %v1559 = vunpack.c.h.b16 %v1468
  %v1560 = vunpack.c.l.b16 %v1469
  %v1561 = vunpack.c.h.b16 %v1469
  %v1562 = vunpack.c.l.b16 %v1470
  %v1563 = vunpack.c.h.b16 %v1470
  %v1564 = vunpack.c.l.b16 %v1471
  %v1565 = vunpack.c.h.b16 %v1471
  %v1566 = vunpack.c.l.b16 %v1472
  %v1567 = vunpack.c.h.b16 %v1472
  %v1568 = vunpack.c.l.b16 %v1473
  %v1569 = vunpack.c.h.b16 %v1473
  %v1570 = vpack.c.b16 %v1506, %v1506
  %v1571 = vpack.c.b16 %v1507, %v1507
  %v1572 = vpack.c.b16 %v1508, %v1508
  %v1573 = vpack.c.b16 %v1509, %v1509
  %v1574 = vpack.c.b16 %v1510, %v1510
  %v1575 = vpack.c.b16 %v1511, %v1511
  %v1576 = vpack.c.b16 %v1512, %v1512
  %v1577 = vpack.c.b16 %v1513, %v1513
  %v1578 = vpack.c.b16 %v1514, %v1514
  %v1579 = vpack.c.b16 %v1515, %v1515
  %v1580 = vpack.c.b16 %v1516, %v1516
  %v1581 = vpack.c.b16 %v1517, %v1517
  %v1582 = vpack.c.b16 %v1518, %v1518
  %v1583 = vpack.c.b16 %v1519, %v1519
  %v1584 = vpack.c.b16 %v1520, %v1520
  %v1585 = vpack.c.b16 %v1521, %v1521
  %v1586 = vpack.c.b16 %v1522, %v1522
  %v1587 = vpack.c.b16 %v1523, %v1523
  %v1588 = vpack.c.b16 %v1524, %v1524
  %v1589 = vpack.c.b16 %v1525, %v1525
  %v1590 = vpack.c.b16 %v1526, %v1526
  %v1591 = vpack.c.b16 %v1527, %v1527
  %v1592 = vpack.c.b16 %v1528, %v1528
  %v1593 = vpack.c.b16 %v1529, %v1529
  %v1594 = vpack.c.b16 %v1530, %v1530
  %v1595 = vpack.c.b16 %v1531, %v1531
  %v1596 = vpack.c.b16 %v1532, %v1532
  %v1597 = vpack.c.b16 %v1533, %v1533
  %v1598 = vpack.c.b16 %v1534, %v1534
  %v1599 = vpack.c.b16 %v1535, %v1535
  %v1600 = vpack.c.b16 %v1536, %v1536
  %v1601 = vpack.c.b16 %v1537, %v1537
  %v1602 = vpack.c.b16 %v1538, %v1538
  %v1603 = vpack.c.b16 %v1539, %v1539
  %v1604 = vpack.c.b16 %v1540, %v1540
  %v1605 = vpack.c.b16 %v1541, %v1541
  %v1606 = vpack.c.b16 %v1542, %v1542
  %v1607 = vpack.c.b16 %v1543, %v1543
  %v1608 = vpack.c.b16 %v1544, %v1544
  %v1609 = vpack.c.b16 %v1545, %v1545
  %v1610 = vpack.c.b16 %v1546, %v1546
  %v1611 = vpack.c.b16 %v1547, %v1547
  %v1612 = vpack.c.b16 %v1548, %v1548
  %v1613 = vpack.c.b16 %v1549, %v1549
  %v1614 = vpack.c.b16 %v1550, %v1550
  %v1615 = vpack.c.b16 %v1551, %v1551
  %v1616 = vpack.c.b16 %v1552, %v1552
  %v1617 = vpack.c.b16 %v1553, %v1553
  %v1618 = vpack.c.b16 %v1554, %v1554
  %v1619 = vpack.c.b16 %v1555, %v1555
  %v1620 = vpack.c.b16 %v1556, %v1556
  %v1621 = vpack.c.b16 %v1557, %v1557
  %v1622 = vpack.c.b16 %v1558, %v1558
  %v1623 = vpack.c.b16 %v1559, %v1559
  %v1624 = vpack.c.b16 %v1560, %v1560
  %v1625 = vpack.c.b16 %v1561, %v1561
  %v1626 = vpack.c.b16 %v1562, %v1562
  %v1627 = vpack.c.b16 %v1563, %v1563
  %v1628 = vpack.c.b16 %v1564, %v1564
  %v1629 = vpack.c.b16 %v1565, %v1565
  %v1630 = vpack.c.b16 %v1566, %v1566
  %v1631 = vpack.c.b16 %v1567, %v1567
  %v1632 = vpack.c.b16 %v1568, %v1568
  %v1633 = vpack.c.b16 %v1569, %v1569
  %1698 = vst [vmem:[%s2] sm:$0xf] %v1570
  %1699 = vst [vmem:[%s2 + $0x4] sm:$0xf] %v1571
  %1700 = vst [vmem:[%s2 + $0x8] sm:$0xf] %v1572
  %1701 = vst [vmem:[%s2 + $0xc] sm:$0xf] %v1573
  %1702 = vst [vmem:[%s2 + $0x10] sm:$0xf] %v1574
  %1703 = vst [vmem:[%s2 + $0x14] sm:$0xf] %v1575
  %1704 = vst [vmem:[%s2 + $0x18] sm:$0xf] %v1576
  %1705 = vst [vmem:[%s2 + $0x1c] sm:$0xf] %v1577
  %1706 = vst [vmem:[%s2 + $0x20] sm:$0xf] %v1578
  %1707 = vst [vmem:[%s2 + $0x24] sm:$0xf] %v1579
  %1708 = vst [vmem:[%s2 + $0x28] sm:$0xf] %v1580
  %1709 = vst [vmem:[%s2 + $0x2c] sm:$0xf] %v1581
  %1710 = vst [vmem:[%s2 + $0x30] sm:$0xf] %v1582
  %1711 = vst [vmem:[%s2 + $0x34] sm:$0xf] %v1583
  %1712 = vst [vmem:[%s2 + $0x38] sm:$0xf] %v1584
  %1713 = vst [vmem:[%s2 + $0x3c] sm:$0xf] %v1585
  %1714 = vst [vmem:[%s2 + $0x40] sm:$0xf] %v1586
  %1715 = vst [vmem:[%s2 + $0x44] sm:$0xf] %v1587
  %1716 = vst [vmem:[%s2 + $0x48] sm:$0xf] %v1588
  %1717 = vst [vmem:[%s2 + $0x4c] sm:$0xf] %v1589
  %1718 = vst [vmem:[%s2 + $0x50] sm:$0xf] %v1590
  %1719 = vst [vmem:[%s2 + $0x54] sm:$0xf] %v1591
  %1720 = vst [vmem:[%s2 + $0x58] sm:$0xf] %v1592
  %1721 = vst [vmem:[%s2 + $0x5c] sm:$0xf] %v1593
  %1722 = vst [vmem:[%s2 + $0x60] sm:$0xf] %v1594
  %1723 = vst [vmem:[%s2 + $0x64] sm:$0xf] %v1595
  %1724 = vst [vmem:[%s2 + $0x68] sm:$0xf] %v1596
  %1725 = vst [vmem:[%s2 + $0x6c] sm:$0xf] %v1597
  %1726 = vst [vmem:[%s2 + $0x70] sm:$0xf] %v1598
  %1727 = vst [vmem:[%s2 + $0x74] sm:$0xf] %v1599
  %1728 = vst [vmem:[%s2 + $0x78] sm:$0xf] %v1600
  %1729 = vst [vmem:[%s2 + $0x7c] sm:$0xf] %v1601
  %1730 = vst [vmem:[%s2 + $0x80] sm:$0xf] %v1602
  %1731 = vst [vmem:[%s2 + $0x84] sm:$0xf] %v1603
  %1732 = vst [vmem:[%s2 + $0x88] sm:$0xf] %v1604
  %1733 = vst [vmem:[%s2 + $0x8c] sm:$0xf] %v1605
  %1734 = vst [vmem:[%s2 + $0x90] sm:$0xf] %v1606
  %1735 = vst [vmem:[%s2 + $0x94] sm:$0xf] %v1607
  %1736 = vst [vmem:[%s2 + $0x98] sm:$0xf] %v1608
  %1737 = vst [vmem:[%s2 + $0x9c] sm:$0xf] %v1609
  %1738 = vst [vmem:[%s2 + $0xa0] sm:$0xf] %v1610
  %1739 = vst [vmem:[%s2 + $0xa4] sm:$0xf] %v1611
  %1740 = vst [vmem:[%s2 + $0xa8] sm:$0xf] %v1612
  %1741 = vst [vmem:[%s2 + $0xac] sm:$0xf] %v1613
  %1742 = vst [vmem:[%s2 + $0xb0] sm:$0xf] %v1614
  %1743 = vst [vmem:[%s2 + $0xb4] sm:$0xf] %v1615
  %1744 = vst [vmem:[%s2 + $0xb8] sm:$0xf] %v1616
  %1745 = vst [vmem:[%s2 + $0xbc] sm:$0xf] %v1617
  %1746 = vst [vmem:[%s2 + $0xc0] sm:$0xf] %v1618
  %1747 = vst [vmem:[%s2 + $0xc4] sm:$0xf] %v1619
  %1748 = vst [vmem:[%s2 + $0xc8] sm:$0xf] %v1620
  %1749 = vst [vmem:[%s2 + $0xcc] sm:$0xf] %v1621
  %1750 = vst [vmem:[%s2 + $0xd0] sm:$0xf] %v1622
  %1751 = vst [vmem:[%s2 + $0xd4] sm:$0xf] %v1623
  %1752 = vst [vmem:[%s2 + $0xd8] sm:$0xf] %v1624
  %1753 = vst [vmem:[%s2 + $0xdc] sm:$0xf] %v1625
  %1754 = vst [vmem:[%s2 + $0xe0] sm:$0xf] %v1626
  %1755 = vst [vmem:[%s2 + $0xe4] sm:$0xf] %v1627
  %1756 = vst [vmem:[%s2 + $0xe8] sm:$0xf] %v1628
  %1757 = vst [vmem:[%s2 + $0xec] sm:$0xf] %v1629
  %1758 = vst [vmem:[%s2 + $0xf0] sm:$0xf] %v1630
  %1759 = vst [vmem:[%s2 + $0xf4] sm:$0xf] %v1631
  %1760 = vst [vmem:[%s2 + $0xf8] sm:$0xf] %v1632
  %1761 = vst [vmem:[%s2 + $0xfc] sm:$0xf] %v1633
  %v1762 = vadd.f32 %v1188, %v1191
  %v1763 = vadd.f32 %v1762, %v1196
  %v1764 = vadd.f32 %v1763, %v1199
  %v1765 = vadd.f32 %v1764, %v1204
  %v1766 = vadd.f32 %v1765, %v1207
  %v1767 = vadd.f32 %v1766, %v1212
  %v1768 = vadd.f32 %v1767, %v1215
  %v1769 = vadd.f32 %v1768, %v1220
  %v1770 = vadd.f32 %v1769, %v1223
  %v1771 = vadd.f32 %v1770, %v1228
  %v1772 = vadd.f32 %v1771, %v1231
  %v1773 = vadd.f32 %v1772, %v1236
  %v1774 = vadd.f32 %v1773, %v1239
  %v1775 = vadd.f32 %v1774, %v1244
  %v1776 = vadd.f32 %v1775, %v1247
  %v1777 = vadd.f32 %v1776, %v1252
  %v1778 = vadd.f32 %v1777, %v1255
  %v1779 = vadd.f32 %v1778, %v1260
  %v1780 = vadd.f32 %v1779, %v1263
  %v1781 = vadd.f32 %v1780, %v1268
  %v1782 = vadd.f32 %v1781, %v1271
  %v1783 = vadd.f32 %v1782, %v1276
  %v1784 = vadd.f32 %v1783, %v1279
  %v1785 = vadd.f32 %v1784, %v1284
  %v1786 = vadd.f32 %v1785, %v1287
  %v1787 = vadd.f32 %v1786, %v1292
  %v1788 = vadd.f32 %v1787, %v1295
  %v1789 = vadd.f32 %v1788, %v1300
  %v1790 = vadd.f32 %v1789, %v1303
  %v1791 = vadd.f32 %v1790, %v1308
  %v1792 = vadd.f32 %v1791, %v1311
  %v1793 = vadd.f32 %v1792, %v1316
  %v1794 = vadd.f32 %v1793, %v1319
  %v1795 = vadd.f32 %v1794, %v1324
  %v1796 = vadd.f32 %v1795, %v1327
  %v1797 = vadd.f32 %v1796, %v1332
  %v1798 = vadd.f32 %v1797, %v1335
  %v1799 = vadd.f32 %v1798, %v1340
  %v1800 = vadd.f32 %v1799, %v1343
  %v1801 = vadd.f32 %v1800, %v1348
  %v1802 = vadd.f32 %v1801, %v1351
  %v1803 = vadd.f32 %v1802, %v1356
  %v1804 = vadd.f32 %v1803, %v1359
  %v1805 = vadd.f32 %v1804, %v1364
  %v1806 = vadd.f32 %v1805, %v1367
  %v1807 = vadd.f32 %v1806, %v1372
  %v1808 = vadd.f32 %v1807, %v1375
  %v1809 = vadd.f32 %v1808, %v1380
  %v1810 = vadd.f32 %v1809, %v1383
  %v1811 = vadd.f32 %v1810, %v1388
  %v1812 = vadd.f32 %v1811, %v1391
  %v1813 = vadd.f32 %v1812, %v1396
  %v1814 = vadd.f32 %v1813, %v1399
  %v1815 = vadd.f32 %v1814, %v1404
  %v1816 = vadd.f32 %v1815, %v1407
  %v1817 = vadd.f32 %v1816, %v1412
  %v1818 = vadd.f32 %v1817, %v1415
  %v1819 = vadd.f32 %v1818, %v1420
  %v1820 = vadd.f32 %v1819, %v1423
  %v1821 = vadd.f32 %v1820, %v1428
  %v1822 = vadd.f32 %v1821, %v1431
  %v1823 = vadd.f32 %v1822, %v1436
  %v1824 = vadd.f32 %v1823, %v1439
  %v1825 = vrot.slane %v1824, 4
  %v1826 = vadd.f32 %v1824, %v1825
  %v1827 = vrot.slane %v1826, 2
  %v1828 = vadd.f32 %v1826, %v1827
  %v1829 = vrot.slane %v1828, 1
  %v1830 = vadd.f32 %v1828, %v1829
  %v1831 = vmul.f32 %v1188, %v1188
  %v1832 = vmul.f32 %v1191, %v1191
  %v1833 = vmul.f32 %v1196, %v1196
  %v1834 = vmul.f32 %v1199, %v1199
  %v1835 = vmul.f32 %v1204, %v1204
  %v1836 = vmul.f32 %v1207, %v1207
  %v1837 = vmul.f32 %v1212, %v1212
  %v1838 = vmul.f32 %v1215, %v1215
  %v1839 = vmul.f32 %v1220, %v1220
  %v1840 = vmul.f32 %v1223, %v1223
  %v1841 = vmul.f32 %v1228, %v1228
  %v1842 = vmul.f32 %v1231, %v1231
  %v1843 = vmul.f32 %v1236, %v1236
  %v1844 = vmul.f32 %v1239, %v1239
  %v1845 = vmul.f32 %v1244, %v1244
  %v1846 = vmul.f32 %v1247, %v1247
  %v1847 = vmul.f32 %v1252, %v1252
  %v1848 = vmul.f32 %v1255, %v1255
  %v1849 = vmul.f32 %v1260, %v1260
  %v1850 = vmul.f32 %v1263, %v1263
  %v1851 = vmul.f32 %v1268, %v1268
  %v1852 = vmul.f32 %v1271, %v1271
  %v1853 = vmul.f32 %v1276, %v1276
  %v1854 = vmul.f32 %v1279, %v1279
  %v1855 = vmul.f32 %v1284, %v1284
  %v1856 = vmul.f32 %v1287, %v1287
  %v1857 = vmul.f32 %v1292, %v1292
  %v1858 = vmul.f32 %v1295, %v1295
  %v1859 = vmul.f32 %v1300, %v1300
  %v1860 = vmul.f32 %v1303, %v1303
  %v1861 = vmul.f32 %v1308, %v1308
  %v1862 = vmul.f32 %v1311, %v1311
  %v1863 = vmul.f32 %v1316, %v1316
  %v1864 = vmul.f32 %v1319, %v1319
  %v1865 = vmul.f32 %v1324, %v1324
  %v1866 = vmul.f32 %v1327, %v1327
  %v1867 = vmul.f32 %v1332, %v1332
  %v1868 = vmul.f32 %v1335, %v1335
  %v1869 = vmul.f32 %v1340, %v1340
  %v1870 = vmul.f32 %v1343, %v1343
  %v1871 = vmul.f32 %v1348, %v1348
  %v1872 = vmul.f32 %v1351, %v1351
  %v1873 = vmul.f32 %v1356, %v1356
  %v1874 = vmul.f32 %v1359, %v1359
  %v1875 = vmul.f32 %v1364, %v1364
  %v1876 = vmul.f32 %v1367, %v1367
  %v1877 = vmul.f32 %v1372, %v1372
  %v1878 = vmul.f32 %v1375, %v1375
  %v1879 = vmul.f32 %v1380, %v1380
  %v1880 = vmul.f32 %v1383, %v1383
  %v1881 = vmul.f32 %v1388, %v1388
  %v1882 = vmul.f32 %v1391, %v1391
  %v1883 = vmul.f32 %v1396, %v1396
  %v1884 = vmul.f32 %v1399, %v1399
  %v1885 = vmul.f32 %v1404, %v1404
  %v1886 = vmul.f32 %v1407, %v1407
  %v1887 = vmul.f32 %v1412, %v1412
  %v1888 = vmul.f32 %v1415, %v1415
  %v1889 = vmul.f32 %v1420, %v1420
  %v1890 = vmul.f32 %v1423, %v1423
  %v1891 = vmul.f32 %v1428, %v1428
  %v1892 = vmul.f32 %v1431, %v1431
  %v1893 = vmul.f32 %v1436, %v1436
  %v1894 = vmul.f32 %v1439, %v1439
  %v1895 = vadd.f32 %v1831, %v1832
  %v1896 = vadd.f32 %v1895, %v1833
  %v1897 = vadd.f32 %v1896, %v1834
  %v1898 = vadd.f32 %v1897, %v1835
  %v1899 = vadd.f32 %v1898, %v1836
  %v1900 = vadd.f32 %v1899, %v1837
  %v1901 = vadd.f32 %v1900, %v1838
  %v1902 = vadd.f32 %v1901, %v1839
  %v1903 = vadd.f32 %v1902, %v1840
  %v1904 = vadd.f32 %v1903, %v1841
  %v1905 = vadd.f32 %v1904, %v1842
  %v1906 = vadd.f32 %v1905, %v1843
  %v1907 = vadd.f32 %v1906, %v1844
  %v1908 = vadd.f32 %v1907, %v1845
  %v1909 = vadd.f32 %v1908, %v1846
  %v1910 = vadd.f32 %v1909, %v1847
  %v1911 = vadd.f32 %v1910, %v1848
  %v1912 = vadd.f32 %v1911, %v1849
  %v1913 = vadd.f32 %v1912, %v1850
  %v1914 = vadd.f32 %v1913, %v1851
  %v1915 = vadd.f32 %v1914, %v1852
  %v1916 = vadd.f32 %v1915, %v1853
  %v1917 = vadd.f32 %v1916, %v1854
  %v1918 = vadd.f32 %v1917, %v1855
  %v1919 = vadd.f32 %v1918, %v1856
  %v1920 = vadd.f32 %v1919, %v1857
  %v1921 = vadd.f32 %v1920, %v1858
  %v1922 = vadd.f32 %v1921, %v1859
  %v1923 = vadd.f32 %v1922, %v1860
  %v1924 = vadd.f32 %v1923, %v1861
  %v1925 = vadd.f32 %v1924, %v1862
  %v1926 = vadd.f32 %v1925, %v1863
  %v1927 = vadd.f32 %v1926, %v1864
  %v1928 = vadd.f32 %v1927, %v1865
  %v1929 = vadd.f32 %v1928, %v1866
  %v1930 = vadd.f32 %v1929, %v1867
  %v1931 = vadd.f32 %v1930, %v1868
  %v1932 = vadd.f32 %v1931, %v1869
  %v1933 = vadd.f32 %v1932, %v1870
  %v1934 = vadd.f32 %v1933, %v1871
  %v1935 = vadd.f32 %v1934, %v1872
  %v1936 = vadd.f32 %v1935, %v1873
  %v1937 = vadd.f32 %v1936, %v1874
  %v1938 = vadd.f32 %v1937, %v1875
  %v1939 = vadd.f32 %v1938, %v1876
  %v1940 = vadd.f32 %v1939, %v1877
  %v1941 = vadd.f32 %v1940, %v1878
  %v1942 = vadd.f32 %v1941, %v1879
  %v1943 = vadd.f32 %v1942, %v1880
  %v1944 = vadd.f32 %v1943, %v1881
  %v1945 = vadd.f32 %v1944, %v1882
  %v1946 = vadd.f32 %v1945, %v1883
  %v1947 = vadd.f32 %v1946, %v1884
  %v1948 = vadd.f32 %v1947, %v1885
  %v1949 = vadd.f32 %v1948, %v1886
  %v1950 = vadd.f32 %v1949, %v1887
  %v1951 = vadd.f32 %v1950, %v1888
  %v1952 = vadd.f32 %v1951, %v1889
  %v1953 = vadd.f32 %v1952, %v1890
  %v1954 = vadd.f32 %v1953, %v1891
  %v1955 = vadd.f32 %v1954, %v1892
  %v1956 = vadd.f32 %v1955, %v1893
  %v1957 = vadd.f32 %v1956, %v1894
  %v1958 = vrot.slane %v1957, 4
  %v1959 = vadd.f32 %v1957, %v1958
  %v1960 = vrot.slane %v1959, 2
  %v1961 = vadd.f32 %v1959, %v1960
  %v1962 = vrot.slane %v1961, 1
  %v1963 = vadd.f32 %v1961, %v1962
  %v1964 = vlaneseq
  %v1965 = vshrl.u32 %v1964, 7
  %vm1966 = vcmp.eq.s32.totalorder %v1965, 0
  %v1967 = vsel %vm1966, %v1830, 0.0
  %1968 = vst [vmem:[%s3] sm:$0xff] %v1967
  %v1969 = vsel %vm1966, %v1963, 0.0
  %1970 = vst [vmem:[%s4] sm:$0xff] %v1969
  // Predicated region
  $region10: #{_lambda_.15} parent=0 // pred_check
    _
  $region11: #{_lambda_.15} parent=0 // pred_check_branch
    %1972 = sbr.rel (0) target = $region13
  $region12: #{_lambda_.15} parent=0 // pred_region
    _
  $region13: #{_lambda_.15} parent=0 // pred_fallthru
    _
  // Predicated region
  $region14: #{_lambda_.15} parent=0 // pred_check
    _
  $region15: #{_lambda_.15} parent=0 // pred_check_branch
    %1974 = sbr.rel (0) target = $region17
  $region16: #{_lambda_.15} parent=0 // pred_region
    _
  $region17: #{_lambda_.15} parent=0 // pred_fallthru
    _
  // Predicated region
  $region18: #{_lambda_.15} parent=0 // pred_check
    _
  $region19: #{_lambda_.15} parent=0 // pred_check_branch
    %1976 = sbr.rel (0) target = $region21
  $region20: #{_lambda_.15} parent=0 // pred_region
    _
  $region21: #{_lambda_.15} parent=0 // pred_fallthru
    _
  // Predicated region
  $region22: #{_lambda_.15} parent=0 // pred_check
    _
  $region23: #{_lambda_.15} parent=0 // pred_check_branch
    %1978 = sbr.rel (0) target = $region25
  $region24: #{_lambda_.15} parent=0 // pred_region
    _
  $region25: #{_lambda_.15} parent=0 // pred_fallthru
    _
  // Predicated region
  $region26: #{_lambda_.15} parent=0 // pred_check
    _
  $region27: #{_lambda_.15} parent=0 // pred_check_branch
    %1980 = sbr.rel (0) target = $region29
  $region28: #{_lambda_.15} parent=0 // pred_region
    _
  $region29: #{_lambda_.15} parent=0 // pred_fallthru
    _
  // Predicated region
  $region30: #{_lambda_.15} parent=0 // pred_check
    _
  $region31: #{_lambda_.15} parent=0 // pred_check_branch
    %1982 = sbr.rel (0) target = $region33
  $region32: #{_lambda_.15} parent=0 // pred_region
    _
  $region33: #{_lambda_.15} parent=0 // pred_fallthru
    _

// kernel: _lambda_.17
$region0: #{_lambda_.17}
  #allocation0 [shape = 'u32[]', space=smem, size = 0x4, offset = 0x4, fixed_abs, tag = 'smem constant byte address 0x4 - core index']
  #allocation1 [shape = 'u32[144,128]{1,0:T(1,128)}', space=vmem, size = 0x12000, scoped, tag = 'internal scratch']
  %s0 = inlined_call_operand.vmem [shape: bf16[2048,288], index: 0, kind: input, shape index: {}]
  %s1 = inlined_call_operand.vmem [shape: bf16[288,128], index: 1, kind: input, shape index: {}]
  %s2 = inlined_call_operand.vmem [shape: f32[2048,128], index: 2, kind: output, shape index: {}]
  %s3 = sld [smem:[#allocation0]]
  $region41: #{_lambda_.17} parent=0
    _
  %s5 = ssub.s32 1, %s3
  %s6 = scalar_select 0, %s5, %s3
  loop: start=0, step=1, limit=6
  $region2: #{_lambda_.17} parent=0 // loop_pre_header
    _
  $region3: #{_lambda_.17} parent=0 // loop_header
    %s8 = sphi 0, %s12
    %p9 = scmp.ge.s32.totalorder %s8, 6
    %s18 = sphi 0, %s20
    %s21 = sphi 0, %s18
    %s22 = sphi 0, %s21
    %s38 = sphi 0, %s22
    %s42 = sphi 0, %s42
    %s44 = sphi 0, %s42
    %s45 = sphi 0, %s44
    %s59 = sphi 0, %s45
    %s65 = sphi 0, %s67
    %s68 = sphi 0, %s65
    %s69 = sphi 0, %s68
    %s85 = sphi 0, %s69
  $region4: #{_lambda_.17} parent=0 // loop_header_branch
    %11 = sbr.rel (%p9) target = $region8
  $region5: #{_lambda_.17} parent=0 // loop_body
    %s13 = ssub.s32 %s8, 1
    %s14 = ssub.s32 %s8, 2
    %s15 = sadd.s32 %s8, 1
    %s16 = ssub.s32 %s8, %s15
    %p17 = scmp.eq.s32.totalorder %s16, 0
    %s19 = sadd.s32 %s18, 1
    %s20 = scalar_select %p17, %s18, %s19
    %p23 = pneg %p17
    %p24 = scmp.eq.s32.totalorder %s8, 3
    %p25 = por %p23, %p24
    %p26 = scmp.ne.s32.totalorder %s18, %s21
    %p27 = scmp.eq.s32.totalorder %s8, 0
    %p28 = por %p26, %p27
    %p29 = scmp.ne.s32.totalorder %s18, %s21
    %p30 = scmp.eq.s32.totalorder %s13, 3
    %p31 = por %p29, %p30
    %p32 = scmp.ne.s32.totalorder %s21, %s22
    %p33 = scmp.eq.s32.totalorder %s13, 0
    %p34 = por %p32, %p33
    %p35 = scmp.ne.s32.totalorder %s21, %s22
    %p36 = scmp.eq.s32.totalorder %s14, 3
    %p37 = por %p35, %p36
    %p39 = scmp.ne.s32.totalorder %s22, %s38
    %p40 = scmp.eq.s32.totalorder %s14, 0
    %p41 = por %p39, %p40
    %s43 = sadd.s32 %s42, 1
    %p46 = scmp.eq.s32.totalorder %s8, 3
    %p47 = scmp.ne.s32.totalorder %s42, %s44
    %p48 = scmp.eq.s32.totalorder %s8, 0
    %p49 = por %p47, %p48
    %p50 = scmp.ne.s32.totalorder %s42, %s44
    %p51 = scmp.eq.s32.totalorder %s13, 3
    %p52 = por %p50, %p51
    %p53 = scmp.ne.s32.totalorder %s44, %s45
    %p54 = scmp.eq.s32.totalorder %s13, 0
    %p55 = por %p53, %p54
    %p56 = scmp.ne.s32.totalorder %s44, %s45
    %p57 = scmp.eq.s32.totalorder %s14, 3
    %p58 = por %p56, %p57
    %p60 = scmp.ne.s32.totalorder %s45, %s59
    %p61 = scmp.eq.s32.totalorder %s14, 0
    %p62 = por %p60, %p61
    %s63 = ssub.s32 %s8, %s15
    %p64 = scmp.eq.s32.totalorder %s63, 0
    %s66 = sadd.s32 %s65, 1
    %s67 = scalar_select %p64, %s65, %s66
    %p70 = pneg %p64
    %p71 = scmp.eq.s32.totalorder %s8, 3
    %p72 = por %p70, %p71
    %p73 = scmp.ne.s32.totalorder %s65, %s68
    %p74 = scmp.eq.s32.totalorder %s8, 0
    %p75 = por %p73, %p74
    %p76 = scmp.ne.s32.totalorder %s65, %s68
    %p77 = scmp.eq.s32.totalorder %s13, 3
    %p78 = por %p76, %p77
    %p79 = scmp.ne.s32.totalorder %s68, %s69
    %p80 = scmp.eq.s32.totalorder %s13, 0
    %p81 = por %p79, %p80
    %p82 = scmp.ne.s32.totalorder %s68, %s69
    %p83 = scmp.eq.s32.totalorder %s14, 3
    %p84 = por %p82, %p83
    %p86 = scmp.ne.s32.totalorder %s69, %s85
    %p87 = scmp.eq.s32.totalorder %s14, 0
    %p88 = por %p86, %p87
    %p89 = scmp.le.s32.totalorder 1, %s8
    %p90 = scmp.lt.s32.totalorder %s8, 5
    %p91 = pnand %p89, %p90
    %p92 = pneg %p91
    // Predicated region
    $region9: #{_lambda_.17} parent=5 // pred_check
      _
    $region10: #{_lambda_.17} parent=5 // pred_check_branch
      %94 = sbr.rel (%p91) target = $region12
    $region11: #{_lambda_.17} parent=5 // pred_region
      %s95 = ssub.s32 %s8, 1
      // Predicated region
      $region13: #{_lambda_.17} parent=11 // pred_check
        %p96 = pneg %p55
      $region14: #{_lambda_.17} parent=11 // pred_check_branch
        %98 = sbr.rel (%p96) target = $region16
      $region15: #{_lambda_.17} parent=11 // pred_region
        _
      $region16: #{_lambda_.17} parent=11 // pred_fallthru
        _
    $region12: #{_lambda_.17} parent=5 // pred_fallthru
      _
    %p99 = scmp.lt.s32.totalorder %s8, 4
    // Predicated region
    $region17: #{_lambda_.17} parent=5 // pred_check
      %p100 = pneg %p99
    $region18: #{_lambda_.17} parent=5 // pred_check_branch
      %102 = sbr.rel (%p100) target = $region20
    $region19: #{_lambda_.17} parent=5 // pred_region
      // Predicated region
      $region21: #{_lambda_.17} parent=19 // pred_check
        %p103 = pneg %p28
      $region22: #{_lambda_.17} parent=19 // pred_check_branch
        %105 = sbr.rel (%p103) target = $region24
      $region23: #{_lambda_.17} parent=19 // pred_region
        %s106 = smul.u32 64, %s8
        %p107 = scmp.lt.s32.totalorder %s106, 255
        %s108 = scalar_select %p107, %s106, 255
        %s109 = smul.addr %s108, 3
        %s110 = smul.addr %s109, 4
        %s111 = scalar_lea.vmem %s0, %s110
        %s112 = smul.u32 64, %s8
      $region24: #{_lambda_.17} parent=19 // pred_fallthru
        _
    $region20: #{_lambda_.17} parent=5 // pred_fallthru
      _
    %p113 = scmp.le.s32.totalorder 1, %s8
    %p114 = scmp.lt.s32.totalorder %s8, 5
    %p115 = pnand %p113, %p114
    %p116 = pneg %p115
    // Predicated region
    $region25: #{_lambda_.17} parent=5 // pred_check
      _
    $region26: #{_lambda_.17} parent=5 // pred_check_branch
      %118 = sbr.rel (%p115) target = $region28
    $region27: #{_lambda_.17} parent=5 // pred_region
      %s119 = ssub.s32 %s8, 1
      %s120 = smul.u32 64, %s13
      %p121 = scmp.lt.s32.totalorder %s120, 255
      %s122 = scalar_select %p121, %s120, 255
      %s123 = smul.addr %s122, 3
      %s124 = smul.addr %s123, 4
      %s125 = scalar_lea.vmem %s0, %s124
      %p126 = pneg %p34
      %p127 = pneg %p31
      %p128 = pneg %p55
      %p129 = pneg %p52
      %p130 = pneg %p81
      %p131 = pneg %p78
      %s132 = smul.u32 64, %s13
      %p133 = scmp.lt.s32.totalorder %s132, 255
      %s134 = scalar_select %p133, %s132, 255
      %s135 = smul.addr %s134, 8
      %s136 = scalar_lea.vmem %s2, %s135
      %s137 = smul.u32 64, %s13
      %p138 = scmp.lt.s32.totalorder %s137, 255
      %s139 = scalar_select %p138, %s137, 255
      %s140 = smul.addr %s139, 3
      %s141 = smul.addr %s140, 4
      %s142 = scalar_lea.vmem %s0, %s141
      %s143 = smul.u32 64, %s13
      %s144 = smul.u32 64, %s13
      %p145 = scmp.lt.s32.totalorder %s144, 255
      %s146 = scalar_select %p145, %s144, 255
      %s147 = smul.addr %s146, 8
      %s148 = scalar_lea.vmem %s2, %s147
      %s149 = smul.u32 64, %s13
      %v151 = vld [vmem:[%s142] sm:$0xff]
      %v152 = vld [vmem:[%s142 + $0x8] sm:$0xf]
      %v153 = vld [vmem:[%s142 + $0xc] sm:$0xff]
      %v154 = vld [vmem:[%s142 + $0x14] sm:$0xf]
      %v155 = vld [vmem:[%s142 + $0x18] sm:$0xff]
      %v156 = vld [vmem:[%s142 + $0x20] sm:$0xf]
      %v157 = vld [vmem:[%s142 + $0x24] sm:$0xff]
      %v158 = vld [vmem:[%s142 + $0x2c] sm:$0xf]
      %v159 = vld [vmem:[%s142 + $0x30] sm:$0xff]
      %v160 = vld [vmem:[%s142 + $0x38] sm:$0xf]
      %v161 = vld [vmem:[%s142 + $0x3c] sm:$0xff]
      %v162 = vld [vmem:[%s142 + $0x44] sm:$0xf]
      %v163 = vld [vmem:[%s142 + $0x48] sm:$0xff]
      %v164 = vld [vmem:[%s142 + $0x50] sm:$0xf]
      %v165 = vld [vmem:[%s142 + $0x54] sm:$0xff]
      %v166 = vld [vmem:[%s142 + $0x5c] sm:$0xf]
      %v167 = vld [vmem:[%s142 + $0x60] sm:$0xff]
      %v168 = vld [vmem:[%s142 + $0x68] sm:$0xf]
      %v169 = vld [vmem:[%s142 + $0x6c] sm:$0xff]
      %v170 = vld [vmem:[%s142 + $0x74] sm:$0xf]
      %v171 = vld [vmem:[%s142 + $0x78] sm:$0xff]
      %v172 = vld [vmem:[%s142 + $0x80] sm:$0xf]
      %v173 = vld [vmem:[%s142 + $0x84] sm:$0xff]
      %v174 = vld [vmem:[%s142 + $0x8c] sm:$0xf]
      %v175 = vld [vmem:[%s142 + $0x90] sm:$0xff]
      %v176 = vld [vmem:[%s142 + $0x98] sm:$0xf]
      %v177 = vld [vmem:[%s142 + $0x9c] sm:$0xff]
      %v178 = vld [vmem:[%s142 + $0xa4] sm:$0xf]
      %v179 = vld [vmem:[%s142 + $0xa8] sm:$0xff]
      %v180 = vld [vmem:[%s142 + $0xb0] sm:$0xf]
      %v181 = vld [vmem:[%s142 + $0xb4] sm:$0xff]
      %v182 = vld [vmem:[%s142 + $0xbc] sm:$0xf]
      %v183 = vld [vmem:[%s142 + $0xc0] sm:$0xff]
      %v184 = vld [vmem:[%s142 + $0xc8] sm:$0xf]
      %v185 = vld [vmem:[%s142 + $0xcc] sm:$0xff]
      %v186 = vld [vmem:[%s142 + $0xd4] sm:$0xf]
      %v187 = vld [vmem:[%s142 + $0xd8] sm:$0xff]
      %v188 = vld [vmem:[%s142 + $0xe0] sm:$0xf]
      %v189 = vld [vmem:[%s142 + $0xe4] sm:$0xff]
      %v190 = vld [vmem:[%s142 + $0xec] sm:$0xf]
      %v191 = vld [vmem:[%s142 + $0xf0] sm:$0xff]
      %v192 = vld [vmem:[%s142 + $0xf8] sm:$0xf]
      %v193 = vld [vmem:[%s142 + $0xfc] sm:$0xff]
      %v194 = vld [vmem:[%s142 + $0x104] sm:$0xf]
      %v195 = vld [vmem:[%s142 + $0x108] sm:$0xff]
      %v196 = vld [vmem:[%s142 + $0x110] sm:$0xf]
      %v197 = vld [vmem:[%s142 + $0x114] sm:$0xff]
      %v198 = vld [vmem:[%s142 + $0x11c] sm:$0xf]
      %v199 = vld [vmem:[%s142 + $0x120] sm:$0xff]
      %v200 = vld [vmem:[%s142 + $0x128] sm:$0xf]
      %v201 = vld [vmem:[%s142 + $0x12c] sm:$0xff]
      %v202 = vld [vmem:[%s142 + $0x134] sm:$0xf]
      %v203 = vld [vmem:[%s142 + $0x138] sm:$0xff]
      %v204 = vld [vmem:[%s142 + $0x140] sm:$0xf]
      %v205 = vld [vmem:[%s142 + $0x144] sm:$0xff]
      %v206 = vld [vmem:[%s142 + $0x14c] sm:$0xf]
      %v207 = vld [vmem:[%s142 + $0x150] sm:$0xff]
      %v208 = vld [vmem:[%s142 + $0x158] sm:$0xf]
      %v209 = vld [vmem:[%s142 + $0x15c] sm:$0xff]
      %v210 = vld [vmem:[%s142 + $0x164] sm:$0xf]
      %v211 = vld [vmem:[%s142 + $0x168] sm:$0xff]
      %v212 = vld [vmem:[%s142 + $0x170] sm:$0xf]
      %v213 = vld [vmem:[%s142 + $0x174] sm:$0xff]
      %v214 = vld [vmem:[%s142 + $0x17c] sm:$0xf]
      %v215 = vld [vmem:[%s142 + $0x180] sm:$0xff]
      %v216 = vld [vmem:[%s142 + $0x188] sm:$0xf]
      %v217 = vld [vmem:[%s142 + $0x18c] sm:$0xff]
      %v218 = vld [vmem:[%s142 + $0x194] sm:$0xf]
      %v219 = vld [vmem:[%s142 + $0x198] sm:$0xff]
      %v220 = vld [vmem:[%s142 + $0x1a0] sm:$0xf]
      %v221 = vld [vmem:[%s142 + $0x1a4] sm:$0xff]
      %v222 = vld [vmem:[%s142 + $0x1ac] sm:$0xf]
      %v223 = vld [vmem:[%s142 + $0x1b0] sm:$0xff]
      %v224 = vld [vmem:[%s142 + $0x1b8] sm:$0xf]
      %v225 = vld [vmem:[%s142 + $0x1bc] sm:$0xff]
      %v226 = vld [vmem:[%s142 + $0x1c4] sm:$0xf]
      %v227 = vld [vmem:[%s142 + $0x1c8] sm:$0xff]
      %v228 = vld [vmem:[%s142 + $0x1d0] sm:$0xf]
      %v229 = vld [vmem:[%s142 + $0x1d4] sm:$0xff]
      %v230 = vld [vmem:[%s142 + $0x1dc] sm:$0xf]
      %v231 = vld [vmem:[%s142 + $0x1e0] sm:$0xff]
      %v232 = vld [vmem:[%s142 + $0x1e8] sm:$0xf]
      %v233 = vld [vmem:[%s142 + $0x1ec] sm:$0xff]
      %v234 = vld [vmem:[%s142 + $0x1f4] sm:$0xf]
      %v235 = vld [vmem:[%s142 + $0x1f8] sm:$0xff]
      %v236 = vld [vmem:[%s142 + $0x200] sm:$0xf]
      %v237 = vld [vmem:[%s142 + $0x204] sm:$0xff]
      %v238 = vld [vmem:[%s142 + $0x20c] sm:$0xf]
      %v239 = vld [vmem:[%s142 + $0x210] sm:$0xff]
      %v240 = vld [vmem:[%s142 + $0x218] sm:$0xf]
      %v241 = vld [vmem:[%s142 + $0x21c] sm:$0xff]
      %v242 = vld [vmem:[%s142 + $0x224] sm:$0xf]
      %v243 = vld [vmem:[%s142 + $0x228] sm:$0xff]
      %v244 = vld [vmem:[%s142 + $0x230] sm:$0xf]
      %v245 = vld [vmem:[%s142 + $0x234] sm:$0xff]
      %v246 = vld [vmem:[%s142 + $0x23c] sm:$0xf]
      %v247 = vld [vmem:[%s142 + $0x240] sm:$0xff]
      %v248 = vld [vmem:[%s142 + $0x248] sm:$0xf]
      %v249 = vld [vmem:[%s142 + $0x24c] sm:$0xff]
      %v250 = vld [vmem:[%s142 + $0x254] sm:$0xf]
      %v251 = vld [vmem:[%s142 + $0x258] sm:$0xff]
      %v252 = vld [vmem:[%s142 + $0x260] sm:$0xf]
      %v253 = vld [vmem:[%s142 + $0x264] sm:$0xff]
      %v254 = vld [vmem:[%s142 + $0x26c] sm:$0xf]
      %v255 = vld [vmem:[%s142 + $0x270] sm:$0xff]
      %v256 = vld [vmem:[%s142 + $0x278] sm:$0xf]
      %v257 = vld [vmem:[%s142 + $0x27c] sm:$0xff]
      %v258 = vld [vmem:[%s142 + $0x284] sm:$0xf]
      %v259 = vld [vmem:[%s142 + $0x288] sm:$0xff]
      %v260 = vld [vmem:[%s142 + $0x290] sm:$0xf]
      %v261 = vld [vmem:[%s142 + $0x294] sm:$0xff]
      %v262 = vld [vmem:[%s142 + $0x29c] sm:$0xf]
      %v263 = vld [vmem:[%s142 + $0x2a0] sm:$0xff]
      %v264 = vld [vmem:[%s142 + $0x2a8] sm:$0xf]
      %v265 = vld [vmem:[%s142 + $0x2ac] sm:$0xff]
      %v266 = vld [vmem:[%s142 + $0x2b4] sm:$0xf]
      %v267 = vld [vmem:[%s142 + $0x2b8] sm:$0xff]
      %v268 = vld [vmem:[%s142 + $0x2c0] sm:$0xf]
      %v269 = vld [vmem:[%s142 + $0x2c4] sm:$0xff]
      %v270 = vld [vmem:[%s142 + $0x2cc] sm:$0xf]
      %v271 = vld [vmem:[%s142 + $0x2d0] sm:$0xff]
      %v272 = vld [vmem:[%s142 + $0x2d8] sm:$0xf]
      %v273 = vld [vmem:[%s142 + $0x2dc] sm:$0xff]
      %v274 = vld [vmem:[%s142 + $0x2e4] sm:$0xf]
      %v275 = vld [vmem:[%s142 + $0x2e8] sm:$0xff]
      %v276 = vld [vmem:[%s142 + $0x2f0] sm:$0xf]
      %v277 = vld [vmem:[%s142 + $0x2f4] sm:$0xff]
      %v278 = vld [vmem:[%s142 + $0x2fc] sm:$0xf]
      %v279 = vld [vmem:[%s1] sm:$0xf]
      %v280 = vld [vmem:[%s1 + $0x4] sm:$0xf]
      %v281 = vld [vmem:[%s1 + $0x8] sm:$0xf]
      %v282 = vld [vmem:[%s1 + $0xc] sm:$0xf]
      %v283 = vld [vmem:[%s1 + $0x10] sm:$0xf]
      %v284 = vld [vmem:[%s1 + $0x14] sm:$0xf]
      %v285 = vld [vmem:[%s1 + $0x18] sm:$0xf]
      %v286 = vld [vmem:[%s1 + $0x1c] sm:$0xf]
      %v287 = vld [vmem:[%s1 + $0x20] sm:$0xf]
      %v288 = vld [vmem:[%s1 + $0x24] sm:$0xf]
      %v289 = vld [vmem:[%s1 + $0x28] sm:$0xf]
      %v290 = vld [vmem:[%s1 + $0x2c] sm:$0xf]
      %v291 = vld [vmem:[%s1 + $0x30] sm:$0xf]
      %v292 = vld [vmem:[%s1 + $0x34] sm:$0xf]
      %v293 = vld [vmem:[%s1 + $0x38] sm:$0xf]
      %v294 = vld [vmem:[%s1 + $0x3c] sm:$0xf]
      %v295 = vld [vmem:[%s1 + $0x40] sm:$0xf]
      %v296 = vld [vmem:[%s1 + $0x44] sm:$0xf]
      %v297 = vld [vmem:[%s1 + $0x48] sm:$0xf]
      %v298 = vld [vmem:[%s1 + $0x4c] sm:$0xf]
      %v299 = vld [vmem:[%s1 + $0x50] sm:$0xf]
      %v300 = vld [vmem:[%s1 + $0x54] sm:$0xf]
      %v301 = vld [vmem:[%s1 + $0x58] sm:$0xf]
      %v302 = vld [vmem:[%s1 + $0x5c] sm:$0xf]
      %v303 = vld [vmem:[%s1 + $0x60] sm:$0xf]
      %v304 = vld [vmem:[%s1 + $0x64] sm:$0xf]
      %v305 = vld [vmem:[%s1 + $0x68] sm:$0xf]
      %v306 = vld [vmem:[%s1 + $0x6c] sm:$0xf]
      %v307 = vld [vmem:[%s1 + $0x70] sm:$0xf]
      %v308 = vld [vmem:[%s1 + $0x74] sm:$0xf]
      %v309 = vld [vmem:[%s1 + $0x78] sm:$0xf]
      %v310 = vld [vmem:[%s1 + $0x7c] sm:$0xf]
      %v311 = vld [vmem:[%s1 + $0x80] sm:$0xf]
      %v312 = vld [vmem:[%s1 + $0x84] sm:$0xf]
      %v313 = vld [vmem:[%s1 + $0x88] sm:$0xf]
      %v314 = vld [vmem:[%s1 + $0x8c] sm:$0xf]
      %v443 = vunpack.c.l.b16 %v151
      %v444 = vunpack.c.h.b16 %v151
      %v445 = vunpack.c.l.b16 %v152
      %v446 = vunpack.c.l.b16 %v153
      %v447 = vunpack.c.h.b16 %v153
      %v448 = vunpack.c.l.b16 %v154
      %v449 = vunpack.c.l.b16 %v155
      %v450 = vunpack.c.h.b16 %v155
      %v451 = vunpack.c.l.b16 %v156
      %v452 = vunpack.c.l.b16 %v157
      %v453 = vunpack.c.h.b16 %v157
      %v454 = vunpack.c.l.b16 %v158
      %v455 = vunpack.c.l.b16 %v159
      %v456 = vunpack.c.h.b16 %v159
      %v457 = vunpack.c.l.b16 %v160
      %v458 = vunpack.c.l.b16 %v161
      %v459 = vunpack.c.h.b16 %v161
      %v460 = vunpack.c.l.b16 %v162
      %v461 = vunpack.c.l.b16 %v163
      %v462 = vunpack.c.h.b16 %v163
      %v463 = vunpack.c.l.b16 %v164
      %v464 = vunpack.c.l.b16 %v165
      %v465 = vunpack.c.h.b16 %v165
      %v466 = vunpack.c.l.b16 %v166
      %v467 = vunpack.c.l.b16 %v167
      %v468 = vunpack.c.h.b16 %v167
      %v469 = vunpack.c.l.b16 %v168
      %v470 = vunpack.c.l.b16 %v169
      %v471 = vunpack.c.h.b16 %v169
      %v472 = vunpack.c.l.b16 %v170
      %v473 = vunpack.c.l.b16 %v171
      %v474 = vunpack.c.h.b16 %v171
      %v475 = vunpack.c.l.b16 %v172
      %v476 = vunpack.c.l.b16 %v173
      %v477 = vunpack.c.h.b16 %v173
      %v478 = vunpack.c.l.b16 %v174
      %v479 = vunpack.c.l.b16 %v175
      %v480 = vunpack.c.h.b16 %v175
      %v481 = vunpack.c.l.b16 %v176
      %v482 = vunpack.c.l.b16 %v177
      %v483 = vunpack.c.h.b16 %v177
      %v484 = vunpack.c.l.b16 %v178
      %v485 = vunpack.c.l.b16 %v179
      %v486 = vunpack.c.h.b16 %v179
      %v487 = vunpack.c.l.b16 %v180
      %v488 = vunpack.c.l.b16 %v181
      %v489 = vunpack.c.h.b16 %v181
      %v490 = vunpack.c.l.b16 %v182
      %v491 = vunpack.c.l.b16 %v183
      %v492 = vunpack.c.h.b16 %v183
      %v493 = vunpack.c.l.b16 %v184
      %v494 = vunpack.c.l.b16 %v185
      %v495 = vunpack.c.h.b16 %v185
      %v496 = vunpack.c.l.b16 %v186
      %v497 = vunpack.c.l.b16 %v187
      %v498 = vunpack.c.h.b16 %v187
      %v499 = vunpack.c.l.b16 %v188
      %v500 = vunpack.c.l.b16 %v189
      %v501 = vunpack.c.h.b16 %v189
      %v502 = vunpack.c.l.b16 %v190
      %v503 = vunpack.c.l.b16 %v191
      %v504 = vunpack.c.h.b16 %v191
      %v505 = vunpack.c.l.b16 %v192
      %v506 = vunpack.c.l.b16 %v193
      %v507 = vunpack.c.h.b16 %v193
      %v508 = vunpack.c.l.b16 %v194
      %v509 = vunpack.c.l.b16 %v195
      %v510 = vunpack.c.h.b16 %v195
      %v511 = vunpack.c.l.b16 %v196
      %v512 = vunpack.c.l.b16 %v197
      %v513 = vunpack.c.h.b16 %v197
      %v514 = vunpack.c.l.b16 %v198
      %v515 = vunpack.c.l.b16 %v199
      %v516 = vunpack.c.h.b16 %v199
      %v517 = vunpack.c.l.b16 %v200
      %v518 = vunpack.c.l.b16 %v201
      %v519 = vunpack.c.h.b16 %v201
      %v520 = vunpack.c.l.b16 %v202
      %v521 = vunpack.c.l.b16 %v203
      %v522 = vunpack.c.h.b16 %v203
      %v523 = vunpack.c.l.b16 %v204
      %v524 = vunpack.c.l.b16 %v205
      %v525 = vunpack.c.h.b16 %v205
      %v526 = vunpack.c.l.b16 %v206
      %v527 = vunpack.c.l.b16 %v207
      %v528 = vunpack.c.h.b16 %v207
      %v529 = vunpack.c.l.b16 %v208
      %v530 = vunpack.c.l.b16 %v209
      %v531 = vunpack.c.h.b16 %v209
      %v532 = vunpack.c.l.b16 %v210
      %v533 = vunpack.c.l.b16 %v211
      %v534 = vunpack.c.h.b16 %v211
      %v535 = vunpack.c.l.b16 %v212
      %v536 = vunpack.c.l.b16 %v213
      %v537 = vunpack.c.h.b16 %v213
      %v538 = vunpack.c.l.b16 %v214
      %v539 = vunpack.c.l.b16 %v215
      %v540 = vunpack.c.h.b16 %v215
      %v541 = vunpack.c.l.b16 %v216
      %v542 = vunpack.c.l.b16 %v217
      %v543 = vunpack.c.h.b16 %v217
      %v544 = vunpack.c.l.b16 %v218
      %v545 = vunpack.c.l.b16 %v219
      %v546 = vunpack.c.h.b16 %v219
      %v547 = vunpack.c.l.b16 %v220
      %v548 = vunpack.c.l.b16 %v221
      %v549 = vunpack.c.h.b16 %v221
      %v550 = vunpack.c.l.b16 %v222
      %v551 = vunpack.c.l.b16 %v223
      %v552 = vunpack.c.h.b16 %v223
      %v553 = vunpack.c.l.b16 %v224
      %v554 = vunpack.c.l.b16 %v225
      %v555 = vunpack.c.h.b16 %v225
      %v556 = vunpack.c.l.b16 %v226
      %v557 = vunpack.c.l.b16 %v227
      %v558 = vunpack.c.h.b16 %v227
      %v559 = vunpack.c.l.b16 %v228
      %v560 = vunpack.c.l.b16 %v229
      %v561 = vunpack.c.h.b16 %v229
      %v562 = vunpack.c.l.b16 %v230
      %v563 = vunpack.c.l.b16 %v231
      %v564 = vunpack.c.h.b16 %v231
      %v565 = vunpack.c.l.b16 %v232
      %v566 = vunpack.c.l.b16 %v233
      %v567 = vunpack.c.h.b16 %v233
      %v568 = vunpack.c.l.b16 %v234
      %v569 = vunpack.c.l.b16 %v235
      %v570 = vunpack.c.h.b16 %v235
      %v571 = vunpack.c.l.b16 %v236
      %v572 = vunpack.c.l.b16 %v237
      %v573 = vunpack.c.h.b16 %v237
      %v574 = vunpack.c.l.b16 %v238
      %v575 = vunpack.c.l.b16 %v239
      %v576 = vunpack.c.h.b16 %v239
      %v577 = vunpack.c.l.b16 %v240
      %v578 = vunpack.c.l.b16 %v241
      %v579 = vunpack.c.h.b16 %v241
      %v580 = vunpack.c.l.b16 %v242
      %v581 = vunpack.c.l.b16 %v243
      %v582 = vunpack.c.h.b16 %v243
      %v583 = vunpack.c.l.b16 %v244
      %v584 = vunpack.c.l.b16 %v245
      %v585 = vunpack.c.h.b16 %v245
      %v586 = vunpack.c.l.b16 %v246
      %v587 = vunpack.c.l.b16 %v247
      %v588 = vunpack.c.h.b16 %v247
      %v589 = vunpack.c.l.b16 %v248
      %v590 = vunpack.c.l.b16 %v249
      %v591 = vunpack.c.h.b16 %v249
      %v592 = vunpack.c.l.b16 %v250
      %v593 = vunpack.c.l.b16 %v251
      %v594 = vunpack.c.h.b16 %v251
      %v595 = vunpack.c.l.b16 %v252
      %v596 = vunpack.c.l.b16 %v253
      %v597 = vunpack.c.h.b16 %v253
      %v598 = vunpack.c.l.b16 %v254
      %v599 = vunpack.c.l.b16 %v255
      %v600 = vunpack.c.h.b16 %v255
      %v601 = vunpack.c.l.b16 %v256
      %v602 = vunpack.c.l.b16 %v257
      %v603 = vunpack.c.h.b16 %v257
      %v604 = vunpack.c.l.b16 %v258
      %v605 = vunpack.c.l.b16 %v259
      %v606 = vunpack.c.h.b16 %v259
      %v607 = vunpack.c.l.b16 %v260
      %v608 = vunpack.c.l.b16 %v261
      %v609 = vunpack.c.h.b16 %v261
      %v610 = vunpack.c.l.b16 %v262
      %v611 = vunpack.c.l.b16 %v263
      %v612 = vunpack.c.h.b16 %v263
      %v613 = vunpack.c.l.b16 %v264
      %v614 = vunpack.c.l.b16 %v265
      %v615 = vunpack.c.h.b16 %v265
      %v616 = vunpack.c.l.b16 %v266
      %v617 = vunpack.c.l.b16 %v267
      %v618 = vunpack.c.h.b16 %v267
      %v619 = vunpack.c.l.b16 %v268
      %v620 = vunpack.c.l.b16 %v269
      %v621 = vunpack.c.h.b16 %v269
      %v622 = vunpack.c.l.b16 %v270
      %v623 = vunpack.c.l.b16 %v271
      %v624 = vunpack.c.h.b16 %v271
      %v625 = vunpack.c.l.b16 %v272
      %v626 = vunpack.c.l.b16 %v273
      %v627 = vunpack.c.h.b16 %v273
      %v628 = vunpack.c.l.b16 %v274
      %v629 = vunpack.c.l.b16 %v275
      %v630 = vunpack.c.h.b16 %v275
      %v631 = vunpack.c.l.b16 %v276
      %v632 = vunpack.c.l.b16 %v277
      %v633 = vunpack.c.h.b16 %v277
      %v634 = vunpack.c.l.b16 %v278
      %v635 = vpack.c.b16 %v446, %v443
      %v636 = vpack.c.b16 %v447, %v444
      %v637 = vpack.c.b16 %v448, %v445
      %v638 = vpack.c.b16 %v452, %v449
      %v639 = vpack.c.b16 %v453, %v450
      %v640 = vpack.c.b16 %v454, %v451
      %v641 = vpack.c.b16 %v458, %v455
      %v642 = vpack.c.b16 %v459, %v456
      %v643 = vpack.c.b16 %v460, %v457
      %v644 = vpack.c.b16 %v464, %v461
      %v645 = vpack.c.b16 %v465, %v462
      %v646 = vpack.c.b16 %v466, %v463
      %v647 = vpack.c.b16 %v470, %v467
      %v648 = vpack.c.b16 %v471, %v468
      %v649 = vpack.c.b16 %v472, %v469
      %v650 = vpack.c.b16 %v476, %v473
      %v651 = vpack.c.b16 %v477, %v474
      %v652 = vpack.c.b16 %v478, %v475
      %v653 = vpack.c.b16 %v482, %v479
      %v654 = vpack.c.b16 %v483, %v480
      %v655 = vpack.c.b16 %v484, %v481
      %v656 = vpack.c.b16 %v488, %v485
      %v657 = vpack.c.b16 %v489, %v486
      %v658 = vpack.c.b16 %v490, %v487
      %v659 = vpack.c.b16 %v494, %v491
      %v660 = vpack.c.b16 %v495, %v492
      %v661 = vpack.c.b16 %v496, %v493
      %v662 = vpack.c.b16 %v500, %v497
      %v663 = vpack.c.b16 %v501, %v498
      %v664 = vpack.c.b16 %v502, %v499
      %v665 = vpack.c.b16 %v506, %v503
      %v666 = vpack.c.b16 %v507, %v504
      %v667 = vpack.c.b16 %v508, %v505
      %v668 = vpack.c.b16 %v512, %v509
      %v669 = vpack.c.b16 %v513, %v510
      %v670 = vpack.c.b16 %v514, %v511
      %v671 = vpack.c.b16 %v518, %v515
      %v672 = vpack.c.b16 %v519, %v516
      %v673 = vpack.c.b16 %v520, %v517
      %v674 = vpack.c.b16 %v524, %v521
      %v675 = vpack.c.b16 %v525, %v522
      %v676 = vpack.c.b16 %v526, %v523
      %v677 = vpack.c.b16 %v530, %v527
      %v678 = vpack.c.b16 %v531, %v528
      %v679 = vpack.c.b16 %v532, %v529
      %v680 = vpack.c.b16 %v536, %v533
      %v681 = vpack.c.b16 %v537, %v534
      %v682 = vpack.c.b16 %v538, %v535
      %v683 = vpack.c.b16 %v542, %v539
      %v684 = vpack.c.b16 %v543, %v540
      %v685 = vpack.c.b16 %v544, %v541
      %v686 = vpack.c.b16 %v548, %v545
      %v687 = vpack.c.b16 %v549, %v546
      %v688 = vpack.c.b16 %v550, %v547
      %v689 = vpack.c.b16 %v554, %v551
      %v690 = vpack.c.b16 %v555, %v552
      %v691 = vpack.c.b16 %v556, %v553
      %v692 = vpack.c.b16 %v560, %v557
      %v693 = vpack.c.b16 %v561, %v558
      %v694 = vpack.c.b16 %v562, %v559
      %v695 = vpack.c.b16 %v566, %v563
      %v696 = vpack.c.b16 %v567, %v564
      %v697 = vpack.c.b16 %v568, %v565
      %v698 = vpack.c.b16 %v572, %v569
      %v699 = vpack.c.b16 %v573, %v570
      %v700 = vpack.c.b16 %v574, %v571
      %v701 = vpack.c.b16 %v578, %v575
      %v702 = vpack.c.b16 %v579, %v576
      %v703 = vpack.c.b16 %v580, %v577
      %v704 = vpack.c.b16 %v584, %v581
      %v705 = vpack.c.b16 %v585, %v582
      %v706 = vpack.c.b16 %v586, %v583
      %v707 = vpack.c.b16 %v590, %v587
      %v708 = vpack.c.b16 %v591, %v588
      %v709 = vpack.c.b16 %v592, %v589
      %v710 = vpack.c.b16 %v596, %v593
      %v711 = vpack.c.b16 %v597, %v594
      %v712 = vpack.c.b16 %v598, %v595
      %v713 = vpack.c.b16 %v602, %v599
      %v714 = vpack.c.b16 %v603, %v600
      %v715 = vpack.c.b16 %v604, %v601
      %v716 = vpack.c.b16 %v608, %v605
      %v717 = vpack.c.b16 %v609, %v606
      %v718 = vpack.c.b16 %v610, %v607
      %v719 = vpack.c.b16 %v614, %v611
      %v720 = vpack.c.b16 %v615, %v612
      %v721 = vpack.c.b16 %v616, %v613
      %v722 = vpack.c.b16 %v620, %v617
      %v723 = vpack.c.b16 %v621, %v618
      %v724 = vpack.c.b16 %v622, %v619
      %v725 = vpack.c.b16 %v626, %v623
      %v726 = vpack.c.b16 %v627, %v624
      %v727 = vpack.c.b16 %v628, %v625
      %v728 = vpack.c.b16 %v632, %v629
      %v729 = vpack.c.b16 %v633, %v630
      %v730 = vpack.c.b16 %v634, %v631
      %v831 = vunpack.c.l.b16 %v279
      %v832 = vunpack.c.l.b16 %v280
      %v833 = vunpack.c.l.b16 %v281
      %v834 = vunpack.c.l.b16 %v282
      %v835 = vunpack.c.l.b16 %v283
      %v836 = vunpack.c.l.b16 %v284
      %v837 = vunpack.c.l.b16 %v285
      %v838 = vunpack.c.l.b16 %v286
      %v839 = vunpack.c.l.b16 %v287
      %v840 = vunpack.c.l.b16 %v288
      %v841 = vunpack.c.l.b16 %v289
      %v842 = vunpack.c.l.b16 %v290
      %v843 = vunpack.c.l.b16 %v291
      %v844 = vunpack.c.l.b16 %v292
      %v845 = vunpack.c.l.b16 %v293
      %v846 = vunpack.c.l.b16 %v294
      %v847 = vunpack.c.l.b16 %v295
      %v848 = vunpack.c.l.b16 %v296
      %v849 = vunpack.c.l.b16 %v297
      %v850 = vunpack.c.l.b16 %v298
      %v851 = vunpack.c.l.b16 %v299
      %v852 = vunpack.c.l.b16 %v300
      %v853 = vunpack.c.l.b16 %v301
      %v854 = vunpack.c.l.b16 %v302
      %v855 = vunpack.c.l.b16 %v303
      %v856 = vunpack.c.l.b16 %v304
      %v857 = vunpack.c.l.b16 %v305
      %v858 = vunpack.c.l.b16 %v306
      %v859 = vunpack.c.l.b16 %v307
      %v860 = vunpack.c.l.b16 %v308
      %v861 = vunpack.c.l.b16 %v309
      %v862 = vunpack.c.l.b16 %v310
      %v863 = vunpack.c.l.b16 %v311
      %v864 = vunpack.c.l.b16 %v312
      %v865 = vunpack.c.l.b16 %v313
      %v866 = vunpack.c.l.b16 %v314
      %v867 = vpack.c.b16 %v832, %v831
      %v868 = vpack.c.b16 %v834, %v833
      %v869 = vpack.c.b16 %v836, %v835
      %v870 = vpack.c.b16 %v838, %v837
      %v871 = vpack.c.b16 %v840, %v839
      %v872 = vpack.c.b16 %v842, %v841
      %v873 = vpack.c.b16 %v844, %v843
      %v874 = vpack.c.b16 %v846, %v845
      %v875 = vpack.c.b16 %v848, %v847
      %v876 = vpack.c.b16 %v850, %v849
      %v877 = vpack.c.b16 %v852, %v851
      %v878 = vpack.c.b16 %v854, %v853
      %v879 = vpack.c.b16 %v856, %v855
      %v880 = vpack.c.b16 %v858, %v857
      %v881 = vpack.c.b16 %v860, %v859
      %v882 = vpack.c.b16 %v862, %v861
      %v883 = vpack.c.b16 %v864, %v863
      %v884 = vpack.c.b16 %v866, %v865
      %vm903 = vcmask 261120
      %v905 = vsel %vm903, %v637, 0
      %v908 = vsel %vm903, %v640, 0
      %v911 = vsel %vm903, %v643, 0
      %v914 = vsel %vm903, %v646, 0
      %v917 = vsel %vm903, %v649, 0
      %v920 = vsel %vm903, %v652, 0
      %v923 = vsel %vm903, %v655, 0
      %v926 = vsel %vm903, %v658, 0
      %v929 = vsel %vm903, %v661, 0
      %v932 = vsel %vm903, %v664, 0
      %v935 = vsel %vm903, %v667, 0
      %v938 = vsel %vm903, %v670, 0
      %v941 = vsel %vm903, %v673, 0
      %v944 = vsel %vm903, %v676, 0
      %v947 = vsel %vm903, %v679, 0
      %v950 = vsel %vm903, %v682, 0
      %v953 = vsel %vm903, %v685, 0
      %v956 = vsel %vm903, %v688, 0
      %v959 = vsel %vm903, %v691, 0
      %v962 = vsel %vm903, %v694, 0
      %v965 = vsel %vm903, %v697, 0
      %v968 = vsel %vm903, %v700, 0
      %v971 = vsel %vm903, %v703, 0
      %v974 = vsel %vm903, %v706, 0
      %v977 = vsel %vm903, %v709, 0
      %v980 = vsel %vm903, %v712, 0
      %v983 = vsel %vm903, %v715, 0
      %v986 = vsel %vm903, %v718, 0
      %v989 = vsel %vm903, %v721, 0
      %v992 = vsel %vm903, %v724, 0
      %v995 = vsel %vm903, %v727, 0
      %v998 = vsel %vm903, %v730, 0
      %1000 = vmatprep.subr.bf16.mxu0 0
      %1001 = vmatpush1.bf16.msra.mxu0 %v874
      %1002 = vmatprep.subr.bf16.mxu0 0
      %1003 = vmatpush1.bf16.msra.mxu0 %v873
      %1004 = vmatprep.subr.bf16.mxu0 0
      %1005 = vmatpush1.bf16.msra.mxu0 %v872
      %1006 = vmatprep.subr.bf16.mxu0 0
      %1007 = vmatpush1.bf16.msra.mxu0 %v871
      %1008 = vmatprep.subr.bf16.mxu0 0
      %1009 = vmatpush1.bf16.msra.mxu0 %v870
      %1010 = vmatprep.subr.bf16.mxu0 0
      %1011 = vmatpush1.bf16.msra.mxu0 %v869
      %1012 = vmatprep.subr.bf16.mxu0 0
      %1013 = vmatpush1.bf16.msra.mxu0 %v868
      %1014 = vmatprep.subr.bf16.mxu0 0
      %1015 = vmatpush1.bf16.msra.mxu0 %v867
      %1016 = vmatprep.subr.bf16.mxu0 0
      %1017 = vmatpush2.bf16.msra.mxu0 %v882
      %1018 = vmatprep.subr.bf16.mxu0 0
      %1019 = vmatpush2.bf16.msra.mxu0 %v881
      %1020 = vmatprep.subr.bf16.mxu0 0
      %1021 = vmatpush2.bf16.msra.mxu0 %v880
      %1022 = vmatprep.subr.bf16.mxu0 0
      %1023 = vmatpush2.bf16.msra.mxu0 %v879
      %1024 = vmatprep.subr.bf16.mxu0 0
      %1025 = vmatpush2.bf16.msra.mxu0 %v878
      %1026 = vmatprep.subr.bf16.mxu0 0
      %1027 = vmatpush2.bf16.msra.mxu0 %v877
      %1028 = vmatprep.subr.bf16.mxu0 0
      %1029 = vmatpush2.bf16.msra.mxu0 %v876
      %1030 = vmatprep.subr.bf16.mxu0 0
      %1031 = vmatpush2.bf16.msra.mxu0 %v875
      %1032 = vmatprep.mubr.bf16.mxu0 %v636
      %1033 = vmatmul.mubr.bf16.gmra.mxu0 %v635
      %v1034 = vpop.f32.mrf.mxu0
      %v1035 = vadd.f32 0.0, %v1034
      %v1036 = vpop.f32.mrf.mxu0
      %v1037 = vpop.f32.mrf.mxu0
      %v1038 = vadd.f32 0.0, %v1037
      %v1039 = vpop.f32.mrf.mxu0
      %1040 = vmatprep.mubr.bf16.mxu0 %v639
      %1041 = vmatmul.mubr.bf16.gmra.mxu0 %v638
      %v1042 = vpop.f32.mrf.mxu0
      %v1043 = vadd.f32 0.0, %v1042
      %v1044 = vpop.f32.mrf.mxu0
      %v1045 = vpop.f32.mrf.mxu0
      %v1046 = vadd.f32 0.0, %v1045
      %v1047 = vpop.f32.mrf.mxu0
      %1048 = vmatprep.mubr.bf16.mxu0 %v642
      %1049 = vmatmul.mubr.bf16.gmra.mxu0 %v641
      %v1050 = vpop.f32.mrf.mxu0
      %v1051 = vadd.f32 0.0, %v1050
      %v1052 = vpop.f32.mrf.mxu0
      %v1053 = vpop.f32.mrf.mxu0
      %v1054 = vadd.f32 0.0, %v1053
      %v1055 = vpop.f32.mrf.mxu0
      %1056 = vmatprep.mubr.bf16.mxu0 %v645
      %1057 = vmatmul.mubr.bf16.gmra.mxu0 %v644
      %v1058 = vpop.f32.mrf.mxu0
      %v1059 = vadd.f32 0.0, %v1058
      %v1060 = vpop.f32.mrf.mxu0
      %v1061 = vpop.f32.mrf.mxu0
      %v1062 = vadd.f32 0.0, %v1061
      %v1063 = vpop.f32.mrf.mxu0
      %1064 = vmatprep.mubr.bf16.mxu0 %v648
      %1065 = vmatmul.mubr.bf16.gmra.mxu0 %v647
      %v1066 = vpop.f32.mrf.mxu0
      %v1067 = vadd.f32 0.0, %v1066
      %v1068 = vpop.f32.mrf.mxu0
      %v1069 = vpop.f32.mrf.mxu0
      %v1070 = vadd.f32 0.0, %v1069
      %v1071 = vpop.f32.mrf.mxu0
      %1072 = vmatprep.mubr.bf16.mxu0 %v651
      %1073 = vmatmul.mubr.bf16.gmra.mxu0 %v650
      %v1074 = vpop.f32.mrf.mxu0
      %v1075 = vadd.f32 0.0, %v1074
      %v1076 = vpop.f32.mrf.mxu0
      %v1077 = vpop.f32.mrf.mxu0
      %v1078 = vadd.f32 0.0, %v1077
      %v1079 = vpop.f32.mrf.mxu0
      %1080 = vmatprep.mubr.bf16.mxu0 %v654
      %1081 = vmatmul.mubr.bf16.gmra.mxu0 %v653
      %v1082 = vpop.f32.mrf.mxu0
      %v1083 = vadd.f32 0.0, %v1082
      %v1084 = vpop.f32.mrf.mxu0
      %v1085 = vpop.f32.mrf.mxu0
      %v1086 = vadd.f32 0.0, %v1085
      %v1087 = vpop.f32.mrf.mxu0
      %1088 = vmatprep.mubr.bf16.mxu0 %v657
      %1089 = vmatmul.mubr.bf16.gmra.mxu0 %v656
      %v1090 = vpop.f32.mrf.mxu0
      %v1091 = vadd.f32 0.0, %v1090
      %v1092 = vpop.f32.mrf.mxu0
      %v1093 = vpop.f32.mrf.mxu0
      %v1094 = vadd.f32 0.0, %v1093
      %v1095 = vpop.f32.mrf.mxu0
      %1096 = vmatprep.mubr.bf16.mxu0 %v660
      %1097 = vmatmul.mubr.bf16.gmra.mxu0 %v659
      %v1098 = vpop.f32.mrf.mxu0
      %v1099 = vadd.f32 0.0, %v1098
      %v1100 = vpop.f32.mrf.mxu0
      %v1101 = vpop.f32.mrf.mxu0
      %v1102 = vadd.f32 0.0, %v1101
      %v1103 = vpop.f32.mrf.mxu0
      %1104 = vmatprep.mubr.bf16.mxu0 %v663
      %1105 = vmatmul.mubr.bf16.gmra.mxu0 %v662
      %v1106 = vpop.f32.mrf.mxu0
      %v1107 = vadd.f32 0.0, %v1106
      %v1108 = vpop.f32.mrf.mxu0
      %v1109 = vpop.f32.mrf.mxu0
      %v1110 = vadd.f32 0.0, %v1109
      %v1111 = vpop.f32.mrf.mxu0
      %1112 = vmatprep.mubr.bf16.mxu0 %v666
      %1113 = vmatmul.mubr.bf16.gmra.mxu0 %v665
      %v1114 = vpop.f32.mrf.mxu0
      %v1115 = vadd.f32 0.0, %v1114
      %v1116 = vpop.f32.mrf.mxu0
      %v1117 = vpop.f32.mrf.mxu0
      %v1118 = vadd.f32 0.0, %v1117
      %v1119 = vpop.f32.mrf.mxu0
      %1120 = vmatprep.mubr.bf16.mxu0 %v669
      %1121 = vmatmul.mubr.bf16.gmra.mxu0 %v668
      %v1122 = vpop.f32.mrf.mxu0
      %v1123 = vadd.f32 0.0, %v1122
      %v1124 = vpop.f32.mrf.mxu0
      %v1125 = vpop.f32.mrf.mxu0
      %v1126 = vadd.f32 0.0, %v1125
      %v1127 = vpop.f32.mrf.mxu0
      %1128 = vmatprep.mubr.bf16.mxu0 %v672
      %1129 = vmatmul.mubr.bf16.gmra.mxu0 %v671
      %v1130 = vpop.f32.mrf.mxu0
      %v1131 = vadd.f32 0.0, %v1130
      %v1132 = vpop.f32.mrf.mxu0
      %v1133 = vpop.f32.mrf.mxu0
      %v1134 = vadd.f32 0.0, %v1133
      %v1135 = vpop.f32.mrf.mxu0
      %1136 = vmatprep.mubr.bf16.mxu0 %v675
      %1137 = vmatmul.mubr.bf16.gmra.mxu0 %v674
      %v1138 = vpop.f32.mrf.mxu0
      %v1139 = vadd.f32 0.0, %v1138
      %v1140 = vpop.f32.mrf.mxu0
      %v1141 = vpop.f32.mrf.mxu0
      %v1142 = vadd.f32 0.0, %v1141
      %v1143 = vpop.f32.mrf.mxu0
      %1144 = vmatprep.mubr.bf16.mxu0 %v678
      %1145 = vmatmul.mubr.bf16.gmra.mxu0 %v677
      %v1146 = vpop.f32.mrf.mxu0
      %v1147 = vadd.f32 0.0, %v1146
      %v1148 = vpop.f32.mrf.mxu0
      %v1149 = vpop.f32.mrf.mxu0
      %v1150 = vadd.f32 0.0, %v1149
      %v1151 = vpop.f32.mrf.mxu0
      %1152 = vmatprep.mubr.bf16.mxu0 %v681
      %1153 = vmatmul.mubr.bf16.gmra.mxu0 %v680
      %v1154 = vpop.f32.mrf.mxu0
      %v1155 = vadd.f32 0.0, %v1154
      %v1156 = vpop.f32.mrf.mxu0
      %v1157 = vpop.f32.mrf.mxu0
      %v1158 = vadd.f32 0.0, %v1157
      %v1159 = vpop.f32.mrf.mxu0
      %1160 = vmatprep.mubr.bf16.mxu0 %v684
      %1161 = vmatmul.mubr.bf16.gmra.mxu0 %v683
      %v1162 = vpop.f32.mrf.mxu0
      %v1163 = vadd.f32 0.0, %v1162
      %v1164 = vpop.f32.mrf.mxu0
      %v1165 = vpop.f32.mrf.mxu0
      %v1166 = vadd.f32 0.0, %v1165
      %v1167 = vpop.f32.mrf.mxu0
      %1168 = vmatprep.mubr.bf16.mxu0 %v687
      %1169 = vmatmul.mubr.bf16.gmra.mxu0 %v686
      %v1170 = vpop.f32.mrf.mxu0
      %v1171 = vadd.f32 0.0, %v1170
      %v1172 = vpop.f32.mrf.mxu0
      %v1173 = vpop.f32.mrf.mxu0
      %v1174 = vadd.f32 0.0, %v1173
      %v1175 = vpop.f32.mrf.mxu0
      %1176 = vmatprep.mubr.bf16.mxu0 %v690
      %1177 = vmatmul.mubr.bf16.gmra.mxu0 %v689
      %v1178 = vpop.f32.mrf.mxu0
      %v1179 = vadd.f32 0.0, %v1178
      %v1180 = vpop.f32.mrf.mxu0
      %v1181 = vpop.f32.mrf.mxu0
      %v1182 = vadd.f32 0.0, %v1181
      %v1183 = vpop.f32.mrf.mxu0
      %1184 = vmatprep.mubr.bf16.mxu0 %v693
      %1185 = vmatmul.mubr.bf16.gmra.mxu0 %v692
      %v1186 = vpop.f32.mrf.mxu0
      %v1187 = vadd.f32 0.0, %v1186
      %v1188 = vpop.f32.mrf.mxu0
      %v1189 = vpop.f32.mrf.mxu0
      %v1190 = vadd.f32 0.0, %v1189
      %v1191 = vpop.f32.mrf.mxu0
      %1192 = vmatprep.mubr.bf16.mxu0 %v696
      %1193 = vmatmul.mubr.bf16.gmra.mxu0 %v695
      %v1194 = vpop.f32.mrf.mxu0
      %v1195 = vadd.f32 0.0, %v1194
      %v1196 = vpop.f32.mrf.mxu0
      %v1197 = vpop.f32.mrf.mxu0
      %v1198 = vadd.f32 0.0, %v1197
      %v1199 = vpop.f32.mrf.mxu0
      %1200 = vmatprep.mubr.bf16.mxu0 %v699
      %1201 = vmatmul.mubr.bf16.gmra.mxu0 %v698
      %v1202 = vpop.f32.mrf.mxu0
      %v1203 = vadd.f32 0.0, %v1202
      %v1204 = vpop.f32.mrf.mxu0
      %v1205 = vpop.f32.mrf.mxu0
      %v1206 = vadd.f32 0.0, %v1205
      %v1207 = vpop.f32.mrf.mxu0
      %1208 = vmatprep.mubr.bf16.mxu0 %v702
      %1209 = vmatmul.mubr.bf16.gmra.mxu0 %v701
      %v1210 = vpop.f32.mrf.mxu0
      %v1211 = vadd.f32 0.0, %v1210
      %v1212 = vpop.f32.mrf.mxu0
      %v1213 = vpop.f32.mrf.mxu0
      %v1214 = vadd.f32 0.0, %v1213
      %v1215 = vpop.f32.mrf.mxu0
      %1216 = vmatprep.mubr.bf16.mxu0 %v705
      %1217 = vmatmul.mubr.bf16.gmra.mxu0 %v704
      %v1218 = vpop.f32.mrf.mxu0
      %v1219 = vadd.f32 0.0, %v1218
      %v1220 = vpop.f32.mrf.mxu0
      %v1221 = vpop.f32.mrf.mxu0
      %v1222 = vadd.f32 0.0, %v1221
      %v1223 = vpop.f32.mrf.mxu0
      %1224 = vmatprep.mubr.bf16.mxu0 %v708
      %1225 = vmatmul.mubr.bf16.gmra.mxu0 %v707
      %v1226 = vpop.f32.mrf.mxu0
      %v1227 = vadd.f32 0.0, %v1226
      %v1228 = vpop.f32.mrf.mxu0
      %v1229 = vpop.f32.mrf.mxu0
      %v1230 = vadd.f32 0.0, %v1229
      %v1231 = vpop.f32.mrf.mxu0
      %1232 = vmatprep.mubr.bf16.mxu0 %v711
      %1233 = vmatmul.mubr.bf16.gmra.mxu0 %v710
      %v1234 = vpop.f32.mrf.mxu0
      %v1235 = vadd.f32 0.0, %v1234
      %v1236 = vpop.f32.mrf.mxu0
      %v1237 = vpop.f32.mrf.mxu0
      %v1238 = vadd.f32 0.0, %v1237
      %v1239 = vpop.f32.mrf.mxu0
      %1240 = vmatprep.mubr.bf16.mxu0 %v714
      %1241 = vmatmul.mubr.bf16.gmra.mxu0 %v713
      %v1242 = vpop.f32.mrf.mxu0
      %v1243 = vadd.f32 0.0, %v1242
      %v1244 = vpop.f32.mrf.mxu0
      %v1245 = vpop.f32.mrf.mxu0
      %v1246 = vadd.f32 0.0, %v1245
      %v1247 = vpop.f32.mrf.mxu0
      %1248 = vmatprep.mubr.bf16.mxu0 %v717
      %1249 = vmatmul.mubr.bf16.gmra.mxu0 %v716
      %v1250 = vpop.f32.mrf.mxu0
      %v1251 = vadd.f32 0.0, %v1250
      %v1252 = vpop.f32.mrf.mxu0
      %v1253 = vpop.f32.mrf.mxu0
      %v1254 = vadd.f32 0.0, %v1253
      %v1255 = vpop.f32.mrf.mxu0
      %1256 = vmatprep.mubr.bf16.mxu0 %v720
      %1257 = vmatmul.mubr.bf16.gmra.mxu0 %v719
      %v1258 = vpop.f32.mrf.mxu0
      %v1259 = vadd.f32 0.0, %v1258
      %v1260 = vpop.f32.mrf.mxu0
      %v1261 = vpop.f32.mrf.mxu0
      %v1262 = vadd.f32 0.0, %v1261
      %v1263 = vpop.f32.mrf.mxu0
      %1264 = vmatprep.mubr.bf16.mxu0 %v723
      %1265 = vmatmul.mubr.bf16.gmra.mxu0 %v722
      %v1266 = vpop.f32.mrf.mxu0
      %v1267 = vadd.f32 0.0, %v1266
      %v1268 = vpop.f32.mrf.mxu0
      %v1269 = vpop.f32.mrf.mxu0
      %v1270 = vadd.f32 0.0, %v1269
      %v1271 = vpop.f32.mrf.mxu0
      %1272 = vmatprep.mubr.bf16.mxu0 %v726
      %1273 = vmatmul.mubr.bf16.gmra.mxu0 %v725
      %v1274 = vpop.f32.mrf.mxu0
      %v1275 = vadd.f32 0.0, %v1274
      %v1276 = vpop.f32.mrf.mxu0
      %v1277 = vpop.f32.mrf.mxu0
      %v1278 = vadd.f32 0.0, %v1277
      %v1279 = vpop.f32.mrf.mxu0
      %1280 = vmatprep.mubr.bf16.mxu0 %v729
      %1281 = vmatmul.mubr.bf16.gmra.mxu0 %v728
      %v1282 = vpop.f32.mrf.mxu0
      %v1283 = vadd.f32 0.0, %v1282
      %v1284 = vpop.f32.mrf.mxu0
      %v1285 = vpop.f32.mrf.mxu0
      %v1286 = vadd.f32 0.0, %v1285
      %v1287 = vpop.f32.mrf.mxu0
      %1288 = vdwg.mxu0
      %1289 = vmatprep.subr.bf16.mxu0 0
      %1290 = vmatpush1.bf16.msra.mxu0 0
      %1291 = vmatprep.subr.bf16.mxu0 0
      %1292 = vmatpush1.bf16.msra.mxu0 0
      %1293 = vmatprep.subr.bf16.mxu0 0
      %1294 = vmatpush1.bf16.msra.mxu0 0
      %1295 = vmatprep.subr.bf16.mxu0 0
      %1296 = vmatpush1.bf16.msra.mxu0 0
      %1297 = vmatprep.subr.bf16.mxu0 0
      %1298 = vmatpush1.bf16.msra.mxu0 0
      %1299 = vmatprep.subr.bf16.mxu0 0
      %1300 = vmatpush1.bf16.msra.mxu0 0
      %1301 = vmatprep.subr.bf16.mxu0 0
      %1302 = vmatpush1.bf16.msra.mxu0 %v884
      %1303 = vmatprep.subr.bf16.mxu0 0
      %1304 = vmatpush1.bf16.msra.mxu0 %v883
      %1305 = vmatprep.subr.bf16.mxu0 0
      %1306 = vmatpush2.bf16.msra.mxu0 0
      %1307 = vmatprep.subr.bf16.mxu0 0
      %1308 = vmatpush2.bf16.msra.mxu0 0
      %1309 = vmatprep.subr.bf16.mxu0 0
      %1310 = vmatpush2.bf16.msra.mxu0 0
      %1311 = vmatprep.subr.bf16.mxu0 0
      %1312 = vmatpush2.bf16.msra.mxu0 0
      %1313 = vmatprep.subr.bf16.mxu0 0
      %1314 = vmatpush2.bf16.msra.mxu0 0
      %1315 = vmatprep.subr.bf16.mxu0 0
      %1316 = vmatpush2.bf16.msra.mxu0 0
      %1317 = vmatprep.subr.bf16.mxu0 0
      %1318 = vmatpush2.bf16.msra.mxu0 0
      %1319 = vmatprep.subr.bf16.mxu0 0
      %1320 = vmatpush2.bf16.msra.mxu0 0
      %1321 = vmatprep.mubr.bf16.mxu0 0
      %1322 = vmatmul.mubr.bf16.gmra.mxu0 %v905
      %v1323 = vpop.f32.mrf.mxu0
      %v1324 = vadd.f32 %v1035, %v1323
      %v1325 = vpop.f32.mrf.mxu0
      %v1326 = vpop.f32.mrf.mxu0
      %v1327 = vadd.f32 %v1038, %v1326
      %v1328 = vpop.f32.mrf.mxu0
      %1329 = vmatprep.mubr.bf16.mxu0 0
      %1330 = vmatmul.mubr.bf16.gmra.mxu0 %v908
      %v1331 = vpop.f32.mrf.mxu0
      %v1332 = vadd.f32 %v1043, %v1331
      %v1333 = vpop.f32.mrf.mxu0
      %v1334 = vpop.f32.mrf.mxu0
      %v1335 = vadd.f32 %v1046, %v1334
      %v1336 = vpop.f32.mrf.mxu0
      %1337 = vmatprep.mubr.bf16.mxu0 0
      %1338 = vmatmul.mubr.bf16.gmra.mxu0 %v911
      %v1339 = vpop.f32.mrf.mxu0
      %v1340 = vadd.f32 %v1051, %v1339
      %v1341 = vpop.f32.mrf.mxu0
      %v1342 = vpop.f32.mrf.mxu0
      %v1343 = vadd.f32 %v1054, %v1342
      %v1344 = vpop.f32.mrf.mxu0
      %1345 = vmatprep.mubr.bf16.mxu0 0
      %1346 = vmatmul.mubr.bf16.gmra.mxu0 %v914
      %v1347 = vpop.f32.mrf.mxu0
      %v1348 = vadd.f32 %v1059, %v1347
      %v1349 = vpop.f32.mrf.mxu0
      %v1350 = vpop.f32.mrf.mxu0
      %v1351 = vadd.f32 %v1062, %v1350
      %v1352 = vpop.f32.mrf.mxu0
      %1353 = vmatprep.mubr.bf16.mxu0 0
      %1354 = vmatmul.mubr.bf16.gmra.mxu0 %v917
      %v1355 = vpop.f32.mrf.mxu0
      %v1356 = vadd.f32 %v1067, %v1355
      %v1357 = vpop.f32.mrf.mxu0
      %v1358 = vpop.f32.mrf.mxu0
      %v1359 = vadd.f32 %v1070, %v1358
      %v1360 = vpop.f32.mrf.mxu0
      %1361 = vmatprep.mubr.bf16.mxu0 0
      %1362 = vmatmul.mubr.bf16.gmra.mxu0 %v920
      %v1363 = vpop.f32.mrf.mxu0
      %v1364 = vadd.f32 %v1075, %v1363
      %v1365 = vpop.f32.mrf.mxu0
      %v1366 = vpop.f32.mrf.mxu0
      %v1367 = vadd.f32 %v1078, %v1366
      %v1368 = vpop.f32.mrf.mxu0
      %1369 = vmatprep.mubr.bf16.mxu0 0
      %1370 = vmatmul.mubr.bf16.gmra.mxu0 %v923
      %v1371 = vpop.f32.mrf.mxu0
      %v1372 = vadd.f32 %v1083, %v1371
      %v1373 = vpop.f32.mrf.mxu0
      %v1374 = vpop.f32.mrf.mxu0
      %v1375 = vadd.f32 %v1086, %v1374
      %v1376 = vpop.f32.mrf.mxu0
      %1377 = vmatprep.mubr.bf16.mxu0 0
      %1378 = vmatmul.mubr.bf16.gmra.mxu0 %v926
      %v1379 = vpop.f32.mrf.mxu0
      %v1380 = vadd.f32 %v1091, %v1379
      %v1381 = vpop.f32.mrf.mxu0
      %v1382 = vpop.f32.mrf.mxu0
      %v1383 = vadd.f32 %v1094, %v1382
      %v1384 = vpop.f32.mrf.mxu0
      %1385 = vmatprep.mubr.bf16.mxu0 0
      %1386 = vmatmul.mubr.bf16.gmra.mxu0 %v929
      %v1387 = vpop.f32.mrf.mxu0
      %v1388 = vadd.f32 %v1099, %v1387
      %v1389 = vpop.f32.mrf.mxu0
      %v1390 = vpop.f32.mrf.mxu0
      %v1391 = vadd.f32 %v1102, %v1390
      %v1392 = vpop.f32.mrf.mxu0
      %1393 = vmatprep.mubr.bf16.mxu0 0
      %1394 = vmatmul.mubr.bf16.gmra.mxu0 %v932
      %v1395 = vpop.f32.mrf.mxu0
      %v1396 = vadd.f32 %v1107, %v1395
      %v1397 = vpop.f32.mrf.mxu0
      %v1398 = vpop.f32.mrf.mxu0
      %v1399 = vadd.f32 %v1110, %v1398
      %v1400 = vpop.f32.mrf.mxu0
      %1401 = vmatprep.mubr.bf16.mxu0 0
      %1402 = vmatmul.mubr.bf16.gmra.mxu0 %v935
      %v1403 = vpop.f32.mrf.mxu0
      %v1404 = vadd.f32 %v1115, %v1403
      %v1405 = vpop.f32.mrf.mxu0
      %v1406 = vpop.f32.mrf.mxu0
      %v1407 = vadd.f32 %v1118, %v1406
      %v1408 = vpop.f32.mrf.mxu0
      %1409 = vmatprep.mubr.bf16.mxu0 0
      %1410 = vmatmul.mubr.bf16.gmra.mxu0 %v938
      %v1411 = vpop.f32.mrf.mxu0
      %v1412 = vadd.f32 %v1123, %v1411
      %v1413 = vpop.f32.mrf.mxu0
      %v1414 = vpop.f32.mrf.mxu0
      %v1415 = vadd.f32 %v1126, %v1414
      %v1416 = vpop.f32.mrf.mxu0
      %1417 = vmatprep.mubr.bf16.mxu0 0
      %1418 = vmatmul.mubr.bf16.gmra.mxu0 %v941
      %v1419 = vpop.f32.mrf.mxu0
      %v1420 = vadd.f32 %v1131, %v1419
      %v1421 = vpop.f32.mrf.mxu0
      %v1422 = vpop.f32.mrf.mxu0
      %v1423 = vadd.f32 %v1134, %v1422
      %v1424 = vpop.f32.mrf.mxu0
      %1425 = vmatprep.mubr.bf16.mxu0 0
      %1426 = vmatmul.mubr.bf16.gmra.mxu0 %v944
      %v1427 = vpop.f32.mrf.mxu0
      %v1428 = vadd.f32 %v1139, %v1427
      %v1429 = vpop.f32.mrf.mxu0
      %v1430 = vpop.f32.mrf.mxu0
      %v1431 = vadd.f32 %v1142, %v1430
      %v1432 = vpop.f32.mrf.mxu0
      %1433 = vmatprep.mubr.bf16.mxu0 0
      %1434 = vmatmul.mubr.bf16.gmra.mxu0 %v947
      %v1435 = vpop.f32.mrf.mxu0
      %v1436 = vadd.f32 %v1147, %v1435
      %v1437 = vpop.f32.mrf.mxu0
      %v1438 = vpop.f32.mrf.mxu0
      %v1439 = vadd.f32 %v1150, %v1438
      %v1440 = vpop.f32.mrf.mxu0
      %1441 = vmatprep.mubr.bf16.mxu0 0
      %1442 = vmatmul.mubr.bf16.gmra.mxu0 %v950
      %v1443 = vpop.f32.mrf.mxu0
      %v1444 = vadd.f32 %v1155, %v1443
      %v1445 = vpop.f32.mrf.mxu0
      %v1446 = vpop.f32.mrf.mxu0
      %v1447 = vadd.f32 %v1158, %v1446
      %v1448 = vpop.f32.mrf.mxu0
      %1449 = vmatprep.mubr.bf16.mxu0 0
      %1450 = vmatmul.mubr.bf16.gmra.mxu0 %v953
      %v1451 = vpop.f32.mrf.mxu0
      %v1452 = vadd.f32 %v1163, %v1451
      %v1453 = vpop.f32.mrf.mxu0
      %v1454 = vpop.f32.mrf.mxu0
      %v1455 = vadd.f32 %v1166, %v1454
      %v1456 = vpop.f32.mrf.mxu0
      %1457 = vmatprep.mubr.bf16.mxu0 0
      %1458 = vmatmul.mubr.bf16.gmra.mxu0 %v956
      %v1459 = vpop.f32.mrf.mxu0
      %v1460 = vadd.f32 %v1171, %v1459
      %v1461 = vpop.f32.mrf.mxu0
      %v1462 = vpop.f32.mrf.mxu0
      %v1463 = vadd.f32 %v1174, %v1462
      %v1464 = vpop.f32.mrf.mxu0
      %1465 = vmatprep.mubr.bf16.mxu0 0
      %1466 = vmatmul.mubr.bf16.gmra.mxu0 %v959
      %v1467 = vpop.f32.mrf.mxu0
      %v1468 = vadd.f32 %v1179, %v1467
      %v1469 = vpop.f32.mrf.mxu0
      %v1470 = vpop.f32.mrf.mxu0
      %v1471 = vadd.f32 %v1182, %v1470
      %v1472 = vpop.f32.mrf.mxu0
      %1473 = vmatprep.mubr.bf16.mxu0 0
      %1474 = vmatmul.mubr.bf16.gmra.mxu0 %v962
      %v1475 = vpop.f32.mrf.mxu0
      %v1476 = vadd.f32 %v1187, %v1475
      %v1477 = vpop.f32.mrf.mxu0
      %v1478 = vpop.f32.mrf.mxu0
      %v1479 = vadd.f32 %v1190, %v1478
      %v1480 = vpop.f32.mrf.mxu0
      %1481 = vmatprep.mubr.bf16.mxu0 0
      %1482 = vmatmul.mubr.bf16.gmra.mxu0 %v965
      %v1483 = vpop.f32.mrf.mxu0
      %v1484 = vadd.f32 %v1195, %v1483
      %v1485 = vpop.f32.mrf.mxu0
      %v1486 = vpop.f32.mrf.mxu0
      %v1487 = vadd.f32 %v1198, %v1486
      %v1488 = vpop.f32.mrf.mxu0
      %1489 = vmatprep.mubr.bf16.mxu0 0
      %1490 = vmatmul.mubr.bf16.gmra.mxu0 %v968
      %v1491 = vpop.f32.mrf.mxu0
      %v1492 = vadd.f32 %v1203, %v1491
      %v1493 = vpop.f32.mrf.mxu0
      %v1494 = vpop.f32.mrf.mxu0
      %v1495 = vadd.f32 %v1206, %v1494
      %v1496 = vpop.f32.mrf.mxu0
      %1497 = vmatprep.mubr.bf16.mxu0 0
      %1498 = vmatmul.mubr.bf16.gmra.mxu0 %v971
      %v1499 = vpop.f32.mrf.mxu0
      %v1500 = vadd.f32 %v1211, %v1499
      %v1501 = vpop.f32.mrf.mxu0
      %v1502 = vpop.f32.mrf.mxu0
      %v1503 = vadd.f32 %v1214, %v1502
      %v1504 = vpop.f32.mrf.mxu0
      %1505 = vmatprep.mubr.bf16.mxu0 0
      %1506 = vmatmul.mubr.bf16.gmra.mxu0 %v974
      %v1507 = vpop.f32.mrf.mxu0
      %v1508 = vadd.f32 %v1219, %v1507
      %v1509 = vpop.f32.mrf.mxu0
      %v1510 = vpop.f32.mrf.mxu0
      %v1511 = vadd.f32 %v1222, %v1510
      %v1512 = vpop.f32.mrf.mxu0
      %1513 = vmatprep.mubr.bf16.mxu0 0
      %1514 = vmatmul.mubr.bf16.gmra.mxu0 %v977
      %v1515 = vpop.f32.mrf.mxu0
      %v1516 = vadd.f32 %v1227, %v1515
      %v1517 = vpop.f32.mrf.mxu0
      %v1518 = vpop.f32.mrf.mxu0
      %v1519 = vadd.f32 %v1230, %v1518
      %v1520 = vpop.f32.mrf.mxu0
      %1521 = vmatprep.mubr.bf16.mxu0 0
      %1522 = vmatmul.mubr.bf16.gmra.mxu0 %v980
      %v1523 = vpop.f32.mrf.mxu0
      %v1524 = vadd.f32 %v1235, %v1523
      %v1525 = vpop.f32.mrf.mxu0
      %v1526 = vpop.f32.mrf.mxu0
      %v1527 = vadd.f32 %v1238, %v1526
      %v1528 = vpop.f32.mrf.mxu0
      %1529 = vmatprep.mubr.bf16.mxu0 0
      %1530 = vmatmul.mubr.bf16.gmra.mxu0 %v983
      %v1531 = vpop.f32.mrf.mxu0
      %v1532 = vadd.f32 %v1243, %v1531
      %v1533 = vpop.f32.mrf.mxu0
      %v1534 = vpop.f32.mrf.mxu0
      %v1535 = vadd.f32 %v1246, %v1534
      %v1536 = vpop.f32.mrf.mxu0
      %1537 = vmatprep.mubr.bf16.mxu0 0
      %1538 = vmatmul.mubr.bf16.gmra.mxu0 %v986
      %v1539 = vpop.f32.mrf.mxu0
      %v1540 = vadd.f32 %v1251, %v1539
      %v1541 = vpop.f32.mrf.mxu0
      %v1542 = vpop.f32.mrf.mxu0
      %v1543 = vadd.f32 %v1254, %v1542
      %v1544 = vpop.f32.mrf.mxu0
      %1545 = vmatprep.mubr.bf16.mxu0 0
      %1546 = vmatmul.mubr.bf16.gmra.mxu0 %v989
      %v1547 = vpop.f32.mrf.mxu0
      %v1548 = vadd.f32 %v1259, %v1547
      %v1549 = vpop.f32.mrf.mxu0
      %v1550 = vpop.f32.mrf.mxu0
      %v1551 = vadd.f32 %v1262, %v1550
      %v1552 = vpop.f32.mrf.mxu0
      %1553 = vmatprep.mubr.bf16.mxu0 0
      %1554 = vmatmul.mubr.bf16.gmra.mxu0 %v992
      %v1555 = vpop.f32.mrf.mxu0
      %v1556 = vadd.f32 %v1267, %v1555
      %v1557 = vpop.f32.mrf.mxu0
      %v1558 = vpop.f32.mrf.mxu0
      %v1559 = vadd.f32 %v1270, %v1558
      %v1560 = vpop.f32.mrf.mxu0
      %1561 = vmatprep.mubr.bf16.mxu0 0
      %1562 = vmatmul.mubr.bf16.gmra.mxu0 %v995
      %v1563 = vpop.f32.mrf.mxu0
      %v1564 = vadd.f32 %v1275, %v1563
      %v1565 = vpop.f32.mrf.mxu0
      %v1566 = vpop.f32.mrf.mxu0
      %v1567 = vadd.f32 %v1278, %v1566
      %v1568 = vpop.f32.mrf.mxu0
      %1569 = vmatprep.mubr.bf16.mxu0 0
      %1570 = vmatmul.mubr.bf16.gmra.mxu0 %v998
      %v1571 = vpop.f32.mrf.mxu0
      %v1572 = vadd.f32 %v1283, %v1571
      %v1573 = vpop.f32.mrf.mxu0
      %v1574 = vpop.f32.mrf.mxu0
      %v1575 = vadd.f32 %v1286, %v1574
      %v1576 = vpop.f32.mrf.mxu0
      %1577 = vdwg.mxu0
      %v1578 = vtanh.pop %v1324
      %v1579 = vtanh.pop %v1327
      %v1580 = vtanh.pop %v1332
      %v1581 = vtanh.pop %v1335
      %v1582 = vtanh.pop %v1340
      %v1583 = vtanh.pop %v1343
      %v1584 = vtanh.pop %v1348
      %v1585 = vtanh.pop %v1351
      %v1586 = vtanh.pop %v1356
      %v1587 = vtanh.pop %v1359
      %v1588 = vtanh.pop %v1364
      %v1589 = vtanh.pop %v1367
      %v1590 = vtanh.pop %v1372
      %v1591 = vtanh.pop %v1375
      %v1592 = vtanh.pop %v1380
      %v1593 = vtanh.pop %v1383
      %v1594 = vtanh.pop %v1388
      %v1595 = vtanh.pop %v1391
      %v1596 = vtanh.pop %v1396
      %v1597 = vtanh.pop %v1399
      %v1598 = vtanh.pop %v1404
      %v1599 = vtanh.pop %v1407
      %v1600 = vtanh.pop %v1412
      %v1601 = vtanh.pop %v1415
      %v1602 = vtanh.pop %v1420
      %v1603 = vtanh.pop %v1423
      %v1604 = vtanh.pop %v1428
      %v1605 = vtanh.pop %v1431
      %v1606 = vtanh.pop %v1436
      %v1607 = vtanh.pop %v1439
      %v1608 = vtanh.pop %v1444
      %v1609 = vtanh.pop %v1447
      %v1610 = vtanh.pop %v1452
      %v1611 = vtanh.pop %v1455
      %v1612 = vtanh.pop %v1460
      %v1613 = vtanh.pop %v1463
      %v1614 = vtanh.pop %v1468
      %v1615 = vtanh.pop %v1471
      %v1616 = vtanh.pop %v1476
      %v1617 = vtanh.pop %v1479
      %v1618 = vtanh.pop %v1484
      %v1619 = vtanh.pop %v1487
      %v1620 = vtanh.pop %v1492
      %v1621 = vtanh.pop %v1495
      %v1622 = vtanh.pop %v1500
      %v1623 = vtanh.pop %v1503
      %v1624 = vtanh.pop %v1508
      %v1625 = vtanh.pop %v1511
      %v1626 = vtanh.pop %v1516
      %v1627 = vtanh.pop %v1519
      %v1628 = vtanh.pop %v1524
      %v1629 = vtanh.pop %v1527
      %v1630 = vtanh.pop %v1532
      %v1631 = vtanh.pop %v1535
      %v1632 = vtanh.pop %v1540
      %v1633 = vtanh.pop %v1543
      %v1634 = vtanh.pop %v1548
      %v1635 = vtanh.pop %v1551
      %v1636 = vtanh.pop %v1556
      %v1637 = vtanh.pop %v1559
      %v1638 = vtanh.pop %v1564
      %v1639 = vtanh.pop %v1567
      %v1640 = vtanh.pop %v1572
      %v1641 = vtanh.pop %v1575
      %1642 = vst [vmem:[%s148] sm:$0xff] %v1578
      %1643 = vst [vmem:[%s148 + $0x8] sm:$0xff] %v1579
      %1644 = vst [vmem:[%s148 + $0x10] sm:$0xff] %v1580
      %1645 = vst [vmem:[%s148 + $0x18] sm:$0xff] %v1581
      %1646 = vst [vmem:[%s148 + $0x20] sm:$0xff] %v1582
      %1647 = vst [vmem:[%s148 + $0x28] sm:$0xff] %v1583
      %1648 = vst [vmem:[%s148 + $0x30] sm:$0xff] %v1584
      %1649 = vst [vmem:[%s148 + $0x38] sm:$0xff] %v1585
      %1650 = vst [vmem:[%s148 + $0x40] sm:$0xff] %v1586
      %1651 = vst [vmem:[%s148 + $0x48] sm:$0xff] %v1587
      %1652 = vst [vmem:[%s148 + $0x50] sm:$0xff] %v1588
      %1653 = vst [vmem:[%s148 + $0x58] sm:$0xff] %v1589
      %1654 = vst [vmem:[%s148 + $0x60] sm:$0xff] %v1590
      %1655 = vst [vmem:[%s148 + $0x68] sm:$0xff] %v1591
      %1656 = vst [vmem:[%s148 + $0x70] sm:$0xff] %v1592
      %1657 = vst [vmem:[%s148 + $0x78] sm:$0xff] %v1593
      %1658 = vst [vmem:[%s148 + $0x80] sm:$0xff] %v1594
      %1659 = vst [vmem:[%s148 + $0x88] sm:$0xff] %v1595
      %1660 = vst [vmem:[%s148 + $0x90] sm:$0xff] %v1596
      %1661 = vst [vmem:[%s148 + $0x98] sm:$0xff] %v1597
      %1662 = vst [vmem:[%s148 + $0xa0] sm:$0xff] %v1598
      %1663 = vst [vmem:[%s148 + $0xa8] sm:$0xff] %v1599
      %1664 = vst [vmem:[%s148 + $0xb0] sm:$0xff] %v1600
      %1665 = vst [vmem:[%s148 + $0xb8] sm:$0xff] %v1601
      %1666 = vst [vmem:[%s148 + $0xc0] sm:$0xff] %v1602
      %1667 = vst [vmem:[%s148 + $0xc8] sm:$0xff] %v1603
      %1668 = vst [vmem:[%s148 + $0xd0] sm:$0xff] %v1604
      %1669 = vst [vmem:[%s148 + $0xd8] sm:$0xff] %v1605
      %1670 = vst [vmem:[%s148 + $0xe0] sm:$0xff] %v1606
      %1671 = vst [vmem:[%s148 + $0xe8] sm:$0xff] %v1607
      %1672 = vst [vmem:[%s148 + $0xf0] sm:$0xff] %v1608
      %1673 = vst [vmem:[%s148 + $0xf8] sm:$0xff] %v1609
      %1674 = vst [vmem:[%s148 + $0x100] sm:$0xff] %v1610
      %1675 = vst [vmem:[%s148 + $0x108] sm:$0xff] %v1611
      %1676 = vst [vmem:[%s148 + $0x110] sm:$0xff] %v1612
      %1677 = vst [vmem:[%s148 + $0x118] sm:$0xff] %v1613
      %1678 = vst [vmem:[%s148 + $0x120] sm:$0xff] %v1614
      %1679 = vst [vmem:[%s148 + $0x128] sm:$0xff] %v1615
      %1680 = vst [vmem:[%s148 + $0x130] sm:$0xff] %v1616
      %1681 = vst [vmem:[%s148 + $0x138] sm:$0xff] %v1617
      %1682 = vst [vmem:[%s148 + $0x140] sm:$0xff] %v1618
      %1683 = vst [vmem:[%s148 + $0x148] sm:$0xff] %v1619
      %1684 = vst [vmem:[%s148 + $0x150] sm:$0xff] %v1620
      %1685 = vst [vmem:[%s148 + $0x158] sm:$0xff] %v1621
      %1686 = vst [vmem:[%s148 + $0x160] sm:$0xff] %v1622
      %1687 = vst [vmem:[%s148 + $0x168] sm:$0xff] %v1623
      %1688 = vst [vmem:[%s148 + $0x170] sm:$0xff] %v1624
      %1689 = vst [vmem:[%s148 + $0x178] sm:$0xff] %v1625
      %1690 = vst [vmem:[%s148 + $0x180] sm:$0xff] %v1626
      %1691 = vst [vmem:[%s148 + $0x188] sm:$0xff] %v1627
      %1692 = vst [vmem:[%s148 + $0x190] sm:$0xff] %v1628
      %1693 = vst [vmem:[%s148 + $0x198] sm:$0xff] %v1629
      %1694 = vst [vmem:[%s148 + $0x1a0] sm:$0xff] %v1630
      %1695 = vst [vmem:[%s148 + $0x1a8] sm:$0xff] %v1631
      %1696 = vst [vmem:[%s148 + $0x1b0] sm:$0xff] %v1632
      %1697 = vst [vmem:[%s148 + $0x1b8] sm:$0xff] %v1633
      %1698 = vst [vmem:[%s148 + $0x1c0] sm:$0xff] %v1634
      %1699 = vst [vmem:[%s148 + $0x1c8] sm:$0xff] %v1635
      %1700 = vst [vmem:[%s148 + $0x1d0] sm:$0xff] %v1636
      %1701 = vst [vmem:[%s148 + $0x1d8] sm:$0xff] %v1637
      %1702 = vst [vmem:[%s148 + $0x1e0] sm:$0xff] %v1638
      %1703 = vst [vmem:[%s148 + $0x1e8] sm:$0xff] %v1639
      %1704 = vst [vmem:[%s148 + $0x1f0] sm:$0xff] %v1640
      %1705 = vst [vmem:[%s148 + $0x1f8] sm:$0xff] %v1641
      %s1706 = smul.u32 64, %s13
      %p1707 = scmp.lt.s32.totalorder %s1706, 255
      %s1708 = scalar_select %p1707, %s1706, 255
      %s1709 = smul.addr %s1708, 8
      %s1710 = scalar_lea.vmem %s2, %s1709
      // Predicated region
      $region29: #{_lambda_.17} parent=27 // pred_check
        %p1711 = pneg %p78
      $region30: #{_lambda_.17} parent=27 // pred_check_branch
        %1713 = sbr.rel (%p1711) target = $region32
      $region31: #{_lambda_.17} parent=27 // pred_region
        %s1714 = smul.u32 64, %s13
      $region32: #{_lambda_.17} parent=27 // pred_fallthru
        _
    $region28: #{_lambda_.17} parent=5 // pred_fallthru
      _
    %p1715 = scmp.le.s32.totalorder 2, %s8
    // Predicated region
    $region33: #{_lambda_.17} parent=5 // pred_check
      %p1716 = pneg %p1715
    $region34: #{_lambda_.17} parent=5 // pred_check_branch
      %1718 = sbr.rel (%p1716) target = $region36
    $region35: #{_lambda_.17} parent=5 // pred_region
      %s1719 = ssub.s32 %s8, 2
      // Predicated region
      $region37: #{_lambda_.17} parent=35 // pred_check
        %p1720 = pneg %p84
      $region38: #{_lambda_.17} parent=35 // pred_check_branch
        %1722 = sbr.rel (%p1720) target = $region40
      $region39: #{_lambda_.17} parent=35 // pred_region
        %s1723 = smul.u32 64, %s14
        %p1724 = scmp.lt.s32.totalorder %s1723, 255
        %s1725 = scalar_select %p1724, %s1723, 255
        %s1726 = smul.addr %s1725, 8
        %s1727 = scalar_lea.vmem %s2, %s1726
      $region40: #{_lambda_.17} parent=35 // pred_fallthru
        _
    $region36: #{_lambda_.17} parent=5 // pred_fallthru
      _
  $region6: #{_lambda_.17} parent=0 // loop_footer
    %s12 = sadd.s32 1, %s8
  $region7: #{_lambda_.17} parent=0 // loop_footer_branch
    %7 = sbr.rel target = $region3
  $region8: #{_lambda_.17} parent=0 // loop_exit
    _

</llo_original>
